<compile_context>
chip_gen: v6e
topology: v6e:2x2x1
jax: 0.10.0
libtpu: 0.0.40
codegen_flags: <defaults>
</compile_context>

<pallas_src>
import functools
import math

import numpy as np
import jax
import jax.numpy as jnp
from jax.experimental import pallas as pl
from jax.experimental.pallas import tpu as pltpu

# ------------------------- model configuration -----------------------------
BATCH = 2
DATA_SHAPE = (16, 120)      # (H, W); chosen so the conv stack reduces to 1x1
PARAM_SHAPE = (4,)          # theta dimensionality
HIDDEN = 32
N_THETA_LAYERS = 4

# (C_in, C_out, (kh, kw), (sh, sw), (ph, pw)) for each Conv2d in self.convs
CONV_CFG = (
    (2,           HIDDEN // 4, (2, 5), (2, 3), (1, 2)),
    (HIDDEN // 4, HIDDEN // 4, (2, 3), (2, 1), (1, 1)),
    (HIDDEN // 4, HIDDEN // 4, (2, 3), (2, 1), (1, 1)),
    (HIDDEN // 4, HIDDEN // 4, (2, 3), (2, 1), (1, 1)),
    (HIDDEN // 4, HIDDEN // 2, (2, 5), (2, 3), (1, 2)),
    (HIDDEN // 2, HIDDEN // 2, (2, 3), (2, 1), (1, 1)),
    (HIDDEN // 2, HIDDEN // 2, (2, 3), (2, 1), (1, 1)),
    (HIDDEN // 2, HIDDEN // 2, (2, 3), (2, 1), (1, 1)),
    (HIDDEN // 2, HIDDEN,      (2, 5), (1, 3), (0, 1)),
    (HIDDEN,      HIDDEN,      (1, 4), (1, 1), (0, 0)),
)

# theta_mlp (4 x Linear+ReLU) followed by out_mlp (Linear+ReLU, 4x, Linear)
MLP_DIMS = ([(math.prod(PARAM_SHAPE), HIDDEN)] + [(HIDDEN, HIDDEN)] * 3
            + [(2 * HIDDEN, HIDDEN)] + [(HIDDEN, HIDDEN)] * 4 + [(HIDDEN, 1)])


# ------------------------- static geometry / packing plan ------------------
def _conv_geometry():
    geom = []
    h, w = DATA_SHAPE
    for cin, cout, (kh, kw), (sh, sw), (ph, pw) in CONV_CFG:
        ho = (h + 2 * ph - kh) // sh + 1
        wo = (w + 2 * pw - kw) // sw + 1
        geom.append(dict(cin=cin, cout=cout, kh=kh, kw=kw, sh=sh, sw=sw,
                         ph=ph, pw=pw, hin=h, win=w, ho=ho, wo=wo))
        h, w = ho, wo
    assert (h, w) == (1, 1), (h, w)   # conv stack must end at 1x1 spatial
    return tuple(geom)


GEOM = _conv_geometry()


def _r8(n):                       # keep every stacked block 8-row aligned
    return -(-n // 8) * 8


def _build_plan():
    """Static (shape-only) layout of the packed constant operands."""
    l_cols = max(BATCH * g["hin"] for g in GEOM)           # 32
    r_cols = max(g["cout"] * g["wo"] for g in GEOM)        # 320
    conv, l_rows, r_rows = [], 0, 0
    for i, g in enumerate(GEOM):
        taps = []
        for dh in range(g["kh"]):
            lr, lc = BATCH * g["ho"], BATCH * g["hin"]
            rr = g["win"] if i == 0 else g["cin"] * g["win"]  # layer 0: C folded
            rc = g["cout"] * g["wo"]
            taps.append(dict(dh=dh, l_off=l_rows, l_rows=lr, l_cols=lc,
                             r_off=r_rows, r_rows=rr, r_cols=rc))
            l_rows += _r8(lr)
            r_rows += _r8(rr)
        conv.append(dict(taps=tuple(taps), ncols=g["cout"] * g["wo"]))
    mlp, w_rows = [], 0
    for li, (din, dout) in enumerate(MLP_DIMS):
        mlp.append(dict(w_off=w_rows, w_rows=din, w_cols=dout, b_row=li))
        w_rows += _r8(din)
    return dict(conv=tuple(conv), mlp=tuple(mlp),
                l_shape=(l_rows, l_cols), r_shape=(r_rows, r_cols),
                cb_shape=(len(GEOM), r_cols),
                mw_shape=(w_rows, HIDDEN), mb_shape=(len(MLP_DIMS), HIDDEN))


_PLAN = _build_plan()


# ---------------- one-time param reformatting (outside jit) -----------------
def prepare_kernel_params(params):
    """Pack raw (torch-layout) params into the fused kernel's constant operands."""
    p = _PLAN
    Lbuf = np.zeros(p["l_shape"], np.float32)
    Rbuf = np.zeros(p["r_shape"], np.float32)
    CB = np.zeros(p["cb_shape"], np.float32)
    MW = np.zeros(p["mw_shape"], np.float32)
    MB = np.zeros(p["mb_shape"], np.float32)

    # add_data_channels('diff') is linear: x_2ch_row = x_row @ C, folded into R of layer 1.
    w0 = DATA_SHAPE[1]
    C = np.zeros((w0, 2 * w0), np.float32)
    C[np.arange(w0), np.arange(w0)] = 1.0
    C[np.arange(1, w0), w0 + np.arange(w0 - 1)] += 1.0   # +x[w+1]
    C[np.arange(w0 - 1), w0 + np.arange(w0 - 1)] -= 1.0  # -x[w]; last diff col stays 0

    for i, (g, meta) in enumerate(zip(GEOM, p["conv"])):
        w = np.asarray(params["conv_w"][i], np.float32)   # (cout, cin, kh, kw)
        b = np.asarray(params["conv_b"][i], np.float32)   # (cout,)
        CB[i, :g["cout"] * g["wo"]] = np.repeat(b, g["wo"])
        for tap in meta["taps"]:
            dh = tap["dh"]
            # L: circular H-pad + H-stride row selection, block-diagonal over batch.
            L = np.zeros((BATCH * g["ho"], BATCH * g["hin"]), np.float32)
            for bb in range(BATCH):
                for ho in range(g["ho"]):
                    hs = (ho * g["sh"] + dh - g["ph"]) % g["hin"]
                    L[bb * g["ho"] + ho, bb * g["hin"] + hs] = 1.0
            Lbuf[tap["l_off"]:tap["l_off"] + L.shape[0], :L.shape[1]] = L
            # R: circular W-pad + W-stride + kw taps + channel contraction.
            R = np.zeros((g["cin"] * g["win"], g["cout"] * g["wo"]), np.float32)
            wo_idx = np.arange(g["wo"])
            for dw in range(g["kw"]):
                ws = (wo_idx * g["sw"] + dw - g["pw"]) % g["win"]
                for ci in range(g["cin"]):
                    for co in range(g["cout"]):
                        R[ci * g["win"] + ws, co * g["wo"] + wo_idx] += w[co, ci, dh, dw]
            if i == 0:
                R = C @ R                                   # fold the 'diff' channel
            Rbuf[tap["r_off"]:tap["r_off"] + R.shape[0], :R.shape[1]] = R

    mlp_params = list(params["theta_mlp"]) + list(params["out_mlp"])
    for entry, (wm, bm) in zip(p["mlp"], mlp_params):
        wm = np.asarray(wm, np.float32)
        bm = np.asarray(bm, np.float32).reshape(-1)
        MW[entry["w_off"]:entry["w_off"] + wm.shape[0], :wm.shape[1]] = wm
        MB[entry["b_row"], :wm.shape[1]] = bm

    return {"L": jnp.asarray(Lbuf), "R": jnp.asarray(Rbuf), "CB": jnp.asarray(CB),
            "MW": jnp.asarray(MW), "MB": jnp.asarray(MB)}


# ------------------------------ fused kernel --------------------------------
def _cnnre_kernel(x_ref, th_ref, l_ref, r_ref, cb_ref, mw_ref, mb_ref, o_ref):
    f32 = jnp.float32

    # ---- conv stack: layer = ReLU( sum_dh (L_dh @ H) @ R_dh + bias_row ) ----
    h = x_ref[...]                                        # (B*H0, W0) = (32, 120)
    for i, meta in enumerate(_PLAN["conv"]):
        acc = None
        for tap in meta["taps"]:
            lo, lr, lc = tap["l_off"], tap["l_rows"], tap["l_cols"]
            ro, rr, rc = tap["r_off"], tap["r_rows"], tap["r_cols"]
            sel = jnp.dot(l_ref[lo:lo + lr, :lc], h, preferred_element_type=f32)
            term = jnp.dot(sel, r_ref[ro:ro + rr, :rc], preferred_element_type=f32)
            acc = term if acc is None else acc + term
        h = jnp.maximum(acc + cb_ref[i:i + 1, :meta["ncols"]], 0.0)
    conv_feat = h                                         # (B, HIDDEN)

    # ---- theta_mlp ----
    # TODO(synk): theta_dropout(p=0.2) implemented as eval-mode identity.
    t = th_ref[...]                                       # (B, 4)
    for entry in _PLAN["mlp"][:N_THETA_LAYERS]:
        w = mw_ref[entry["w_off"]:entry["w_off"] + entry["w_rows"], :entry["w_cols"]]
        b = mb_ref[entry["b_row"]:entry["b_row"] + 1, :entry["w_cols"]]
        t = jnp.maximum(jnp.dot(t, w, preferred_element_type=f32) + b, 0.0)

    # ---- out_mlp: torch.cat([conv_feat, theta_feat]) folded via split W0 ----
    out_entries = _PLAN["mlp"][N_THETA_LAYERS:]
    e0 = out_entries[0]
    w0a = mw_ref[e0["w_off"]:e0["w_off"] + HIDDEN, :e0["w_cols"]]
    w0b = mw_ref[e0["w_off"] + HIDDEN:e0["w_off"] + 2 * HIDDEN, :e0["w_cols"]]
    b0 = mb_ref[e0["b_row"]:e0["b_row"] + 1, :e0["w_cols"]]
    z = (jnp.dot(conv_feat, w0a, preferred_element_type=f32)
         + jnp.dot(t, w0b, preferred_element_type=f32) + b0)
    z = jnp.maximum(z, 0.0)
    for entry in out_entries[1:-1]:
        w = mw_ref[entry["w_off"]:entry["w_off"] + entry["w_rows"], :entry["w_cols"]]
        b = mb_ref[entry["b_row"]:entry["b_row"] + 1, :entry["w_cols"]]
        z = jnp.maximum(jnp.dot(z, w, preferred_element_type=f32) + b, 0.0)
    el = out_entries[-1]
    wl = mw_ref[el["w_off"]:el["w_off"] + el["w_rows"], :el["w_cols"]]
    bl = mb_ref[el["b_row"]:el["b_row"] + 1, :el["w_cols"]]
    o_ref[...] = (jnp.dot(z, wl, preferred_element_type=f32) + bl).astype(o_ref.dtype)


_VMEM_SPEC = pl.BlockSpec(memory_space=pltpu.MemorySpace.VMEM)


@jax.jit
def cnnre_forward(x, theta, kparams):
    # Only wrapper-side op: collapse (B, H, W) -> (B*H, W); everything else is
    # inside the single pallas_call.
    x2d = x.reshape(BATCH * DATA_SHAPE[0], DATA_SHAPE[1]).astype(jnp.float32)
    return pl.pallas_call(
        _cnnre_kernel,
        out_shape=jax.ShapeDtypeStruct((BATCH, 1), jnp.float32),
        in_specs=[_VMEM_SPEC] * 7,
        out_specs=_VMEM_SPEC,
        # ~6 MiB of packed constants; 32 MiB matches v6e/v7x defaults and only
        # effectively raises the v5e (16 MiB) scoped default.  No grid, no
        # multi-buffering: nothing to pipeline at this footprint.
        compiler_params=pltpu.CompilerParams(vmem_limit_bytes=32 * 1024 * 1024),
    )(x2d, theta.astype(jnp.float32), kparams["L"], kparams["R"],
      kparams["CB"], kparams["MW"], kparams["MB"])


# ------------------------ pure-JAX reference (check) -------------------------
def _circular_pad(x, ph, pw):
    if ph == 0 and pw == 0:
        return x
    return jnp.pad(x, ((0, 0), (0, 0), (ph, ph), (pw, pw)), mode="wrap")


def _add_data_channels(x):
    """channel 0 = X, channel 1 = 'diff' (right-zero-padded forward difference)."""
    diff = jnp.pad(x[:, :, 1:] - x[:, :, :-1], ((0, 0), (0, 0), (0, 1)))
    return jnp.stack([x, diff], axis=1)                   # (B, 2, H, W)


@jax.jit
def cnnre_forward_ref(x, theta, params):
    hi = jax.lax.Precision.HIGHEST
    h = _add_data_channels(x)
    for cfg, w, b in zip(CONV_CFG, params["conv_w"], params["conv_b"]):
        _, _, _, stride, pad = cfg
        hp = _circular_pad(h, pad[0], pad[1])
        y = jax.lax.conv_general_dilated(
            hp, w, window_strides=stride, padding="VALID",
            dimension_numbers=("NCHW", "OIHW", "NCHW"), precision=hi)
        h = jnp.maximum(y + b[None, :, None, None], 0.0)
    conv_feat = h.reshape(h.shape[0], HIDDEN)
    tf = theta
    for w, b in params["theta_mlp"]:
        tf = jnp.maximum(jnp.dot(tf, w, precision=hi) + b, 0.0)
    z = jnp.concatenate([conv_feat, tf], axis=1)
    w0, b0 = params["out_mlp"][0]
    z = jnp.maximum(jnp.dot(z, w0, precision=hi) + b0, 0.0)
    for w, b in params["out_mlp"][1:5]:
        z = jnp.maximum(jnp.dot(z, w, precision=hi) + b, 0.0)
    w5, b5 = params["out_mlp"][5]
    return jnp.dot(z, w5, precision=hi) + b5


# ------------------------------- parameters ----------------------------------
def _init_params(key):
    def uniform(k, shape, fan_in):
        bound = 1.0 / math.sqrt(fan_in)
        return jax.random.uniform(k, shape, dtype=jnp.float32,
                                  minval=-bound, maxval=bound)

    params = {"conv_w": [], "conv_b": [], "theta_mlp": [], "out_mlp": []}
    for cin, cout, (kh, kw), _, _ in CONV_CFG:
        key, kw_, kb_ = jax.random.split(key, 3)
        fan_in = cin * kh * kw
        params["conv_w"].append(uniform(kw_, (cout, cin, kh, kw), fan_in))
        params["conv_b"].append(uniform(kb_, (cout,), fan_in))

    p_in = math.prod(PARAM_SHAPE)
    for din, dout in [(p_in, HIDDEN)] + [(HIDDEN, HIDDEN)] * 3:
        key, kw_, kb_ = jax.random.split(key, 3)
        params["theta_mlp"].append((uniform(kw_, (din, dout), din),
                                    uniform(kb_, (1, dout), din)))
    for din, dout in [(2 * HIDDEN, HIDDEN)] + [(HIDDEN, HIDDEN)] * 4 + [(HIDDEN, 1)]:
        key, kw_, kb_ = jax.random.split(key, 3)
        params["out_mlp"].append((uniform(kw_, (din, dout), din),
                                  uniform(kb_, (1, dout), din)))
    return params


if __name__ == "__main__":
    key = jax.random.PRNGKey(0)
    key, kx, kt, kp = jax.random.split(key, 4)
    x = jax.random.normal(kx, (BATCH,) + DATA_SHAPE, dtype=jnp.float32)
    theta = jax.random.normal(kt, (BATCH,) + PARAM_SHAPE, dtype=jnp.float32)
    params = _init_params(kp)
    kparams = prepare_kernel_params(params)   # one-time weight reformatting

    logratio = cnnre_forward(x, theta, kparams)
    jax.block_until_ready(logratio)

    ref = cnnre_forward_ref(x, theta, params)
    jax.block_until_ready(ref)

    assert logratio.shape == (BATCH, 1)
    assert logratio.dtype == jnp.float32
    assert bool(jnp.allclose(logratio, ref, rtol=5e-2, atol=5e-2)), (logratio, ref)

    print("KERNEL_OK")
</pallas_src>

<mosaic_0001>
module attributes {stable_mosaic.version = 11 : i64} {
  func.func @_cnnre_kernel(%arg0: memref<32x120xf32, #tpu.memory_space<vmem>>, %arg1: memref<2x4xf32, #tpu.memory_space<vmem>>, %arg2: memref<200x32xf32, #tpu.memory_space<vmem>>, %arg3: memref<4720x320xf32, #tpu.memory_space<vmem>>, %arg4: memref<10x320xf32, #tpu.memory_space<vmem>>, %arg5: memref<328x32xf32, #tpu.memory_space<vmem>>, %arg6: memref<10x32xf32, #tpu.memory_space<vmem>>, %arg7: memref<2x1xf32, #tpu.memory_space<vmem>>) attributes {dimension_semantics = [], scalar_prefetch = 0 : i64, scratch_operands = 0 : i64, tpu.core_type = #tpu.core_type<tc>} {
    %c0 = arith.constant 0 : index
    %c0_0 = arith.constant 0 : index
    %0 = vector.load %arg0[%c0, %c0_0] : memref<32x120xf32, #tpu.memory_space<vmem>>, vector<32x120xf32>
    %c0_1 = arith.constant 0 : index
    %c0_2 = arith.constant 0 : index
    %1 = vector.load %arg2[%c0_1, %c0_2] : memref<200x32xf32, #tpu.memory_space<vmem>>, vector<18x32xf32>
    %cst = arith.constant dense<0.000000e+00> : vector<18x120xf32>
    %2 = tpu.matmul %1, %0, %cst {dimension_numbers = #tpu.dot_dimension_numbers<[1], [0], [0], [1], [0, 0, 1, 1], [], []>} : vector<18x32xf32>, vector<32x120xf32>, vector<18x120xf32> -> vector<18x120xf32>
    %c0_3 = arith.constant 0 : index
    %c0_4 = arith.constant 0 : index
    %3 = vector.load %arg3[%c0_3, %c0_4] : memref<4720x320xf32, #tpu.memory_space<vmem>>, vector<120x320xf32>
    %cst_5 = arith.constant dense<0.000000e+00> : vector<18x320xf32>
    %4 = tpu.matmul %2, %3, %cst_5 {dimension_numbers = #tpu.dot_dimension_numbers<[1], [0], [0], [1], [0, 0, 1, 1], [], []>} : vector<18x120xf32>, vector<120x320xf32>, vector<18x320xf32> -> vector<18x320xf32>
    %c24 = arith.constant 24 : index
    %c0_6 = arith.constant 0 : index
    %5 = vector.load %arg2[%c24, %c0_6] : memref<200x32xf32, #tpu.memory_space<vmem>>, vector<18x32xf32>
    %cst_7 = arith.constant dense<0.000000e+00> : vector<18x120xf32>
    %6 = tpu.matmul %5, %0, %cst_7 {dimension_numbers = #tpu.dot_dimension_numbers<[1], [0], [0], [1], [0, 0, 1, 1], [], []>} : vector<18x32xf32>, vector<32x120xf32>, vector<18x120xf32> -> vector<18x120xf32>
    %c120 = arith.constant 120 : index
    %c0_8 = arith.constant 0 : index
    %7 = vector.load %arg3[%c120, %c0_8] : memref<4720x320xf32, #tpu.memory_space<vmem>>, vector<120x320xf32>
    %cst_9 = arith.constant dense<0.000000e+00> : vector<18x320xf32>
    %8 = tpu.matmul %6, %7, %cst_9 {dimension_numbers = #tpu.dot_dimension_numbers<[1], [0], [0], [1], [0, 0, 1, 1], [], []>} : vector<18x120xf32>, vector<120x320xf32>, vector<18x320xf32> -> vector<18x320xf32>
    %9 = arith.addf %4, %8 : vector<18x320xf32>
    %c0_10 = arith.constant 0 : index
    %c0_11 = arith.constant 0 : index
    %10 = vector.load %arg4[%c0_10, %c0_11] : memref<10x320xf32, #tpu.memory_space<vmem>>, vector<1x320xf32>
    %11 = vector.broadcast %10 : vector<1x320xf32> to vector<18x320xf32>
    %12 = arith.addf %9, %11 : vector<18x320xf32>
    %cst_12 = arith.constant 0.000000e+00 : f32
    %13 = vector.broadcast %cst_12 : f32 to vector<18x320xf32>
    %14 = arith.maximumf %12, %13 : vector<18x320xf32>
    %c48 = arith.constant 48 : index
    %c0_13 = arith.constant 0 : index
    %15 = vector.load %arg2[%c48, %c0_13] : memref<200x32xf32, #tpu.memory_space<vmem>>, vector<10x18xf32>
    %cst_14 = arith.constant dense<0.000000e+00> : vector<10x320xf32>
    %16 = tpu.matmul %15, %14, %cst_14 {dimension_numbers = #tpu.dot_dimension_numbers<[1], [0], [0], [1], [0, 0, 1, 1], [], []>} : vector<10x18xf32>, vector<18x320xf32>, vector<10x320xf32> -> vector<10x320xf32>
    %c240 = arith.constant 240 : index
    %c0_15 = arith.constant 0 : index
    %17 = vector.load %arg3[%c240, %c0_15] : memref<4720x320xf32, #tpu.memory_space<vmem>>, vector<320x320xf32>
    %cst_16 = arith.constant dense<0.000000e+00> : vector<10x320xf32>
    %18 = tpu.matmul %16, %17, %cst_16 {dimension_numbers = #tpu.dot_dimension_numbers<[1], [0], [0], [1], [0, 0, 1, 1], [], []>} : vector<10x320xf32>, vector<320x320xf32>, vector<10x320xf32> -> vector<10x320xf32>
    %c64 = arith.constant 64 : index
    %c0_17 = arith.constant 0 : index
    %19 = vector.load %arg2[%c64, %c0_17] : memref<200x32xf32, #tpu.memory_space<vmem>>, vector<10x18xf32>
    %cst_18 = arith.constant dense<0.000000e+00> : vector<10x320xf32>
    %20 = tpu.matmul %19, %14, %cst_18 {dimension_numbers = #tpu.dot_dimension_numbers<[1], [0], [0], [1], [0, 0, 1, 1], [], []>} : vector<10x18xf32>, vector<18x320xf32>, vector<10x320xf32> -> vector<10x320xf32>
    %c560 = arith.constant 560 : index
    %c0_19 = arith.constant 0 : index
    %21 = vector.load %arg3[%c560, %c0_19] : memref<4720x320xf32, #tpu.memory_space<vmem>>, vector<320x320xf32>
    %cst_20 = arith.constant dense<0.000000e+00> : vector<10x320xf32>
    %22 = tpu.matmul %20, %21, %cst_20 {dimension_numbers = #tpu.dot_dimension_numbers<[1], [0], [0], [1], [0, 0, 1, 1], [], []>} : vector<10x320xf32>, vector<320x320xf32>, vector<10x320xf32> -> vector<10x320xf32>
    %23 = arith.addf %18, %22 : vector<10x320xf32>
    %c1 = arith.constant 1 : index
    %c0_21 = arith.constant 0 : index
    %24 = vector.load %arg4[%c1, %c0_21] : memref<10x320xf32, #tpu.memory_space<vmem>>, vector<1x320xf32>
    %25 = vector.broadcast %24 : vector<1x320xf32> to vector<10x320xf32>
    %26 = arith.addf %23, %25 : vector<10x320xf32>
    %cst_22 = arith.constant 0.000000e+00 : f32
    %27 = vector.broadcast %cst_22 : f32 to vector<10x320xf32>
    %28 = arith.maximumf %26, %27 : vector<10x320xf32>
    %c80 = arith.constant 80 : index
    %c0_23 = arith.constant 0 : index
    %29 = vector.load %arg2[%c80, %c0_23] : memref<200x32xf32, #tpu.memory_space<vmem>>, vector<6x10xf32>
    %cst_24 = arith.constant dense<0.000000e+00> : vector<6x320xf32>
    %30 = tpu.matmul %29, %28, %cst_24 {dimension_numbers = #tpu.dot_dimension_numbers<[1], [0], [0], [1], [0, 0, 1, 1], [], []>} : vector<6x10xf32>, vector<10x320xf32>, vector<6x320xf32> -> vector<6x320xf32>
    %c880 = arith.constant 880 : index
    %c0_25 = arith.constant 0 : index
    %31 = vector.load %arg3[%c880, %c0_25] : memref<4720x320xf32, #tpu.memory_space<vmem>>, vector<320x320xf32>
    %cst_26 = arith.constant dense<0.000000e+00> : vector<6x320xf32>
    %32 = tpu.matmul %30, %31, %cst_26 {dimension_numbers = #tpu.dot_dimension_numbers<[1], [0], [0], [1], [0, 0, 1, 1], [], []>} : vector<6x320xf32>, vector<320x320xf32>, vector<6x320xf32> -> vector<6x320xf32>
    %c88 = arith.constant 88 : index
    %c0_27 = arith.constant 0 : index
    %33 = vector.load %arg2[%c88, %c0_27] : memref<200x32xf32, #tpu.memory_space<vmem>>, vector<6x10xf32>
    %cst_28 = arith.constant dense<0.000000e+00> : vector<6x320xf32>
    %34 = tpu.matmul %33, %28, %cst_28 {dimension_numbers = #tpu.dot_dimension_numbers<[1], [0], [0], [1], [0, 0, 1, 1], [], []>} : vector<6x10xf32>, vector<10x320xf32>, vector<6x320xf32> -> vector<6x320xf32>
    %c1200 = arith.constant 1200 : index
    %c0_29 = arith.constant 0 : index
    %35 = vector.load %arg3[%c1200, %c0_29] : memref<4720x320xf32, #tpu.memory_space<vmem>>, vector<320x320xf32>
    %cst_30 = arith.constant dense<0.000000e+00> : vector<6x320xf32>
    %36 = tpu.matmul %34, %35, %cst_30 {dimension_numbers = #tpu.dot_dimension_numbers<[1], [0], [0], [1], [0, 0, 1, 1], [], []>} : vector<6x320xf32>, vector<320x320xf32>, vector<6x320xf32> -> vector<6x320xf32>
    %37 = arith.addf %32, %36 : vector<6x320xf32>
    %c2 = arith.constant 2 : index
    %c0_31 = arith.constant 0 : index
    %38 = vector.load %arg4[%c2, %c0_31] : memref<10x320xf32, #tpu.memory_space<vmem>>, vector<1x320xf32>
    %39 = vector.broadcast %38 : vector<1x320xf32> to vector<6x320xf32>
    %40 = arith.addf %37, %39 : vector<6x320xf32>
    %cst_32 = arith.constant 0.000000e+00 : f32
    %41 = vector.broadcast %cst_32 : f32 to vector<6x320xf32>
    %42 = arith.maximumf %40, %41 : vector<6x320xf32>
    %c96 = arith.constant 96 : index
    %c0_33 = arith.constant 0 : index
    %43 = vector.load %arg2[%c96, %c0_33] : memref<200x32xf32, #tpu.memory_space<vmem>>, vector<4x6xf32>
    %cst_34 = arith.constant dense<0.000000e+00> : vector<4x320xf32>
    %44 = tpu.matmul %43, %42, %cst_34 {dimension_numbers = #tpu.dot_dimension_numbers<[1], [0], [0], [1], [0, 0, 1, 1], [], []>} : vector<4x6xf32>, vector<6x320xf32>, vector<4x320xf32> -> vector<4x320xf32>
    %c1520 = arith.constant 1520 : index
    %c0_35 = arith.constant 0 : index
    %45 = vector.load %arg3[%c1520, %c0_35] : memref<4720x320xf32, #tpu.memory_space<vmem>>, vector<320x320xf32>
    %cst_36 = arith.constant dense<0.000000e+00> : vector<4x320xf32>
    %46 = tpu.matmul %44, %45, %cst_36 {dimension_numbers = #tpu.dot_dimension_numbers<[1], [0], [0], [1], [0, 0, 1, 1], [], []>} : vector<4x320xf32>, vector<320x320xf32>, vector<4x320xf32> -> vector<4x320xf32>
    %c104 = arith.constant 104 : index
    %c0_37 = arith.constant 0 : index
    %47 = vector.load %arg2[%c104, %c0_37] : memref<200x32xf32, #tpu.memory_space<vmem>>, vector<4x6xf32>
    %cst_38 = arith.constant dense<0.000000e+00> : vector<4x320xf32>
    %48 = tpu.matmul %47, %42, %cst_38 {dimension_numbers = #tpu.dot_dimension_numbers<[1], [0], [0], [1], [0, 0, 1, 1], [], []>} : vector<4x6xf32>, vector<6x320xf32>, vector<4x320xf32> -> vector<4x320xf32>
    %c1840 = arith.constant 1840 : index
    %c0_39 = arith.constant 0 : index
    %49 = vector.load %arg3[%c1840, %c0_39] : memref<4720x320xf32, #tpu.memory_space<vmem>>, vector<320x320xf32>
    %cst_40 = arith.constant dense<0.000000e+00> : vector<4x320xf32>
    %50 = tpu.matmul %48, %49, %cst_40 {dimension_numbers = #tpu.dot_dimension_numbers<[1], [0], [0], [1], [0, 0, 1, 1], [], []>} : vector<4x320xf32>, vector<320x320xf32>, vector<4x320xf32> -> vector<4x320xf32>
    %51 = arith.addf %46, %50 : vector<4x320xf32>
    %c3 = arith.constant 3 : index
    %c0_41 = arith.constant 0 : index
    %52 = vector.load %arg4[%c3, %c0_41] : memref<10x320xf32, #tpu.memory_space<vmem>>, vector<1x320xf32>
    %53 = vector.broadcast %52 : vector<1x320xf32> to vector<4x320xf32>
    %54 = arith.addf %51, %53 : vector<4x320xf32>
    %cst_42 = arith.constant 0.000000e+00 : f32
    %55 = vector.broadcast %cst_42 : f32 to vector<4x320xf32>
    %56 = arith.maximumf %54, %55 : vector<4x320xf32>
    %c112 = arith.constant 112 : index
    %c0_43 = arith.constant 0 : index
    %57 = vector.load %arg2[%c112, %c0_43] : memref<200x32xf32, #tpu.memory_space<vmem>>, vector<4x4xf32>
    %cst_44 = arith.constant dense<0.000000e+00> : vector<4x320xf32>
    %58 = tpu.matmul %57, %56, %cst_44 {dimension_numbers = #tpu.dot_dimension_numbers<[1], [0], [0], [1], [0, 0, 1, 1], [], []>} : vector<4x4xf32>, vector<4x320xf32>, vector<4x320xf32> -> vector<4x320xf32>
    %c2160 = arith.constant 2160 : index
    %c0_45 = arith.constant 0 : index
    %59 = vector.load %arg3[%c2160, %c0_45] : memref<4720x320xf32, #tpu.memory_space<vmem>>, vector<320x224xf32>
    %cst_46 = arith.constant dense<0.000000e+00> : vector<4x224xf32>
    %60 = tpu.matmul %58, %59, %cst_46 {dimension_numbers = #tpu.dot_dimension_numbers<[1], [0], [0], [1], [0, 0, 1, 1], [], []>} : vector<4x320xf32>, vector<320x224xf32>, vector<4x224xf32> -> vector<4x224xf32>
    %c120_47 = arith.constant 120 : index
    %c0_48 = arith.constant 0 : index
    %61 = vector.load %arg2[%c120_47, %c0_48] : memref<200x32xf32, #tpu.memory_space<vmem>>, vector<4x4xf32>
    %cst_49 = arith.constant dense<0.000000e+00> : vector<4x320xf32>
    %62 = tpu.matmul %61, %56, %cst_49 {dimension_numbers = #tpu.dot_dimension_numbers<[1], [0], [0], [1], [0, 0, 1, 1], [], []>} : vector<4x4xf32>, vector<4x320xf32>, vector<4x320xf32> -> vector<4x320xf32>
    %c2480 = arith.constant 2480 : index
    %c0_50 = arith.constant 0 : index
    %63 = vector.load %arg3[%c2480, %c0_50] : memref<4720x320xf32, #tpu.memory_space<vmem>>, vector<320x224xf32>
    %cst_51 = arith.constant dense<0.000000e+00> : vector<4x224xf32>
    %64 = tpu.matmul %62, %63, %cst_51 {dimension_numbers = #tpu.dot_dimension_numbers<[1], [0], [0], [1], [0, 0, 1, 1], [], []>} : vector<4x320xf32>, vector<320x224xf32>, vector<4x224xf32> -> vector<4x224xf32>
    %65 = arith.addf %60, %64 : vector<4x224xf32>
    %c4 = arith.constant 4 : index
    %c0_52 = arith.constant 0 : index
    %66 = vector.load %arg4[%c4, %c0_52] : memref<10x320xf32, #tpu.memory_space<vmem>>, vector<1x224xf32>
    %67 = vector.broadcast %66 : vector<1x224xf32> to vector<4x224xf32>
    %68 = arith.addf %65, %67 : vector<4x224xf32>
    %cst_53 = arith.constant 0.000000e+00 : f32
    %69 = vector.broadcast %cst_53 : f32 to vector<4x224xf32>
    %70 = arith.maximumf %68, %69 : vector<4x224xf32>
    %c128 = arith.constant 128 : index
    %c0_54 = arith.constant 0 : index
    %71 = vector.load %arg2[%c128, %c0_54] : memref<200x32xf32, #tpu.memory_space<vmem>>, vector<4x4xf32>
    %cst_55 = arith.constant dense<0.000000e+00> : vector<4x224xf32>
    %72 = tpu.matmul %71, %70, %cst_55 {dimension_numbers = #tpu.dot_dimension_numbers<[1], [0], [0], [1], [0, 0, 1, 1], [], []>} : vector<4x4xf32>, vector<4x224xf32>, vector<4x224xf32> -> vector<4x224xf32>
    %c2800 = arith.constant 2800 : index
    %c0_56 = arith.constant 0 : index
    %73 = vector.load %arg3[%c2800, %c0_56] : memref<4720x320xf32, #tpu.memory_space<vmem>>, vector<224x224xf32>
    %cst_57 = arith.constant dense<0.000000e+00> : vector<4x224xf32>
    %74 = tpu.matmul %72, %73, %cst_57 {dimension_numbers = #tpu.dot_dimension_numbers<[1], [0], [0], [1], [0, 0, 1, 1], [], []>} : vector<4x224xf32>, vector<224x224xf32>, vector<4x224xf32> -> vector<4x224xf32>
    %c136 = arith.constant 136 : index
    %c0_58 = arith.constant 0 : index
    %75 = vector.load %arg2[%c136, %c0_58] : memref<200x32xf32, #tpu.memory_space<vmem>>, vector<4x4xf32>
    %cst_59 = arith.constant dense<0.000000e+00> : vector<4x224xf32>
    %76 = tpu.matmul %75, %70, %cst_59 {dimension_numbers = #tpu.dot_dimension_numbers<[1], [0], [0], [1], [0, 0, 1, 1], [], []>} : vector<4x4xf32>, vector<4x224xf32>, vector<4x224xf32> -> vector<4x224xf32>
    %c3024 = arith.constant 3024 : index
    %c0_60 = arith.constant 0 : index
    %77 = vector.load %arg3[%c3024, %c0_60] : memref<4720x320xf32, #tpu.memory_space<vmem>>, vector<224x224xf32>
    %cst_61 = arith.constant dense<0.000000e+00> : vector<4x224xf32>
    %78 = tpu.matmul %76, %77, %cst_61 {dimension_numbers = #tpu.dot_dimension_numbers<[1], [0], [0], [1], [0, 0, 1, 1], [], []>} : vector<4x224xf32>, vector<224x224xf32>, vector<4x224xf32> -> vector<4x224xf32>
    %79 = arith.addf %74, %78 : vector<4x224xf32>
    %c5 = arith.constant 5 : index
    %c0_62 = arith.constant 0 : index
    %80 = vector.load %arg4[%c5, %c0_62] : memref<10x320xf32, #tpu.memory_space<vmem>>, vector<1x224xf32>
    %81 = vector.broadcast %80 : vector<1x224xf32> to vector<4x224xf32>
    %82 = arith.addf %79, %81 : vector<4x224xf32>
    %cst_63 = arith.constant 0.000000e+00 : f32
    %83 = vector.broadcast %cst_63 : f32 to vector<4x224xf32>
    %84 = arith.maximumf %82, %83 : vector<4x224xf32>
    %c144 = arith.constant 144 : index
    %c0_64 = arith.constant 0 : index
    %85 = vector.load %arg2[%c144, %c0_64] : memref<200x32xf32, #tpu.memory_space<vmem>>, vector<4x4xf32>
    %cst_65 = arith.constant dense<0.000000e+00> : vector<4x224xf32>
    %86 = tpu.matmul %85, %84, %cst_65 {dimension_numbers = #tpu.dot_dimension_numbers<[1], [0], [0], [1], [0, 0, 1, 1], [], []>} : vector<4x4xf32>, vector<4x224xf32>, vector<4x224xf32> -> vector<4x224xf32>
    %c3248 = arith.constant 3248 : index
    %c0_66 = arith.constant 0 : index
    %87 = vector.load %arg3[%c3248, %c0_66] : memref<4720x320xf32, #tpu.memory_space<vmem>>, vector<224x224xf32>
    %cst_67 = arith.constant dense<0.000000e+00> : vector<4x224xf32>
    %88 = tpu.matmul %86, %87, %cst_67 {dimension_numbers = #tpu.dot_dimension_numbers<[1], [0], [0], [1], [0, 0, 1, 1], [], []>} : vector<4x224xf32>, vector<224x224xf32>, vector<4x224xf32> -> vector<4x224xf32>
    %c152 = arith.constant 152 : index
    %c0_68 = arith.constant 0 : index
    %89 = vector.load %arg2[%c152, %c0_68] : memref<200x32xf32, #tpu.memory_space<vmem>>, vector<4x4xf32>
    %cst_69 = arith.constant dense<0.000000e+00> : vector<4x224xf32>
    %90 = tpu.matmul %89, %84, %cst_69 {dimension_numbers = #tpu.dot_dimension_numbers<[1], [0], [0], [1], [0, 0, 1, 1], [], []>} : vector<4x4xf32>, vector<4x224xf32>, vector<4x224xf32> -> vector<4x224xf32>
    %c3472 = arith.constant 3472 : index
    %c0_70 = arith.constant 0 : index
    %91 = vector.load %arg3[%c3472, %c0_70] : memref<4720x320xf32, #tpu.memory_space<vmem>>, vector<224x224xf32>
    %cst_71 = arith.constant dense<0.000000e+00> : vector<4x224xf32>
    %92 = tpu.matmul %90, %91, %cst_71 {dimension_numbers = #tpu.dot_dimension_numbers<[1], [0], [0], [1], [0, 0, 1, 1], [], []>} : vector<4x224xf32>, vector<224x224xf32>, vector<4x224xf32> -> vector<4x224xf32>
    %93 = arith.addf %88, %92 : vector<4x224xf32>
    %c6 = arith.constant 6 : index
    %c0_72 = arith.constant 0 : index
    %94 = vector.load %arg4[%c6, %c0_72] : memref<10x320xf32, #tpu.memory_space<vmem>>, vector<1x224xf32>
    %95 = vector.broadcast %94 : vector<1x224xf32> to vector<4x224xf32>
    %96 = arith.addf %93, %95 : vector<4x224xf32>
    %cst_73 = arith.constant 0.000000e+00 : f32
    %97 = vector.broadcast %cst_73 : f32 to vector<4x224xf32>
    %98 = arith.maximumf %96, %97 : vector<4x224xf32>
    %c160 = arith.constant 160 : index
    %c0_74 = arith.constant 0 : index
    %99 = vector.load %arg2[%c160, %c0_74] : memref<200x32xf32, #tpu.memory_space<vmem>>, vector<4x4xf32>
    %cst_75 = arith.constant dense<0.000000e+00> : vector<4x224xf32>
    %100 = tpu.matmul %99, %98, %cst_75 {dimension_numbers = #tpu.dot_dimension_numbers<[1], [0], [0], [1], [0, 0, 1, 1], [], []>} : vector<4x4xf32>, vector<4x224xf32>, vector<4x224xf32> -> vector<4x224xf32>
    %c3696 = arith.constant 3696 : index
    %c0_76 = arith.constant 0 : index
    %101 = vector.load %arg3[%c3696, %c0_76] : memref<4720x320xf32, #tpu.memory_space<vmem>>, vector<224x224xf32>
    %cst_77 = arith.constant dense<0.000000e+00> : vector<4x224xf32>
    %102 = tpu.matmul %100, %101, %cst_77 {dimension_numbers = #tpu.dot_dimension_numbers<[1], [0], [0], [1], [0, 0, 1, 1], [], []>} : vector<4x224xf32>, vector<224x224xf32>, vector<4x224xf32> -> vector<4x224xf32>
    %c168 = arith.constant 168 : index
    %c0_78 = arith.constant 0 : index
    %103 = vector.load %arg2[%c168, %c0_78] : memref<200x32xf32, #tpu.memory_space<vmem>>, vector<4x4xf32>
    %cst_79 = arith.constant dense<0.000000e+00> : vector<4x224xf32>
    %104 = tpu.matmul %103, %98, %cst_79 {dimension_numbers = #tpu.dot_dimension_numbers<[1], [0], [0], [1], [0, 0, 1, 1], [], []>} : vector<4x4xf32>, vector<4x224xf32>, vector<4x224xf32> -> vector<4x224xf32>
    %c3920 = arith.constant 3920 : index
    %c0_80 = arith.constant 0 : index
    %105 = vector.load %arg3[%c3920, %c0_80] : memref<4720x320xf32, #tpu.memory_space<vmem>>, vector<224x224xf32>
    %cst_81 = arith.constant dense<0.000000e+00> : vector<4x224xf32>
    %106 = tpu.matmul %104, %105, %cst_81 {dimension_numbers = #tpu.dot_dimension_numbers<[1], [0], [0], [1], [0, 0, 1, 1], [], []>} : vector<4x224xf32>, vector<224x224xf32>, vector<4x224xf32> -> vector<4x224xf32>
    %107 = arith.addf %102, %106 : vector<4x224xf32>
    %c7 = arith.constant 7 : index
    %c0_82 = arith.constant 0 : index
    %108 = vector.load %arg4[%c7, %c0_82] : memref<10x320xf32, #tpu.memory_space<vmem>>, vector<1x224xf32>
    %109 = vector.broadcast %108 : vector<1x224xf32> to vector<4x224xf32>
    %110 = arith.addf %107, %109 : vector<4x224xf32>
    %cst_83 = arith.constant 0.000000e+00 : f32
    %111 = vector.broadcast %cst_83 : f32 to vector<4x224xf32>
    %112 = arith.maximumf %110, %111 : vector<4x224xf32>
    %c176 = arith.constant 176 : index
    %c0_84 = arith.constant 0 : index
    %113 = vector.load %arg2[%c176, %c0_84] : memref<200x32xf32, #tpu.memory_space<vmem>>, vector<2x4xf32>
    %cst_85 = arith.constant dense<0.000000e+00> : vector<2x224xf32>
    %114 = tpu.matmul %113, %112, %cst_85 {dimension_numbers = #tpu.dot_dimension_numbers<[1], [0], [0], [1], [0, 0, 1, 1], [], []>} : vector<2x4xf32>, vector<4x224xf32>, vector<2x224xf32> -> vector<2x224xf32>
    %c4144 = arith.constant 4144 : index
    %c0_86 = arith.constant 0 : index
    %115 = vector.load %arg3[%c4144, %c0_86] : memref<4720x320xf32, #tpu.memory_space<vmem>>, vector<224x128xf32>
    %cst_87 = arith.constant dense<0.000000e+00> : vector<2x128xf32>
    %116 = tpu.matmul %114, %115, %cst_87 {dimension_numbers = #tpu.dot_dimension_numbers<[1], [0], [0], [1], [0, 0, 1, 1], [], []>} : vector<2x224xf32>, vector<224x128xf32>, vector<2x128xf32> -> vector<2x128xf32>
    %c184 = arith.constant 184 : index
    %c0_88 = arith.constant 0 : index
    %117 = vector.load %arg2[%c184, %c0_88] : memref<200x32xf32, #tpu.memory_space<vmem>>, vector<2x4xf32>
    %cst_89 = arith.constant dense<0.000000e+00> : vector<2x224xf32>
    %118 = tpu.matmul %117, %112, %cst_89 {dimension_numbers = #tpu.dot_dimension_numbers<[1], [0], [0], [1], [0, 0, 1, 1], [], []>} : vector<2x4xf32>, vector<4x224xf32>, vector<2x224xf32> -> vector<2x224xf32>
    %c4368 = arith.constant 4368 : index
    %c0_90 = arith.constant 0 : index
    %119 = vector.load %arg3[%c4368, %c0_90] : memref<4720x320xf32, #tpu.memory_space<vmem>>, vector<224x128xf32>
    %cst_91 = arith.constant dense<0.000000e+00> : vector<2x128xf32>
    %120 = tpu.matmul %118, %119, %cst_91 {dimension_numbers = #tpu.dot_dimension_numbers<[1], [0], [0], [1], [0, 0, 1, 1], [], []>} : vector<2x224xf32>, vector<224x128xf32>, vector<2x128xf32> -> vector<2x128xf32>
    %121 = arith.addf %116, %120 : vector<2x128xf32>
    %c8 = arith.constant 8 : index
    %c0_92 = arith.constant 0 : index
    %122 = vector.load %arg4[%c8, %c0_92] : memref<10x320xf32, #tpu.memory_space<vmem>>, vector<1x128xf32>
    %123 = vector.broadcast %122 : vector<1x128xf32> to vector<2x128xf32>
    %124 = arith.addf %121, %123 : vector<2x128xf32>
    %cst_93 = arith.constant 0.000000e+00 : f32
    %125 = vector.broadcast %cst_93 : f32 to vector<2x128xf32>
    %126 = arith.maximumf %124, %125 : vector<2x128xf32>
    %c192 = arith.constant 192 : index
    %c0_94 = arith.constant 0 : index
    %127 = vector.load %arg2[%c192, %c0_94] : memref<200x32xf32, #tpu.memory_space<vmem>>, vector<2x2xf32>
    %cst_95 = arith.constant dense<0.000000e+00> : vector<2x128xf32>
    %128 = tpu.matmul %127, %126, %cst_95 {dimension_numbers = #tpu.dot_dimension_numbers<[1], [0], [0], [1], [0, 0, 1, 1], [], []>} : vector<2x2xf32>, vector<2x128xf32>, vector<2x128xf32> -> vector<2x128xf32>
    %c4592 = arith.constant 4592 : index
    %c0_96 = arith.constant 0 : index
    %129 = vector.load %arg3[%c4592, %c0_96] : memref<4720x320xf32, #tpu.memory_space<vmem>>, vector<128x32xf32>
    %cst_97 = arith.constant dense<0.000000e+00> : vector<2x32xf32>
    %130 = tpu.matmul %128, %129, %cst_97 {dimension_numbers = #tpu.dot_dimension_numbers<[1], [0], [0], [1], [0, 0, 1, 1], [], []>} : vector<2x128xf32>, vector<128x32xf32>, vector<2x32xf32> -> vector<2x32xf32>
    %c9 = arith.constant 9 : index
    %c0_98 = arith.constant 0 : index
    %131 = vector.load %arg4[%c9, %c0_98] : memref<10x320xf32, #tpu.memory_space<vmem>>, vector<1x32xf32>
    %132 = vector.broadcast %131 : vector<1x32xf32> to vector<2x32xf32>
    %133 = arith.addf %130, %132 : vector<2x32xf32>
    %cst_99 = arith.constant 0.000000e+00 : f32
    %134 = vector.broadcast %cst_99 : f32 to vector<2x32xf32>
    %135 = arith.maximumf %133, %134 : vector<2x32xf32>
    %c0_100 = arith.constant 0 : index
    %c0_101 = arith.constant 0 : index
    %136 = vector.load %arg1[%c0_100, %c0_101] : memref<2x4xf32, #tpu.memory_space<vmem>>, vector<2x4xf32>
    %c0_102 = arith.constant 0 : index
    %c0_103 = arith.constant 0 : index
    %137 = vector.load %arg5[%c0_102, %c0_103] : memref<328x32xf32, #tpu.memory_space<vmem>>, vector<4x32xf32>
    %c0_104 = arith.constant 0 : index
    %c0_105 = arith.constant 0 : index
    %138 = vector.load %arg6[%c0_104, %c0_105] : memref<10x32xf32, #tpu.memory_space<vmem>>, vector<1x32xf32>
    %cst_106 = arith.constant dense<0.000000e+00> : vector<2x32xf32>
    %139 = tpu.matmul %136, %137, %cst_106 {dimension_numbers = #tpu.dot_dimension_numbers<[1], [0], [0], [1], [0, 0, 1, 1], [], []>} : vector<2x4xf32>, vector<4x32xf32>, vector<2x32xf32> -> vector<2x32xf32>
    %140 = vector.broadcast %138 : vector<1x32xf32> to vector<2x32xf32>
    %141 = arith.addf %139, %140 : vector<2x32xf32>
    %cst_107 = arith.constant 0.000000e+00 : f32
    %142 = vector.broadcast %cst_107 : f32 to vector<2x32xf32>
    %143 = arith.maximumf %141, %142 : vector<2x32xf32>
    %c8_108 = arith.constant 8 : index
    %c0_109 = arith.constant 0 : index
    %144 = vector.load %arg5[%c8_108, %c0_109] : memref<328x32xf32, #tpu.memory_space<vmem>>, vector<32x32xf32>
    %c1_110 = arith.constant 1 : index
    %c0_111 = arith.constant 0 : index
    %145 = vector.load %arg6[%c1_110, %c0_111] : memref<10x32xf32, #tpu.memory_space<vmem>>, vector<1x32xf32>
    %cst_112 = arith.constant dense<0.000000e+00> : vector<2x32xf32>
    %146 = tpu.matmul %143, %144, %cst_112 {dimension_numbers = #tpu.dot_dimension_numbers<[1], [0], [0], [1], [0, 0, 1, 1], [], []>} : vector<2x32xf32>, vector<32x32xf32>, vector<2x32xf32> -> vector<2x32xf32>
    %147 = vector.broadcast %145 : vector<1x32xf32> to vector<2x32xf32>
    %148 = arith.addf %146, %147 : vector<2x32xf32>
    %cst_113 = arith.constant 0.000000e+00 : f32
    %149 = vector.broadcast %cst_113 : f32 to vector<2x32xf32>
    %150 = arith.maximumf %148, %149 : vector<2x32xf32>
    %c40 = arith.constant 40 : index
    %c0_114 = arith.constant 0 : index
    %151 = vector.load %arg5[%c40, %c0_114] : memref<328x32xf32, #tpu.memory_space<vmem>>, vector<32x32xf32>
    %c2_115 = arith.constant 2 : index
    %c0_116 = arith.constant 0 : index
    %152 = vector.load %arg6[%c2_115, %c0_116] : memref<10x32xf32, #tpu.memory_space<vmem>>, vector<1x32xf32>
    %cst_117 = arith.constant dense<0.000000e+00> : vector<2x32xf32>
    %153 = tpu.matmul %150, %151, %cst_117 {dimension_numbers = #tpu.dot_dimension_numbers<[1], [0], [0], [1], [0, 0, 1, 1], [], []>} : vector<2x32xf32>, vector<32x32xf32>, vector<2x32xf32> -> vector<2x32xf32>
    %154 = vector.broadcast %152 : vector<1x32xf32> to vector<2x32xf32>
    %155 = arith.addf %153, %154 : vector<2x32xf32>
    %cst_118 = arith.constant 0.000000e+00 : f32
    %156 = vector.broadcast %cst_118 : f32 to vector<2x32xf32>
    %157 = arith.maximumf %155, %156 : vector<2x32xf32>
    %c72 = arith.constant 72 : index
    %c0_119 = arith.constant 0 : index
    %158 = vector.load %arg5[%c72, %c0_119] : memref<328x32xf32, #tpu.memory_space<vmem>>, vector<32x32xf32>
    %c3_120 = arith.constant 3 : index
    %c0_121 = arith.constant 0 : index
    %159 = vector.load %arg6[%c3_120, %c0_121] : memref<10x32xf32, #tpu.memory_space<vmem>>, vector<1x32xf32>
    %cst_122 = arith.constant dense<0.000000e+00> : vector<2x32xf32>
    %160 = tpu.matmul %157, %158, %cst_122 {dimension_numbers = #tpu.dot_dimension_numbers<[1], [0], [0], [1], [0, 0, 1, 1], [], []>} : vector<2x32xf32>, vector<32x32xf32>, vector<2x32xf32> -> vector<2x32xf32>
    %161 = vector.broadcast %159 : vector<1x32xf32> to vector<2x32xf32>
    %162 = arith.addf %160, %161 : vector<2x32xf32>
    %cst_123 = arith.constant 0.000000e+00 : f32
    %163 = vector.broadcast %cst_123 : f32 to vector<2x32xf32>
    %164 = arith.maximumf %162, %163 : vector<2x32xf32>
    %c104_124 = arith.constant 104 : index
    %c0_125 = arith.constant 0 : index
    %165 = vector.load %arg5[%c104_124, %c0_125] : memref<328x32xf32, #tpu.memory_space<vmem>>, vector<32x32xf32>
    %c136_126 = arith.constant 136 : index
    %c0_127 = arith.constant 0 : index
    %166 = vector.load %arg5[%c136_126, %c0_127] : memref<328x32xf32, #tpu.memory_space<vmem>>, vector<32x32xf32>
    %c4_128 = arith.constant 4 : index
    %c0_129 = arith.constant 0 : index
    %167 = vector.load %arg6[%c4_128, %c0_129] : memref<10x32xf32, #tpu.memory_space<vmem>>, vector<1x32xf32>
    %cst_130 = arith.constant dense<0.000000e+00> : vector<2x32xf32>
    %168 = tpu.matmul %135, %165, %cst_130 {dimension_numbers = #tpu.dot_dimension_numbers<[1], [0], [0], [1], [0, 0, 1, 1], [], []>} : vector<2x32xf32>, vector<32x32xf32>, vector<2x32xf32> -> vector<2x32xf32>
    %cst_131 = arith.constant dense<0.000000e+00> : vector<2x32xf32>
    %169 = tpu.matmul %164, %166, %cst_131 {dimension_numbers = #tpu.dot_dimension_numbers<[1], [0], [0], [1], [0, 0, 1, 1], [], []>} : vector<2x32xf32>, vector<32x32xf32>, vector<2x32xf32> -> vector<2x32xf32>
    %170 = arith.addf %168, %169 : vector<2x32xf32>
    %171 = vector.broadcast %167 : vector<1x32xf32> to vector<2x32xf32>
    %172 = arith.addf %170, %171 : vector<2x32xf32>
    %cst_132 = arith.constant 0.000000e+00 : f32
    %173 = vector.broadcast %cst_132 : f32 to vector<2x32xf32>
    %174 = arith.maximumf %172, %173 : vector<2x32xf32>
    %c168_133 = arith.constant 168 : index
    %c0_134 = arith.constant 0 : index
    %175 = vector.load %arg5[%c168_133, %c0_134] : memref<328x32xf32, #tpu.memory_space<vmem>>, vector<32x32xf32>
    %c5_135 = arith.constant 5 : index
    %c0_136 = arith.constant 0 : index
    %176 = vector.load %arg6[%c5_135, %c0_136] : memref<10x32xf32, #tpu.memory_space<vmem>>, vector<1x32xf32>
    %cst_137 = arith.constant dense<0.000000e+00> : vector<2x32xf32>
    %177 = tpu.matmul %174, %175, %cst_137 {dimension_numbers = #tpu.dot_dimension_numbers<[1], [0], [0], [1], [0, 0, 1, 1], [], []>} : vector<2x32xf32>, vector<32x32xf32>, vector<2x32xf32> -> vector<2x32xf32>
    %178 = vector.broadcast %176 : vector<1x32xf32> to vector<2x32xf32>
    %179 = arith.addf %177, %178 : vector<2x32xf32>
    %cst_138 = arith.constant 0.000000e+00 : f32
    %180 = vector.broadcast %cst_138 : f32 to vector<2x32xf32>
    %181 = arith.maximumf %179, %180 : vector<2x32xf32>
    %c200 = arith.constant 200 : index
    %c0_139 = arith.constant 0 : index
    %182 = vector.load %arg5[%c200, %c0_139] : memref<328x32xf32, #tpu.memory_space<vmem>>, vector<32x32xf32>
    %c6_140 = arith.constant 6 : index
    %c0_141 = arith.constant 0 : index
    %183 = vector.load %arg6[%c6_140, %c0_141] : memref<10x32xf32, #tpu.memory_space<vmem>>, vector<1x32xf32>
    %cst_142 = arith.constant dense<0.000000e+00> : vector<2x32xf32>
    %184 = tpu.matmul %181, %182, %cst_142 {dimension_numbers = #tpu.dot_dimension_numbers<[1], [0], [0], [1], [0, 0, 1, 1], [], []>} : vector<2x32xf32>, vector<32x32xf32>, vector<2x32xf32> -> vector<2x32xf32>
    %185 = vector.broadcast %183 : vector<1x32xf32> to vector<2x32xf32>
    %186 = arith.addf %184, %185 : vector<2x32xf32>
    %cst_143 = arith.constant 0.000000e+00 : f32
    %187 = vector.broadcast %cst_143 : f32 to vector<2x32xf32>
    %188 = arith.maximumf %186, %187 : vector<2x32xf32>
    %c232 = arith.constant 232 : index
    %c0_144 = arith.constant 0 : index
    %189 = vector.load %arg5[%c232, %c0_144] : memref<328x32xf32, #tpu.memory_space<vmem>>, vector<32x32xf32>
    %c7_145 = arith.constant 7 : index
    %c0_146 = arith.constant 0 : index
    %190 = vector.load %arg6[%c7_145, %c0_146] : memref<10x32xf32, #tpu.memory_space<vmem>>, vector<1x32xf32>
    %cst_147 = arith.constant dense<0.000000e+00> : vector<2x32xf32>
    %191 = tpu.matmul %188, %189, %cst_147 {dimension_numbers = #tpu.dot_dimension_numbers<[1], [0], [0], [1], [0, 0, 1, 1], [], []>} : vector<2x32xf32>, vector<32x32xf32>, vector<2x32xf32> -> vector<2x32xf32>
    %192 = vector.broadcast %190 : vector<1x32xf32> to vector<2x32xf32>
    %193 = arith.addf %191, %192 : vector<2x32xf32>
    %cst_148 = arith.constant 0.000000e+00 : f32
    %194 = vector.broadcast %cst_148 : f32 to vector<2x32xf32>
    %195 = arith.maximumf %193, %194 : vector<2x32xf32>
    %c264 = arith.constant 264 : index
    %c0_149 = arith.constant 0 : index
    %196 = vector.load %arg5[%c264, %c0_149] : memref<328x32xf32, #tpu.memory_space<vmem>>, vector<32x32xf32>
    %c8_150 = arith.constant 8 : index
    %c0_151 = arith.constant 0 : index
    %197 = vector.load %arg6[%c8_150, %c0_151] : memref<10x32xf32, #tpu.memory_space<vmem>>, vector<1x32xf32>
    %cst_152 = arith.constant dense<0.000000e+00> : vector<2x32xf32>
    %198 = tpu.matmul %195, %196, %cst_152 {dimension_numbers = #tpu.dot_dimension_numbers<[1], [0], [0], [1], [0, 0, 1, 1], [], []>} : vector<2x32xf32>, vector<32x32xf32>, vector<2x32xf32> -> vector<2x32xf32>
    %199 = vector.broadcast %197 : vector<1x32xf32> to vector<2x32xf32>
    %200 = arith.addf %198, %199 : vector<2x32xf32>
    %cst_153 = arith.constant 0.000000e+00 : f32
    %201 = vector.broadcast %cst_153 : f32 to vector<2x32xf32>
    %202 = arith.maximumf %200, %201 : vector<2x32xf32>
    %c296 = arith.constant 296 : index
    %c0_154 = arith.constant 0 : index
    %203 = vector.load %arg5[%c296, %c0_154] : memref<328x32xf32, #tpu.memory_space<vmem>>, vector<32x1xf32>
    %c9_155 = arith.constant 9 : index
    %c0_156 = arith.constant 0 : index
    %204 = vector.load %arg6[%c9_155, %c0_156] : memref<10x32xf32, #tpu.memory_space<vmem>>, vector<1x1xf32>
    %cst_157 = arith.constant dense<0.000000e+00> : vector<2x1xf32>
    %205 = tpu.matmul %202, %203, %cst_157 {dimension_numbers = #tpu.dot_dimension_numbers<[1], [0], [0], [1], [0, 0, 1, 1], [], []>} : vector<2x32xf32>, vector<32x1xf32>, vector<2x1xf32> -> vector<2x1xf32>
    %206 = vector.broadcast %204 : vector<1x1xf32> to vector<2x1xf32>
    %207 = arith.addf %205, %206 : vector<2x1xf32>
    %c0_158 = arith.constant 0 : index
    %c0_159 = arith.constant 0 : index
    %208 = vector.load %arg7[%c0_158, %c0_159] : memref<2x1xf32, #tpu.memory_space<vmem>>, vector<2x1xf32>
    tpu.vector_store %arg7[%c0_158, %c0_159], %207 {strides = array<i32>} : memref<2x1xf32, #tpu.memory_space<vmem>>, vector<2x1xf32>,
    return
  }
}

</mosaic_0001>

<llo_original>
// kernel: cnnre_forward.1
$region0: #{cnnre_forward.1}
  #allocation0 [shape = 'u32[]', space=smem, size = 0x4, offset = 0x4, fixed_abs, tag = 'smem constant byte address 0x4 - core index']
  #allocation1 [shape = 'u32[144,128]{1,0:T(1,128)}', space=vmem, size = 0x12000, scoped, tag = 'internal scratch']
  %s0 = inlined_call_operand.vmem [shape: f32[32,120], index: 0, kind: input, shape index: {}]
  %s1 = inlined_call_operand.vmem [shape: f32[2,4], index: 1, kind: input, shape index: {}]
  %s2 = inlined_call_operand.vmem [shape: f32[200,32], index: 2, kind: input, shape index: {}]
  %s3 = inlined_call_operand.vmem [shape: f32[4720,320], index: 3, kind: input, shape index: {}]
  %s4 = inlined_call_operand.vmem [shape: f32[10,320], index: 4, kind: input, shape index: {}]
  %s5 = inlined_call_operand.vmem [shape: f32[328,32], index: 5, kind: input, shape index: {}]
  %s6 = inlined_call_operand.vmem [shape: f32[10,32], index: 6, kind: input, shape index: {}]
  %s7 = inlined_call_operand.vmem [shape: f32[2,1], index: 7, kind: output, shape index: {}]
  %s8 = sld [smem:[#allocation0]]
  $region38: #{cnnre_forward.1} parent=0
    _
  %s10 = ssub.s32 1, %s8
  %s11 = scalar_select 0, %s10, %s8
  // Predicated region
  $region2: #{cnnre_forward.1} parent=0 // pred_check
    _
  $region3: #{cnnre_forward.1} parent=0 // pred_check_branch
    %13 = sbr.rel (0) target = $region5
  $region4: #{cnnre_forward.1} parent=0 // pred_region
    _
  $region5: #{cnnre_forward.1} parent=0 // pred_fallthru
    _
  // Predicated region
  $region6: #{cnnre_forward.1} parent=0 // pred_check
    _
  $region7: #{cnnre_forward.1} parent=0 // pred_check_branch
    %15 = sbr.rel (0) target = $region9
  $region8: #{cnnre_forward.1} parent=0 // pred_region
    _
  $region9: #{cnnre_forward.1} parent=0 // pred_fallthru
    _
  // Predicated region
  $region10: #{cnnre_forward.1} parent=0 // pred_check
    _
  $region11: #{cnnre_forward.1} parent=0 // pred_check_branch
    %17 = sbr.rel (0) target = $region13
  $region12: #{cnnre_forward.1} parent=0 // pred_region
    _
  $region13: #{cnnre_forward.1} parent=0 // pred_fallthru
    _
  // Predicated region
  $region14: #{cnnre_forward.1} parent=0 // pred_check
    _
  $region15: #{cnnre_forward.1} parent=0 // pred_check_branch
    %19 = sbr.rel (0) target = $region17
  $region16: #{cnnre_forward.1} parent=0 // pred_region
    _
  $region17: #{cnnre_forward.1} parent=0 // pred_fallthru
    _
  // Predicated region
  $region18: #{cnnre_forward.1} parent=0 // pred_check
    _
  $region19: #{cnnre_forward.1} parent=0 // pred_check_branch
    %21 = sbr.rel (0) target = $region21
  $region20: #{cnnre_forward.1} parent=0 // pred_region
    _
  $region21: #{cnnre_forward.1} parent=0 // pred_fallthru
    _
  // Predicated region
  $region22: #{cnnre_forward.1} parent=0 // pred_check
    _
  $region23: #{cnnre_forward.1} parent=0 // pred_check_branch
    %23 = sbr.rel (0) target = $region25
  $region24: #{cnnre_forward.1} parent=0 // pred_region
    _
  $region25: #{cnnre_forward.1} parent=0 // pred_fallthru
    _
  // Predicated region
  $region26: #{cnnre_forward.1} parent=0 // pred_check
    _
  $region27: #{cnnre_forward.1} parent=0 // pred_check_branch
    %25 = sbr.rel (0) target = $region29
  $region28: #{cnnre_forward.1} parent=0 // pred_region
    _
  $region29: #{cnnre_forward.1} parent=0 // pred_fallthru
    _
  %v26 = vld [vmem:[%s0] sm:$0xff]
  %v27 = vld [vmem:[%s0 + $0x8] sm:$0xff]
  %v28 = vld [vmem:[%s0 + $0x10] sm:$0xff]
  %v29 = vld [vmem:[%s0 + $0x18] sm:$0xff]
  %v30 = vld [vmem:[%s2] sm:$0xff]
  %v31 = vld [vmem:[%s2 + $0x8] sm:$0xff]
  %v32 = vld [vmem:[%s2 + $0x10] sm:$0x3]
  %vm33 = vcmask 261120
  %v35 = vsel %vm33, %v30, 0
  %v38 = vsel %vm33, %v31, 0
  %v41 = vsel %vm33, %v32, 0
  %43 = vmatprep.subr.mxu0 0.0
  %44 = vmatpush1.msra.mxu0 0.0
  %45 = vmatprep.subr.mxu0 0.0
  %46 = vmatpush1.msra.mxu0 0.0
  %47 = vmatprep.subr.mxu0 0.0
  %48 = vmatpush1.msra.mxu0 0.0
  %49 = vmatprep.subr.mxu0 0.0
  %50 = vmatpush1.msra.mxu0 0.0
  %51 = vmatprep.subr.mxu0 0.0
  %52 = vmatpush1.msra.mxu0 0.0
  %53 = vmatprep.subr.mxu0 0.0
  %54 = vmatpush1.msra.mxu0 0.0
  %55 = vmatprep.subr.mxu0 0.0
  %56 = vmatpush1.msra.mxu0 0.0
  %57 = vmatprep.subr.mxu0 0.0
  %58 = vmatpush1.msra.mxu0 0.0
  %59 = vmatprep.subr.mxu0 0.0
  %60 = vmatpush1.msra.mxu0 0.0
  %61 = vmatprep.subr.mxu0 0.0
  %62 = vmatpush1.msra.mxu0 0.0
  %63 = vmatprep.subr.mxu0 0.0
  %64 = vmatpush1.msra.mxu0 0.0
  %65 = vmatprep.subr.mxu0 0.0
  %66 = vmatpush1.msra.mxu0 0.0
  %67 = vmatprep.subr.mxu0 0.0
  %68 = vmatpush1.msra.mxu0 %v29
  %69 = vmatprep.subr.mxu0 0.0
  %70 = vmatpush1.msra.mxu0 %v28
  %71 = vmatprep.subr.mxu0 0.0
  %72 = vmatpush1.msra.mxu0 %v27
  %73 = vmatprep.subr.mxu0 0.0
  %74 = vmatpush1.msra.mxu0 %v26
  %75 = vmatprep.subr.mxu0 0.0
  %76 = vmatpush2.msra.mxu0 0.0
  %77 = vmatprep.subr.mxu0 0.0
  %78 = vmatpush2.msra.mxu0 0.0
  %79 = vmatprep.subr.mxu0 0.0
  %80 = vmatpush2.msra.mxu0 0.0
  %81 = vmatprep.subr.mxu0 0.0
  %82 = vmatpush2.msra.mxu0 0.0
  %83 = vmatprep.subr.mxu0 0.0
  %84 = vmatpush2.msra.mxu0 0.0
  %85 = vmatprep.subr.mxu0 0.0
  %86 = vmatpush2.msra.mxu0 0.0
  %87 = vmatprep.subr.mxu0 0.0
  %88 = vmatpush2.msra.mxu0 0.0
  %89 = vmatprep.subr.mxu0 0.0
  %90 = vmatpush2.msra.mxu0 0.0
  %91 = vmatprep.subr.mxu0 0.0
  %92 = vmatpush2.msra.mxu0 0.0
  %93 = vmatprep.subr.mxu0 0.0
  %94 = vmatpush2.msra.mxu0 0.0
  %95 = vmatprep.subr.mxu0 0.0
  %96 = vmatpush2.msra.mxu0 0.0
  %97 = vmatprep.subr.mxu0 0.0
  %98 = vmatpush2.msra.mxu0 0.0
  %99 = vmatprep.subr.mxu0 0.0
  %100 = vmatpush2.msra.mxu0 0.0
  %101 = vmatprep.subr.mxu0 0.0
  %102 = vmatpush2.msra.mxu0 0.0
  %103 = vmatprep.subr.mxu0 0.0
  %104 = vmatpush2.msra.mxu0 0.0
  %105 = vmatprep.subr.mxu0 0.0
  %106 = vmatpush2.msra.mxu0 0.0
  %107 = vmatprep.mubr.f32.mxu0 0.0
  %108 = vmatmul.mubr.f32.gmra.mxu0 %v35
  %v109 = vpop.f32.mrf.mxu0
  %v110 = vadd.f32 0.0, %v109
  %v111 = vpop.f32.mrf.mxu0
  %112 = vmatprep.mubr.f32.mxu0 0.0
  %113 = vmatmul.mubr.f32.gmra.mxu0 %v38
  %v114 = vpop.f32.mrf.mxu0
  %v115 = vadd.f32 0.0, %v114
  %v116 = vpop.f32.mrf.mxu0
  %117 = vmatprep.mubr.f32.mxu0 0.0
  %118 = vmatmul.mubr.f32.gmra.mxu0 %v41
  %v119 = vpop.f32.mrf.mxu0
  %v120 = vadd.f32 0.0, %v119
  %v121 = vpop.f32.mrf.mxu0
  %122 = vdwg.mxu0
  %v123 = vld [vmem:[%s3] sm:$0xff]
  %v124 = vld [vmem:[%s3 + $0x8] sm:$0xff]
  %v125 = vld [vmem:[%s3 + $0x10] sm:$0xff]
  %v126 = vld [vmem:[%s3 + $0x18] sm:$0xff]
  %v127 = vld [vmem:[%s3 + $0x20] sm:$0xff]
  %v128 = vld [vmem:[%s3 + $0x28] sm:$0xff]
  %v129 = vld [vmem:[%s3 + $0x30] sm:$0xff]
  %v130 = vld [vmem:[%s3 + $0x38] sm:$0xff]
  %v131 = vld [vmem:[%s3 + $0x40] sm:$0xff]
  %v132 = vld [vmem:[%s3 + $0x48] sm:$0xff]
  %v133 = vld [vmem:[%s3 + $0x50] sm:$0xff]
  %v134 = vld [vmem:[%s3 + $0x58] sm:$0xff]
  %v135 = vld [vmem:[%s3 + $0x60] sm:$0xff]
  %v136 = vld [vmem:[%s3 + $0x68] sm:$0xff]
  %v137 = vld [vmem:[%s3 + $0x70] sm:$0xff]
  %v138 = vld [vmem:[%s3 + $0x78] sm:$0xff]
  %v139 = vld [vmem:[%s3 + $0x80] sm:$0xff]
  %v140 = vld [vmem:[%s3 + $0x88] sm:$0xff]
  %v141 = vld [vmem:[%s3 + $0x90] sm:$0xff]
  %v142 = vld [vmem:[%s3 + $0x98] sm:$0xff]
  %v143 = vld [vmem:[%s3 + $0xa0] sm:$0xff]
  %v144 = vld [vmem:[%s3 + $0xa8] sm:$0xff]
  %v145 = vld [vmem:[%s3 + $0xb0] sm:$0xff]
  %v146 = vld [vmem:[%s3 + $0xb8] sm:$0xff]
  %v147 = vld [vmem:[%s3 + $0xc0] sm:$0xff]
  %v148 = vld [vmem:[%s3 + $0xc8] sm:$0xff]
  %v149 = vld [vmem:[%s3 + $0xd0] sm:$0xff]
  %v150 = vld [vmem:[%s3 + $0xd8] sm:$0xff]
  %v151 = vld [vmem:[%s3 + $0xe0] sm:$0xff]
  %v152 = vld [vmem:[%s3 + $0xe8] sm:$0xff]
  %v153 = vld [vmem:[%s3 + $0xf0] sm:$0xff]
  %v154 = vld [vmem:[%s3 + $0xf8] sm:$0xff]
  %v155 = vld [vmem:[%s3 + $0x100] sm:$0xff]
  %v156 = vld [vmem:[%s3 + $0x108] sm:$0xff]
  %v157 = vld [vmem:[%s3 + $0x110] sm:$0xff]
  %v158 = vld [vmem:[%s3 + $0x118] sm:$0xff]
  %v159 = vld [vmem:[%s3 + $0x120] sm:$0xff]
  %v160 = vld [vmem:[%s3 + $0x128] sm:$0xff]
  %v161 = vld [vmem:[%s3 + $0x130] sm:$0xff]
  %v162 = vld [vmem:[%s3 + $0x138] sm:$0xff]
  %v163 = vld [vmem:[%s3 + $0x140] sm:$0xff]
  %v164 = vld [vmem:[%s3 + $0x148] sm:$0xff]
  %v165 = vld [vmem:[%s3 + $0x150] sm:$0xff]
  %v166 = vld [vmem:[%s3 + $0x158] sm:$0xff]
  %v167 = vld [vmem:[%s3 + $0x160] sm:$0xff]
  %v168 = vld [vmem:[%s2 + $0x18] sm:$0xff]
  %v169 = vld [vmem:[%s2 + $0x20] sm:$0xff]
  %v170 = vld [vmem:[%s2 + $0x28] sm:$0x3]
  %v172 = vsel %vm33, %v168, 0
  %v175 = vsel %vm33, %v169, 0
  %v178 = vsel %vm33, %v170, 0
  %180 = vmatprep.subr.mxu0 0.0
  %181 = vmatpush1.msra.mxu0 0.0
  %182 = vmatprep.subr.mxu0 0.0
  %183 = vmatpush1.msra.mxu0 0.0
  %184 = vmatprep.subr.mxu0 0.0
  %185 = vmatpush1.msra.mxu0 0.0
  %186 = vmatprep.subr.mxu0 0.0
  %187 = vmatpush1.msra.mxu0 0.0
  %188 = vmatprep.subr.mxu0 0.0
  %189 = vmatpush1.msra.mxu0 0.0
  %190 = vmatprep.subr.mxu0 0.0
  %191 = vmatpush1.msra.mxu0 0.0
  %192 = vmatprep.subr.mxu0 0.0
  %193 = vmatpush1.msra.mxu0 0.0
  %194 = vmatprep.subr.mxu0 0.0
  %195 = vmatpush1.msra.mxu0 0.0
  %196 = vmatprep.subr.mxu0 0.0
  %197 = vmatpush1.msra.mxu0 0.0
  %198 = vmatprep.subr.mxu0 0.0
  %199 = vmatpush1.msra.mxu0 0.0
  %200 = vmatprep.subr.mxu0 0.0
  %201 = vmatpush1.msra.mxu0 0.0
  %202 = vmatprep.subr.mxu0 0.0
  %203 = vmatpush1.msra.mxu0 0.0
  %204 = vmatprep.subr.mxu0 0.0
  %205 = vmatpush1.msra.mxu0 %v29
  %206 = vmatprep.subr.mxu0 0.0
  %207 = vmatpush1.msra.mxu0 %v28
  %208 = vmatprep.subr.mxu0 0.0
  %209 = vmatpush1.msra.mxu0 %v27
  %210 = vmatprep.subr.mxu0 0.0
  %211 = vmatpush1.msra.mxu0 %v26
  %212 = vmatprep.subr.mxu0 0.0
  %213 = vmatpush2.msra.mxu0 0.0
  %214 = vmatprep.subr.mxu0 0.0
  %215 = vmatpush2.msra.mxu0 0.0
  %216 = vmatprep.subr.mxu0 0.0
  %217 = vmatpush2.msra.mxu0 0.0
  %218 = vmatprep.subr.mxu0 0.0
  %219 = vmatpush2.msra.mxu0 0.0
  %220 = vmatprep.subr.mxu0 0.0
  %221 = vmatpush2.msra.mxu0 0.0
  %222 = vmatprep.subr.mxu0 0.0
  %223 = vmatpush2.msra.mxu0 0.0
  %224 = vmatprep.subr.mxu0 0.0
  %225 = vmatpush2.msra.mxu0 0.0
  %226 = vmatprep.subr.mxu0 0.0
  %227 = vmatpush2.msra.mxu0 0.0
  %228 = vmatprep.subr.mxu0 0.0
  %229 = vmatpush2.msra.mxu0 0.0
  %230 = vmatprep.subr.mxu0 0.0
  %231 = vmatpush2.msra.mxu0 0.0
  %232 = vmatprep.subr.mxu0 0.0
  %233 = vmatpush2.msra.mxu0 0.0
  %234 = vmatprep.subr.mxu0 0.0
  %235 = vmatpush2.msra.mxu0 0.0
  %236 = vmatprep.subr.mxu0 0.0
  %237 = vmatpush2.msra.mxu0 0.0
  %238 = vmatprep.subr.mxu0 0.0
  %239 = vmatpush2.msra.mxu0 0.0
  %240 = vmatprep.subr.mxu0 0.0
  %241 = vmatpush2.msra.mxu0 0.0
  %242 = vmatprep.subr.mxu0 0.0
  %243 = vmatpush2.msra.mxu0 0.0
  %244 = vmatprep.mubr.f32.mxu0 0.0
  %245 = vmatmul.mubr.f32.gmra.mxu0 %v172
  %v246 = vpop.f32.mrf.mxu0
  %v247 = vadd.f32 0.0, %v246
  %v248 = vpop.f32.mrf.mxu0
  %249 = vmatprep.mubr.f32.mxu0 0.0
  %250 = vmatmul.mubr.f32.gmra.mxu0 %v175
  %v251 = vpop.f32.mrf.mxu0
  %v252 = vadd.f32 0.0, %v251
  %v253 = vpop.f32.mrf.mxu0
  %254 = vmatprep.mubr.f32.mxu0 0.0
  %255 = vmatmul.mubr.f32.gmra.mxu0 %v178
  %v256 = vpop.f32.mrf.mxu0
  %v257 = vadd.f32 0.0, %v256
  %v258 = vpop.f32.mrf.mxu0
  %259 = vdwg.mxu0
  %v260 = vld [vmem:[%s3 + $0x168] sm:$0xff]
  %v261 = vld [vmem:[%s3 + $0x170] sm:$0xff]
  %v262 = vld [vmem:[%s3 + $0x178] sm:$0xff]
  %v263 = vld [vmem:[%s3 + $0x180] sm:$0xff]
  %v264 = vld [vmem:[%s3 + $0x188] sm:$0xff]
  %v265 = vld [vmem:[%s3 + $0x190] sm:$0xff]
  %v266 = vld [vmem:[%s3 + $0x198] sm:$0xff]
  %v267 = vld [vmem:[%s3 + $0x1a0] sm:$0xff]
  %v268 = vld [vmem:[%s3 + $0x1a8] sm:$0xff]
  %v269 = vld [vmem:[%s3 + $0x1b0] sm:$0xff]
  %v270 = vld [vmem:[%s3 + $0x1b8] sm:$0xff]
  %v271 = vld [vmem:[%s3 + $0x1c0] sm:$0xff]
  %v272 = vld [vmem:[%s3 + $0x1c8] sm:$0xff]
  %v273 = vld [vmem:[%s3 + $0x1d0] sm:$0xff]
  %v274 = vld [vmem:[%s3 + $0x1d8] sm:$0xff]
  %v275 = vld [vmem:[%s3 + $0x1e0] sm:$0xff]
  %v276 = vld [vmem:[%s3 + $0x1e8] sm:$0xff]
  %v277 = vld [vmem:[%s3 + $0x1f0] sm:$0xff]
  %v278 = vld [vmem:[%s3 + $0x1f8] sm:$0xff]
  %v279 = vld [vmem:[%s3 + $0x200] sm:$0xff]
  %v280 = vld [vmem:[%s3 + $0x208] sm:$0xff]
  %v281 = vld [vmem:[%s3 + $0x210] sm:$0xff]
  %v282 = vld [vmem:[%s3 + $0x218] sm:$0xff]
  %v283 = vld [vmem:[%s3 + $0x220] sm:$0xff]
  %v284 = vld [vmem:[%s3 + $0x228] sm:$0xff]
  %v285 = vld [vmem:[%s3 + $0x230] sm:$0xff]
  %v286 = vld [vmem:[%s3 + $0x238] sm:$0xff]
  %v287 = vld [vmem:[%s3 + $0x240] sm:$0xff]
  %v288 = vld [vmem:[%s3 + $0x248] sm:$0xff]
  %v289 = vld [vmem:[%s3 + $0x250] sm:$0xff]
  %v290 = vld [vmem:[%s3 + $0x258] sm:$0xff]
  %v291 = vld [vmem:[%s3 + $0x260] sm:$0xff]
  %v292 = vld [vmem:[%s3 + $0x268] sm:$0xff]
  %v293 = vld [vmem:[%s3 + $0x270] sm:$0xff]
  %v294 = vld [vmem:[%s3 + $0x278] sm:$0xff]
  %v295 = vld [vmem:[%s3 + $0x280] sm:$0xff]
  %v296 = vld [vmem:[%s3 + $0x288] sm:$0xff]
  %v297 = vld [vmem:[%s3 + $0x290] sm:$0xff]
  %v298 = vld [vmem:[%s3 + $0x298] sm:$0xff]
  %v299 = vld [vmem:[%s3 + $0x2a0] sm:$0xff]
  %v300 = vld [vmem:[%s3 + $0x2a8] sm:$0xff]
  %v301 = vld [vmem:[%s3 + $0x2b0] sm:$0xff]
  %v302 = vld [vmem:[%s3 + $0x2b8] sm:$0xff]
  %v303 = vld [vmem:[%s3 + $0x2c0] sm:$0xff]
  %v304 = vld [vmem:[%s3 + $0x2c8] sm:$0xff]
  %vm305 = vcmask 982016
  %v307 = vsel %vm305, %v247, 0
  %v310 = vsel %vm305, %v252, 0
  %v313 = vsel %vm305, %v257, 0
  %315 = vmatprep.subr.mxu0 0.0
  %316 = vmatpush1.msra.mxu0 0.0
  %317 = vmatprep.subr.mxu0 %v303
  %318 = vmatpush1.msra.mxu0 %v302
  %319 = vmatprep.subr.mxu0 %v300
  %320 = vmatpush1.msra.mxu0 %v299
  %321 = vmatprep.subr.mxu0 %v297
  %322 = vmatpush1.msra.mxu0 %v296
  %323 = vmatprep.subr.mxu0 %v294
  %324 = vmatpush1.msra.mxu0 %v293
  %325 = vmatprep.subr.mxu0 %v291
  %326 = vmatpush1.msra.mxu0 %v290
  %327 = vmatprep.subr.mxu0 %v288
  %328 = vmatpush1.msra.mxu0 %v287
  %329 = vmatprep.subr.mxu0 %v285
  %330 = vmatpush1.msra.mxu0 %v284
  %331 = vmatprep.subr.mxu0 %v282
  %332 = vmatpush1.msra.mxu0 %v281
  %333 = vmatprep.subr.mxu0 %v279
  %334 = vmatpush1.msra.mxu0 %v278
  %335 = vmatprep.subr.mxu0 %v276
  %336 = vmatpush1.msra.mxu0 %v275
  %337 = vmatprep.subr.mxu0 %v273
  %338 = vmatpush1.msra.mxu0 %v272
  %339 = vmatprep.subr.mxu0 %v270
  %340 = vmatpush1.msra.mxu0 %v269
  %341 = vmatprep.subr.mxu0 %v267
  %342 = vmatpush1.msra.mxu0 %v266
  %343 = vmatprep.subr.mxu0 %v264
  %344 = vmatpush1.msra.mxu0 %v263
  %345 = vmatprep.subr.mxu0 %v261
  %346 = vmatpush1.msra.mxu0 %v260
  %347 = vmatprep.subr.mxu0 0.0
  %348 = vmatpush2.msra.mxu0 0.0
  %349 = vmatprep.subr.mxu0 0.0
  %350 = vmatpush2.msra.mxu0 0.0
  %351 = vmatprep.subr.mxu0 0.0
  %352 = vmatpush2.msra.mxu0 0.0
  %353 = vmatprep.subr.mxu0 0.0
  %354 = vmatpush2.msra.mxu0 0.0
  %355 = vmatprep.subr.mxu0 0.0
  %356 = vmatpush2.msra.mxu0 0.0
  %357 = vmatprep.subr.mxu0 0.0
  %358 = vmatpush2.msra.mxu0 0.0
  %359 = vmatprep.subr.mxu0 0.0
  %360 = vmatpush2.msra.mxu0 0.0
  %361 = vmatprep.subr.mxu0 0.0
  %362 = vmatpush2.msra.mxu0 0.0
  %363 = vmatprep.subr.mxu0 0.0
  %364 = vmatpush2.msra.mxu0 0.0
  %365 = vmatprep.subr.mxu0 0.0
  %366 = vmatpush2.msra.mxu0 0.0
  %367 = vmatprep.subr.mxu0 0.0
  %368 = vmatpush2.msra.mxu0 0.0
  %369 = vmatprep.subr.mxu0 0.0
  %370 = vmatpush2.msra.mxu0 0.0
  %371 = vmatprep.subr.mxu0 0.0
  %372 = vmatpush2.msra.mxu0 0.0
  %373 = vmatprep.subr.mxu0 0.0
  %374 = vmatpush2.msra.mxu0 0.0
  %375 = vmatprep.subr.mxu0 0.0
  %376 = vmatpush2.msra.mxu0 0.0
  %377 = vmatprep.subr.mxu0 0.0
  %378 = vmatpush2.msra.mxu0 0.0
  %379 = vmatprep.mubr.f32.mxu0 0.0
  %380 = vmatmul.mubr.f32.gmra.mxu0 %v307
  %v381 = vpop.f32.mrf.mxu0
  %v382 = vadd.f32 0.0, %v381
  %v383 = vpop.f32.mrf.mxu0
  %v384 = vadd.f32 0.0, %v383
  %385 = vmatprep.mubr.f32.mxu0 0.0
  %386 = vmatmul.mubr.f32.gmra.mxu0 %v310
  %v387 = vpop.f32.mrf.mxu0
  %v388 = vadd.f32 0.0, %v387
  %v389 = vpop.f32.mrf.mxu0
  %v390 = vadd.f32 0.0, %v389
  %391 = vmatprep.mubr.f32.mxu0 0.0
  %392 = vmatmul.mubr.f32.gmra.mxu0 %v313
  %v393 = vpop.f32.mrf.mxu0
  %v394 = vadd.f32 0.0, %v393
  %v395 = vpop.f32.mrf.mxu0
  %v396 = vadd.f32 0.0, %v395
  %397 = vdwg.mxu0
  %398 = vmatprep.subr.mxu0 0.0
  %399 = vmatpush1.msra.mxu0 0.0
  %400 = vmatprep.subr.mxu0 0.0
  %401 = vmatpush1.msra.mxu0 %v304
  %402 = vmatprep.subr.mxu0 0.0
  %403 = vmatpush1.msra.mxu0 %v301
  %404 = vmatprep.subr.mxu0 0.0
  %405 = vmatpush1.msra.mxu0 %v298
  %406 = vmatprep.subr.mxu0 0.0
  %407 = vmatpush1.msra.mxu0 %v295
  %408 = vmatprep.subr.mxu0 0.0
  %409 = vmatpush1.msra.mxu0 %v292
  %410 = vmatprep.subr.mxu0 0.0
  %411 = vmatpush1.msra.mxu0 %v289
  %412 = vmatprep.subr.mxu0 0.0
  %413 = vmatpush1.msra.mxu0 %v286
  %414 = vmatprep.subr.mxu0 0.0
  %415 = vmatpush1.msra.mxu0 %v283
  %416 = vmatprep.subr.mxu0 0.0
  %417 = vmatpush1.msra.mxu0 %v280
  %418 = vmatprep.subr.mxu0 0.0
  %419 = vmatpush1.msra.mxu0 %v277
  %420 = vmatprep.subr.mxu0 0.0
  %421 = vmatpush1.msra.mxu0 %v274
  %422 = vmatprep.subr.mxu0 0.0
  %423 = vmatpush1.msra.mxu0 %v271
  %424 = vmatprep.subr.mxu0 0.0
  %425 = vmatpush1.msra.mxu0 %v268
  %426 = vmatprep.subr.mxu0 0.0
  %427 = vmatpush1.msra.mxu0 %v265
  %428 = vmatprep.subr.mxu0 0.0
  %429 = vmatpush1.msra.mxu0 %v262
  %430 = vmatprep.subr.mxu0 0.0
  %431 = vmatpush2.msra.mxu0 0.0
  %432 = vmatprep.subr.mxu0 0.0
  %433 = vmatpush2.msra.mxu0 0.0
  %434 = vmatprep.subr.mxu0 0.0
  %435 = vmatpush2.msra.mxu0 0.0
  %436 = vmatprep.subr.mxu0 0.0
  %437 = vmatpush2.msra.mxu0 0.0
  %438 = vmatprep.subr.mxu0 0.0
  %439 = vmatpush2.msra.mxu0 0.0
  %440 = vmatprep.subr.mxu0 0.0
  %441 = vmatpush2.msra.mxu0 0.0
  %442 = vmatprep.subr.mxu0 0.0
  %443 = vmatpush2.msra.mxu0 0.0
  %444 = vmatprep.subr.mxu0 0.0
  %445 = vmatpush2.msra.mxu0 0.0
  %446 = vmatprep.subr.mxu0 0.0
  %447 = vmatpush2.msra.mxu0 0.0
  %448 = vmatprep.subr.mxu0 0.0
  %449 = vmatpush2.msra.mxu0 0.0
  %450 = vmatprep.subr.mxu0 0.0
  %451 = vmatpush2.msra.mxu0 0.0
  %452 = vmatprep.subr.mxu0 0.0
  %453 = vmatpush2.msra.mxu0 0.0
  %454 = vmatprep.subr.mxu0 0.0
  %455 = vmatpush2.msra.mxu0 0.0
  %456 = vmatprep.subr.mxu0 0.0
  %457 = vmatpush2.msra.mxu0 0.0
  %458 = vmatprep.subr.mxu0 0.0
  %459 = vmatpush2.msra.mxu0 0.0
  %460 = vmatprep.subr.mxu0 0.0
  %461 = vmatpush2.msra.mxu0 0.0
  %462 = vmatprep.mubr.f32.mxu0 0.0
  %463 = vmatmul.mubr.f32.gmra.mxu0 %v307
  %v464 = vpop.f32.mrf.mxu0
  %v465 = vadd.f32 0.0, %v464
  %v466 = vpop.f32.mrf.mxu0
  %467 = vmatprep.mubr.f32.mxu0 0.0
  %468 = vmatmul.mubr.f32.gmra.mxu0 %v310
  %v469 = vpop.f32.mrf.mxu0
  %v470 = vadd.f32 0.0, %v469
  %v471 = vpop.f32.mrf.mxu0
  %472 = vmatprep.mubr.f32.mxu0 0.0
  %473 = vmatmul.mubr.f32.gmra.mxu0 %v313
  %v474 = vpop.f32.mrf.mxu0
  %v475 = vadd.f32 0.0, %v474
  %v476 = vpop.f32.mrf.mxu0
  %477 = vdwg.mxu0
  %v479 = vsel %vm305, %v110, 0
  %v482 = vsel %vm305, %v115, 0
  %v485 = vsel %vm305, %v120, 0
  %487 = vmatprep.subr.mxu0 0.0
  %488 = vmatpush1.msra.mxu0 0.0
  %489 = vmatprep.subr.mxu0 %v166
  %490 = vmatpush1.msra.mxu0 %v165
  %491 = vmatprep.subr.mxu0 %v163
  %492 = vmatpush1.msra.mxu0 %v162
  %493 = vmatprep.subr.mxu0 %v160
  %494 = vmatpush1.msra.mxu0 %v159
  %495 = vmatprep.subr.mxu0 %v157
  %496 = vmatpush1.msra.mxu0 %v156
  %497 = vmatprep.subr.mxu0 %v154
  %498 = vmatpush1.msra.mxu0 %v153
  %499 = vmatprep.subr.mxu0 %v151
  %500 = vmatpush1.msra.mxu0 %v150
  %501 = vmatprep.subr.mxu0 %v148
  %502 = vmatpush1.msra.mxu0 %v147
  %503 = vmatprep.subr.mxu0 %v145
  %504 = vmatpush1.msra.mxu0 %v144
  %505 = vmatprep.subr.mxu0 %v142
  %506 = vmatpush1.msra.mxu0 %v141
  %507 = vmatprep.subr.mxu0 %v139
  %508 = vmatpush1.msra.mxu0 %v138
  %509 = vmatprep.subr.mxu0 %v136
  %510 = vmatpush1.msra.mxu0 %v135
  %511 = vmatprep.subr.mxu0 %v133
  %512 = vmatpush1.msra.mxu0 %v132
  %513 = vmatprep.subr.mxu0 %v130
  %514 = vmatpush1.msra.mxu0 %v129
  %515 = vmatprep.subr.mxu0 %v127
  %516 = vmatpush1.msra.mxu0 %v126
  %517 = vmatprep.subr.mxu0 %v124
  %518 = vmatpush1.msra.mxu0 %v123
  %519 = vmatprep.subr.mxu0 0.0
  %520 = vmatpush2.msra.mxu0 0.0
  %521 = vmatprep.subr.mxu0 0.0
  %522 = vmatpush2.msra.mxu0 0.0
  %523 = vmatprep.subr.mxu0 0.0
  %524 = vmatpush2.msra.mxu0 0.0
  %525 = vmatprep.subr.mxu0 0.0
  %526 = vmatpush2.msra.mxu0 0.0
  %527 = vmatprep.subr.mxu0 0.0
  %528 = vmatpush2.msra.mxu0 0.0
  %529 = vmatprep.subr.mxu0 0.0
  %530 = vmatpush2.msra.mxu0 0.0
  %531 = vmatprep.subr.mxu0 0.0
  %532 = vmatpush2.msra.mxu0 0.0
  %533 = vmatprep.subr.mxu0 0.0
  %534 = vmatpush2.msra.mxu0 0.0
  %535 = vmatprep.subr.mxu0 0.0
  %536 = vmatpush2.msra.mxu0 0.0
  %537 = vmatprep.subr.mxu0 0.0
  %538 = vmatpush2.msra.mxu0 0.0
  %539 = vmatprep.subr.mxu0 0.0
  %540 = vmatpush2.msra.mxu0 0.0
  %541 = vmatprep.subr.mxu0 0.0
  %542 = vmatpush2.msra.mxu0 0.0
  %543 = vmatprep.subr.mxu0 0.0
  %544 = vmatpush2.msra.mxu0 0.0
  %545 = vmatprep.subr.mxu0 0.0
  %546 = vmatpush2.msra.mxu0 0.0
  %547 = vmatprep.subr.mxu0 0.0
  %548 = vmatpush2.msra.mxu0 0.0
  %549 = vmatprep.subr.mxu0 0.0
  %550 = vmatpush2.msra.mxu0 0.0
  %551 = vmatprep.mubr.f32.mxu0 0.0
  %552 = vmatmul.mubr.f32.gmra.mxu0 %v479
  %v553 = vpop.f32.mrf.mxu0
  %v554 = vadd.f32 %v382, %v553
  %v555 = vpop.f32.mrf.mxu0
  %v556 = vadd.f32 %v384, %v555
  %557 = vmatprep.mubr.f32.mxu0 0.0
  %558 = vmatmul.mubr.f32.gmra.mxu0 %v482
  %v559 = vpop.f32.mrf.mxu0
  %v560 = vadd.f32 %v388, %v559
  %v561 = vpop.f32.mrf.mxu0
  %v562 = vadd.f32 %v390, %v561
  %563 = vmatprep.mubr.f32.mxu0 0.0
  %564 = vmatmul.mubr.f32.gmra.mxu0 %v485
  %v565 = vpop.f32.mrf.mxu0
  %v566 = vadd.f32 %v394, %v565
  %v567 = vpop.f32.mrf.mxu0
  %v568 = vadd.f32 %v396, %v567
  %569 = vdwg.mxu0
  %570 = vmatprep.subr.mxu0 0.0
  %571 = vmatpush1.msra.mxu0 0.0
  %572 = vmatprep.subr.mxu0 0.0
  %573 = vmatpush1.msra.mxu0 %v167
  %574 = vmatprep.subr.mxu0 0.0
  %575 = vmatpush1.msra.mxu0 %v164
  %576 = vmatprep.subr.mxu0 0.0
  %577 = vmatpush1.msra.mxu0 %v161
  %578 = vmatprep.subr.mxu0 0.0
  %579 = vmatpush1.msra.mxu0 %v158
  %580 = vmatprep.subr.mxu0 0.0
  %581 = vmatpush1.msra.mxu0 %v155
  %582 = vmatprep.subr.mxu0 0.0
  %583 = vmatpush1.msra.mxu0 %v152
  %584 = vmatprep.subr.mxu0 0.0
  %585 = vmatpush1.msra.mxu0 %v149
  %586 = vmatprep.subr.mxu0 0.0
  %587 = vmatpush1.msra.mxu0 %v146
  %588 = vmatprep.subr.mxu0 0.0
  %589 = vmatpush1.msra.mxu0 %v143
  %590 = vmatprep.subr.mxu0 0.0
  %591 = vmatpush1.msra.mxu0 %v140
  %592 = vmatprep.subr.mxu0 0.0
  %593 = vmatpush1.msra.mxu0 %v137
  %594 = vmatprep.subr.mxu0 0.0
  %595 = vmatpush1.msra.mxu0 %v134
  %596 = vmatprep.subr.mxu0 0.0
  %597 = vmatpush1.msra.mxu0 %v131
  %598 = vmatprep.subr.mxu0 0.0
  %599 = vmatpush1.msra.mxu0 %v128
  %600 = vmatprep.subr.mxu0 0.0
  %601 = vmatpush1.msra.mxu0 %v125
  %602 = vmatprep.subr.mxu0 0.0
  %603 = vmatpush2.msra.mxu0 0.0
  %604 = vmatprep.subr.mxu0 0.0
  %605 = vmatpush2.msra.mxu0 0.0
  %606 = vmatprep.subr.mxu0 0.0
  %607 = vmatpush2.msra.mxu0 0.0
  %608 = vmatprep.subr.mxu0 0.0
  %609 = vmatpush2.msra.mxu0 0.0
  %610 = vmatprep.subr.mxu0 0.0
  %611 = vmatpush2.msra.mxu0 0.0
  %612 = vmatprep.subr.mxu0 0.0
  %613 = vmatpush2.msra.mxu0 0.0
  %614 = vmatprep.subr.mxu0 0.0
  %615 = vmatpush2.msra.mxu0 0.0
  %616 = vmatprep.subr.mxu0 0.0
  %617 = vmatpush2.msra.mxu0 0.0
  %618 = vmatprep.subr.mxu0 0.0
  %619 = vmatpush2.msra.mxu0 0.0
  %620 = vmatprep.subr.mxu0 0.0
  %621 = vmatpush2.msra.mxu0 0.0
  %622 = vmatprep.subr.mxu0 0.0
  %623 = vmatpush2.msra.mxu0 0.0
  %624 = vmatprep.subr.mxu0 0.0
  %625 = vmatpush2.msra.mxu0 0.0
  %626 = vmatprep.subr.mxu0 0.0
  %627 = vmatpush2.msra.mxu0 0.0
  %628 = vmatprep.subr.mxu0 0.0
  %629 = vmatpush2.msra.mxu0 0.0
  %630 = vmatprep.subr.mxu0 0.0
  %631 = vmatpush2.msra.mxu0 0.0
  %632 = vmatprep.subr.mxu0 0.0
  %633 = vmatpush2.msra.mxu0 0.0
  %634 = vmatprep.mubr.f32.mxu0 0.0
  %635 = vmatmul.mubr.f32.gmra.mxu0 %v479
  %v636 = vpop.f32.mrf.mxu0
  %v637 = vadd.f32 %v465, %v636
  %v638 = vpop.f32.mrf.mxu0
  %639 = vmatprep.mubr.f32.mxu0 0.0
  %640 = vmatmul.mubr.f32.gmra.mxu0 %v482
  %v641 = vpop.f32.mrf.mxu0
  %v642 = vadd.f32 %v470, %v641
  %v643 = vpop.f32.mrf.mxu0
  %644 = vmatprep.mubr.f32.mxu0 0.0
  %645 = vmatmul.mubr.f32.gmra.mxu0 %v485
  %v646 = vpop.f32.mrf.mxu0
  %v647 = vadd.f32 %v475, %v646
  %v648 = vpop.f32.mrf.mxu0
  %649 = vdwg.mxu0
  %v650 = vld [vmem:[%s4] ss:$8 sm:$0x7]
  %v652 = vlaneseq
  %v653 = vshrl.u32 %v652, 7
  %v654 = vsub.s32 0, %v653
  %v655 = vrot.slane %v650, %v654
  %v656 = vlaneseq
  %v657 = vshrl.u32 %v656, 7
  %v658 = vsub.s32 1, %v657
  %v659 = vrot.slane %v650, %v658
  %v660 = vlaneseq
  %v661 = vshrl.u32 %v660, 7
  %v662 = vsub.s32 2, %v661
  %v663 = vrot.slane %v650, %v662
  %v667 = vadd.f32 %v554, %v655
  %v668 = vadd.f32 %v556, %v659
  %v669 = vadd.f32 %v637, %v663
  %v670 = vadd.f32 %v560, %v655
  %v671 = vadd.f32 %v562, %v659
  %v672 = vadd.f32 %v642, %v663
  %v673 = vadd.f32 %v566, %v655
  %v674 = vadd.f32 %v568, %v659
  %v675 = vadd.f32 %v647, %v663
  %v676 = vmax.f32 %v667, 0.0
  %v677 = vmax.f32 %v668, 0.0
  %v678 = vmax.f32 %v669, 0.0
  %v679 = vmax.f32 %v670, 0.0
  %v680 = vmax.f32 %v671, 0.0
  %v681 = vmax.f32 %v672, 0.0
  %v682 = vmax.f32 %v673, 0.0
  %v683 = vmax.f32 %v674, 0.0
  %v684 = vmax.f32 %v675, 0.0
  %v685 = vld [vmem:[%s2 + $0x30] sm:$0xff]
  %v686 = vld [vmem:[%s2 + $0x38] sm:$0x3]
  %vm687 = vcmask 146432
  %v689 = vsel %vm687, %v685, 0
  %v692 = vsel %vm687, %v686, 0
  %vm694 = vcmask 1041408
  %v696 = vsel %vm694, %v682, 0
  %v699 = vsel %vm694, %v683, 0
  %v702 = vsel %vm694, %v684, 0
  %704 = vmatprep.subr.mxu0 0.0
  %705 = vmatpush1.msra.mxu0 0.0
  %706 = vmatprep.subr.mxu0 0.0
  %707 = vmatpush1.msra.mxu0 0.0
  %708 = vmatprep.subr.mxu0 0.0
  %709 = vmatpush1.msra.mxu0 0.0
  %710 = vmatprep.subr.mxu0 0.0
  %711 = vmatpush1.msra.mxu0 0.0
  %712 = vmatprep.subr.mxu0 0.0
  %713 = vmatpush1.msra.mxu0 0.0
  %714 = vmatprep.subr.mxu0 0.0
  %715 = vmatpush1.msra.mxu0 0.0
  %716 = vmatprep.subr.mxu0 0.0
  %717 = vmatpush1.msra.mxu0 0.0
  %718 = vmatprep.subr.mxu0 0.0
  %719 = vmatpush1.msra.mxu0 0.0
  %720 = vmatprep.subr.mxu0 0.0
  %721 = vmatpush1.msra.mxu0 0.0
  %722 = vmatprep.subr.mxu0 0.0
  %723 = vmatpush1.msra.mxu0 0.0
  %724 = vmatprep.subr.mxu0 0.0
  %725 = vmatpush1.msra.mxu0 0.0
  %726 = vmatprep.subr.mxu0 0.0
  %727 = vmatpush1.msra.mxu0 0.0
  %728 = vmatprep.subr.mxu0 0.0
  %729 = vmatpush1.msra.mxu0 0.0
  %730 = vmatprep.subr.mxu0 %v699
  %731 = vmatpush1.msra.mxu0 %v696
  %732 = vmatprep.subr.mxu0 %v680
  %733 = vmatpush1.msra.mxu0 %v679
  %734 = vmatprep.subr.mxu0 %v677
  %735 = vmatpush1.msra.mxu0 %v676
  %736 = vmatprep.subr.mxu0 0.0
  %737 = vmatpush2.msra.mxu0 0.0
  %738 = vmatprep.subr.mxu0 0.0
  %739 = vmatpush2.msra.mxu0 0.0
  %740 = vmatprep.subr.mxu0 0.0
  %741 = vmatpush2.msra.mxu0 0.0
  %742 = vmatprep.subr.mxu0 0.0
  %743 = vmatpush2.msra.mxu0 0.0
  %744 = vmatprep.subr.mxu0 0.0
  %745 = vmatpush2.msra.mxu0 0.0
  %746 = vmatprep.subr.mxu0 0.0
  %747 = vmatpush2.msra.mxu0 0.0
  %748 = vmatprep.subr.mxu0 0.0
  %749 = vmatpush2.msra.mxu0 0.0
  %750 = vmatprep.subr.mxu0 0.0
  %751 = vmatpush2.msra.mxu0 0.0
  %752 = vmatprep.subr.mxu0 0.0
  %753 = vmatpush2.msra.mxu0 0.0
  %754 = vmatprep.subr.mxu0 0.0
  %755 = vmatpush2.msra.mxu0 0.0
  %756 = vmatprep.subr.mxu0 0.0
  %757 = vmatpush2.msra.mxu0 0.0
  %758 = vmatprep.subr.mxu0 0.0
  %759 = vmatpush2.msra.mxu0 0.0
  %760 = vmatprep.subr.mxu0 0.0
  %761 = vmatpush2.msra.mxu0 0.0
  %762 = vmatprep.subr.mxu0 0.0
  %763 = vmatpush2.msra.mxu0 0.0
  %764 = vmatprep.subr.mxu0 0.0
  %765 = vmatpush2.msra.mxu0 0.0
  %766 = vmatprep.subr.mxu0 0.0
  %767 = vmatpush2.msra.mxu0 0.0
  %768 = vmatprep.mubr.f32.mxu0 0.0
  %769 = vmatmul.mubr.f32.gmra.mxu0 %v689
  %v770 = vpop.f32.mrf.mxu0
  %v771 = vadd.f32 0.0, %v770
  %v772 = vpop.f32.mrf.mxu0
  %v773 = vadd.f32 0.0, %v772
  %774 = vmatprep.mubr.f32.mxu0 0.0
  %775 = vmatmul.mubr.f32.gmra.mxu0 %v692
  %v776 = vpop.f32.mrf.mxu0
  %v777 = vadd.f32 0.0, %v776
  %v778 = vpop.f32.mrf.mxu0
  %v779 = vadd.f32 0.0, %v778
  %780 = vdwg.mxu0
  %781 = vmatprep.subr.mxu0 0.0
  %782 = vmatpush1.msra.mxu0 0.0
  %783 = vmatprep.subr.mxu0 0.0
  %784 = vmatpush1.msra.mxu0 0.0
  %785 = vmatprep.subr.mxu0 0.0
  %786 = vmatpush1.msra.mxu0 0.0
  %787 = vmatprep.subr.mxu0 0.0
  %788 = vmatpush1.msra.mxu0 0.0
  %789 = vmatprep.subr.mxu0 0.0
  %790 = vmatpush1.msra.mxu0 0.0
  %791 = vmatprep.subr.mxu0 0.0
  %792 = vmatpush1.msra.mxu0 0.0
  %793 = vmatprep.subr.mxu0 0.0
  %794 = vmatpush1.msra.mxu0 0.0
  %795 = vmatprep.subr.mxu0 0.0
  %796 = vmatpush1.msra.mxu0 0.0
  %797 = vmatprep.subr.mxu0 0.0
  %798 = vmatpush1.msra.mxu0 0.0
  %799 = vmatprep.subr.mxu0 0.0
  %800 = vmatpush1.msra.mxu0 0.0
  %801 = vmatprep.subr.mxu0 0.0
  %802 = vmatpush1.msra.mxu0 0.0
  %803 = vmatprep.subr.mxu0 0.0
  %804 = vmatpush1.msra.mxu0 0.0
  %805 = vmatprep.subr.mxu0 0.0
  %806 = vmatpush1.msra.mxu0 0.0
  %807 = vmatprep.subr.mxu0 0.0
  %808 = vmatpush1.msra.mxu0 %v702
  %809 = vmatprep.subr.mxu0 0.0
  %810 = vmatpush1.msra.mxu0 %v681
  %811 = vmatprep.subr.mxu0 0.0
  %812 = vmatpush1.msra.mxu0 %v678
  %813 = vmatprep.subr.mxu0 0.0
  %814 = vmatpush2.msra.mxu0 0.0
  %815 = vmatprep.subr.mxu0 0.0
  %816 = vmatpush2.msra.mxu0 0.0
  %817 = vmatprep.subr.mxu0 0.0
  %818 = vmatpush2.msra.mxu0 0.0
  %819 = vmatprep.subr.mxu0 0.0
  %820 = vmatpush2.msra.mxu0 0.0
  %821 = vmatprep.subr.mxu0 0.0
  %822 = vmatpush2.msra.mxu0 0.0
  %823 = vmatprep.subr.mxu0 0.0
  %824 = vmatpush2.msra.mxu0 0.0
  %825 = vmatprep.subr.mxu0 0.0
  %826 = vmatpush2.msra.mxu0 0.0
  %827 = vmatprep.subr.mxu0 0.0
  %828 = vmatpush2.msra.mxu0 0.0
  %829 = vmatprep.subr.mxu0 0.0
  %830 = vmatpush2.msra.mxu0 0.0
  %831 = vmatprep.subr.mxu0 0.0
  %832 = vmatpush2.msra.mxu0 0.0
  %833 = vmatprep.subr.mxu0 0.0
  %834 = vmatpush2.msra.mxu0 0.0
  %835 = vmatprep.subr.mxu0 0.0
  %836 = vmatpush2.msra.mxu0 0.0
  %837 = vmatprep.subr.mxu0 0.0
  %838 = vmatpush2.msra.mxu0 0.0
  %839 = vmatprep.subr.mxu0 0.0
  %840 = vmatpush2.msra.mxu0 0.0
  %841 = vmatprep.subr.mxu0 0.0
  %842 = vmatpush2.msra.mxu0 0.0
  %843 = vmatprep.subr.mxu0 0.0
  %844 = vmatpush2.msra.mxu0 0.0
  %845 = vmatprep.mubr.f32.mxu0 0.0
  %846 = vmatmul.mubr.f32.gmra.mxu0 %v689
  %v847 = vpop.f32.mrf.mxu0
  %v848 = vadd.f32 0.0, %v847
  %v849 = vpop.f32.mrf.mxu0
  %850 = vmatprep.mubr.f32.mxu0 0.0
  %851 = vmatmul.mubr.f32.gmra.mxu0 %v692
  %v852 = vpop.f32.mrf.mxu0
  %v853 = vadd.f32 0.0, %v852
  %v854 = vpop.f32.mrf.mxu0
  %855 = vdwg.mxu0
  %v856 = vld [vmem:[%s3 + $0x2d0] sm:$0xff]
  %v857 = vld [vmem:[%s3 + $0x2d8] sm:$0xff]
  %v858 = vld [vmem:[%s3 + $0x2e0] sm:$0xff]
  %v859 = vld [vmem:[%s3 + $0x2e8] sm:$0xff]
  %v860 = vld [vmem:[%s3 + $0x2f0] sm:$0xff]
  %v861 = vld [vmem:[%s3 + $0x2f8] sm:$0xff]
  %v862 = vld [vmem:[%s3 + $0x300] sm:$0xff]
  %v863 = vld [vmem:[%s3 + $0x308] sm:$0xff]
  %v864 = vld [vmem:[%s3 + $0x310] sm:$0xff]
  %v865 = vld [vmem:[%s3 + $0x318] sm:$0xff]
  %v866 = vld [vmem:[%s3 + $0x320] sm:$0xff]
  %v867 = vld [vmem:[%s3 + $0x328] sm:$0xff]
  %v868 = vld [vmem:[%s3 + $0x330] sm:$0xff]
  %v869 = vld [vmem:[%s3 + $0x338] sm:$0xff]
  %v870 = vld [vmem:[%s3 + $0x340] sm:$0xff]
  %v871 = vld [vmem:[%s3 + $0x348] sm:$0xff]
  %v872 = vld [vmem:[%s3 + $0x350] sm:$0xff]
  %v873 = vld [vmem:[%s3 + $0x358] sm:$0xff]
  %v874 = vld [vmem:[%s3 + $0x360] sm:$0xff]
  %v875 = vld [vmem:[%s3 + $0x368] sm:$0xff]
  %v876 = vld [vmem:[%s3 + $0x370] sm:$0xff]
  %v877 = vld [vmem:[%s3 + $0x378] sm:$0xff]
  %v878 = vld [vmem:[%s3 + $0x380] sm:$0xff]
  %v879 = vld [vmem:[%s3 + $0x388] sm:$0xff]
  %v880 = vld [vmem:[%s3 + $0x390] sm:$0xff]
  %v881 = vld [vmem:[%s3 + $0x398] sm:$0xff]
  %v882 = vld [vmem:[%s3 + $0x3a0] sm:$0xff]
  %v883 = vld [vmem:[%s3 + $0x3a8] sm:$0xff]
  %v884 = vld [vmem:[%s3 + $0x3b0] sm:$0xff]
  %v885 = vld [vmem:[%s3 + $0x3b8] sm:$0xff]
  %v886 = vld [vmem:[%s3 + $0x3c0] sm:$0xff]
  %v887 = vld [vmem:[%s3 + $0x3c8] sm:$0xff]
  %v888 = vld [vmem:[%s3 + $0x3d0] sm:$0xff]
  %v889 = vld [vmem:[%s3 + $0x3d8] sm:$0xff]
  %v890 = vld [vmem:[%s3 + $0x3e0] sm:$0xff]
  %v891 = vld [vmem:[%s3 + $0x3e8] sm:$0xff]
  %v892 = vld [vmem:[%s3 + $0x3f0] sm:$0xff]
  %v893 = vld [vmem:[%s3 + $0x3f8] sm:$0xff]
  %v894 = vld [vmem:[%s3 + $0x400] sm:$0xff]
  %v895 = vld [vmem:[%s3 + $0x408] sm:$0xff]
  %v896 = vld [vmem:[%s3 + $0x410] sm:$0xff]
  %v897 = vld [vmem:[%s3 + $0x418] sm:$0xff]
  %v898 = vld [vmem:[%s3 + $0x420] sm:$0xff]
  %v899 = vld [vmem:[%s3 + $0x428] sm:$0xff]
  %v900 = vld [vmem:[%s3 + $0x430] sm:$0xff]
  %v901 = vld [vmem:[%s3 + $0x438] sm:$0xff]
  %v902 = vld [vmem:[%s3 + $0x440] sm:$0xff]
  %v903 = vld [vmem:[%s3 + $0x448] sm:$0xff]
  %v904 = vld [vmem:[%s3 + $0x450] sm:$0xff]
  %v905 = vld [vmem:[%s3 + $0x458] sm:$0xff]
  %v906 = vld [vmem:[%s3 + $0x460] sm:$0xff]
  %v907 = vld [vmem:[%s3 + $0x468] sm:$0xff]
  %v908 = vld [vmem:[%s3 + $0x470] sm:$0xff]
  %v909 = vld [vmem:[%s3 + $0x478] sm:$0xff]
  %v910 = vld [vmem:[%s3 + $0x480] sm:$0xff]
  %v911 = vld [vmem:[%s3 + $0x488] sm:$0xff]
  %v912 = vld [vmem:[%s3 + $0x490] sm:$0xff]
  %v913 = vld [vmem:[%s3 + $0x498] sm:$0xff]
  %v914 = vld [vmem:[%s3 + $0x4a0] sm:$0xff]
  %v915 = vld [vmem:[%s3 + $0x4a8] sm:$0xff]
  %v916 = vld [vmem:[%s3 + $0x4b0] sm:$0xff]
  %v917 = vld [vmem:[%s3 + $0x4b8] sm:$0xff]
  %v918 = vld [vmem:[%s3 + $0x4c0] sm:$0xff]
  %v919 = vld [vmem:[%s3 + $0x4c8] sm:$0xff]
  %v920 = vld [vmem:[%s3 + $0x4d0] sm:$0xff]
  %v921 = vld [vmem:[%s3 + $0x4d8] sm:$0xff]
  %v922 = vld [vmem:[%s3 + $0x4e0] sm:$0xff]
  %v923 = vld [vmem:[%s3 + $0x4e8] sm:$0xff]
  %v924 = vld [vmem:[%s3 + $0x4f0] sm:$0xff]
  %v925 = vld [vmem:[%s3 + $0x4f8] sm:$0xff]
  %v926 = vld [vmem:[%s3 + $0x500] sm:$0xff]
  %v927 = vld [vmem:[%s3 + $0x508] sm:$0xff]
  %v928 = vld [vmem:[%s3 + $0x510] sm:$0xff]
  %v929 = vld [vmem:[%s3 + $0x518] sm:$0xff]
  %v930 = vld [vmem:[%s3 + $0x520] sm:$0xff]
  %v931 = vld [vmem:[%s3 + $0x528] sm:$0xff]
  %v932 = vld [vmem:[%s3 + $0x530] sm:$0xff]
  %v933 = vld [vmem:[%s3 + $0x538] sm:$0xff]
  %v934 = vld [vmem:[%s3 + $0x540] sm:$0xff]
  %v935 = vld [vmem:[%s3 + $0x548] sm:$0xff]
  %v936 = vld [vmem:[%s3 + $0x550] sm:$0xff]
  %v937 = vld [vmem:[%s3 + $0x558] sm:$0xff]
  %v938 = vld [vmem:[%s3 + $0x560] sm:$0xff]
  %v939 = vld [vmem:[%s3 + $0x568] sm:$0xff]
  %v940 = vld [vmem:[%s3 + $0x570] sm:$0xff]
  %v941 = vld [vmem:[%s3 + $0x578] sm:$0xff]
  %v942 = vld [vmem:[%s3 + $0x580] sm:$0xff]
  %v943 = vld [vmem:[%s3 + $0x588] sm:$0xff]
  %v944 = vld [vmem:[%s3 + $0x590] sm:$0xff]
  %v945 = vld [vmem:[%s3 + $0x598] sm:$0xff]
  %v946 = vld [vmem:[%s3 + $0x5a0] sm:$0xff]
  %v947 = vld [vmem:[%s3 + $0x5a8] sm:$0xff]
  %v948 = vld [vmem:[%s3 + $0x5b0] sm:$0xff]
  %v949 = vld [vmem:[%s3 + $0x5b8] sm:$0xff]
  %v950 = vld [vmem:[%s3 + $0x5c0] sm:$0xff]
  %v951 = vld [vmem:[%s3 + $0x5c8] sm:$0xff]
  %v952 = vld [vmem:[%s3 + $0x5d0] sm:$0xff]
  %v953 = vld [vmem:[%s3 + $0x5d8] sm:$0xff]
  %v954 = vld [vmem:[%s3 + $0x5e0] sm:$0xff]
  %v955 = vld [vmem:[%s3 + $0x5e8] sm:$0xff]
  %v956 = vld [vmem:[%s3 + $0x5f0] sm:$0xff]
  %v957 = vld [vmem:[%s3 + $0x5f8] sm:$0xff]
  %v958 = vld [vmem:[%s3 + $0x600] sm:$0xff]
  %v959 = vld [vmem:[%s3 + $0x608] sm:$0xff]
  %v960 = vld [vmem:[%s3 + $0x610] sm:$0xff]
  %v961 = vld [vmem:[%s3 + $0x618] sm:$0xff]
  %v962 = vld [vmem:[%s3 + $0x620] sm:$0xff]
  %v963 = vld [vmem:[%s3 + $0x628] sm:$0xff]
  %v964 = vld [vmem:[%s3 + $0x630] sm:$0xff]
  %v965 = vld [vmem:[%s3 + $0x638] sm:$0xff]
  %v966 = vld [vmem:[%s3 + $0x640] sm:$0xff]
  %v967 = vld [vmem:[%s3 + $0x648] sm:$0xff]
  %v968 = vld [vmem:[%s3 + $0x650] sm:$0xff]
  %v969 = vld [vmem:[%s3 + $0x658] sm:$0xff]
  %v970 = vld [vmem:[%s3 + $0x660] sm:$0xff]
  %v971 = vld [vmem:[%s3 + $0x668] sm:$0xff]
  %v972 = vld [vmem:[%s3 + $0x670] sm:$0xff]
  %v973 = vld [vmem:[%s3 + $0x678] sm:$0xff]
  %v974 = vld [vmem:[%s3 + $0x680] sm:$0xff]
  %v975 = vld [vmem:[%s3 + $0x688] sm:$0xff]
  %v976 = vld [vmem:[%s2 + $0x40] sm:$0xff]
  %v977 = vld [vmem:[%s2 + $0x48] sm:$0x3]
  %v979 = vsel %vm687, %v976, 0
  %v982 = vsel %vm687, %v977, 0
  %984 = vmatprep.subr.mxu0 0.0
  %985 = vmatpush1.msra.mxu0 0.0
  %986 = vmatprep.subr.mxu0 0.0
  %987 = vmatpush1.msra.mxu0 0.0
  %988 = vmatprep.subr.mxu0 0.0
  %989 = vmatpush1.msra.mxu0 0.0
  %990 = vmatprep.subr.mxu0 0.0
  %991 = vmatpush1.msra.mxu0 0.0
  %992 = vmatprep.subr.mxu0 0.0
  %993 = vmatpush1.msra.mxu0 0.0
  %994 = vmatprep.subr.mxu0 0.0
  %995 = vmatpush1.msra.mxu0 0.0
  %996 = vmatprep.subr.mxu0 0.0
  %997 = vmatpush1.msra.mxu0 0.0
  %998 = vmatprep.subr.mxu0 0.0
  %999 = vmatpush1.msra.mxu0 0.0
  %1000 = vmatprep.subr.mxu0 0.0
  %1001 = vmatpush1.msra.mxu0 0.0
  %1002 = vmatprep.subr.mxu0 0.0
  %1003 = vmatpush1.msra.mxu0 0.0
  %1004 = vmatprep.subr.mxu0 0.0
  %1005 = vmatpush1.msra.mxu0 0.0
  %1006 = vmatprep.subr.mxu0 0.0
  %1007 = vmatpush1.msra.mxu0 0.0
  %1008 = vmatprep.subr.mxu0 0.0
  %1009 = vmatpush1.msra.mxu0 0.0
  %1010 = vmatprep.subr.mxu0 %v699
  %1011 = vmatpush1.msra.mxu0 %v696
  %1012 = vmatprep.subr.mxu0 %v680
  %1013 = vmatpush1.msra.mxu0 %v679
  %1014 = vmatprep.subr.mxu0 %v677
  %1015 = vmatpush1.msra.mxu0 %v676
  %1016 = vmatprep.subr.mxu0 0.0
  %1017 = vmatpush2.msra.mxu0 0.0
  %1018 = vmatprep.subr.mxu0 0.0
  %1019 = vmatpush2.msra.mxu0 0.0
  %1020 = vmatprep.subr.mxu0 0.0
  %1021 = vmatpush2.msra.mxu0 0.0
  %1022 = vmatprep.subr.mxu0 0.0
  %1023 = vmatpush2.msra.mxu0 0.0
  %1024 = vmatprep.subr.mxu0 0.0
  %1025 = vmatpush2.msra.mxu0 0.0
  %1026 = vmatprep.subr.mxu0 0.0
  %1027 = vmatpush2.msra.mxu0 0.0
  %1028 = vmatprep.subr.mxu0 0.0
  %1029 = vmatpush2.msra.mxu0 0.0
  %1030 = vmatprep.subr.mxu0 0.0
  %1031 = vmatpush2.msra.mxu0 0.0
  %1032 = vmatprep.subr.mxu0 0.0
  %1033 = vmatpush2.msra.mxu0 0.0
  %1034 = vmatprep.subr.mxu0 0.0
  %1035 = vmatpush2.msra.mxu0 0.0
  %1036 = vmatprep.subr.mxu0 0.0
  %1037 = vmatpush2.msra.mxu0 0.0
  %1038 = vmatprep.subr.mxu0 0.0
  %1039 = vmatpush2.msra.mxu0 0.0
  %1040 = vmatprep.subr.mxu0 0.0
  %1041 = vmatpush2.msra.mxu0 0.0
  %1042 = vmatprep.subr.mxu0 0.0
  %1043 = vmatpush2.msra.mxu0 0.0
  %1044 = vmatprep.subr.mxu0 0.0
  %1045 = vmatpush2.msra.mxu0 0.0
  %1046 = vmatprep.subr.mxu0 0.0
  %1047 = vmatpush2.msra.mxu0 0.0
  %1048 = vmatprep.mubr.f32.mxu0 0.0
  %1049 = vmatmul.mubr.f32.gmra.mxu0 %v979
  %v1050 = vpop.f32.mrf.mxu0
  %v1051 = vadd.f32 0.0, %v1050
  %v1052 = vpop.f32.mrf.mxu0
  %v1053 = vadd.f32 0.0, %v1052
  %1054 = vmatprep.mubr.f32.mxu0 0.0
  %1055 = vmatmul.mubr.f32.gmra.mxu0 %v982
  %v1056 = vpop.f32.mrf.mxu0
  %v1057 = vadd.f32 0.0, %v1056
  %v1058 = vpop.f32.mrf.mxu0
  %v1059 = vadd.f32 0.0, %v1058
  %1060 = vdwg.mxu0
  %1061 = vmatprep.subr.mxu0 0.0
  %1062 = vmatpush1.msra.mxu0 0.0
  %1063 = vmatprep.subr.mxu0 0.0
  %1064 = vmatpush1.msra.mxu0 0.0
  %1065 = vmatprep.subr.mxu0 0.0
  %1066 = vmatpush1.msra.mxu0 0.0
  %1067 = vmatprep.subr.mxu0 0.0
  %1068 = vmatpush1.msra.mxu0 0.0
  %1069 = vmatprep.subr.mxu0 0.0
  %1070 = vmatpush1.msra.mxu0 0.0
  %1071 = vmatprep.subr.mxu0 0.0
  %1072 = vmatpush1.msra.mxu0 0.0
  %1073 = vmatprep.subr.mxu0 0.0
  %1074 = vmatpush1.msra.mxu0 0.0
  %1075 = vmatprep.subr.mxu0 0.0
  %1076 = vmatpush1.msra.mxu0 0.0
  %1077 = vmatprep.subr.mxu0 0.0
  %1078 = vmatpush1.msra.mxu0 0.0
  %1079 = vmatprep.subr.mxu0 0.0
  %1080 = vmatpush1.msra.mxu0 0.0
  %1081 = vmatprep.subr.mxu0 0.0
  %1082 = vmatpush1.msra.mxu0 0.0
  %1083 = vmatprep.subr.mxu0 0.0
  %1084 = vmatpush1.msra.mxu0 0.0
  %1085 = vmatprep.subr.mxu0 0.0
  %1086 = vmatpush1.msra.mxu0 0.0
  %1087 = vmatprep.subr.mxu0 0.0
  %1088 = vmatpush1.msra.mxu0 %v702
  %1089 = vmatprep.subr.mxu0 0.0
  %1090 = vmatpush1.msra.mxu0 %v681
  %1091 = vmatprep.subr.mxu0 0.0
  %1092 = vmatpush1.msra.mxu0 %v678
  %1093 = vmatprep.subr.mxu0 0.0
  %1094 = vmatpush2.msra.mxu0 0.0
  %1095 = vmatprep.subr.mxu0 0.0
  %1096 = vmatpush2.msra.mxu0 0.0
  %1097 = vmatprep.subr.mxu0 0.0
  %1098 = vmatpush2.msra.mxu0 0.0
  %1099 = vmatprep.subr.mxu0 0.0
  %1100 = vmatpush2.msra.mxu0 0.0
  %1101 = vmatprep.subr.mxu0 0.0
  %1102 = vmatpush2.msra.mxu0 0.0
  %1103 = vmatprep.subr.mxu0 0.0
  %1104 = vmatpush2.msra.mxu0 0.0
  %1105 = vmatprep.subr.mxu0 0.0
  %1106 = vmatpush2.msra.mxu0 0.0
  %1107 = vmatprep.subr.mxu0 0.0
  %1108 = vmatpush2.msra.mxu0 0.0
  %1109 = vmatprep.subr.mxu0 0.0
  %1110 = vmatpush2.msra.mxu0 0.0
  %1111 = vmatprep.subr.mxu0 0.0
  %1112 = vmatpush2.msra.mxu0 0.0
  %1113 = vmatprep.subr.mxu0 0.0
  %1114 = vmatpush2.msra.mxu0 0.0
  %1115 = vmatprep.subr.mxu0 0.0
  %1116 = vmatpush2.msra.mxu0 0.0
  %1117 = vmatprep.subr.mxu0 0.0
  %1118 = vmatpush2.msra.mxu0 0.0
  %1119 = vmatprep.subr.mxu0 0.0
  %1120 = vmatpush2.msra.mxu0 0.0
  %1121 = vmatprep.subr.mxu0 0.0
  %1122 = vmatpush2.msra.mxu0 0.0
  %1123 = vmatprep.subr.mxu0 0.0
  %1124 = vmatpush2.msra.mxu0 0.0
  %1125 = vmatprep.mubr.f32.mxu0 0.0
  %1126 = vmatmul.mubr.f32.gmra.mxu0 %v979
  %v1127 = vpop.f32.mrf.mxu0
  %v1128 = vadd.f32 0.0, %v1127
  %v1129 = vpop.f32.mrf.mxu0
  %1130 = vmatprep.mubr.f32.mxu0 0.0
  %1131 = vmatmul.mubr.f32.gmra.mxu0 %v982
  %v1132 = vpop.f32.mrf.mxu0
  %v1133 = vadd.f32 0.0, %v1132
  %v1134 = vpop.f32.mrf.mxu0
  %1135 = vdwg.mxu0
  %v1136 = vld [vmem:[%s3 + $0x690] sm:$0xff]
  %v1137 = vld [vmem:[%s3 + $0x698] sm:$0xff]
  %v1138 = vld [vmem:[%s3 + $0x6a0] sm:$0xff]
  %v1139 = vld [vmem:[%s3 + $0x6a8] sm:$0xff]
  %v1140 = vld [vmem:[%s3 + $0x6b0] sm:$0xff]
  %v1141 = vld [vmem:[%s3 + $0x6b8] sm:$0xff]
  %v1142 = vld [vmem:[%s3 + $0x6c0] sm:$0xff]
  %v1143 = vld [vmem:[%s3 + $0x6c8] sm:$0xff]
  %v1144 = vld [vmem:[%s3 + $0x6d0] sm:$0xff]
  %v1145 = vld [vmem:[%s3 + $0x6d8] sm:$0xff]
  %v1146 = vld [vmem:[%s3 + $0x6e0] sm:$0xff]
  %v1147 = vld [vmem:[%s3 + $0x6e8] sm:$0xff]
  %v1148 = vld [vmem:[%s3 + $0x6f0] sm:$0xff]
  %v1149 = vld [vmem:[%s3 + $0x6f8] sm:$0xff]
  %v1150 = vld [vmem:[%s3 + $0x700] sm:$0xff]
  %v1151 = vld [vmem:[%s3 + $0x708] sm:$0xff]
  %v1152 = vld [vmem:[%s3 + $0x710] sm:$0xff]
  %v1153 = vld [vmem:[%s3 + $0x718] sm:$0xff]
  %v1154 = vld [vmem:[%s3 + $0x720] sm:$0xff]
  %v1155 = vld [vmem:[%s3 + $0x728] sm:$0xff]
  %v1156 = vld [vmem:[%s3 + $0x730] sm:$0xff]
  %v1157 = vld [vmem:[%s3 + $0x738] sm:$0xff]
  %v1158 = vld [vmem:[%s3 + $0x740] sm:$0xff]
  %v1159 = vld [vmem:[%s3 + $0x748] sm:$0xff]
  %v1160 = vld [vmem:[%s3 + $0x750] sm:$0xff]
  %v1161 = vld [vmem:[%s3 + $0x758] sm:$0xff]
  %v1162 = vld [vmem:[%s3 + $0x760] sm:$0xff]
  %v1163 = vld [vmem:[%s3 + $0x768] sm:$0xff]
  %v1164 = vld [vmem:[%s3 + $0x770] sm:$0xff]
  %v1165 = vld [vmem:[%s3 + $0x778] sm:$0xff]
  %v1166 = vld [vmem:[%s3 + $0x780] sm:$0xff]
  %v1167 = vld [vmem:[%s3 + $0x788] sm:$0xff]
  %v1168 = vld [vmem:[%s3 + $0x790] sm:$0xff]
  %v1169 = vld [vmem:[%s3 + $0x798] sm:$0xff]
  %v1170 = vld [vmem:[%s3 + $0x7a0] sm:$0xff]
  %v1171 = vld [vmem:[%s3 + $0x7a8] sm:$0xff]
  %v1172 = vld [vmem:[%s3 + $0x7b0] sm:$0xff]
  %v1173 = vld [vmem:[%s3 + $0x7b8] sm:$0xff]
  %v1174 = vld [vmem:[%s3 + $0x7c0] sm:$0xff]
  %v1175 = vld [vmem:[%s3 + $0x7c8] sm:$0xff]
  %v1176 = vld [vmem:[%s3 + $0x7d0] sm:$0xff]
  %v1177 = vld [vmem:[%s3 + $0x7d8] sm:$0xff]
  %v1178 = vld [vmem:[%s3 + $0x7e0] sm:$0xff]
  %v1179 = vld [vmem:[%s3 + $0x7e8] sm:$0xff]
  %v1180 = vld [vmem:[%s3 + $0x7f0] sm:$0xff]
  %v1181 = vld [vmem:[%s3 + $0x7f8] sm:$0xff]
  %v1182 = vld [vmem:[%s3 + $0x800] sm:$0xff]
  %v1183 = vld [vmem:[%s3 + $0x808] sm:$0xff]
  %v1184 = vld [vmem:[%s3 + $0x810] sm:$0xff]
  %v1185 = vld [vmem:[%s3 + $0x818] sm:$0xff]
  %v1186 = vld [vmem:[%s3 + $0x820] sm:$0xff]
  %v1187 = vld [vmem:[%s3 + $0x828] sm:$0xff]
  %v1188 = vld [vmem:[%s3 + $0x830] sm:$0xff]
  %v1189 = vld [vmem:[%s3 + $0x838] sm:$0xff]
  %v1190 = vld [vmem:[%s3 + $0x840] sm:$0xff]
  %v1191 = vld [vmem:[%s3 + $0x848] sm:$0xff]
  %v1192 = vld [vmem:[%s3 + $0x850] sm:$0xff]
  %v1193 = vld [vmem:[%s3 + $0x858] sm:$0xff]
  %v1194 = vld [vmem:[%s3 + $0x860] sm:$0xff]
  %v1195 = vld [vmem:[%s3 + $0x868] sm:$0xff]
  %v1196 = vld [vmem:[%s3 + $0x870] sm:$0xff]
  %v1197 = vld [vmem:[%s3 + $0x878] sm:$0xff]
  %v1198 = vld [vmem:[%s3 + $0x880] sm:$0xff]
  %v1199 = vld [vmem:[%s3 + $0x888] sm:$0xff]
  %v1200 = vld [vmem:[%s3 + $0x890] sm:$0xff]
  %v1201 = vld [vmem:[%s3 + $0x898] sm:$0xff]
  %v1202 = vld [vmem:[%s3 + $0x8a0] sm:$0xff]
  %v1203 = vld [vmem:[%s3 + $0x8a8] sm:$0xff]
  %v1204 = vld [vmem:[%s3 + $0x8b0] sm:$0xff]
  %v1205 = vld [vmem:[%s3 + $0x8b8] sm:$0xff]
  %v1206 = vld [vmem:[%s3 + $0x8c0] sm:$0xff]
  %v1207 = vld [vmem:[%s3 + $0x8c8] sm:$0xff]
  %v1208 = vld [vmem:[%s3 + $0x8d0] sm:$0xff]
  %v1209 = vld [vmem:[%s3 + $0x8d8] sm:$0xff]
  %v1210 = vld [vmem:[%s3 + $0x8e0] sm:$0xff]
  %v1211 = vld [vmem:[%s3 + $0x8e8] sm:$0xff]
  %v1212 = vld [vmem:[%s3 + $0x8f0] sm:$0xff]
  %v1213 = vld [vmem:[%s3 + $0x8f8] sm:$0xff]
  %v1214 = vld [vmem:[%s3 + $0x900] sm:$0xff]
  %v1215 = vld [vmem:[%s3 + $0x908] sm:$0xff]
  %v1216 = vld [vmem:[%s3 + $0x910] sm:$0xff]
  %v1217 = vld [vmem:[%s3 + $0x918] sm:$0xff]
  %v1218 = vld [vmem:[%s3 + $0x920] sm:$0xff]
  %v1219 = vld [vmem:[%s3 + $0x928] sm:$0xff]
  %v1220 = vld [vmem:[%s3 + $0x930] sm:$0xff]
  %v1221 = vld [vmem:[%s3 + $0x938] sm:$0xff]
  %v1222 = vld [vmem:[%s3 + $0x940] sm:$0xff]
  %v1223 = vld [vmem:[%s3 + $0x948] sm:$0xff]
  %v1224 = vld [vmem:[%s3 + $0x950] sm:$0xff]
  %v1225 = vld [vmem:[%s3 + $0x958] sm:$0xff]
  %v1226 = vld [vmem:[%s3 + $0x960] sm:$0xff]
  %v1227 = vld [vmem:[%s3 + $0x968] sm:$0xff]
  %v1228 = vld [vmem:[%s3 + $0x970] sm:$0xff]
  %v1229 = vld [vmem:[%s3 + $0x978] sm:$0xff]
  %v1230 = vld [vmem:[%s3 + $0x980] sm:$0xff]
  %v1231 = vld [vmem:[%s3 + $0x988] sm:$0xff]
  %v1232 = vld [vmem:[%s3 + $0x990] sm:$0xff]
  %v1233 = vld [vmem:[%s3 + $0x998] sm:$0xff]
  %v1234 = vld [vmem:[%s3 + $0x9a0] sm:$0xff]
  %v1235 = vld [vmem:[%s3 + $0x9a8] sm:$0xff]
  %v1236 = vld [vmem:[%s3 + $0x9b0] sm:$0xff]
  %v1237 = vld [vmem:[%s3 + $0x9b8] sm:$0xff]
  %v1238 = vld [vmem:[%s3 + $0x9c0] sm:$0xff]
  %v1239 = vld [vmem:[%s3 + $0x9c8] sm:$0xff]
  %v1240 = vld [vmem:[%s3 + $0x9d0] sm:$0xff]
  %v1241 = vld [vmem:[%s3 + $0x9d8] sm:$0xff]
  %v1242 = vld [vmem:[%s3 + $0x9e0] sm:$0xff]
  %v1243 = vld [vmem:[%s3 + $0x9e8] sm:$0xff]
  %v1244 = vld [vmem:[%s3 + $0x9f0] sm:$0xff]
  %v1245 = vld [vmem:[%s3 + $0x9f8] sm:$0xff]
  %v1246 = vld [vmem:[%s3 + $0xa00] sm:$0xff]
  %v1247 = vld [vmem:[%s3 + $0xa08] sm:$0xff]
  %v1248 = vld [vmem:[%s3 + $0xa10] sm:$0xff]
  %v1249 = vld [vmem:[%s3 + $0xa18] sm:$0xff]
  %v1250 = vld [vmem:[%s3 + $0xa20] sm:$0xff]
  %v1251 = vld [vmem:[%s3 + $0xa28] sm:$0xff]
  %v1252 = vld [vmem:[%s3 + $0xa30] sm:$0xff]
  %v1253 = vld [vmem:[%s3 + $0xa38] sm:$0xff]
  %v1254 = vld [vmem:[%s3 + $0xa40] sm:$0xff]
  %v1255 = vld [vmem:[%s3 + $0xa48] sm:$0xff]
  %vm1256 = vcmask 523264
  %v1258 = vsel %vm1256, %v1128, 0
  %v1261 = vsel %vm1256, %v1133, 0
  %1263 = vmatprep.subr.mxu0 %v1182
  %1264 = vmatpush1.msra.mxu0 %v1181
  %1265 = vmatprep.subr.mxu0 %v1179
  %1266 = vmatpush1.msra.mxu0 %v1178
  %1267 = vmatprep.subr.mxu0 %v1176
  %1268 = vmatpush1.msra.mxu0 %v1175
  %1269 = vmatprep.subr.mxu0 %v1173
  %1270 = vmatpush1.msra.mxu0 %v1172
  %1271 = vmatprep.subr.mxu0 %v1170
  %1272 = vmatpush1.msra.mxu0 %v1169
  %1273 = vmatprep.subr.mxu0 %v1167
  %1274 = vmatpush1.msra.mxu0 %v1166
  %1275 = vmatprep.subr.mxu0 %v1164
  %1276 = vmatpush1.msra.mxu0 %v1163
  %1277 = vmatprep.subr.mxu0 %v1161
  %1278 = vmatpush1.msra.mxu0 %v1160
  %1279 = vmatprep.subr.mxu0 %v1158
  %1280 = vmatpush1.msra.mxu0 %v1157
  %1281 = vmatprep.subr.mxu0 %v1155
  %1282 = vmatpush1.msra.mxu0 %v1154
  %1283 = vmatprep.subr.mxu0 %v1152
  %1284 = vmatpush1.msra.mxu0 %v1151
  %1285 = vmatprep.subr.mxu0 %v1149
  %1286 = vmatpush1.msra.mxu0 %v1148
  %1287 = vmatprep.subr.mxu0 %v1146
  %1288 = vmatpush1.msra.mxu0 %v1145
  %1289 = vmatprep.subr.mxu0 %v1143
  %1290 = vmatpush1.msra.mxu0 %v1142
  %1291 = vmatprep.subr.mxu0 %v1140
  %1292 = vmatpush1.msra.mxu0 %v1139
  %1293 = vmatprep.subr.mxu0 %v1137
  %1294 = vmatpush1.msra.mxu0 %v1136
  %1295 = vmatprep.subr.mxu0 %v1230
  %1296 = vmatpush2.msra.mxu0 %v1229
  %1297 = vmatprep.subr.mxu0 %v1227
  %1298 = vmatpush2.msra.mxu0 %v1226
  %1299 = vmatprep.subr.mxu0 %v1224
  %1300 = vmatpush2.msra.mxu0 %v1223
  %1301 = vmatprep.subr.mxu0 %v1221
  %1302 = vmatpush2.msra.mxu0 %v1220
  %1303 = vmatprep.subr.mxu0 %v1218
  %1304 = vmatpush2.msra.mxu0 %v1217
  %1305 = vmatprep.subr.mxu0 %v1215
  %1306 = vmatpush2.msra.mxu0 %v1214
  %1307 = vmatprep.subr.mxu0 %v1212
  %1308 = vmatpush2.msra.mxu0 %v1211
  %1309 = vmatprep.subr.mxu0 %v1209
  %1310 = vmatpush2.msra.mxu0 %v1208
  %1311 = vmatprep.subr.mxu0 %v1206
  %1312 = vmatpush2.msra.mxu0 %v1205
  %1313 = vmatprep.subr.mxu0 %v1203
  %1314 = vmatpush2.msra.mxu0 %v1202
  %1315 = vmatprep.subr.mxu0 %v1200
  %1316 = vmatpush2.msra.mxu0 %v1199
  %1317 = vmatprep.subr.mxu0 %v1197
  %1318 = vmatpush2.msra.mxu0 %v1196
  %1319 = vmatprep.subr.mxu0 %v1194
  %1320 = vmatpush2.msra.mxu0 %v1193
  %1321 = vmatprep.subr.mxu0 %v1191
  %1322 = vmatpush2.msra.mxu0 %v1190
  %1323 = vmatprep.subr.mxu0 %v1188
  %1324 = vmatpush2.msra.mxu0 %v1187
  %1325 = vmatprep.subr.mxu0 %v1185
  %1326 = vmatpush2.msra.mxu0 %v1184
  %1327 = vmatprep.mubr.f32.mxu0 %v1053
  %1328 = vmatmul.mubr.f32.gmra.mxu0 %v1051
  %v1329 = vpop.f32.mrf.mxu0
  %v1330 = vadd.f32 0.0, %v1329
  %v1331 = vpop.f32.mrf.mxu0
  %v1332 = vadd.f32 0.0, %v1331
  %1333 = vmatprep.mubr.f32.mxu0 %v1059
  %1334 = vmatmul.mubr.f32.gmra.mxu0 %v1057
  %v1335 = vpop.f32.mrf.mxu0
  %v1336 = vadd.f32 0.0, %v1335
  %v1337 = vpop.f32.mrf.mxu0
  %v1338 = vadd.f32 0.0, %v1337
  %1339 = vdwg.mxu0
  %1340 = vmatprep.subr.mxu0 0.0
  %1341 = vmatpush1.msra.mxu0 0.0
  %1342 = vmatprep.subr.mxu0 0.0
  %1343 = vmatpush1.msra.mxu0 0.0
  %1344 = vmatprep.subr.mxu0 0.0
  %1345 = vmatpush1.msra.mxu0 0.0
  %1346 = vmatprep.subr.mxu0 0.0
  %1347 = vmatpush1.msra.mxu0 0.0
  %1348 = vmatprep.subr.mxu0 0.0
  %1349 = vmatpush1.msra.mxu0 0.0
  %1350 = vmatprep.subr.mxu0 0.0
  %1351 = vmatpush1.msra.mxu0 0.0
  %1352 = vmatprep.subr.mxu0 0.0
  %1353 = vmatpush1.msra.mxu0 0.0
  %1354 = vmatprep.subr.mxu0 0.0
  %1355 = vmatpush1.msra.mxu0 0.0
  %1356 = vmatprep.subr.mxu0 %v1254
  %1357 = vmatpush1.msra.mxu0 %v1253
  %1358 = vmatprep.subr.mxu0 %v1251
  %1359 = vmatpush1.msra.mxu0 %v1250
  %1360 = vmatprep.subr.mxu0 %v1248
  %1361 = vmatpush1.msra.mxu0 %v1247
  %1362 = vmatprep.subr.mxu0 %v1245
  %1363 = vmatpush1.msra.mxu0 %v1244
  %1364 = vmatprep.subr.mxu0 %v1242
  %1365 = vmatpush1.msra.mxu0 %v1241
  %1366 = vmatprep.subr.mxu0 %v1239
  %1367 = vmatpush1.msra.mxu0 %v1238
  %1368 = vmatprep.subr.mxu0 %v1236
  %1369 = vmatpush1.msra.mxu0 %v1235
  %1370 = vmatprep.subr.mxu0 %v1233
  %1371 = vmatpush1.msra.mxu0 %v1232
  %1372 = vmatprep.subr.mxu0 0.0
  %1373 = vmatpush2.msra.mxu0 0.0
  %1374 = vmatprep.subr.mxu0 0.0
  %1375 = vmatpush2.msra.mxu0 0.0
  %1376 = vmatprep.subr.mxu0 0.0
  %1377 = vmatpush2.msra.mxu0 0.0
  %1378 = vmatprep.subr.mxu0 0.0
  %1379 = vmatpush2.msra.mxu0 0.0
  %1380 = vmatprep.subr.mxu0 0.0
  %1381 = vmatpush2.msra.mxu0 0.0
  %1382 = vmatprep.subr.mxu0 0.0
  %1383 = vmatpush2.msra.mxu0 0.0
  %1384 = vmatprep.subr.mxu0 0.0
  %1385 = vmatpush2.msra.mxu0 0.0
  %1386 = vmatprep.subr.mxu0 0.0
  %1387 = vmatpush2.msra.mxu0 0.0
  %1388 = vmatprep.subr.mxu0 0.0
  %1389 = vmatpush2.msra.mxu0 0.0
  %1390 = vmatprep.subr.mxu0 0.0
  %1391 = vmatpush2.msra.mxu0 0.0
  %1392 = vmatprep.subr.mxu0 0.0
  %1393 = vmatpush2.msra.mxu0 0.0
  %1394 = vmatprep.subr.mxu0 0.0
  %1395 = vmatpush2.msra.mxu0 0.0
  %1396 = vmatprep.subr.mxu0 0.0
  %1397 = vmatpush2.msra.mxu0 0.0
  %1398 = vmatprep.subr.mxu0 0.0
  %1399 = vmatpush2.msra.mxu0 0.0
  %1400 = vmatprep.subr.mxu0 0.0
  %1401 = vmatpush2.msra.mxu0 0.0
  %1402 = vmatprep.subr.mxu0 0.0
  %1403 = vmatpush2.msra.mxu0 0.0
  %1404 = vmatprep.mubr.f32.mxu0 0.0
  %1405 = vmatmul.mubr.f32.gmra.mxu0 %v1258
  %v1406 = vpop.f32.mrf.mxu0
  %v1407 = vadd.f32 %v1330, %v1406
  %v1408 = vpop.f32.mrf.mxu0
  %v1409 = vadd.f32 %v1332, %v1408
  %1410 = vmatprep.mubr.f32.mxu0 0.0
  %1411 = vmatmul.mubr.f32.gmra.mxu0 %v1261
  %v1412 = vpop.f32.mrf.mxu0
  %v1413 = vadd.f32 %v1336, %v1412
  %v1414 = vpop.f32.mrf.mxu0
  %v1415 = vadd.f32 %v1338, %v1414
  %1416 = vdwg.mxu0
  %1417 = vmatprep.subr.mxu0 0.0
  %1418 = vmatpush1.msra.mxu0 %v1183
  %1419 = vmatprep.subr.mxu0 0.0
  %1420 = vmatpush1.msra.mxu0 %v1180
  %1421 = vmatprep.subr.mxu0 0.0
  %1422 = vmatpush1.msra.mxu0 %v1177
  %1423 = vmatprep.subr.mxu0 0.0
  %1424 = vmatpush1.msra.mxu0 %v1174
  %1425 = vmatprep.subr.mxu0 0.0
  %1426 = vmatpush1.msra.mxu0 %v1171
  %1427 = vmatprep.subr.mxu0 0.0
  %1428 = vmatpush1.msra.mxu0 %v1168
  %1429 = vmatprep.subr.mxu0 0.0
  %1430 = vmatpush1.msra.mxu0 %v1165
  %1431 = vmatprep.subr.mxu0 0.0
  %1432 = vmatpush1.msra.mxu0 %v1162
  %1433 = vmatprep.subr.mxu0 0.0
  %1434 = vmatpush1.msra.mxu0 %v1159
  %1435 = vmatprep.subr.mxu0 0.0
  %1436 = vmatpush1.msra.mxu0 %v1156
  %1437 = vmatprep.subr.mxu0 0.0
  %1438 = vmatpush1.msra.mxu0 %v1153
  %1439 = vmatprep.subr.mxu0 0.0
  %1440 = vmatpush1.msra.mxu0 %v1150
  %1441 = vmatprep.subr.mxu0 0.0
  %1442 = vmatpush1.msra.mxu0 %v1147
  %1443 = vmatprep.subr.mxu0 0.0
  %1444 = vmatpush1.msra.mxu0 %v1144
  %1445 = vmatprep.subr.mxu0 0.0
  %1446 = vmatpush1.msra.mxu0 %v1141
  %1447 = vmatprep.subr.mxu0 0.0
  %1448 = vmatpush1.msra.mxu0 %v1138
  %1449 = vmatprep.subr.mxu0 0.0
  %1450 = vmatpush2.msra.mxu0 %v1231
  %1451 = vmatprep.subr.mxu0 0.0
  %1452 = vmatpush2.msra.mxu0 %v1228
  %1453 = vmatprep.subr.mxu0 0.0
  %1454 = vmatpush2.msra.mxu0 %v1225
  %1455 = vmatprep.subr.mxu0 0.0
  %1456 = vmatpush2.msra.mxu0 %v1222
  %1457 = vmatprep.subr.mxu0 0.0
  %1458 = vmatpush2.msra.mxu0 %v1219
  %1459 = vmatprep.subr.mxu0 0.0
  %1460 = vmatpush2.msra.mxu0 %v1216
  %1461 = vmatprep.subr.mxu0 0.0
  %1462 = vmatpush2.msra.mxu0 %v1213
  %1463 = vmatprep.subr.mxu0 0.0
  %1464 = vmatpush2.msra.mxu0 %v1210
  %1465 = vmatprep.subr.mxu0 0.0
  %1466 = vmatpush2.msra.mxu0 %v1207
  %1467 = vmatprep.subr.mxu0 0.0
  %1468 = vmatpush2.msra.mxu0 %v1204
  %1469 = vmatprep.subr.mxu0 0.0
  %1470 = vmatpush2.msra.mxu0 %v1201
  %1471 = vmatprep.subr.mxu0 0.0
  %1472 = vmatpush2.msra.mxu0 %v1198
  %1473 = vmatprep.subr.mxu0 0.0
  %1474 = vmatpush2.msra.mxu0 %v1195
  %1475 = vmatprep.subr.mxu0 0.0
  %1476 = vmatpush2.msra.mxu0 %v1192
  %1477 = vmatprep.subr.mxu0 0.0
  %1478 = vmatpush2.msra.mxu0 %v1189
  %1479 = vmatprep.subr.mxu0 0.0
  %1480 = vmatpush2.msra.mxu0 %v1186
  %1481 = vmatprep.mubr.f32.mxu0 %v1053
  %1482 = vmatmul.mubr.f32.gmra.mxu0 %v1051
  %v1483 = vpop.f32.mrf.mxu0
  %v1484 = vadd.f32 0.0, %v1483
  %v1485 = vpop.f32.mrf.mxu0
  %1486 = vmatprep.mubr.f32.mxu0 %v1059
  %1487 = vmatmul.mubr.f32.gmra.mxu0 %v1057
  %v1488 = vpop.f32.mrf.mxu0
  %v1489 = vadd.f32 0.0, %v1488
  %v1490 = vpop.f32.mrf.mxu0
  %1491 = vdwg.mxu0
  %1492 = vmatprep.subr.mxu0 0.0
  %1493 = vmatpush1.msra.mxu0 0.0
  %1494 = vmatprep.subr.mxu0 0.0
  %1495 = vmatpush1.msra.mxu0 0.0
  %1496 = vmatprep.subr.mxu0 0.0
  %1497 = vmatpush1.msra.mxu0 0.0
  %1498 = vmatprep.subr.mxu0 0.0
  %1499 = vmatpush1.msra.mxu0 0.0
  %1500 = vmatprep.subr.mxu0 0.0
  %1501 = vmatpush1.msra.mxu0 0.0
  %1502 = vmatprep.subr.mxu0 0.0
  %1503 = vmatpush1.msra.mxu0 0.0
  %1504 = vmatprep.subr.mxu0 0.0
  %1505 = vmatpush1.msra.mxu0 0.0
  %1506 = vmatprep.subr.mxu0 0.0
  %1507 = vmatpush1.msra.mxu0 0.0
  %1508 = vmatprep.subr.mxu0 0.0
  %1509 = vmatpush1.msra.mxu0 %v1255
  %1510 = vmatprep.subr.mxu0 0.0
  %1511 = vmatpush1.msra.mxu0 %v1252
  %1512 = vmatprep.subr.mxu0 0.0
  %1513 = vmatpush1.msra.mxu0 %v1249
  %1514 = vmatprep.subr.mxu0 0.0
  %1515 = vmatpush1.msra.mxu0 %v1246
  %1516 = vmatprep.subr.mxu0 0.0
  %1517 = vmatpush1.msra.mxu0 %v1243
  %1518 = vmatprep.subr.mxu0 0.0
  %1519 = vmatpush1.msra.mxu0 %v1240
  %1520 = vmatprep.subr.mxu0 0.0
  %1521 = vmatpush1.msra.mxu0 %v1237
  %1522 = vmatprep.subr.mxu0 0.0
  %1523 = vmatpush1.msra.mxu0 %v1234
  %1524 = vmatprep.subr.mxu0 0.0
  %1525 = vmatpush2.msra.mxu0 0.0
  %1526 = vmatprep.subr.mxu0 0.0
  %1527 = vmatpush2.msra.mxu0 0.0
  %1528 = vmatprep.subr.mxu0 0.0
  %1529 = vmatpush2.msra.mxu0 0.0
  %1530 = vmatprep.subr.mxu0 0.0
  %1531 = vmatpush2.msra.mxu0 0.0
  %1532 = vmatprep.subr.mxu0 0.0
  %1533 = vmatpush2.msra.mxu0 0.0
  %1534 = vmatprep.subr.mxu0 0.0
  %1535 = vmatpush2.msra.mxu0 0.0
  %1536 = vmatprep.subr.mxu0 0.0
  %1537 = vmatpush2.msra.mxu0 0.0
  %1538 = vmatprep.subr.mxu0 0.0
  %1539 = vmatpush2.msra.mxu0 0.0
  %1540 = vmatprep.subr.mxu0 0.0
  %1541 = vmatpush2.msra.mxu0 0.0
  %1542 = vmatprep.subr.mxu0 0.0
  %1543 = vmatpush2.msra.mxu0 0.0
  %1544 = vmatprep.subr.mxu0 0.0
  %1545 = vmatpush2.msra.mxu0 0.0
  %1546 = vmatprep.subr.mxu0 0.0
  %1547 = vmatpush2.msra.mxu0 0.0
  %1548 = vmatprep.subr.mxu0 0.0
  %1549 = vmatpush2.msra.mxu0 0.0
  %1550 = vmatprep.subr.mxu0 0.0
  %1551 = vmatpush2.msra.mxu0 0.0
  %1552 = vmatprep.subr.mxu0 0.0
  %1553 = vmatpush2.msra.mxu0 0.0
  %1554 = vmatprep.subr.mxu0 0.0
  %1555 = vmatpush2.msra.mxu0 0.0
  %1556 = vmatprep.mubr.f32.mxu0 0.0
  %1557 = vmatmul.mubr.f32.gmra.mxu0 %v1258
  %v1558 = vpop.f32.mrf.mxu0
  %v1559 = vadd.f32 %v1484, %v1558
  %v1560 = vpop.f32.mrf.mxu0
  %1561 = vmatprep.mubr.f32.mxu0 0.0
  %1562 = vmatmul.mubr.f32.gmra.mxu0 %v1261
  %v1563 = vpop.f32.mrf.mxu0
  %v1564 = vadd.f32 %v1489, %v1563
  %v1565 = vpop.f32.mrf.mxu0
  %1566 = vdwg.mxu0
  %v1568 = vsel %vm1256, %v848, 0
  %v1571 = vsel %vm1256, %v853, 0
  %1573 = vmatprep.subr.mxu0 %v902
  %1574 = vmatpush1.msra.mxu0 %v901
  %1575 = vmatprep.subr.mxu0 %v899
  %1576 = vmatpush1.msra.mxu0 %v898
  %1577 = vmatprep.subr.mxu0 %v896
  %1578 = vmatpush1.msra.mxu0 %v895
  %1579 = vmatprep.subr.mxu0 %v893
  %1580 = vmatpush1.msra.mxu0 %v892
  %1581 = vmatprep.subr.mxu0 %v890
  %1582 = vmatpush1.msra.mxu0 %v889
  %1583 = vmatprep.subr.mxu0 %v887
  %1584 = vmatpush1.msra.mxu0 %v886
  %1585 = vmatprep.subr.mxu0 %v884
  %1586 = vmatpush1.msra.mxu0 %v883
  %1587 = vmatprep.subr.mxu0 %v881
  %1588 = vmatpush1.msra.mxu0 %v880
  %1589 = vmatprep.subr.mxu0 %v878
  %1590 = vmatpush1.msra.mxu0 %v877
  %1591 = vmatprep.subr.mxu0 %v875
  %1592 = vmatpush1.msra.mxu0 %v874
  %1593 = vmatprep.subr.mxu0 %v872
  %1594 = vmatpush1.msra.mxu0 %v871
  %1595 = vmatprep.subr.mxu0 %v869
  %1596 = vmatpush1.msra.mxu0 %v868
  %1597 = vmatprep.subr.mxu0 %v866
  %1598 = vmatpush1.msra.mxu0 %v865
  %1599 = vmatprep.subr.mxu0 %v863
  %1600 = vmatpush1.msra.mxu0 %v862
  %1601 = vmatprep.subr.mxu0 %v860
  %1602 = vmatpush1.msra.mxu0 %v859
  %1603 = vmatprep.subr.mxu0 %v857
  %1604 = vmatpush1.msra.mxu0 %v856
  %1605 = vmatprep.subr.mxu0 %v950
  %1606 = vmatpush2.msra.mxu0 %v949
  %1607 = vmatprep.subr.mxu0 %v947
  %1608 = vmatpush2.msra.mxu0 %v946
  %1609 = vmatprep.subr.mxu0 %v944
  %1610 = vmatpush2.msra.mxu0 %v943
  %1611 = vmatprep.subr.mxu0 %v941
  %1612 = vmatpush2.msra.mxu0 %v940
  %1613 = vmatprep.subr.mxu0 %v938
  %1614 = vmatpush2.msra.mxu0 %v937
  %1615 = vmatprep.subr.mxu0 %v935
  %1616 = vmatpush2.msra.mxu0 %v934
  %1617 = vmatprep.subr.mxu0 %v932
  %1618 = vmatpush2.msra.mxu0 %v931
  %1619 = vmatprep.subr.mxu0 %v929
  %1620 = vmatpush2.msra.mxu0 %v928
  %1621 = vmatprep.subr.mxu0 %v926
  %1622 = vmatpush2.msra.mxu0 %v925
  %1623 = vmatprep.subr.mxu0 %v923
  %1624 = vmatpush2.msra.mxu0 %v922
  %1625 = vmatprep.subr.mxu0 %v920
  %1626 = vmatpush2.msra.mxu0 %v919
  %1627 = vmatprep.subr.mxu0 %v917
  %1628 = vmatpush2.msra.mxu0 %v916
  %1629 = vmatprep.subr.mxu0 %v914
  %1630 = vmatpush2.msra.mxu0 %v913
  %1631 = vmatprep.subr.mxu0 %v911
  %1632 = vmatpush2.msra.mxu0 %v910
  %1633 = vmatprep.subr.mxu0 %v908
  %1634 = vmatpush2.msra.mxu0 %v907
  %1635 = vmatprep.subr.mxu0 %v905
  %1636 = vmatpush2.msra.mxu0 %v904
  %1637 = vmatprep.mubr.f32.mxu0 %v773
  %1638 = vmatmul.mubr.f32.gmra.mxu0 %v771
  %v1639 = vpop.f32.mrf.mxu0
  %v1640 = vadd.f32 %v1407, %v1639
  %v1641 = vpop.f32.mrf.mxu0
  %v1642 = vadd.f32 %v1409, %v1641
  %1643 = vmatprep.mubr.f32.mxu0 %v779
  %1644 = vmatmul.mubr.f32.gmra.mxu0 %v777
  %v1645 = vpop.f32.mrf.mxu0
  %v1646 = vadd.f32 %v1413, %v1645
  %v1647 = vpop.f32.mrf.mxu0
  %v1648 = vadd.f32 %v1415, %v1647
  %1649 = vdwg.mxu0
  %1650 = vmatprep.subr.mxu0 0.0
  %1651 = vmatpush1.msra.mxu0 0.0
  %1652 = vmatprep.subr.mxu0 0.0
  %1653 = vmatpush1.msra.mxu0 0.0
  %1654 = vmatprep.subr.mxu0 0.0
  %1655 = vmatpush1.msra.mxu0 0.0
  %1656 = vmatprep.subr.mxu0 0.0
  %1657 = vmatpush1.msra.mxu0 0.0
  %1658 = vmatprep.subr.mxu0 0.0
  %1659 = vmatpush1.msra.mxu0 0.0
  %1660 = vmatprep.subr.mxu0 0.0
  %1661 = vmatpush1.msra.mxu0 0.0
  %1662 = vmatprep.subr.mxu0 0.0
  %1663 = vmatpush1.msra.mxu0 0.0
  %1664 = vmatprep.subr.mxu0 0.0
  %1665 = vmatpush1.msra.mxu0 0.0
  %1666 = vmatprep.subr.mxu0 %v974
  %1667 = vmatpush1.msra.mxu0 %v973
  %1668 = vmatprep.subr.mxu0 %v971
  %1669 = vmatpush1.msra.mxu0 %v970
  %1670 = vmatprep.subr.mxu0 %v968
  %1671 = vmatpush1.msra.mxu0 %v967
  %1672 = vmatprep.subr.mxu0 %v965
  %1673 = vmatpush1.msra.mxu0 %v964
  %1674 = vmatprep.subr.mxu0 %v962
  %1675 = vmatpush1.msra.mxu0 %v961
  %1676 = vmatprep.subr.mxu0 %v959
  %1677 = vmatpush1.msra.mxu0 %v958
  %1678 = vmatprep.subr.mxu0 %v956
  %1679 = vmatpush1.msra.mxu0 %v955
  %1680 = vmatprep.subr.mxu0 %v953
  %1681 = vmatpush1.msra.mxu0 %v952
  %1682 = vmatprep.subr.mxu0 0.0
  %1683 = vmatpush2.msra.mxu0 0.0
  %1684 = vmatprep.subr.mxu0 0.0
  %1685 = vmatpush2.msra.mxu0 0.0
  %1686 = vmatprep.subr.mxu0 0.0
  %1687 = vmatpush2.msra.mxu0 0.0
  %1688 = vmatprep.subr.mxu0 0.0
  %1689 = vmatpush2.msra.mxu0 0.0
  %1690 = vmatprep.subr.mxu0 0.0
  %1691 = vmatpush2.msra.mxu0 0.0
  %1692 = vmatprep.subr.mxu0 0.0
  %1693 = vmatpush2.msra.mxu0 0.0
  %1694 = vmatprep.subr.mxu0 0.0
  %1695 = vmatpush2.msra.mxu0 0.0
  %1696 = vmatprep.subr.mxu0 0.0
  %1697 = vmatpush2.msra.mxu0 0.0
  %1698 = vmatprep.subr.mxu0 0.0
  %1699 = vmatpush2.msra.mxu0 0.0
  %1700 = vmatprep.subr.mxu0 0.0
  %1701 = vmatpush2.msra.mxu0 0.0
  %1702 = vmatprep.subr.mxu0 0.0
  %1703 = vmatpush2.msra.mxu0 0.0
  %1704 = vmatprep.subr.mxu0 0.0
  %1705 = vmatpush2.msra.mxu0 0.0
  %1706 = vmatprep.subr.mxu0 0.0
  %1707 = vmatpush2.msra.mxu0 0.0
  %1708 = vmatprep.subr.mxu0 0.0
  %1709 = vmatpush2.msra.mxu0 0.0
  %1710 = vmatprep.subr.mxu0 0.0
  %1711 = vmatpush2.msra.mxu0 0.0
  %1712 = vmatprep.subr.mxu0 0.0
  %1713 = vmatpush2.msra.mxu0 0.0
  %1714 = vmatprep.mubr.f32.mxu0 0.0
  %1715 = vmatmul.mubr.f32.gmra.mxu0 %v1568
  %v1716 = vpop.f32.mrf.mxu0
  %v1717 = vadd.f32 %v1640, %v1716
  %v1718 = vpop.f32.mrf.mxu0
  %v1719 = vadd.f32 %v1642, %v1718
  %1720 = vmatprep.mubr.f32.mxu0 0.0
  %1721 = vmatmul.mubr.f32.gmra.mxu0 %v1571
  %v1722 = vpop.f32.mrf.mxu0
  %v1723 = vadd.f32 %v1646, %v1722
  %v1724 = vpop.f32.mrf.mxu0
  %v1725 = vadd.f32 %v1648, %v1724
  %1726 = vdwg.mxu0
  %1727 = vmatprep.subr.mxu0 0.0
  %1728 = vmatpush1.msra.mxu0 %v903
  %1729 = vmatprep.subr.mxu0 0.0
  %1730 = vmatpush1.msra.mxu0 %v900
  %1731 = vmatprep.subr.mxu0 0.0
  %1732 = vmatpush1.msra.mxu0 %v897
  %1733 = vmatprep.subr.mxu0 0.0
  %1734 = vmatpush1.msra.mxu0 %v894
  %1735 = vmatprep.subr.mxu0 0.0
  %1736 = vmatpush1.msra.mxu0 %v891
  %1737 = vmatprep.subr.mxu0 0.0
  %1738 = vmatpush1.msra.mxu0 %v888
  %1739 = vmatprep.subr.mxu0 0.0
  %1740 = vmatpush1.msra.mxu0 %v885
  %1741 = vmatprep.subr.mxu0 0.0
  %1742 = vmatpush1.msra.mxu0 %v882
  %1743 = vmatprep.subr.mxu0 0.0
  %1744 = vmatpush1.msra.mxu0 %v879
  %1745 = vmatprep.subr.mxu0 0.0
  %1746 = vmatpush1.msra.mxu0 %v876
  %1747 = vmatprep.subr.mxu0 0.0
  %1748 = vmatpush1.msra.mxu0 %v873
  %1749 = vmatprep.subr.mxu0 0.0
  %1750 = vmatpush1.msra.mxu0 %v870
  %1751 = vmatprep.subr.mxu0 0.0
  %1752 = vmatpush1.msra.mxu0 %v867
  %1753 = vmatprep.subr.mxu0 0.0
  %1754 = vmatpush1.msra.mxu0 %v864
  %1755 = vmatprep.subr.mxu0 0.0
  %1756 = vmatpush1.msra.mxu0 %v861
  %1757 = vmatprep.subr.mxu0 0.0
  %1758 = vmatpush1.msra.mxu0 %v858
  %1759 = vmatprep.subr.mxu0 0.0
  %1760 = vmatpush2.msra.mxu0 %v951
  %1761 = vmatprep.subr.mxu0 0.0
  %1762 = vmatpush2.msra.mxu0 %v948
  %1763 = vmatprep.subr.mxu0 0.0
  %1764 = vmatpush2.msra.mxu0 %v945
  %1765 = vmatprep.subr.mxu0 0.0
  %1766 = vmatpush2.msra.mxu0 %v942
  %1767 = vmatprep.subr.mxu0 0.0
  %1768 = vmatpush2.msra.mxu0 %v939
  %1769 = vmatprep.subr.mxu0 0.0
  %1770 = vmatpush2.msra.mxu0 %v936
  %1771 = vmatprep.subr.mxu0 0.0
  %1772 = vmatpush2.msra.mxu0 %v933
  %1773 = vmatprep.subr.mxu0 0.0
  %1774 = vmatpush2.msra.mxu0 %v930
  %1775 = vmatprep.subr.mxu0 0.0
  %1776 = vmatpush2.msra.mxu0 %v927
  %1777 = vmatprep.subr.mxu0 0.0
  %1778 = vmatpush2.msra.mxu0 %v924
  %1779 = vmatprep.subr.mxu0 0.0
  %1780 = vmatpush2.msra.mxu0 %v921
  %1781 = vmatprep.subr.mxu0 0.0
  %1782 = vmatpush2.msra.mxu0 %v918
  %1783 = vmatprep.subr.mxu0 0.0
  %1784 = vmatpush2.msra.mxu0 %v915
  %1785 = vmatprep.subr.mxu0 0.0
  %1786 = vmatpush2.msra.mxu0 %v912
  %1787 = vmatprep.subr.mxu0 0.0
  %1788 = vmatpush2.msra.mxu0 %v909
  %1789 = vmatprep.subr.mxu0 0.0
  %1790 = vmatpush2.msra.mxu0 %v906
  %1791 = vmatprep.mubr.f32.mxu0 %v773
  %1792 = vmatmul.mubr.f32.gmra.mxu0 %v771
  %v1793 = vpop.f32.mrf.mxu0
  %v1794 = vadd.f32 %v1559, %v1793
  %v1795 = vpop.f32.mrf.mxu0
  %1796 = vmatprep.mubr.f32.mxu0 %v779
  %1797 = vmatmul.mubr.f32.gmra.mxu0 %v777
  %v1798 = vpop.f32.mrf.mxu0
  %v1799 = vadd.f32 %v1564, %v1798
  %v1800 = vpop.f32.mrf.mxu0
  %1801 = vdwg.mxu0
  %1802 = vmatprep.subr.mxu0 0.0
  %1803 = vmatpush1.msra.mxu0 0.0
  %1804 = vmatprep.subr.mxu0 0.0
  %1805 = vmatpush1.msra.mxu0 0.0
  %1806 = vmatprep.subr.mxu0 0.0
  %1807 = vmatpush1.msra.mxu0 0.0
  %1808 = vmatprep.subr.mxu0 0.0
  %1809 = vmatpush1.msra.mxu0 0.0
  %1810 = vmatprep.subr.mxu0 0.0
  %1811 = vmatpush1.msra.mxu0 0.0
  %1812 = vmatprep.subr.mxu0 0.0
  %1813 = vmatpush1.msra.mxu0 0.0
  %1814 = vmatprep.subr.mxu0 0.0
  %1815 = vmatpush1.msra.mxu0 0.0
  %1816 = vmatprep.subr.mxu0 0.0
  %1817 = vmatpush1.msra.mxu0 0.0
  %1818 = vmatprep.subr.mxu0 0.0
  %1819 = vmatpush1.msra.mxu0 %v975
  %1820 = vmatprep.subr.mxu0 0.0
  %1821 = vmatpush1.msra.mxu0 %v972
  %1822 = vmatprep.subr.mxu0 0.0
  %1823 = vmatpush1.msra.mxu0 %v969
  %1824 = vmatprep.subr.mxu0 0.0
  %1825 = vmatpush1.msra.mxu0 %v966
  %1826 = vmatprep.subr.mxu0 0.0
  %1827 = vmatpush1.msra.mxu0 %v963
  %1828 = vmatprep.subr.mxu0 0.0
  %1829 = vmatpush1.msra.mxu0 %v960
  %1830 = vmatprep.subr.mxu0 0.0
  %1831 = vmatpush1.msra.mxu0 %v957
  %1832 = vmatprep.subr.mxu0 0.0
  %1833 = vmatpush1.msra.mxu0 %v954
  %1834 = vmatprep.subr.mxu0 0.0
  %1835 = vmatpush2.msra.mxu0 0.0
  %1836 = vmatprep.subr.mxu0 0.0
  %1837 = vmatpush2.msra.mxu0 0.0
  %1838 = vmatprep.subr.mxu0 0.0
  %1839 = vmatpush2.msra.mxu0 0.0
  %1840 = vmatprep.subr.mxu0 0.0
  %1841 = vmatpush2.msra.mxu0 0.0
  %1842 = vmatprep.subr.mxu0 0.0
  %1843 = vmatpush2.msra.mxu0 0.0
  %1844 = vmatprep.subr.mxu0 0.0
  %1845 = vmatpush2.msra.mxu0 0.0
  %1846 = vmatprep.subr.mxu0 0.0
  %1847 = vmatpush2.msra.mxu0 0.0
  %1848 = vmatprep.subr.mxu0 0.0
  %1849 = vmatpush2.msra.mxu0 0.0
  %1850 = vmatprep.subr.mxu0 0.0
  %1851 = vmatpush2.msra.mxu0 0.0
  %1852 = vmatprep.subr.mxu0 0.0
  %1853 = vmatpush2.msra.mxu0 0.0
  %1854 = vmatprep.subr.mxu0 0.0
  %1855 = vmatpush2.msra.mxu0 0.0
  %1856 = vmatprep.subr.mxu0 0.0
  %1857 = vmatpush2.msra.mxu0 0.0
  %1858 = vmatprep.subr.mxu0 0.0
  %1859 = vmatpush2.msra.mxu0 0.0
  %1860 = vmatprep.subr.mxu0 0.0
  %1861 = vmatpush2.msra.mxu0 0.0
  %1862 = vmatprep.subr.mxu0 0.0
  %1863 = vmatpush2.msra.mxu0 0.0
  %1864 = vmatprep.subr.mxu0 0.0
  %1865 = vmatpush2.msra.mxu0 0.0
  %1866 = vmatprep.mubr.f32.mxu0 0.0
  %1867 = vmatmul.mubr.f32.gmra.mxu0 %v1568
  %v1868 = vpop.f32.mrf.mxu0
  %v1869 = vadd.f32 %v1794, %v1868
  %v1870 = vpop.f32.mrf.mxu0
  %1871 = vmatprep.mubr.f32.mxu0 0.0
  %1872 = vmatmul.mubr.f32.gmra.mxu0 %v1571
  %v1873 = vpop.f32.mrf.mxu0
  %v1874 = vadd.f32 %v1799, %v1873
  %v1875 = vpop.f32.mrf.mxu0
  %1876 = vdwg.mxu0
  %s1877 = scalar_lea.vmem %s4, 1
  %v1878 = vld [vmem:[%s1877] ss:$8 sm:$0x7]
  %v1880 = vlaneseq
  %v1881 = vshrl.u32 %v1880, 7
  %v1882 = vsub.s32 0, %v1881
  %v1883 = vrot.slane %v1878, %v1882
  %v1884 = vlaneseq
  %v1885 = vshrl.u32 %v1884, 7
  %v1886 = vsub.s32 1, %v1885
  %v1887 = vrot.slane %v1878, %v1886
  %v1888 = vlaneseq
  %v1889 = vshrl.u32 %v1888, 7
  %v1890 = vsub.s32 2, %v1889
  %v1891 = vrot.slane %v1878, %v1890
  %v1895 = vadd.f32 %v1717, %v1883
  %v1896 = vadd.f32 %v1719, %v1887
  %v1897 = vadd.f32 %v1869, %v1891
  %v1898 = vadd.f32 %v1723, %v1883
  %v1899 = vadd.f32 %v1725, %v1887
  %v1900 = vadd.f32 %v1874, %v1891
  %v1901 = vmax.f32 %v1895, 0.0
  %v1902 = vmax.f32 %v1896, 0.0
  %v1903 = vmax.f32 %v1897, 0.0
  %v1904 = vmax.f32 %v1898, 0.0
  %v1905 = vmax.f32 %v1899, 0.0
  %v1906 = vmax.f32 %v1900, 0.0
  %v1907 = vld [vmem:[%s2 + $0x50] sm:$0x3f]
  %vm1908 = vcmask 80896
  %v1910 = vsel %vm1908, %v1907, 0
  %v1913 = vsel %vm694, %v1904, 0
  %v1916 = vsel %vm694, %v1905, 0
  %v1919 = vsel %vm694, %v1906, 0
  %1921 = vmatprep.subr.mxu0 0.0
  %1922 = vmatpush1.msra.mxu0 0.0
  %1923 = vmatprep.subr.mxu0 0.0
  %1924 = vmatpush1.msra.mxu0 0.0
  %1925 = vmatprep.subr.mxu0 0.0
  %1926 = vmatpush1.msra.mxu0 0.0
  %1927 = vmatprep.subr.mxu0 0.0
  %1928 = vmatpush1.msra.mxu0 0.0
  %1929 = vmatprep.subr.mxu0 0.0
  %1930 = vmatpush1.msra.mxu0 0.0
  %1931 = vmatprep.subr.mxu0 0.0
  %1932 = vmatpush1.msra.mxu0 0.0
  %1933 = vmatprep.subr.mxu0 0.0
  %1934 = vmatpush1.msra.mxu0 0.0
  %1935 = vmatprep.subr.mxu0 0.0
  %1936 = vmatpush1.msra.mxu0 0.0
  %1937 = vmatprep.subr.mxu0 0.0
  %1938 = vmatpush1.msra.mxu0 0.0
  %1939 = vmatprep.subr.mxu0 0.0
  %1940 = vmatpush1.msra.mxu0 0.0
  %1941 = vmatprep.subr.mxu0 0.0
  %1942 = vmatpush1.msra.mxu0 0.0
  %1943 = vmatprep.subr.mxu0 0.0
  %1944 = vmatpush1.msra.mxu0 0.0
  %1945 = vmatprep.subr.mxu0 0.0
  %1946 = vmatpush1.msra.mxu0 0.0
  %1947 = vmatprep.subr.mxu0 0.0
  %1948 = vmatpush1.msra.mxu0 0.0
  %1949 = vmatprep.subr.mxu0 %v1916
  %1950 = vmatpush1.msra.mxu0 %v1913
  %1951 = vmatprep.subr.mxu0 %v1902
  %1952 = vmatpush1.msra.mxu0 %v1901
  %1953 = vmatprep.subr.mxu0 0.0
  %1954 = vmatpush2.msra.mxu0 0.0
  %1955 = vmatprep.subr.mxu0 0.0
  %1956 = vmatpush2.msra.mxu0 0.0
  %1957 = vmatprep.subr.mxu0 0.0
  %1958 = vmatpush2.msra.mxu0 0.0
  %1959 = vmatprep.subr.mxu0 0.0
  %1960 = vmatpush2.msra.mxu0 0.0
  %1961 = vmatprep.subr.mxu0 0.0
  %1962 = vmatpush2.msra.mxu0 0.0
  %1963 = vmatprep.subr.mxu0 0.0
  %1964 = vmatpush2.msra.mxu0 0.0
  %1965 = vmatprep.subr.mxu0 0.0
  %1966 = vmatpush2.msra.mxu0 0.0
  %1967 = vmatprep.subr.mxu0 0.0
  %1968 = vmatpush2.msra.mxu0 0.0
  %1969 = vmatprep.subr.mxu0 0.0
  %1970 = vmatpush2.msra.mxu0 0.0
  %1971 = vmatprep.subr.mxu0 0.0
  %1972 = vmatpush2.msra.mxu0 0.0
  %1973 = vmatprep.subr.mxu0 0.0
  %1974 = vmatpush2.msra.mxu0 0.0
  %1975 = vmatprep.subr.mxu0 0.0
  %1976 = vmatpush2.msra.mxu0 0.0
  %1977 = vmatprep.subr.mxu0 0.0
  %1978 = vmatpush2.msra.mxu0 0.0
  %1979 = vmatprep.subr.mxu0 0.0
  %1980 = vmatpush2.msra.mxu0 0.0
  %1981 = vmatprep.subr.mxu0 0.0
  %1982 = vmatpush2.msra.mxu0 0.0
  %1983 = vmatprep.subr.mxu0 0.0
  %1984 = vmatpush2.msra.mxu0 0.0
  %1985 = vmatprep.mubr.f32.mxu0 0.0
  %1986 = vmatmul.mubr.f32.gmra.mxu0 %v1910
  %v1987 = vpop.f32.mrf.mxu0
  %v1988 = vadd.f32 0.0, %v1987
  %v1989 = vpop.f32.mrf.mxu0
  %v1990 = vadd.f32 0.0, %v1989
  %1991 = vdwg.mxu0
  %1992 = vmatprep.subr.mxu0 0.0
  %1993 = vmatpush1.msra.mxu0 0.0
  %1994 = vmatprep.subr.mxu0 0.0
  %1995 = vmatpush1.msra.mxu0 0.0
  %1996 = vmatprep.subr.mxu0 0.0
  %1997 = vmatpush1.msra.mxu0 0.0
  %1998 = vmatprep.subr.mxu0 0.0
  %1999 = vmatpush1.msra.mxu0 0.0
  %2000 = vmatprep.subr.mxu0 0.0
  %2001 = vmatpush1.msra.mxu0 0.0
  %2002 = vmatprep.subr.mxu0 0.0
  %2003 = vmatpush1.msra.mxu0 0.0
  %2004 = vmatprep.subr.mxu0 0.0
  %2005 = vmatpush1.msra.mxu0 0.0
  %2006 = vmatprep.subr.mxu0 0.0
  %2007 = vmatpush1.msra.mxu0 0.0
  %2008 = vmatprep.subr.mxu0 0.0
  %2009 = vmatpush1.msra.mxu0 0.0
  %2010 = vmatprep.subr.mxu0 0.0
  %2011 = vmatpush1.msra.mxu0 0.0
  %2012 = vmatprep.subr.mxu0 0.0
  %2013 = vmatpush1.msra.mxu0 0.0
  %2014 = vmatprep.subr.mxu0 0.0
  %2015 = vmatpush1.msra.mxu0 0.0
  %2016 = vmatprep.subr.mxu0 0.0
  %2017 = vmatpush1.msra.mxu0 0.0
  %2018 = vmatprep.subr.mxu0 0.0
  %2019 = vmatpush1.msra.mxu0 0.0
  %2020 = vmatprep.subr.mxu0 0.0
  %2021 = vmatpush1.msra.mxu0 %v1919
  %2022 = vmatprep.subr.mxu0 0.0
  %2023 = vmatpush1.msra.mxu0 %v1903
  %2024 = vmatprep.subr.mxu0 0.0
  %2025 = vmatpush2.msra.mxu0 0.0
  %2026 = vmatprep.subr.mxu0 0.0
  %2027 = vmatpush2.msra.mxu0 0.0
  %2028 = vmatprep.subr.mxu0 0.0
  %2029 = vmatpush2.msra.mxu0 0.0
  %2030 = vmatprep.subr.mxu0 0.0
  %2031 = vmatpush2.msra.mxu0 0.0
  %2032 = vmatprep.subr.mxu0 0.0
  %2033 = vmatpush2.msra.mxu0 0.0
  %2034 = vmatprep.subr.mxu0 0.0
  %2035 = vmatpush2.msra.mxu0 0.0
  %2036 = vmatprep.subr.mxu0 0.0
  %2037 = vmatpush2.msra.mxu0 0.0
  %2038 = vmatprep.subr.mxu0 0.0
  %2039 = vmatpush2.msra.mxu0 0.0
  %2040 = vmatprep.subr.mxu0 0.0
  %2041 = vmatpush2.msra.mxu0 0.0
  %2042 = vmatprep.subr.mxu0 0.0
  %2043 = vmatpush2.msra.mxu0 0.0
  %2044 = vmatprep.subr.mxu0 0.0
  %2045 = vmatpush2.msra.mxu0 0.0
  %2046 = vmatprep.subr.mxu0 0.0
  %2047 = vmatpush2.msra.mxu0 0.0
  %2048 = vmatprep.subr.mxu0 0.0
  %2049 = vmatpush2.msra.mxu0 0.0
  %2050 = vmatprep.subr.mxu0 0.0
  %2051 = vmatpush2.msra.mxu0 0.0
  %2052 = vmatprep.subr.mxu0 0.0
  %2053 = vmatpush2.msra.mxu0 0.0
  %2054 = vmatprep.subr.mxu0 0.0
  %2055 = vmatpush2.msra.mxu0 0.0
  %2056 = vmatprep.mubr.f32.mxu0 0.0
  %2057 = vmatmul.mubr.f32.gmra.mxu0 %v1910
  %v2058 = vpop.f32.mrf.mxu0
  %v2059 = vadd.f32 0.0, %v2058
  %v2060 = vpop.f32.mrf.mxu0
  %2061 = vdwg.mxu0
  %v2062 = vld [vmem:[%s3 + $0xa50] sm:$0xff]
  %v2063 = vld [vmem:[%s3 + $0xa58] sm:$0xff]
  %v2064 = vld [vmem:[%s3 + $0xa60] sm:$0xff]
  %v2065 = vld [vmem:[%s3 + $0xa68] sm:$0xff]
  %v2066 = vld [vmem:[%s3 + $0xa70] sm:$0xff]
  %v2067 = vld [vmem:[%s3 + $0xa78] sm:$0xff]
  %v2068 = vld [vmem:[%s3 + $0xa80] sm:$0xff]
  %v2069 = vld [vmem:[%s3 + $0xa88] sm:$0xff]
  %v2070 = vld [vmem:[%s3 + $0xa90] sm:$0xff]
  %v2071 = vld [vmem:[%s3 + $0xa98] sm:$0xff]
  %v2072 = vld [vmem:[%s3 + $0xaa0] sm:$0xff]
  %v2073 = vld [vmem:[%s3 + $0xaa8] sm:$0xff]
  %v2074 = vld [vmem:[%s3 + $0xab0] sm:$0xff]
  %v2075 = vld [vmem:[%s3 + $0xab8] sm:$0xff]
  %v2076 = vld [vmem:[%s3 + $0xac0] sm:$0xff]
  %v2077 = vld [vmem:[%s3 + $0xac8] sm:$0xff]
  %v2078 = vld [vmem:[%s3 + $0xad0] sm:$0xff]
  %v2079 = vld [vmem:[%s3 + $0xad8] sm:$0xff]
  %v2080 = vld [vmem:[%s3 + $0xae0] sm:$0xff]
  %v2081 = vld [vmem:[%s3 + $0xae8] sm:$0xff]
  %v2082 = vld [vmem:[%s3 + $0xaf0] sm:$0xff]
  %v2083 = vld [vmem:[%s3 + $0xaf8] sm:$0xff]
  %v2084 = vld [vmem:[%s3 + $0xb00] sm:$0xff]
  %v2085 = vld [vmem:[%s3 + $0xb08] sm:$0xff]
  %v2086 = vld [vmem:[%s3 + $0xb10] sm:$0xff]
  %v2087 = vld [vmem:[%s3 + $0xb18] sm:$0xff]
  %v2088 = vld [vmem:[%s3 + $0xb20] sm:$0xff]
  %v2089 = vld [vmem:[%s3 + $0xb28] sm:$0xff]
  %v2090 = vld [vmem:[%s3 + $0xb30] sm:$0xff]
  %v2091 = vld [vmem:[%s3 + $0xb38] sm:$0xff]
  %v2092 = vld [vmem:[%s3 + $0xb40] sm:$0xff]
  %v2093 = vld [vmem:[%s3 + $0xb48] sm:$0xff]
  %v2094 = vld [vmem:[%s3 + $0xb50] sm:$0xff]
  %v2095 = vld [vmem:[%s3 + $0xb58] sm:$0xff]
  %v2096 = vld [vmem:[%s3 + $0xb60] sm:$0xff]
  %v2097 = vld [vmem:[%s3 + $0xb68] sm:$0xff]
  %v2098 = vld [vmem:[%s3 + $0xb70] sm:$0xff]
  %v2099 = vld [vmem:[%s3 + $0xb78] sm:$0xff]
  %v2100 = vld [vmem:[%s3 + $0xb80] sm:$0xff]
  %v2101 = vld [vmem:[%s3 + $0xb88] sm:$0xff]
  %v2102 = vld [vmem:[%s3 + $0xb90] sm:$0xff]
  %v2103 = vld [vmem:[%s3 + $0xb98] sm:$0xff]
  %v2104 = vld [vmem:[%s3 + $0xba0] sm:$0xff]
  %v2105 = vld [vmem:[%s3 + $0xba8] sm:$0xff]
  %v2106 = vld [vmem:[%s3 + $0xbb0] sm:$0xff]
  %v2107 = vld [vmem:[%s3 + $0xbb8] sm:$0xff]
  %v2108 = vld [vmem:[%s3 + $0xbc0] sm:$0xff]
  %v2109 = vld [vmem:[%s3 + $0xbc8] sm:$0xff]
  %v2110 = vld [vmem:[%s3 + $0xbd0] sm:$0xff]
  %v2111 = vld [vmem:[%s3 + $0xbd8] sm:$0xff]
  %v2112 = vld [vmem:[%s3 + $0xbe0] sm:$0xff]
  %v2113 = vld [vmem:[%s3 + $0xbe8] sm:$0xff]
  %v2114 = vld [vmem:[%s3 + $0xbf0] sm:$0xff]
  %v2115 = vld [vmem:[%s3 + $0xbf8] sm:$0xff]
  %v2116 = vld [vmem:[%s3 + $0xc00] sm:$0xff]
  %v2117 = vld [vmem:[%s3 + $0xc08] sm:$0xff]
  %v2118 = vld [vmem:[%s3 + $0xc10] sm:$0xff]
  %v2119 = vld [vmem:[%s3 + $0xc18] sm:$0xff]
  %v2120 = vld [vmem:[%s3 + $0xc20] sm:$0xff]
  %v2121 = vld [vmem:[%s3 + $0xc28] sm:$0xff]
  %v2122 = vld [vmem:[%s3 + $0xc30] sm:$0xff]
  %v2123 = vld [vmem:[%s3 + $0xc38] sm:$0xff]
  %v2124 = vld [vmem:[%s3 + $0xc40] sm:$0xff]
  %v2125 = vld [vmem:[%s3 + $0xc48] sm:$0xff]
  %v2126 = vld [vmem:[%s3 + $0xc50] sm:$0xff]
  %v2127 = vld [vmem:[%s3 + $0xc58] sm:$0xff]
  %v2128 = vld [vmem:[%s3 + $0xc60] sm:$0xff]
  %v2129 = vld [vmem:[%s3 + $0xc68] sm:$0xff]
  %v2130 = vld [vmem:[%s3 + $0xc70] sm:$0xff]
  %v2131 = vld [vmem:[%s3 + $0xc78] sm:$0xff]
  %v2132 = vld [vmem:[%s3 + $0xc80] sm:$0xff]
  %v2133 = vld [vmem:[%s3 + $0xc88] sm:$0xff]
  %v2134 = vld [vmem:[%s3 + $0xc90] sm:$0xff]
  %v2135 = vld [vmem:[%s3 + $0xc98] sm:$0xff]
  %v2136 = vld [vmem:[%s3 + $0xca0] sm:$0xff]
  %v2137 = vld [vmem:[%s3 + $0xca8] sm:$0xff]
  %v2138 = vld [vmem:[%s3 + $0xcb0] sm:$0xff]
  %v2139 = vld [vmem:[%s3 + $0xcb8] sm:$0xff]
  %v2140 = vld [vmem:[%s3 + $0xcc0] sm:$0xff]
  %v2141 = vld [vmem:[%s3 + $0xcc8] sm:$0xff]
  %v2142 = vld [vmem:[%s3 + $0xcd0] sm:$0xff]
  %v2143 = vld [vmem:[%s3 + $0xcd8] sm:$0xff]
  %v2144 = vld [vmem:[%s3 + $0xce0] sm:$0xff]
  %v2145 = vld [vmem:[%s3 + $0xce8] sm:$0xff]
  %v2146 = vld [vmem:[%s3 + $0xcf0] sm:$0xff]
  %v2147 = vld [vmem:[%s3 + $0xcf8] sm:$0xff]
  %v2148 = vld [vmem:[%s3 + $0xd00] sm:$0xff]
  %v2149 = vld [vmem:[%s3 + $0xd08] sm:$0xff]
  %v2150 = vld [vmem:[%s3 + $0xd10] sm:$0xff]
  %v2151 = vld [vmem:[%s3 + $0xd18] sm:$0xff]
  %v2152 = vld [vmem:[%s3 + $0xd20] sm:$0xff]
  %v2153 = vld [vmem:[%s3 + $0xd28] sm:$0xff]
  %v2154 = vld [vmem:[%s3 + $0xd30] sm:$0xff]
  %v2155 = vld [vmem:[%s3 + $0xd38] sm:$0xff]
  %v2156 = vld [vmem:[%s3 + $0xd40] sm:$0xff]
  %v2157 = vld [vmem:[%s3 + $0xd48] sm:$0xff]
  %v2158 = vld [vmem:[%s3 + $0xd50] sm:$0xff]
  %v2159 = vld [vmem:[%s3 + $0xd58] sm:$0xff]
  %v2160 = vld [vmem:[%s3 + $0xd60] sm:$0xff]
  %v2161 = vld [vmem:[%s3 + $0xd68] sm:$0xff]
  %v2162 = vld [vmem:[%s3 + $0xd70] sm:$0xff]
  %v2163 = vld [vmem:[%s3 + $0xd78] sm:$0xff]
  %v2164 = vld [vmem:[%s3 + $0xd80] sm:$0xff]
  %v2165 = vld [vmem:[%s3 + $0xd88] sm:$0xff]
  %v2166 = vld [vmem:[%s3 + $0xd90] sm:$0xff]
  %v2167 = vld [vmem:[%s3 + $0xd98] sm:$0xff]
  %v2168 = vld [vmem:[%s3 + $0xda0] sm:$0xff]
  %v2169 = vld [vmem:[%s3 + $0xda8] sm:$0xff]
  %v2170 = vld [vmem:[%s3 + $0xdb0] sm:$0xff]
  %v2171 = vld [vmem:[%s3 + $0xdb8] sm:$0xff]
  %v2172 = vld [vmem:[%s3 + $0xdc0] sm:$0xff]
  %v2173 = vld [vmem:[%s3 + $0xdc8] sm:$0xff]
  %v2174 = vld [vmem:[%s3 + $0xdd0] sm:$0xff]
  %v2175 = vld [vmem:[%s3 + $0xdd8] sm:$0xff]
  %v2176 = vld [vmem:[%s3 + $0xde0] sm:$0xff]
  %v2177 = vld [vmem:[%s3 + $0xde8] sm:$0xff]
  %v2178 = vld [vmem:[%s3 + $0xdf0] sm:$0xff]
  %v2179 = vld [vmem:[%s3 + $0xdf8] sm:$0xff]
  %v2180 = vld [vmem:[%s3 + $0xe00] sm:$0xff]
  %v2181 = vld [vmem:[%s3 + $0xe08] sm:$0xff]
  %v2182 = vld [vmem:[%s2 + $0x58] sm:$0x3f]
  %v2184 = vsel %vm1908, %v2182, 0
  %2186 = vmatprep.subr.mxu0 0.0
  %2187 = vmatpush1.msra.mxu0 0.0
  %2188 = vmatprep.subr.mxu0 0.0
  %2189 = vmatpush1.msra.mxu0 0.0
  %2190 = vmatprep.subr.mxu0 0.0
  %2191 = vmatpush1.msra.mxu0 0.0
  %2192 = vmatprep.subr.mxu0 0.0
  %2193 = vmatpush1.msra.mxu0 0.0
  %2194 = vmatprep.subr.mxu0 0.0
  %2195 = vmatpush1.msra.mxu0 0.0
  %2196 = vmatprep.subr.mxu0 0.0
  %2197 = vmatpush1.msra.mxu0 0.0
  %2198 = vmatprep.subr.mxu0 0.0
  %2199 = vmatpush1.msra.mxu0 0.0
  %2200 = vmatprep.subr.mxu0 0.0
  %2201 = vmatpush1.msra.mxu0 0.0
  %2202 = vmatprep.subr.mxu0 0.0
  %2203 = vmatpush1.msra.mxu0 0.0
  %2204 = vmatprep.subr.mxu0 0.0
  %2205 = vmatpush1.msra.mxu0 0.0
  %2206 = vmatprep.subr.mxu0 0.0
  %2207 = vmatpush1.msra.mxu0 0.0
  %2208 = vmatprep.subr.mxu0 0.0
  %2209 = vmatpush1.msra.mxu0 0.0
  %2210 = vmatprep.subr.mxu0 0.0
  %2211 = vmatpush1.msra.mxu0 0.0
  %2212 = vmatprep.subr.mxu0 0.0
  %2213 = vmatpush1.msra.mxu0 0.0
  %2214 = vmatprep.subr.mxu0 %v1916
  %2215 = vmatpush1.msra.mxu0 %v1913
  %2216 = vmatprep.subr.mxu0 %v1902
  %2217 = vmatpush1.msra.mxu0 %v1901
  %2218 = vmatprep.subr.mxu0 0.0
  %2219 = vmatpush2.msra.mxu0 0.0
  %2220 = vmatprep.subr.mxu0 0.0
  %2221 = vmatpush2.msra.mxu0 0.0
  %2222 = vmatprep.subr.mxu0 0.0
  %2223 = vmatpush2.msra.mxu0 0.0
  %2224 = vmatprep.subr.mxu0 0.0
  %2225 = vmatpush2.msra.mxu0 0.0
  %2226 = vmatprep.subr.mxu0 0.0
  %2227 = vmatpush2.msra.mxu0 0.0
  %2228 = vmatprep.subr.mxu0 0.0
  %2229 = vmatpush2.msra.mxu0 0.0
  %2230 = vmatprep.subr.mxu0 0.0
  %2231 = vmatpush2.msra.mxu0 0.0
  %2232 = vmatprep.subr.mxu0 0.0
  %2233 = vmatpush2.msra.mxu0 0.0
  %2234 = vmatprep.subr.mxu0 0.0
  %2235 = vmatpush2.msra.mxu0 0.0
  %2236 = vmatprep.subr.mxu0 0.0
  %2237 = vmatpush2.msra.mxu0 0.0
  %2238 = vmatprep.subr.mxu0 0.0
  %2239 = vmatpush2.msra.mxu0 0.0
  %2240 = vmatprep.subr.mxu0 0.0
  %2241 = vmatpush2.msra.mxu0 0.0
  %2242 = vmatprep.subr.mxu0 0.0
  %2243 = vmatpush2.msra.mxu0 0.0
  %2244 = vmatprep.subr.mxu0 0.0
  %2245 = vmatpush2.msra.mxu0 0.0
  %2246 = vmatprep.subr.mxu0 0.0
  %2247 = vmatpush2.msra.mxu0 0.0
  %2248 = vmatprep.subr.mxu0 0.0
  %2249 = vmatpush2.msra.mxu0 0.0
  %2250 = vmatprep.mubr.f32.mxu0 0.0
  %2251 = vmatmul.mubr.f32.gmra.mxu0 %v2184
  %v2252 = vpop.f32.mrf.mxu0
  %v2253 = vadd.f32 0.0, %v2252
  %v2254 = vpop.f32.mrf.mxu0
  %v2255 = vadd.f32 0.0, %v2254
  %2256 = vdwg.mxu0
  %2257 = vmatprep.subr.mxu0 0.0
  %2258 = vmatpush1.msra.mxu0 0.0
  %2259 = vmatprep.subr.mxu0 0.0
  %2260 = vmatpush1.msra.mxu0 0.0
  %2261 = vmatprep.subr.mxu0 0.0
  %2262 = vmatpush1.msra.mxu0 0.0
  %2263 = vmatprep.subr.mxu0 0.0
  %2264 = vmatpush1.msra.mxu0 0.0
  %2265 = vmatprep.subr.mxu0 0.0
  %2266 = vmatpush1.msra.mxu0 0.0
  %2267 = vmatprep.subr.mxu0 0.0
  %2268 = vmatpush1.msra.mxu0 0.0
  %2269 = vmatprep.subr.mxu0 0.0
  %2270 = vmatpush1.msra.mxu0 0.0
  %2271 = vmatprep.subr.mxu0 0.0
  %2272 = vmatpush1.msra.mxu0 0.0
  %2273 = vmatprep.subr.mxu0 0.0
  %2274 = vmatpush1.msra.mxu0 0.0
  %2275 = vmatprep.subr.mxu0 0.0
  %2276 = vmatpush1.msra.mxu0 0.0
  %2277 = vmatprep.subr.mxu0 0.0
  %2278 = vmatpush1.msra.mxu0 0.0
  %2279 = vmatprep.subr.mxu0 0.0
  %2280 = vmatpush1.msra.mxu0 0.0
  %2281 = vmatprep.subr.mxu0 0.0
  %2282 = vmatpush1.msra.mxu0 0.0
  %2283 = vmatprep.subr.mxu0 0.0
  %2284 = vmatpush1.msra.mxu0 0.0
  %2285 = vmatprep.subr.mxu0 0.0
  %2286 = vmatpush1.msra.mxu0 %v1919
  %2287 = vmatprep.subr.mxu0 0.0
  %2288 = vmatpush1.msra.mxu0 %v1903
  %2289 = vmatprep.subr.mxu0 0.0
  %2290 = vmatpush2.msra.mxu0 0.0
  %2291 = vmatprep.subr.mxu0 0.0
  %2292 = vmatpush2.msra.mxu0 0.0
  %2293 = vmatprep.subr.mxu0 0.0
  %2294 = vmatpush2.msra.mxu0 0.0
  %2295 = vmatprep.subr.mxu0 0.0
  %2296 = vmatpush2.msra.mxu0 0.0
  %2297 = vmatprep.subr.mxu0 0.0
  %2298 = vmatpush2.msra.mxu0 0.0
  %2299 = vmatprep.subr.mxu0 0.0
  %2300 = vmatpush2.msra.mxu0 0.0
  %2301 = vmatprep.subr.mxu0 0.0
  %2302 = vmatpush2.msra.mxu0 0.0
  %2303 = vmatprep.subr.mxu0 0.0
  %2304 = vmatpush2.msra.mxu0 0.0
  %2305 = vmatprep.subr.mxu0 0.0
  %2306 = vmatpush2.msra.mxu0 0.0
  %2307 = vmatprep.subr.mxu0 0.0
  %2308 = vmatpush2.msra.mxu0 0.0
  %2309 = vmatprep.subr.mxu0 0.0
  %2310 = vmatpush2.msra.mxu0 0.0
  %2311 = vmatprep.subr.mxu0 0.0
  %2312 = vmatpush2.msra.mxu0 0.0
  %2313 = vmatprep.subr.mxu0 0.0
  %2314 = vmatpush2.msra.mxu0 0.0
  %2315 = vmatprep.subr.mxu0 0.0
  %2316 = vmatpush2.msra.mxu0 0.0
  %2317 = vmatprep.subr.mxu0 0.0
  %2318 = vmatpush2.msra.mxu0 0.0
  %2319 = vmatprep.subr.mxu0 0.0
  %2320 = vmatpush2.msra.mxu0 0.0
  %2321 = vmatprep.mubr.f32.mxu0 0.0
  %2322 = vmatmul.mubr.f32.gmra.mxu0 %v2184
  %v2323 = vpop.f32.mrf.mxu0
  %v2324 = vadd.f32 0.0, %v2323
  %v2325 = vpop.f32.mrf.mxu0
  %2326 = vdwg.mxu0
  %v2327 = vld [vmem:[%s3 + $0xe10] sm:$0xff]
  %v2328 = vld [vmem:[%s3 + $0xe18] sm:$0xff]
  %v2329 = vld [vmem:[%s3 + $0xe20] sm:$0xff]
  %v2330 = vld [vmem:[%s3 + $0xe28] sm:$0xff]
  %v2331 = vld [vmem:[%s3 + $0xe30] sm:$0xff]
  %v2332 = vld [vmem:[%s3 + $0xe38] sm:$0xff]
  %v2333 = vld [vmem:[%s3 + $0xe40] sm:$0xff]
  %v2334 = vld [vmem:[%s3 + $0xe48] sm:$0xff]
  %v2335 = vld [vmem:[%s3 + $0xe50] sm:$0xff]
  %v2336 = vld [vmem:[%s3 + $0xe58] sm:$0xff]
  %v2337 = vld [vmem:[%s3 + $0xe60] sm:$0xff]
  %v2338 = vld [vmem:[%s3 + $0xe68] sm:$0xff]
  %v2339 = vld [vmem:[%s3 + $0xe70] sm:$0xff]
  %v2340 = vld [vmem:[%s3 + $0xe78] sm:$0xff]
  %v2341 = vld [vmem:[%s3 + $0xe80] sm:$0xff]
  %v2342 = vld [vmem:[%s3 + $0xe88] sm:$0xff]
  %v2343 = vld [vmem:[%s3 + $0xe90] sm:$0xff]
  %v2344 = vld [vmem:[%s3 + $0xe98] sm:$0xff]
  %v2345 = vld [vmem:[%s3 + $0xea0] sm:$0xff]
  %v2346 = vld [vmem:[%s3 + $0xea8] sm:$0xff]
  %v2347 = vld [vmem:[%s3 + $0xeb0] sm:$0xff]
  %v2348 = vld [vmem:[%s3 + $0xeb8] sm:$0xff]
  %v2349 = vld [vmem:[%s3 + $0xec0] sm:$0xff]
  %v2350 = vld [vmem:[%s3 + $0xec8] sm:$0xff]
  %v2351 = vld [vmem:[%s3 + $0xed0] sm:$0xff]
  %v2352 = vld [vmem:[%s3 + $0xed8] sm:$0xff]
  %v2353 = vld [vmem:[%s3 + $0xee0] sm:$0xff]
  %v2354 = vld [vmem:[%s3 + $0xee8] sm:$0xff]
  %v2355 = vld [vmem:[%s3 + $0xef0] sm:$0xff]
  %v2356 = vld [vmem:[%s3 + $0xef8] sm:$0xff]
  %v2357 = vld [vmem:[%s3 + $0xf00] sm:$0xff]
  %v2358 = vld [vmem:[%s3 + $0xf08] sm:$0xff]
  %v2359 = vld [vmem:[%s3 + $0xf10] sm:$0xff]
  %v2360 = vld [vmem:[%s3 + $0xf18] sm:$0xff]
  %v2361 = vld [vmem:[%s3 + $0xf20] sm:$0xff]
  %v2362 = vld [vmem:[%s3 + $0xf28] sm:$0xff]
  %v2363 = vld [vmem:[%s3 + $0xf30] sm:$0xff]
  %v2364 = vld [vmem:[%s3 + $0xf38] sm:$0xff]
  %v2365 = vld [vmem:[%s3 + $0xf40] sm:$0xff]
  %v2366 = vld [vmem:[%s3 + $0xf48] sm:$0xff]
  %v2367 = vld [vmem:[%s3 + $0xf50] sm:$0xff]
  %v2368 = vld [vmem:[%s3 + $0xf58] sm:$0xff]
  %v2369 = vld [vmem:[%s3 + $0xf60] sm:$0xff]
  %v2370 = vld [vmem:[%s3 + $0xf68] sm:$0xff]
  %v2371 = vld [vmem:[%s3 + $0xf70] sm:$0xff]
  %v2372 = vld [vmem:[%s3 + $0xf78] sm:$0xff]
  %v2373 = vld [vmem:[%s3 + $0xf80] sm:$0xff]
  %v2374 = vld [vmem:[%s3 + $0xf88] sm:$0xff]
  %v2375 = vld [vmem:[%s3 + $0xf90] sm:$0xff]
  %v2376 = vld [vmem:[%s3 + $0xf98] sm:$0xff]
  %v2377 = vld [vmem:[%s3 + $0xfa0] sm:$0xff]
  %v2378 = vld [vmem:[%s3 + $0xfa8] sm:$0xff]
  %v2379 = vld [vmem:[%s3 + $0xfb0] sm:$0xff]
  %v2380 = vld [vmem:[%s3 + $0xfb8] sm:$0xff]
  %v2381 = vld [vmem:[%s3 + $0xfc0] sm:$0xff]
  %v2382 = vld [vmem:[%s3 + $0xfc8] sm:$0xff]
  %v2383 = vld [vmem:[%s3 + $0xfd0] sm:$0xff]
  %v2384 = vld [vmem:[%s3 + $0xfd8] sm:$0xff]
  %v2385 = vld [vmem:[%s3 + $0xfe0] sm:$0xff]
  %v2386 = vld [vmem:[%s3 + $0xfe8] sm:$0xff]
  %v2387 = vld [vmem:[%s3 + $0xff0] sm:$0xff]
  %v2388 = vld [vmem:[%s3 + $0xff8] sm:$0xff]
  %v2389 = vld [vmem:[%s3 + $0x1000] sm:$0xff]
  %v2390 = vld [vmem:[%s3 + $0x1008] sm:$0xff]
  %v2391 = vld [vmem:[%s3 + $0x1010] sm:$0xff]
  %v2392 = vld [vmem:[%s3 + $0x1018] sm:$0xff]
  %v2393 = vld [vmem:[%s3 + $0x1020] sm:$0xff]
  %v2394 = vld [vmem:[%s3 + $0x1028] sm:$0xff]
  %v2395 = vld [vmem:[%s3 + $0x1030] sm:$0xff]
  %v2396 = vld [vmem:[%s3 + $0x1038] sm:$0xff]
  %v2397 = vld [vmem:[%s3 + $0x1040] sm:$0xff]
  %v2398 = vld [vmem:[%s3 + $0x1048] sm:$0xff]
  %v2399 = vld [vmem:[%s3 + $0x1050] sm:$0xff]
  %v2400 = vld [vmem:[%s3 + $0x1058] sm:$0xff]
  %v2401 = vld [vmem:[%s3 + $0x1060] sm:$0xff]
  %v2402 = vld [vmem:[%s3 + $0x1068] sm:$0xff]
  %v2403 = vld [vmem:[%s3 + $0x1070] sm:$0xff]
  %v2404 = vld [vmem:[%s3 + $0x1078] sm:$0xff]
  %v2405 = vld [vmem:[%s3 + $0x1080] sm:$0xff]
  %v2406 = vld [vmem:[%s3 + $0x1088] sm:$0xff]
  %v2407 = vld [vmem:[%s3 + $0x1090] sm:$0xff]
  %v2408 = vld [vmem:[%s3 + $0x1098] sm:$0xff]
  %v2409 = vld [vmem:[%s3 + $0x10a0] sm:$0xff]
  %v2410 = vld [vmem:[%s3 + $0x10a8] sm:$0xff]
  %v2411 = vld [vmem:[%s3 + $0x10b0] sm:$0xff]
  %v2412 = vld [vmem:[%s3 + $0x10b8] sm:$0xff]
  %v2413 = vld [vmem:[%s3 + $0x10c0] sm:$0xff]
  %v2414 = vld [vmem:[%s3 + $0x10c8] sm:$0xff]
  %v2415 = vld [vmem:[%s3 + $0x10d0] sm:$0xff]
  %v2416 = vld [vmem:[%s3 + $0x10d8] sm:$0xff]
  %v2417 = vld [vmem:[%s3 + $0x10e0] sm:$0xff]
  %v2418 = vld [vmem:[%s3 + $0x10e8] sm:$0xff]
  %v2419 = vld [vmem:[%s3 + $0x10f0] sm:$0xff]
  %v2420 = vld [vmem:[%s3 + $0x10f8] sm:$0xff]
  %v2421 = vld [vmem:[%s3 + $0x1100] sm:$0xff]
  %v2422 = vld [vmem:[%s3 + $0x1108] sm:$0xff]
  %v2423 = vld [vmem:[%s3 + $0x1110] sm:$0xff]
  %v2424 = vld [vmem:[%s3 + $0x1118] sm:$0xff]
  %v2425 = vld [vmem:[%s3 + $0x1120] sm:$0xff]
  %v2426 = vld [vmem:[%s3 + $0x1128] sm:$0xff]
  %v2427 = vld [vmem:[%s3 + $0x1130] sm:$0xff]
  %v2428 = vld [vmem:[%s3 + $0x1138] sm:$0xff]
  %v2429 = vld [vmem:[%s3 + $0x1140] sm:$0xff]
  %v2430 = vld [vmem:[%s3 + $0x1148] sm:$0xff]
  %v2431 = vld [vmem:[%s3 + $0x1150] sm:$0xff]
  %v2432 = vld [vmem:[%s3 + $0x1158] sm:$0xff]
  %v2433 = vld [vmem:[%s3 + $0x1160] sm:$0xff]
  %v2434 = vld [vmem:[%s3 + $0x1168] sm:$0xff]
  %v2435 = vld [vmem:[%s3 + $0x1170] sm:$0xff]
  %v2436 = vld [vmem:[%s3 + $0x1178] sm:$0xff]
  %v2437 = vld [vmem:[%s3 + $0x1180] sm:$0xff]
  %v2438 = vld [vmem:[%s3 + $0x1188] sm:$0xff]
  %v2439 = vld [vmem:[%s3 + $0x1190] sm:$0xff]
  %v2440 = vld [vmem:[%s3 + $0x1198] sm:$0xff]
  %v2441 = vld [vmem:[%s3 + $0x11a0] sm:$0xff]
  %v2442 = vld [vmem:[%s3 + $0x11a8] sm:$0xff]
  %v2443 = vld [vmem:[%s3 + $0x11b0] sm:$0xff]
  %v2444 = vld [vmem:[%s3 + $0x11b8] sm:$0xff]
  %v2445 = vld [vmem:[%s3 + $0x11c0] sm:$0xff]
  %v2446 = vld [vmem:[%s3 + $0x11c8] sm:$0xff]
  %v2448 = vsel %vm1256, %v2324, 0
  %2450 = vmatprep.subr.mxu0 %v2373
  %2451 = vmatpush1.msra.mxu0 %v2372
  %2452 = vmatprep.subr.mxu0 %v2370
  %2453 = vmatpush1.msra.mxu0 %v2369
  %2454 = vmatprep.subr.mxu0 %v2367
  %2455 = vmatpush1.msra.mxu0 %v2366
  %2456 = vmatprep.subr.mxu0 %v2364
  %2457 = vmatpush1.msra.mxu0 %v2363
  %2458 = vmatprep.subr.mxu0 %v2361
  %2459 = vmatpush1.msra.mxu0 %v2360
  %2460 = vmatprep.subr.mxu0 %v2358
  %2461 = vmatpush1.msra.mxu0 %v2357
  %2462 = vmatprep.subr.mxu0 %v2355
  %2463 = vmatpush1.msra.mxu0 %v2354
  %2464 = vmatprep.subr.mxu0 %v2352
  %2465 = vmatpush1.msra.mxu0 %v2351
  %2466 = vmatprep.subr.mxu0 %v2349
  %2467 = vmatpush1.msra.mxu0 %v2348
  %2468 = vmatprep.subr.mxu0 %v2346
  %2469 = vmatpush1.msra.mxu0 %v2345
  %2470 = vmatprep.subr.mxu0 %v2343
  %2471 = vmatpush1.msra.mxu0 %v2342
  %2472 = vmatprep.subr.mxu0 %v2340
  %2473 = vmatpush1.msra.mxu0 %v2339
  %2474 = vmatprep.subr.mxu0 %v2337
  %2475 = vmatpush1.msra.mxu0 %v2336
  %2476 = vmatprep.subr.mxu0 %v2334
  %2477 = vmatpush1.msra.mxu0 %v2333
  %2478 = vmatprep.subr.mxu0 %v2331
  %2479 = vmatpush1.msra.mxu0 %v2330
  %2480 = vmatprep.subr.mxu0 %v2328
  %2481 = vmatpush1.msra.mxu0 %v2327
  %2482 = vmatprep.subr.mxu0 %v2421
  %2483 = vmatpush2.msra.mxu0 %v2420
  %2484 = vmatprep.subr.mxu0 %v2418
  %2485 = vmatpush2.msra.mxu0 %v2417
  %2486 = vmatprep.subr.mxu0 %v2415
  %2487 = vmatpush2.msra.mxu0 %v2414
  %2488 = vmatprep.subr.mxu0 %v2412
  %2489 = vmatpush2.msra.mxu0 %v2411
  %2490 = vmatprep.subr.mxu0 %v2409
  %2491 = vmatpush2.msra.mxu0 %v2408
  %2492 = vmatprep.subr.mxu0 %v2406
  %2493 = vmatpush2.msra.mxu0 %v2405
  %2494 = vmatprep.subr.mxu0 %v2403
  %2495 = vmatpush2.msra.mxu0 %v2402
  %2496 = vmatprep.subr.mxu0 %v2400
  %2497 = vmatpush2.msra.mxu0 %v2399
  %2498 = vmatprep.subr.mxu0 %v2397
  %2499 = vmatpush2.msra.mxu0 %v2396
  %2500 = vmatprep.subr.mxu0 %v2394
  %2501 = vmatpush2.msra.mxu0 %v2393
  %2502 = vmatprep.subr.mxu0 %v2391
  %2503 = vmatpush2.msra.mxu0 %v2390
  %2504 = vmatprep.subr.mxu0 %v2388
  %2505 = vmatpush2.msra.mxu0 %v2387
  %2506 = vmatprep.subr.mxu0 %v2385
  %2507 = vmatpush2.msra.mxu0 %v2384
  %2508 = vmatprep.subr.mxu0 %v2382
  %2509 = vmatpush2.msra.mxu0 %v2381
  %2510 = vmatprep.subr.mxu0 %v2379
  %2511 = vmatpush2.msra.mxu0 %v2378
  %2512 = vmatprep.subr.mxu0 %v2376
  %2513 = vmatpush2.msra.mxu0 %v2375
  %2514 = vmatprep.mubr.f32.mxu0 %v2255
  %2515 = vmatmul.mubr.f32.gmra.mxu0 %v2253
  %v2516 = vpop.f32.mrf.mxu0
  %v2517 = vadd.f32 0.0, %v2516
  %v2518 = vpop.f32.mrf.mxu0
  %v2519 = vadd.f32 0.0, %v2518
  %2520 = vdwg.mxu0
  %2521 = vmatprep.subr.mxu0 0.0
  %2522 = vmatpush1.msra.mxu0 0.0
  %2523 = vmatprep.subr.mxu0 0.0
  %2524 = vmatpush1.msra.mxu0 0.0
  %2525 = vmatprep.subr.mxu0 0.0
  %2526 = vmatpush1.msra.mxu0 0.0
  %2527 = vmatprep.subr.mxu0 0.0
  %2528 = vmatpush1.msra.mxu0 0.0
  %2529 = vmatprep.subr.mxu0 0.0
  %2530 = vmatpush1.msra.mxu0 0.0
  %2531 = vmatprep.subr.mxu0 0.0
  %2532 = vmatpush1.msra.mxu0 0.0
  %2533 = vmatprep.subr.mxu0 0.0
  %2534 = vmatpush1.msra.mxu0 0.0
  %2535 = vmatprep.subr.mxu0 0.0
  %2536 = vmatpush1.msra.mxu0 0.0
  %2537 = vmatprep.subr.mxu0 %v2445
  %2538 = vmatpush1.msra.mxu0 %v2444
  %2539 = vmatprep.subr.mxu0 %v2442
  %2540 = vmatpush1.msra.mxu0 %v2441
  %2541 = vmatprep.subr.mxu0 %v2439
  %2542 = vmatpush1.msra.mxu0 %v2438
  %2543 = vmatprep.subr.mxu0 %v2436
  %2544 = vmatpush1.msra.mxu0 %v2435
  %2545 = vmatprep.subr.mxu0 %v2433
  %2546 = vmatpush1.msra.mxu0 %v2432
  %2547 = vmatprep.subr.mxu0 %v2430
  %2548 = vmatpush1.msra.mxu0 %v2429
  %2549 = vmatprep.subr.mxu0 %v2427
  %2550 = vmatpush1.msra.mxu0 %v2426
  %2551 = vmatprep.subr.mxu0 %v2424
  %2552 = vmatpush1.msra.mxu0 %v2423
  %2553 = vmatprep.subr.mxu0 0.0
  %2554 = vmatpush2.msra.mxu0 0.0
  %2555 = vmatprep.subr.mxu0 0.0
  %2556 = vmatpush2.msra.mxu0 0.0
  %2557 = vmatprep.subr.mxu0 0.0
  %2558 = vmatpush2.msra.mxu0 0.0
  %2559 = vmatprep.subr.mxu0 0.0
  %2560 = vmatpush2.msra.mxu0 0.0
  %2561 = vmatprep.subr.mxu0 0.0
  %2562 = vmatpush2.msra.mxu0 0.0
  %2563 = vmatprep.subr.mxu0 0.0
  %2564 = vmatpush2.msra.mxu0 0.0
  %2565 = vmatprep.subr.mxu0 0.0
  %2566 = vmatpush2.msra.mxu0 0.0
  %2567 = vmatprep.subr.mxu0 0.0
  %2568 = vmatpush2.msra.mxu0 0.0
  %2569 = vmatprep.subr.mxu0 0.0
  %2570 = vmatpush2.msra.mxu0 0.0
  %2571 = vmatprep.subr.mxu0 0.0
  %2572 = vmatpush2.msra.mxu0 0.0
  %2573 = vmatprep.subr.mxu0 0.0
  %2574 = vmatpush2.msra.mxu0 0.0
  %2575 = vmatprep.subr.mxu0 0.0
  %2576 = vmatpush2.msra.mxu0 0.0
  %2577 = vmatprep.subr.mxu0 0.0
  %2578 = vmatpush2.msra.mxu0 0.0
  %2579 = vmatprep.subr.mxu0 0.0
  %2580 = vmatpush2.msra.mxu0 0.0
  %2581 = vmatprep.subr.mxu0 0.0
  %2582 = vmatpush2.msra.mxu0 0.0
  %2583 = vmatprep.subr.mxu0 0.0
  %2584 = vmatpush2.msra.mxu0 0.0
  %2585 = vmatprep.mubr.f32.mxu0 0.0
  %2586 = vmatmul.mubr.f32.gmra.mxu0 %v2448
  %v2587 = vpop.f32.mrf.mxu0
  %v2588 = vadd.f32 %v2517, %v2587
  %v2589 = vpop.f32.mrf.mxu0
  %v2590 = vadd.f32 %v2519, %v2589
  %2591 = vdwg.mxu0
  %2592 = vmatprep.subr.mxu0 0.0
  %2593 = vmatpush1.msra.mxu0 %v2374
  %2594 = vmatprep.subr.mxu0 0.0
  %2595 = vmatpush1.msra.mxu0 %v2371
  %2596 = vmatprep.subr.mxu0 0.0
  %2597 = vmatpush1.msra.mxu0 %v2368
  %2598 = vmatprep.subr.mxu0 0.0
  %2599 = vmatpush1.msra.mxu0 %v2365
  %2600 = vmatprep.subr.mxu0 0.0
  %2601 = vmatpush1.msra.mxu0 %v2362
  %2602 = vmatprep.subr.mxu0 0.0
  %2603 = vmatpush1.msra.mxu0 %v2359
  %2604 = vmatprep.subr.mxu0 0.0
  %2605 = vmatpush1.msra.mxu0 %v2356
  %2606 = vmatprep.subr.mxu0 0.0
  %2607 = vmatpush1.msra.mxu0 %v2353
  %2608 = vmatprep.subr.mxu0 0.0
  %2609 = vmatpush1.msra.mxu0 %v2350
  %2610 = vmatprep.subr.mxu0 0.0
  %2611 = vmatpush1.msra.mxu0 %v2347
  %2612 = vmatprep.subr.mxu0 0.0
  %2613 = vmatpush1.msra.mxu0 %v2344
  %2614 = vmatprep.subr.mxu0 0.0
  %2615 = vmatpush1.msra.mxu0 %v2341
  %2616 = vmatprep.subr.mxu0 0.0
  %2617 = vmatpush1.msra.mxu0 %v2338
  %2618 = vmatprep.subr.mxu0 0.0
  %2619 = vmatpush1.msra.mxu0 %v2335
  %2620 = vmatprep.subr.mxu0 0.0
  %2621 = vmatpush1.msra.mxu0 %v2332
  %2622 = vmatprep.subr.mxu0 0.0
  %2623 = vmatpush1.msra.mxu0 %v2329
  %2624 = vmatprep.subr.mxu0 0.0
  %2625 = vmatpush2.msra.mxu0 %v2422
  %2626 = vmatprep.subr.mxu0 0.0
  %2627 = vmatpush2.msra.mxu0 %v2419
  %2628 = vmatprep.subr.mxu0 0.0
  %2629 = vmatpush2.msra.mxu0 %v2416
  %2630 = vmatprep.subr.mxu0 0.0
  %2631 = vmatpush2.msra.mxu0 %v2413
  %2632 = vmatprep.subr.mxu0 0.0
  %2633 = vmatpush2.msra.mxu0 %v2410
  %2634 = vmatprep.subr.mxu0 0.0
  %2635 = vmatpush2.msra.mxu0 %v2407
  %2636 = vmatprep.subr.mxu0 0.0
  %2637 = vmatpush2.msra.mxu0 %v2404
  %2638 = vmatprep.subr.mxu0 0.0
  %2639 = vmatpush2.msra.mxu0 %v2401
  %2640 = vmatprep.subr.mxu0 0.0
  %2641 = vmatpush2.msra.mxu0 %v2398
  %2642 = vmatprep.subr.mxu0 0.0
  %2643 = vmatpush2.msra.mxu0 %v2395
  %2644 = vmatprep.subr.mxu0 0.0
  %2645 = vmatpush2.msra.mxu0 %v2392
  %2646 = vmatprep.subr.mxu0 0.0
  %2647 = vmatpush2.msra.mxu0 %v2389
  %2648 = vmatprep.subr.mxu0 0.0
  %2649 = vmatpush2.msra.mxu0 %v2386
  %2650 = vmatprep.subr.mxu0 0.0
  %2651 = vmatpush2.msra.mxu0 %v2383
  %2652 = vmatprep.subr.mxu0 0.0
  %2653 = vmatpush2.msra.mxu0 %v2380
  %2654 = vmatprep.subr.mxu0 0.0
  %2655 = vmatpush2.msra.mxu0 %v2377
  %2656 = vmatprep.mubr.f32.mxu0 %v2255
  %2657 = vmatmul.mubr.f32.gmra.mxu0 %v2253
  %v2658 = vpop.f32.mrf.mxu0
  %v2659 = vadd.f32 0.0, %v2658
  %v2660 = vpop.f32.mrf.mxu0
  %2661 = vdwg.mxu0
  %2662 = vmatprep.subr.mxu0 0.0
  %2663 = vmatpush1.msra.mxu0 0.0
  %2664 = vmatprep.subr.mxu0 0.0
  %2665 = vmatpush1.msra.mxu0 0.0
  %2666 = vmatprep.subr.mxu0 0.0
  %2667 = vmatpush1.msra.mxu0 0.0
  %2668 = vmatprep.subr.mxu0 0.0
  %2669 = vmatpush1.msra.mxu0 0.0
  %2670 = vmatprep.subr.mxu0 0.0
  %2671 = vmatpush1.msra.mxu0 0.0
  %2672 = vmatprep.subr.mxu0 0.0
  %2673 = vmatpush1.msra.mxu0 0.0
  %2674 = vmatprep.subr.mxu0 0.0
  %2675 = vmatpush1.msra.mxu0 0.0
  %2676 = vmatprep.subr.mxu0 0.0
  %2677 = vmatpush1.msra.mxu0 0.0
  %2678 = vmatprep.subr.mxu0 0.0
  %2679 = vmatpush1.msra.mxu0 %v2446
  %2680 = vmatprep.subr.mxu0 0.0
  %2681 = vmatpush1.msra.mxu0 %v2443
  %2682 = vmatprep.subr.mxu0 0.0
  %2683 = vmatpush1.msra.mxu0 %v2440
  %2684 = vmatprep.subr.mxu0 0.0
  %2685 = vmatpush1.msra.mxu0 %v2437
  %2686 = vmatprep.subr.mxu0 0.0
  %2687 = vmatpush1.msra.mxu0 %v2434
  %2688 = vmatprep.subr.mxu0 0.0
  %2689 = vmatpush1.msra.mxu0 %v2431
  %2690 = vmatprep.subr.mxu0 0.0
  %2691 = vmatpush1.msra.mxu0 %v2428
  %2692 = vmatprep.subr.mxu0 0.0
  %2693 = vmatpush1.msra.mxu0 %v2425
  %2694 = vmatprep.subr.mxu0 0.0
  %2695 = vmatpush2.msra.mxu0 0.0
  %2696 = vmatprep.subr.mxu0 0.0
  %2697 = vmatpush2.msra.mxu0 0.0
  %2698 = vmatprep.subr.mxu0 0.0
  %2699 = vmatpush2.msra.mxu0 0.0
  %2700 = vmatprep.subr.mxu0 0.0
  %2701 = vmatpush2.msra.mxu0 0.0
  %2702 = vmatprep.subr.mxu0 0.0
  %2703 = vmatpush2.msra.mxu0 0.0
  %2704 = vmatprep.subr.mxu0 0.0
  %2705 = vmatpush2.msra.mxu0 0.0
  %2706 = vmatprep.subr.mxu0 0.0
  %2707 = vmatpush2.msra.mxu0 0.0
  %2708 = vmatprep.subr.mxu0 0.0
  %2709 = vmatpush2.msra.mxu0 0.0
  %2710 = vmatprep.subr.mxu0 0.0
  %2711 = vmatpush2.msra.mxu0 0.0
  %2712 = vmatprep.subr.mxu0 0.0
  %2713 = vmatpush2.msra.mxu0 0.0
  %2714 = vmatprep.subr.mxu0 0.0
  %2715 = vmatpush2.msra.mxu0 0.0
  %2716 = vmatprep.subr.mxu0 0.0
  %2717 = vmatpush2.msra.mxu0 0.0
  %2718 = vmatprep.subr.mxu0 0.0
  %2719 = vmatpush2.msra.mxu0 0.0
  %2720 = vmatprep.subr.mxu0 0.0
  %2721 = vmatpush2.msra.mxu0 0.0
  %2722 = vmatprep.subr.mxu0 0.0
  %2723 = vmatpush2.msra.mxu0 0.0
  %2724 = vmatprep.subr.mxu0 0.0
  %2725 = vmatpush2.msra.mxu0 0.0
  %2726 = vmatprep.mubr.f32.mxu0 0.0
  %2727 = vmatmul.mubr.f32.gmra.mxu0 %v2448
  %v2728 = vpop.f32.mrf.mxu0
  %v2729 = vadd.f32 %v2659, %v2728
  %v2730 = vpop.f32.mrf.mxu0
  %2731 = vdwg.mxu0
  %v2733 = vsel %vm1256, %v2059, 0
  %2735 = vmatprep.subr.mxu0 %v2108
  %2736 = vmatpush1.msra.mxu0 %v2107
  %2737 = vmatprep.subr.mxu0 %v2105
  %2738 = vmatpush1.msra.mxu0 %v2104
  %2739 = vmatprep.subr.mxu0 %v2102
  %2740 = vmatpush1.msra.mxu0 %v2101
  %2741 = vmatprep.subr.mxu0 %v2099
  %2742 = vmatpush1.msra.mxu0 %v2098
  %2743 = vmatprep.subr.mxu0 %v2096
  %2744 = vmatpush1.msra.mxu0 %v2095
  %2745 = vmatprep.subr.mxu0 %v2093
  %2746 = vmatpush1.msra.mxu0 %v2092
  %2747 = vmatprep.subr.mxu0 %v2090
  %2748 = vmatpush1.msra.mxu0 %v2089
  %2749 = vmatprep.subr.mxu0 %v2087
  %2750 = vmatpush1.msra.mxu0 %v2086
  %2751 = vmatprep.subr.mxu0 %v2084
  %2752 = vmatpush1.msra.mxu0 %v2083
  %2753 = vmatprep.subr.mxu0 %v2081
  %2754 = vmatpush1.msra.mxu0 %v2080
  %2755 = vmatprep.subr.mxu0 %v2078
  %2756 = vmatpush1.msra.mxu0 %v2077
  %2757 = vmatprep.subr.mxu0 %v2075
  %2758 = vmatpush1.msra.mxu0 %v2074
  %2759 = vmatprep.subr.mxu0 %v2072
  %2760 = vmatpush1.msra.mxu0 %v2071
  %2761 = vmatprep.subr.mxu0 %v2069
  %2762 = vmatpush1.msra.mxu0 %v2068
  %2763 = vmatprep.subr.mxu0 %v2066
  %2764 = vmatpush1.msra.mxu0 %v2065
  %2765 = vmatprep.subr.mxu0 %v2063
  %2766 = vmatpush1.msra.mxu0 %v2062
  %2767 = vmatprep.subr.mxu0 %v2156
  %2768 = vmatpush2.msra.mxu0 %v2155
  %2769 = vmatprep.subr.mxu0 %v2153
  %2770 = vmatpush2.msra.mxu0 %v2152
  %2771 = vmatprep.subr.mxu0 %v2150
  %2772 = vmatpush2.msra.mxu0 %v2149
  %2773 = vmatprep.subr.mxu0 %v2147
  %2774 = vmatpush2.msra.mxu0 %v2146
  %2775 = vmatprep.subr.mxu0 %v2144
  %2776 = vmatpush2.msra.mxu0 %v2143
  %2777 = vmatprep.subr.mxu0 %v2141
  %2778 = vmatpush2.msra.mxu0 %v2140
  %2779 = vmatprep.subr.mxu0 %v2138
  %2780 = vmatpush2.msra.mxu0 %v2137
  %2781 = vmatprep.subr.mxu0 %v2135
  %2782 = vmatpush2.msra.mxu0 %v2134
  %2783 = vmatprep.subr.mxu0 %v2132
  %2784 = vmatpush2.msra.mxu0 %v2131
  %2785 = vmatprep.subr.mxu0 %v2129
  %2786 = vmatpush2.msra.mxu0 %v2128
  %2787 = vmatprep.subr.mxu0 %v2126
  %2788 = vmatpush2.msra.mxu0 %v2125
  %2789 = vmatprep.subr.mxu0 %v2123
  %2790 = vmatpush2.msra.mxu0 %v2122
  %2791 = vmatprep.subr.mxu0 %v2120
  %2792 = vmatpush2.msra.mxu0 %v2119
  %2793 = vmatprep.subr.mxu0 %v2117
  %2794 = vmatpush2.msra.mxu0 %v2116
  %2795 = vmatprep.subr.mxu0 %v2114
  %2796 = vmatpush2.msra.mxu0 %v2113
  %2797 = vmatprep.subr.mxu0 %v2111
  %2798 = vmatpush2.msra.mxu0 %v2110
  %2799 = vmatprep.mubr.f32.mxu0 %v1990
  %2800 = vmatmul.mubr.f32.gmra.mxu0 %v1988
  %v2801 = vpop.f32.mrf.mxu0
  %v2802 = vadd.f32 %v2588, %v2801
  %v2803 = vpop.f32.mrf.mxu0
  %v2804 = vadd.f32 %v2590, %v2803
  %2805 = vdwg.mxu0
  %2806 = vmatprep.subr.mxu0 0.0
  %2807 = vmatpush1.msra.mxu0 0.0
  %2808 = vmatprep.subr.mxu0 0.0
  %2809 = vmatpush1.msra.mxu0 0.0
  %2810 = vmatprep.subr.mxu0 0.0
  %2811 = vmatpush1.msra.mxu0 0.0
  %2812 = vmatprep.subr.mxu0 0.0
  %2813 = vmatpush1.msra.mxu0 0.0
  %2814 = vmatprep.subr.mxu0 0.0
  %2815 = vmatpush1.msra.mxu0 0.0
  %2816 = vmatprep.subr.mxu0 0.0
  %2817 = vmatpush1.msra.mxu0 0.0
  %2818 = vmatprep.subr.mxu0 0.0
  %2819 = vmatpush1.msra.mxu0 0.0
  %2820 = vmatprep.subr.mxu0 0.0
  %2821 = vmatpush1.msra.mxu0 0.0
  %2822 = vmatprep.subr.mxu0 %v2180
  %2823 = vmatpush1.msra.mxu0 %v2179
  %2824 = vmatprep.subr.mxu0 %v2177
  %2825 = vmatpush1.msra.mxu0 %v2176
  %2826 = vmatprep.subr.mxu0 %v2174
  %2827 = vmatpush1.msra.mxu0 %v2173
  %2828 = vmatprep.subr.mxu0 %v2171
  %2829 = vmatpush1.msra.mxu0 %v2170
  %2830 = vmatprep.subr.mxu0 %v2168
  %2831 = vmatpush1.msra.mxu0 %v2167
  %2832 = vmatprep.subr.mxu0 %v2165
  %2833 = vmatpush1.msra.mxu0 %v2164
  %2834 = vmatprep.subr.mxu0 %v2162
  %2835 = vmatpush1.msra.mxu0 %v2161
  %2836 = vmatprep.subr.mxu0 %v2159
  %2837 = vmatpush1.msra.mxu0 %v2158
  %2838 = vmatprep.subr.mxu0 0.0
  %2839 = vmatpush2.msra.mxu0 0.0
  %2840 = vmatprep.subr.mxu0 0.0
  %2841 = vmatpush2.msra.mxu0 0.0
  %2842 = vmatprep.subr.mxu0 0.0
  %2843 = vmatpush2.msra.mxu0 0.0
  %2844 = vmatprep.subr.mxu0 0.0
  %2845 = vmatpush2.msra.mxu0 0.0
  %2846 = vmatprep.subr.mxu0 0.0
  %2847 = vmatpush2.msra.mxu0 0.0
  %2848 = vmatprep.subr.mxu0 0.0
  %2849 = vmatpush2.msra.mxu0 0.0
  %2850 = vmatprep.subr.mxu0 0.0
  %2851 = vmatpush2.msra.mxu0 0.0
  %2852 = vmatprep.subr.mxu0 0.0
  %2853 = vmatpush2.msra.mxu0 0.0
  %2854 = vmatprep.subr.mxu0 0.0
  %2855 = vmatpush2.msra.mxu0 0.0
  %2856 = vmatprep.subr.mxu0 0.0
  %2857 = vmatpush2.msra.mxu0 0.0
  %2858 = vmatprep.subr.mxu0 0.0
  %2859 = vmatpush2.msra.mxu0 0.0
  %2860 = vmatprep.subr.mxu0 0.0
  %2861 = vmatpush2.msra.mxu0 0.0
  %2862 = vmatprep.subr.mxu0 0.0
  %2863 = vmatpush2.msra.mxu0 0.0
  %2864 = vmatprep.subr.mxu0 0.0
  %2865 = vmatpush2.msra.mxu0 0.0
  %2866 = vmatprep.subr.mxu0 0.0
  %2867 = vmatpush2.msra.mxu0 0.0
  %2868 = vmatprep.subr.mxu0 0.0
  %2869 = vmatpush2.msra.mxu0 0.0
  %2870 = vmatprep.mubr.f32.mxu0 0.0
  %2871 = vmatmul.mubr.f32.gmra.mxu0 %v2733
  %v2872 = vpop.f32.mrf.mxu0
  %v2873 = vadd.f32 %v2802, %v2872
  %v2874 = vpop.f32.mrf.mxu0
  %v2875 = vadd.f32 %v2804, %v2874
  %2876 = vdwg.mxu0
  %2877 = vmatprep.subr.mxu0 0.0
  %2878 = vmatpush1.msra.mxu0 %v2109
  %2879 = vmatprep.subr.mxu0 0.0
  %2880 = vmatpush1.msra.mxu0 %v2106
  %2881 = vmatprep.subr.mxu0 0.0
  %2882 = vmatpush1.msra.mxu0 %v2103
  %2883 = vmatprep.subr.mxu0 0.0
  %2884 = vmatpush1.msra.mxu0 %v2100
  %2885 = vmatprep.subr.mxu0 0.0
  %2886 = vmatpush1.msra.mxu0 %v2097
  %2887 = vmatprep.subr.mxu0 0.0
  %2888 = vmatpush1.msra.mxu0 %v2094
  %2889 = vmatprep.subr.mxu0 0.0
  %2890 = vmatpush1.msra.mxu0 %v2091
  %2891 = vmatprep.subr.mxu0 0.0
  %2892 = vmatpush1.msra.mxu0 %v2088
  %2893 = vmatprep.subr.mxu0 0.0
  %2894 = vmatpush1.msra.mxu0 %v2085
  %2895 = vmatprep.subr.mxu0 0.0
  %2896 = vmatpush1.msra.mxu0 %v2082
  %2897 = vmatprep.subr.mxu0 0.0
  %2898 = vmatpush1.msra.mxu0 %v2079
  %2899 = vmatprep.subr.mxu0 0.0
  %2900 = vmatpush1.msra.mxu0 %v2076
  %2901 = vmatprep.subr.mxu0 0.0
  %2902 = vmatpush1.msra.mxu0 %v2073
  %2903 = vmatprep.subr.mxu0 0.0
  %2904 = vmatpush1.msra.mxu0 %v2070
  %2905 = vmatprep.subr.mxu0 0.0
  %2906 = vmatpush1.msra.mxu0 %v2067
  %2907 = vmatprep.subr.mxu0 0.0
  %2908 = vmatpush1.msra.mxu0 %v2064
  %2909 = vmatprep.subr.mxu0 0.0
  %2910 = vmatpush2.msra.mxu0 %v2157
  %2911 = vmatprep.subr.mxu0 0.0
  %2912 = vmatpush2.msra.mxu0 %v2154
  %2913 = vmatprep.subr.mxu0 0.0
  %2914 = vmatpush2.msra.mxu0 %v2151
  %2915 = vmatprep.subr.mxu0 0.0
  %2916 = vmatpush2.msra.mxu0 %v2148
  %2917 = vmatprep.subr.mxu0 0.0
  %2918 = vmatpush2.msra.mxu0 %v2145
  %2919 = vmatprep.subr.mxu0 0.0
  %2920 = vmatpush2.msra.mxu0 %v2142
  %2921 = vmatprep.subr.mxu0 0.0
  %2922 = vmatpush2.msra.mxu0 %v2139
  %2923 = vmatprep.subr.mxu0 0.0
  %2924 = vmatpush2.msra.mxu0 %v2136
  %2925 = vmatprep.subr.mxu0 0.0
  %2926 = vmatpush2.msra.mxu0 %v2133
  %2927 = vmatprep.subr.mxu0 0.0
  %2928 = vmatpush2.msra.mxu0 %v2130
  %2929 = vmatprep.subr.mxu0 0.0
  %2930 = vmatpush2.msra.mxu0 %v2127
  %2931 = vmatprep.subr.mxu0 0.0
  %2932 = vmatpush2.msra.mxu0 %v2124
  %2933 = vmatprep.subr.mxu0 0.0
  %2934 = vmatpush2.msra.mxu0 %v2121
  %2935 = vmatprep.subr.mxu0 0.0
  %2936 = vmatpush2.msra.mxu0 %v2118
  %2937 = vmatprep.subr.mxu0 0.0
  %2938 = vmatpush2.msra.mxu0 %v2115
  %2939 = vmatprep.subr.mxu0 0.0
  %2940 = vmatpush2.msra.mxu0 %v2112
  %2941 = vmatprep.mubr.f32.mxu0 %v1990
  %2942 = vmatmul.mubr.f32.gmra.mxu0 %v1988
  %v2943 = vpop.f32.mrf.mxu0
  %v2944 = vadd.f32 %v2729, %v2943
  %v2945 = vpop.f32.mrf.mxu0
  %2946 = vdwg.mxu0
  %2947 = vmatprep.subr.mxu0 0.0
  %2948 = vmatpush1.msra.mxu0 0.0
  %2949 = vmatprep.subr.mxu0 0.0
  %2950 = vmatpush1.msra.mxu0 0.0
  %2951 = vmatprep.subr.mxu0 0.0
  %2952 = vmatpush1.msra.mxu0 0.0
  %2953 = vmatprep.subr.mxu0 0.0
  %2954 = vmatpush1.msra.mxu0 0.0
  %2955 = vmatprep.subr.mxu0 0.0
  %2956 = vmatpush1.msra.mxu0 0.0
  %2957 = vmatprep.subr.mxu0 0.0
  %2958 = vmatpush1.msra.mxu0 0.0
  %2959 = vmatprep.subr.mxu0 0.0
  %2960 = vmatpush1.msra.mxu0 0.0
  %2961 = vmatprep.subr.mxu0 0.0
  %2962 = vmatpush1.msra.mxu0 0.0
  %2963 = vmatprep.subr.mxu0 0.0
  %2964 = vmatpush1.msra.mxu0 %v2181
  %2965 = vmatprep.subr.mxu0 0.0
  %2966 = vmatpush1.msra.mxu0 %v2178
  %2967 = vmatprep.subr.mxu0 0.0
  %2968 = vmatpush1.msra.mxu0 %v2175
  %2969 = vmatprep.subr.mxu0 0.0
  %2970 = vmatpush1.msra.mxu0 %v2172
  %2971 = vmatprep.subr.mxu0 0.0
  %2972 = vmatpush1.msra.mxu0 %v2169
  %2973 = vmatprep.subr.mxu0 0.0
  %2974 = vmatpush1.msra.mxu0 %v2166
  %2975 = vmatprep.subr.mxu0 0.0
  %2976 = vmatpush1.msra.mxu0 %v2163
  %2977 = vmatprep.subr.mxu0 0.0
  %2978 = vmatpush1.msra.mxu0 %v2160
  %2979 = vmatprep.subr.mxu0 0.0
  %2980 = vmatpush2.msra.mxu0 0.0
  %2981 = vmatprep.subr.mxu0 0.0
  %2982 = vmatpush2.msra.mxu0 0.0
  %2983 = vmatprep.subr.mxu0 0.0
  %2984 = vmatpush2.msra.mxu0 0.0
  %2985 = vmatprep.subr.mxu0 0.0
  %2986 = vmatpush2.msra.mxu0 0.0
  %2987 = vmatprep.subr.mxu0 0.0
  %2988 = vmatpush2.msra.mxu0 0.0
  %2989 = vmatprep.subr.mxu0 0.0
  %2990 = vmatpush2.msra.mxu0 0.0
  %2991 = vmatprep.subr.mxu0 0.0
  %2992 = vmatpush2.msra.mxu0 0.0
  %2993 = vmatprep.subr.mxu0 0.0
  %2994 = vmatpush2.msra.mxu0 0.0
  %2995 = vmatprep.subr.mxu0 0.0
  %2996 = vmatpush2.msra.mxu0 0.0
  %2997 = vmatprep.subr.mxu0 0.0
  %2998 = vmatpush2.msra.mxu0 0.0
  %2999 = vmatprep.subr.mxu0 0.0
  %3000 = vmatpush2.msra.mxu0 0.0
  %3001 = vmatprep.subr.mxu0 0.0
  %3002 = vmatpush2.msra.mxu0 0.0
  %3003 = vmatprep.subr.mxu0 0.0
  %3004 = vmatpush2.msra.mxu0 0.0
  %3005 = vmatprep.subr.mxu0 0.0
  %3006 = vmatpush2.msra.mxu0 0.0
  %3007 = vmatprep.subr.mxu0 0.0
  %3008 = vmatpush2.msra.mxu0 0.0
  %3009 = vmatprep.subr.mxu0 0.0
  %3010 = vmatpush2.msra.mxu0 0.0
  %3011 = vmatprep.mubr.f32.mxu0 0.0
  %3012 = vmatmul.mubr.f32.gmra.mxu0 %v2733
  %v3013 = vpop.f32.mrf.mxu0
  %v3014 = vadd.f32 %v2944, %v3013
  %v3015 = vpop.f32.mrf.mxu0
  %3016 = vdwg.mxu0
  %s3017 = scalar_lea.vmem %s4, 2
  %v3018 = vld [vmem:[%s3017] ss:$8 sm:$0x7]
  %v3020 = vlaneseq
  %v3021 = vshrl.u32 %v3020, 7
  %v3022 = vsub.s32 0, %v3021
  %v3023 = vrot.slane %v3018, %v3022
  %v3024 = vlaneseq
  %v3025 = vshrl.u32 %v3024, 7
  %v3026 = vsub.s32 1, %v3025
  %v3027 = vrot.slane %v3018, %v3026
  %v3028 = vlaneseq
  %v3029 = vshrl.u32 %v3028, 7
  %v3030 = vsub.s32 2, %v3029
  %v3031 = vrot.slane %v3018, %v3030
  %v3035 = vadd.f32 %v2873, %v3023
  %v3036 = vadd.f32 %v2875, %v3027
  %v3037 = vadd.f32 %v3014, %v3031
  %v3038 = vmax.f32 %v3035, 0.0
  %v3039 = vmax.f32 %v3036, 0.0
  %v3040 = vmax.f32 %v3037, 0.0
  %v3041 = vld [vmem:[%s2 + $0x60] sm:$0xf]
  %vm3042 = vcmask 48128
  %v3044 = vsel %vm3042, %v3041, 0
  %vm3046 = vcmask 1045504
  %v3048 = vsel %vm3046, %v3038, 0
  %v3051 = vsel %vm3046, %v3039, 0
  %v3054 = vsel %vm3046, %v3040, 0
  %3056 = vmatprep.subr.mxu0 0.0
  %3057 = vmatpush1.msra.mxu0 0.0
  %3058 = vmatprep.subr.mxu0 0.0
  %3059 = vmatpush1.msra.mxu0 0.0
  %3060 = vmatprep.subr.mxu0 0.0
  %3061 = vmatpush1.msra.mxu0 0.0
  %3062 = vmatprep.subr.mxu0 0.0
  %3063 = vmatpush1.msra.mxu0 0.0
  %3064 = vmatprep.subr.mxu0 0.0
  %3065 = vmatpush1.msra.mxu0 0.0
  %3066 = vmatprep.subr.mxu0 0.0
  %3067 = vmatpush1.msra.mxu0 0.0
  %3068 = vmatprep.subr.mxu0 0.0
  %3069 = vmatpush1.msra.mxu0 0.0
  %3070 = vmatprep.subr.mxu0 0.0
  %3071 = vmatpush1.msra.mxu0 0.0
  %3072 = vmatprep.subr.mxu0 0.0
  %3073 = vmatpush1.msra.mxu0 0.0
  %3074 = vmatprep.subr.mxu0 0.0
  %3075 = vmatpush1.msra.mxu0 0.0
  %3076 = vmatprep.subr.mxu0 0.0
  %3077 = vmatpush1.msra.mxu0 0.0
  %3078 = vmatprep.subr.mxu0 0.0
  %3079 = vmatpush1.msra.mxu0 0.0
  %3080 = vmatprep.subr.mxu0 0.0
  %3081 = vmatpush1.msra.mxu0 0.0
  %3082 = vmatprep.subr.mxu0 0.0
  %3083 = vmatpush1.msra.mxu0 0.0
  %3084 = vmatprep.subr.mxu0 0.0
  %3085 = vmatpush1.msra.mxu0 0.0
  %3086 = vmatprep.subr.mxu0 %v3051
  %3087 = vmatpush1.msra.mxu0 %v3048
  %3088 = vmatprep.subr.mxu0 0.0
  %3089 = vmatpush2.msra.mxu0 0.0
  %3090 = vmatprep.subr.mxu0 0.0
  %3091 = vmatpush2.msra.mxu0 0.0
  %3092 = vmatprep.subr.mxu0 0.0
  %3093 = vmatpush2.msra.mxu0 0.0
  %3094 = vmatprep.subr.mxu0 0.0
  %3095 = vmatpush2.msra.mxu0 0.0
  %3096 = vmatprep.subr.mxu0 0.0
  %3097 = vmatpush2.msra.mxu0 0.0
  %3098 = vmatprep.subr.mxu0 0.0
  %3099 = vmatpush2.msra.mxu0 0.0
  %3100 = vmatprep.subr.mxu0 0.0
  %3101 = vmatpush2.msra.mxu0 0.0
  %3102 = vmatprep.subr.mxu0 0.0
  %3103 = vmatpush2.msra.mxu0 0.0
  %3104 = vmatprep.subr.mxu0 0.0
  %3105 = vmatpush2.msra.mxu0 0.0
  %3106 = vmatprep.subr.mxu0 0.0
  %3107 = vmatpush2.msra.mxu0 0.0
  %3108 = vmatprep.subr.mxu0 0.0
  %3109 = vmatpush2.msra.mxu0 0.0
  %3110 = vmatprep.subr.mxu0 0.0
  %3111 = vmatpush2.msra.mxu0 0.0
  %3112 = vmatprep.subr.mxu0 0.0
  %3113 = vmatpush2.msra.mxu0 0.0
  %3114 = vmatprep.subr.mxu0 0.0
  %3115 = vmatpush2.msra.mxu0 0.0
  %3116 = vmatprep.subr.mxu0 0.0
  %3117 = vmatpush2.msra.mxu0 0.0
  %3118 = vmatprep.subr.mxu0 0.0
  %3119 = vmatpush2.msra.mxu0 0.0
  %3120 = vmatprep.mubr.f32.mxu0 0.0
  %3121 = vmatmul.mubr.f32.gmra.mxu0 %v3044
  %v3122 = vpop.f32.mrf.mxu0
  %v3123 = vadd.f32 0.0, %v3122
  %v3124 = vpop.f32.mrf.mxu0
  %v3125 = vadd.f32 0.0, %v3124
  %3126 = vdwg.mxu0
  %3127 = vmatprep.subr.mxu0 0.0
  %3128 = vmatpush1.msra.mxu0 0.0
  %3129 = vmatprep.subr.mxu0 0.0
  %3130 = vmatpush1.msra.mxu0 0.0
  %3131 = vmatprep.subr.mxu0 0.0
  %3132 = vmatpush1.msra.mxu0 0.0
  %3133 = vmatprep.subr.mxu0 0.0
  %3134 = vmatpush1.msra.mxu0 0.0
  %3135 = vmatprep.subr.mxu0 0.0
  %3136 = vmatpush1.msra.mxu0 0.0
  %3137 = vmatprep.subr.mxu0 0.0
  %3138 = vmatpush1.msra.mxu0 0.0
  %3139 = vmatprep.subr.mxu0 0.0
  %3140 = vmatpush1.msra.mxu0 0.0
  %3141 = vmatprep.subr.mxu0 0.0
  %3142 = vmatpush1.msra.mxu0 0.0
  %3143 = vmatprep.subr.mxu0 0.0
  %3144 = vmatpush1.msra.mxu0 0.0
  %3145 = vmatprep.subr.mxu0 0.0
  %3146 = vmatpush1.msra.mxu0 0.0
  %3147 = vmatprep.subr.mxu0 0.0
  %3148 = vmatpush1.msra.mxu0 0.0
  %3149 = vmatprep.subr.mxu0 0.0
  %3150 = vmatpush1.msra.mxu0 0.0
  %3151 = vmatprep.subr.mxu0 0.0
  %3152 = vmatpush1.msra.mxu0 0.0
  %3153 = vmatprep.subr.mxu0 0.0
  %3154 = vmatpush1.msra.mxu0 0.0
  %3155 = vmatprep.subr.mxu0 0.0
  %3156 = vmatpush1.msra.mxu0 0.0
  %3157 = vmatprep.subr.mxu0 0.0
  %3158 = vmatpush1.msra.mxu0 %v3054
  %3159 = vmatprep.subr.mxu0 0.0
  %3160 = vmatpush2.msra.mxu0 0.0
  %3161 = vmatprep.subr.mxu0 0.0
  %3162 = vmatpush2.msra.mxu0 0.0
  %3163 = vmatprep.subr.mxu0 0.0
  %3164 = vmatpush2.msra.mxu0 0.0
  %3165 = vmatprep.subr.mxu0 0.0
  %3166 = vmatpush2.msra.mxu0 0.0
  %3167 = vmatprep.subr.mxu0 0.0
  %3168 = vmatpush2.msra.mxu0 0.0
  %3169 = vmatprep.subr.mxu0 0.0
  %3170 = vmatpush2.msra.mxu0 0.0
  %3171 = vmatprep.subr.mxu0 0.0
  %3172 = vmatpush2.msra.mxu0 0.0
  %3173 = vmatprep.subr.mxu0 0.0
  %3174 = vmatpush2.msra.mxu0 0.0
  %3175 = vmatprep.subr.mxu0 0.0
  %3176 = vmatpush2.msra.mxu0 0.0
  %3177 = vmatprep.subr.mxu0 0.0
  %3178 = vmatpush2.msra.mxu0 0.0
  %3179 = vmatprep.subr.mxu0 0.0
  %3180 = vmatpush2.msra.mxu0 0.0
  %3181 = vmatprep.subr.mxu0 0.0
  %3182 = vmatpush2.msra.mxu0 0.0
  %3183 = vmatprep.subr.mxu0 0.0
  %3184 = vmatpush2.msra.mxu0 0.0
  %3185 = vmatprep.subr.mxu0 0.0
  %3186 = vmatpush2.msra.mxu0 0.0
  %3187 = vmatprep.subr.mxu0 0.0
  %3188 = vmatpush2.msra.mxu0 0.0
  %3189 = vmatprep.subr.mxu0 0.0
  %3190 = vmatpush2.msra.mxu0 0.0
  %3191 = vmatprep.mubr.f32.mxu0 0.0
  %3192 = vmatmul.mubr.f32.gmra.mxu0 %v3044
  %v3193 = vpop.f32.mrf.mxu0
  %v3194 = vadd.f32 0.0, %v3193
  %v3195 = vpop.f32.mrf.mxu0
  %3196 = vdwg.mxu0
  %v3197 = vld [vmem:[%s3 + $0x11d0] sm:$0xff]
  %v3198 = vld [vmem:[%s3 + $0x11d8] sm:$0xff]
  %v3199 = vld [vmem:[%s3 + $0x11e0] sm:$0xff]
  %v3200 = vld [vmem:[%s3 + $0x11e8] sm:$0xff]
  %v3201 = vld [vmem:[%s3 + $0x11f0] sm:$0xff]
  %v3202 = vld [vmem:[%s3 + $0x11f8] sm:$0xff]
  %v3203 = vld [vmem:[%s3 + $0x1200] sm:$0xff]
  %v3204 = vld [vmem:[%s3 + $0x1208] sm:$0xff]
  %v3205 = vld [vmem:[%s3 + $0x1210] sm:$0xff]
  %v3206 = vld [vmem:[%s3 + $0x1218] sm:$0xff]
  %v3207 = vld [vmem:[%s3 + $0x1220] sm:$0xff]
  %v3208 = vld [vmem:[%s3 + $0x1228] sm:$0xff]
  %v3209 = vld [vmem:[%s3 + $0x1230] sm:$0xff]
  %v3210 = vld [vmem:[%s3 + $0x1238] sm:$0xff]
  %v3211 = vld [vmem:[%s3 + $0x1240] sm:$0xff]
  %v3212 = vld [vmem:[%s3 + $0x1248] sm:$0xff]
  %v3213 = vld [vmem:[%s3 + $0x1250] sm:$0xff]
  %v3214 = vld [vmem:[%s3 + $0x1258] sm:$0xff]
  %v3215 = vld [vmem:[%s3 + $0x1260] sm:$0xff]
  %v3216 = vld [vmem:[%s3 + $0x1268] sm:$0xff]
  %v3217 = vld [vmem:[%s3 + $0x1270] sm:$0xff]
  %v3218 = vld [vmem:[%s3 + $0x1278] sm:$0xff]
  %v3219 = vld [vmem:[%s3 + $0x1280] sm:$0xff]
  %v3220 = vld [vmem:[%s3 + $0x1288] sm:$0xff]
  %v3221 = vld [vmem:[%s3 + $0x1290] sm:$0xff]
  %v3222 = vld [vmem:[%s3 + $0x1298] sm:$0xff]
  %v3223 = vld [vmem:[%s3 + $0x12a0] sm:$0xff]
  %v3224 = vld [vmem:[%s3 + $0x12a8] sm:$0xff]
  %v3225 = vld [vmem:[%s3 + $0x12b0] sm:$0xff]
  %v3226 = vld [vmem:[%s3 + $0x12b8] sm:$0xff]
  %v3227 = vld [vmem:[%s3 + $0x12c0] sm:$0xff]
  %v3228 = vld [vmem:[%s3 + $0x12c8] sm:$0xff]
  %v3229 = vld [vmem:[%s3 + $0x12d0] sm:$0xff]
  %v3230 = vld [vmem:[%s3 + $0x12d8] sm:$0xff]
  %v3231 = vld [vmem:[%s3 + $0x12e0] sm:$0xff]
  %v3232 = vld [vmem:[%s3 + $0x12e8] sm:$0xff]
  %v3233 = vld [vmem:[%s3 + $0x12f0] sm:$0xff]
  %v3234 = vld [vmem:[%s3 + $0x12f8] sm:$0xff]
  %v3235 = vld [vmem:[%s3 + $0x1300] sm:$0xff]
  %v3236 = vld [vmem:[%s3 + $0x1308] sm:$0xff]
  %v3237 = vld [vmem:[%s3 + $0x1310] sm:$0xff]
  %v3238 = vld [vmem:[%s3 + $0x1318] sm:$0xff]
  %v3239 = vld [vmem:[%s3 + $0x1320] sm:$0xff]
  %v3240 = vld [vmem:[%s3 + $0x1328] sm:$0xff]
  %v3241 = vld [vmem:[%s3 + $0x1330] sm:$0xff]
  %v3242 = vld [vmem:[%s3 + $0x1338] sm:$0xff]
  %v3243 = vld [vmem:[%s3 + $0x1340] sm:$0xff]
  %v3244 = vld [vmem:[%s3 + $0x1348] sm:$0xff]
  %v3245 = vld [vmem:[%s3 + $0x1350] sm:$0xff]
  %v3246 = vld [vmem:[%s3 + $0x1358] sm:$0xff]
  %v3247 = vld [vmem:[%s3 + $0x1360] sm:$0xff]
  %v3248 = vld [vmem:[%s3 + $0x1368] sm:$0xff]
  %v3249 = vld [vmem:[%s3 + $0x1370] sm:$0xff]
  %v3250 = vld [vmem:[%s3 + $0x1378] sm:$0xff]
  %v3251 = vld [vmem:[%s3 + $0x1380] sm:$0xff]
  %v3252 = vld [vmem:[%s3 + $0x1388] sm:$0xff]
  %v3253 = vld [vmem:[%s3 + $0x1390] sm:$0xff]
  %v3254 = vld [vmem:[%s3 + $0x1398] sm:$0xff]
  %v3255 = vld [vmem:[%s3 + $0x13a0] sm:$0xff]
  %v3256 = vld [vmem:[%s3 + $0x13a8] sm:$0xff]
  %v3257 = vld [vmem:[%s3 + $0x13b0] sm:$0xff]
  %v3258 = vld [vmem:[%s3 + $0x13b8] sm:$0xff]
  %v3259 = vld [vmem:[%s3 + $0x13c0] sm:$0xff]
  %v3260 = vld [vmem:[%s3 + $0x13c8] sm:$0xff]
  %v3261 = vld [vmem:[%s3 + $0x13d0] sm:$0xff]
  %v3262 = vld [vmem:[%s3 + $0x13d8] sm:$0xff]
  %v3263 = vld [vmem:[%s3 + $0x13e0] sm:$0xff]
  %v3264 = vld [vmem:[%s3 + $0x13e8] sm:$0xff]
  %v3265 = vld [vmem:[%s3 + $0x13f0] sm:$0xff]
  %v3266 = vld [vmem:[%s3 + $0x13f8] sm:$0xff]
  %v3267 = vld [vmem:[%s3 + $0x1400] sm:$0xff]
  %v3268 = vld [vmem:[%s3 + $0x1408] sm:$0xff]
  %v3269 = vld [vmem:[%s3 + $0x1410] sm:$0xff]
  %v3270 = vld [vmem:[%s3 + $0x1418] sm:$0xff]
  %v3271 = vld [vmem:[%s3 + $0x1420] sm:$0xff]
  %v3272 = vld [vmem:[%s3 + $0x1428] sm:$0xff]
  %v3273 = vld [vmem:[%s3 + $0x1430] sm:$0xff]
  %v3274 = vld [vmem:[%s3 + $0x1438] sm:$0xff]
  %v3275 = vld [vmem:[%s3 + $0x1440] sm:$0xff]
  %v3276 = vld [vmem:[%s3 + $0x1448] sm:$0xff]
  %v3277 = vld [vmem:[%s3 + $0x1450] sm:$0xff]
  %v3278 = vld [vmem:[%s3 + $0x1458] sm:$0xff]
  %v3279 = vld [vmem:[%s3 + $0x1460] sm:$0xff]
  %v3280 = vld [vmem:[%s3 + $0x1468] sm:$0xff]
  %v3281 = vld [vmem:[%s3 + $0x1470] sm:$0xff]
  %v3282 = vld [vmem:[%s3 + $0x1478] sm:$0xff]
  %v3283 = vld [vmem:[%s3 + $0x1480] sm:$0xff]
  %v3284 = vld [vmem:[%s3 + $0x1488] sm:$0xff]
  %v3285 = vld [vmem:[%s3 + $0x1490] sm:$0xff]
  %v3286 = vld [vmem:[%s3 + $0x1498] sm:$0xff]
  %v3287 = vld [vmem:[%s3 + $0x14a0] sm:$0xff]
  %v3288 = vld [vmem:[%s3 + $0x14a8] sm:$0xff]
  %v3289 = vld [vmem:[%s3 + $0x14b0] sm:$0xff]
  %v3290 = vld [vmem:[%s3 + $0x14b8] sm:$0xff]
  %v3291 = vld [vmem:[%s3 + $0x14c0] sm:$0xff]
  %v3292 = vld [vmem:[%s3 + $0x14c8] sm:$0xff]
  %v3293 = vld [vmem:[%s3 + $0x14d0] sm:$0xff]
  %v3294 = vld [vmem:[%s3 + $0x14d8] sm:$0xff]
  %v3295 = vld [vmem:[%s3 + $0x14e0] sm:$0xff]
  %v3296 = vld [vmem:[%s3 + $0x14e8] sm:$0xff]
  %v3297 = vld [vmem:[%s3 + $0x14f0] sm:$0xff]
  %v3298 = vld [vmem:[%s3 + $0x14f8] sm:$0xff]
  %v3299 = vld [vmem:[%s3 + $0x1500] sm:$0xff]
  %v3300 = vld [vmem:[%s3 + $0x1508] sm:$0xff]
  %v3301 = vld [vmem:[%s3 + $0x1510] sm:$0xff]
  %v3302 = vld [vmem:[%s3 + $0x1518] sm:$0xff]
  %v3303 = vld [vmem:[%s3 + $0x1520] sm:$0xff]
  %v3304 = vld [vmem:[%s3 + $0x1528] sm:$0xff]
  %v3305 = vld [vmem:[%s3 + $0x1530] sm:$0xff]
  %v3306 = vld [vmem:[%s3 + $0x1538] sm:$0xff]
  %v3307 = vld [vmem:[%s3 + $0x1540] sm:$0xff]
  %v3308 = vld [vmem:[%s3 + $0x1548] sm:$0xff]
  %v3309 = vld [vmem:[%s3 + $0x1550] sm:$0xff]
  %v3310 = vld [vmem:[%s3 + $0x1558] sm:$0xff]
  %v3311 = vld [vmem:[%s3 + $0x1560] sm:$0xff]
  %v3312 = vld [vmem:[%s3 + $0x1568] sm:$0xff]
  %v3313 = vld [vmem:[%s3 + $0x1570] sm:$0xff]
  %v3314 = vld [vmem:[%s3 + $0x1578] sm:$0xff]
  %v3315 = vld [vmem:[%s3 + $0x1580] sm:$0xff]
  %v3316 = vld [vmem:[%s3 + $0x1588] sm:$0xff]
  %v3317 = vld [vmem:[%s2 + $0x68] sm:$0xf]
  %v3319 = vsel %vm3042, %v3317, 0
  %3321 = vmatprep.subr.mxu0 0.0
  %3322 = vmatpush1.msra.mxu0 0.0
  %3323 = vmatprep.subr.mxu0 0.0
  %3324 = vmatpush1.msra.mxu0 0.0
  %3325 = vmatprep.subr.mxu0 0.0
  %3326 = vmatpush1.msra.mxu0 0.0
  %3327 = vmatprep.subr.mxu0 0.0
  %3328 = vmatpush1.msra.mxu0 0.0
  %3329 = vmatprep.subr.mxu0 0.0
  %3330 = vmatpush1.msra.mxu0 0.0
  %3331 = vmatprep.subr.mxu0 0.0
  %3332 = vmatpush1.msra.mxu0 0.0
  %3333 = vmatprep.subr.mxu0 0.0
  %3334 = vmatpush1.msra.mxu0 0.0
  %3335 = vmatprep.subr.mxu0 0.0
  %3336 = vmatpush1.msra.mxu0 0.0
  %3337 = vmatprep.subr.mxu0 0.0
  %3338 = vmatpush1.msra.mxu0 0.0
  %3339 = vmatprep.subr.mxu0 0.0
  %3340 = vmatpush1.msra.mxu0 0.0
  %3341 = vmatprep.subr.mxu0 0.0
  %3342 = vmatpush1.msra.mxu0 0.0
  %3343 = vmatprep.subr.mxu0 0.0
  %3344 = vmatpush1.msra.mxu0 0.0
  %3345 = vmatprep.subr.mxu0 0.0
  %3346 = vmatpush1.msra.mxu0 0.0
  %3347 = vmatprep.subr.mxu0 0.0
  %3348 = vmatpush1.msra.mxu0 0.0
  %3349 = vmatprep.subr.mxu0 0.0
  %3350 = vmatpush1.msra.mxu0 0.0
  %3351 = vmatprep.subr.mxu0 %v3051
  %3352 = vmatpush1.msra.mxu0 %v3048
  %3353 = vmatprep.subr.mxu0 0.0
  %3354 = vmatpush2.msra.mxu0 0.0
  %3355 = vmatprep.subr.mxu0 0.0
  %3356 = vmatpush2.msra.mxu0 0.0
  %3357 = vmatprep.subr.mxu0 0.0
  %3358 = vmatpush2.msra.mxu0 0.0
  %3359 = vmatprep.subr.mxu0 0.0
  %3360 = vmatpush2.msra.mxu0 0.0
  %3361 = vmatprep.subr.mxu0 0.0
  %3362 = vmatpush2.msra.mxu0 0.0
  %3363 = vmatprep.subr.mxu0 0.0
  %3364 = vmatpush2.msra.mxu0 0.0
  %3365 = vmatprep.subr.mxu0 0.0
  %3366 = vmatpush2.msra.mxu0 0.0
  %3367 = vmatprep.subr.mxu0 0.0
  %3368 = vmatpush2.msra.mxu0 0.0
  %3369 = vmatprep.subr.mxu0 0.0
  %3370 = vmatpush2.msra.mxu0 0.0
  %3371 = vmatprep.subr.mxu0 0.0
  %3372 = vmatpush2.msra.mxu0 0.0
  %3373 = vmatprep.subr.mxu0 0.0
  %3374 = vmatpush2.msra.mxu0 0.0
  %3375 = vmatprep.subr.mxu0 0.0
  %3376 = vmatpush2.msra.mxu0 0.0
  %3377 = vmatprep.subr.mxu0 0.0
  %3378 = vmatpush2.msra.mxu0 0.0
  %3379 = vmatprep.subr.mxu0 0.0
  %3380 = vmatpush2.msra.mxu0 0.0
  %3381 = vmatprep.subr.mxu0 0.0
  %3382 = vmatpush2.msra.mxu0 0.0
  %3383 = vmatprep.subr.mxu0 0.0
  %3384 = vmatpush2.msra.mxu0 0.0
  %3385 = vmatprep.mubr.f32.mxu0 0.0
  %3386 = vmatmul.mubr.f32.gmra.mxu0 %v3319
  %v3387 = vpop.f32.mrf.mxu0
  %v3388 = vadd.f32 0.0, %v3387
  %v3389 = vpop.f32.mrf.mxu0
  %v3390 = vadd.f32 0.0, %v3389
  %3391 = vdwg.mxu0
  %3392 = vmatprep.subr.mxu0 0.0
  %3393 = vmatpush1.msra.mxu0 0.0
  %3394 = vmatprep.subr.mxu0 0.0
  %3395 = vmatpush1.msra.mxu0 0.0
  %3396 = vmatprep.subr.mxu0 0.0
  %3397 = vmatpush1.msra.mxu0 0.0
  %3398 = vmatprep.subr.mxu0 0.0
  %3399 = vmatpush1.msra.mxu0 0.0
  %3400 = vmatprep.subr.mxu0 0.0
  %3401 = vmatpush1.msra.mxu0 0.0
  %3402 = vmatprep.subr.mxu0 0.0
  %3403 = vmatpush1.msra.mxu0 0.0
  %3404 = vmatprep.subr.mxu0 0.0
  %3405 = vmatpush1.msra.mxu0 0.0
  %3406 = vmatprep.subr.mxu0 0.0
  %3407 = vmatpush1.msra.mxu0 0.0
  %3408 = vmatprep.subr.mxu0 0.0
  %3409 = vmatpush1.msra.mxu0 0.0
  %3410 = vmatprep.subr.mxu0 0.0
  %3411 = vmatpush1.msra.mxu0 0.0
  %3412 = vmatprep.subr.mxu0 0.0
  %3413 = vmatpush1.msra.mxu0 0.0
  %3414 = vmatprep.subr.mxu0 0.0
  %3415 = vmatpush1.msra.mxu0 0.0
  %3416 = vmatprep.subr.mxu0 0.0
  %3417 = vmatpush1.msra.mxu0 0.0
  %3418 = vmatprep.subr.mxu0 0.0
  %3419 = vmatpush1.msra.mxu0 0.0
  %3420 = vmatprep.subr.mxu0 0.0
  %3421 = vmatpush1.msra.mxu0 0.0
  %3422 = vmatprep.subr.mxu0 0.0
  %3423 = vmatpush1.msra.mxu0 %v3054
  %3424 = vmatprep.subr.mxu0 0.0
  %3425 = vmatpush2.msra.mxu0 0.0
  %3426 = vmatprep.subr.mxu0 0.0
  %3427 = vmatpush2.msra.mxu0 0.0
  %3428 = vmatprep.subr.mxu0 0.0
  %3429 = vmatpush2.msra.mxu0 0.0
  %3430 = vmatprep.subr.mxu0 0.0
  %3431 = vmatpush2.msra.mxu0 0.0
  %3432 = vmatprep.subr.mxu0 0.0
  %3433 = vmatpush2.msra.mxu0 0.0
  %3434 = vmatprep.subr.mxu0 0.0
  %3435 = vmatpush2.msra.mxu0 0.0
  %3436 = vmatprep.subr.mxu0 0.0
  %3437 = vmatpush2.msra.mxu0 0.0
  %3438 = vmatprep.subr.mxu0 0.0
  %3439 = vmatpush2.msra.mxu0 0.0
  %3440 = vmatprep.subr.mxu0 0.0
  %3441 = vmatpush2.msra.mxu0 0.0
  %3442 = vmatprep.subr.mxu0 0.0
  %3443 = vmatpush2.msra.mxu0 0.0
  %3444 = vmatprep.subr.mxu0 0.0
  %3445 = vmatpush2.msra.mxu0 0.0
  %3446 = vmatprep.subr.mxu0 0.0
  %3447 = vmatpush2.msra.mxu0 0.0
  %3448 = vmatprep.subr.mxu0 0.0
  %3449 = vmatpush2.msra.mxu0 0.0
  %3450 = vmatprep.subr.mxu0 0.0
  %3451 = vmatpush2.msra.mxu0 0.0
  %3452 = vmatprep.subr.mxu0 0.0
  %3453 = vmatpush2.msra.mxu0 0.0
  %3454 = vmatprep.subr.mxu0 0.0
  %3455 = vmatpush2.msra.mxu0 0.0
  %3456 = vmatprep.mubr.f32.mxu0 0.0
  %3457 = vmatmul.mubr.f32.gmra.mxu0 %v3319
  %v3458 = vpop.f32.mrf.mxu0
  %v3459 = vadd.f32 0.0, %v3458
  %v3460 = vpop.f32.mrf.mxu0
  %3461 = vdwg.mxu0
  %v3462 = vld [vmem:[%s3 + $0x1590] sm:$0xff]
  %v3463 = vld [vmem:[%s3 + $0x1598] sm:$0xff]
  %v3464 = vld [vmem:[%s3 + $0x15a0] sm:$0xff]
  %v3465 = vld [vmem:[%s3 + $0x15a8] sm:$0xff]
  %v3466 = vld [vmem:[%s3 + $0x15b0] sm:$0xff]
  %v3467 = vld [vmem:[%s3 + $0x15b8] sm:$0xff]
  %v3468 = vld [vmem:[%s3 + $0x15c0] sm:$0xff]
  %v3469 = vld [vmem:[%s3 + $0x15c8] sm:$0xff]
  %v3470 = vld [vmem:[%s3 + $0x15d0] sm:$0xff]
  %v3471 = vld [vmem:[%s3 + $0x15d8] sm:$0xff]
  %v3472 = vld [vmem:[%s3 + $0x15e0] sm:$0xff]
  %v3473 = vld [vmem:[%s3 + $0x15e8] sm:$0xff]
  %v3474 = vld [vmem:[%s3 + $0x15f0] sm:$0xff]
  %v3475 = vld [vmem:[%s3 + $0x15f8] sm:$0xff]
  %v3476 = vld [vmem:[%s3 + $0x1600] sm:$0xff]
  %v3477 = vld [vmem:[%s3 + $0x1608] sm:$0xff]
  %v3478 = vld [vmem:[%s3 + $0x1610] sm:$0xff]
  %v3479 = vld [vmem:[%s3 + $0x1618] sm:$0xff]
  %v3480 = vld [vmem:[%s3 + $0x1620] sm:$0xff]
  %v3481 = vld [vmem:[%s3 + $0x1628] sm:$0xff]
  %v3482 = vld [vmem:[%s3 + $0x1630] sm:$0xff]
  %v3483 = vld [vmem:[%s3 + $0x1638] sm:$0xff]
  %v3484 = vld [vmem:[%s3 + $0x1640] sm:$0xff]
  %v3485 = vld [vmem:[%s3 + $0x1648] sm:$0xff]
  %v3486 = vld [vmem:[%s3 + $0x1650] sm:$0xff]
  %v3487 = vld [vmem:[%s3 + $0x1658] sm:$0xff]
  %v3488 = vld [vmem:[%s3 + $0x1660] sm:$0xff]
  %v3489 = vld [vmem:[%s3 + $0x1668] sm:$0xff]
  %v3490 = vld [vmem:[%s3 + $0x1670] sm:$0xff]
  %v3491 = vld [vmem:[%s3 + $0x1678] sm:$0xff]
  %v3492 = vld [vmem:[%s3 + $0x1680] sm:$0xff]
  %v3493 = vld [vmem:[%s3 + $0x1688] sm:$0xff]
  %v3494 = vld [vmem:[%s3 + $0x1690] sm:$0xff]
  %v3495 = vld [vmem:[%s3 + $0x1698] sm:$0xff]
  %v3496 = vld [vmem:[%s3 + $0x16a0] sm:$0xff]
  %v3497 = vld [vmem:[%s3 + $0x16a8] sm:$0xff]
  %v3498 = vld [vmem:[%s3 + $0x16b0] sm:$0xff]
  %v3499 = vld [vmem:[%s3 + $0x16b8] sm:$0xff]
  %v3500 = vld [vmem:[%s3 + $0x16c0] sm:$0xff]
  %v3501 = vld [vmem:[%s3 + $0x16c8] sm:$0xff]
  %v3502 = vld [vmem:[%s3 + $0x16d0] sm:$0xff]
  %v3503 = vld [vmem:[%s3 + $0x16d8] sm:$0xff]
  %v3504 = vld [vmem:[%s3 + $0x16e0] sm:$0xff]
  %v3505 = vld [vmem:[%s3 + $0x16e8] sm:$0xff]
  %v3506 = vld [vmem:[%s3 + $0x16f0] sm:$0xff]
  %v3507 = vld [vmem:[%s3 + $0x16f8] sm:$0xff]
  %v3508 = vld [vmem:[%s3 + $0x1700] sm:$0xff]
  %v3509 = vld [vmem:[%s3 + $0x1708] sm:$0xff]
  %v3510 = vld [vmem:[%s3 + $0x1710] sm:$0xff]
  %v3511 = vld [vmem:[%s3 + $0x1718] sm:$0xff]
  %v3512 = vld [vmem:[%s3 + $0x1720] sm:$0xff]
  %v3513 = vld [vmem:[%s3 + $0x1728] sm:$0xff]
  %v3514 = vld [vmem:[%s3 + $0x1730] sm:$0xff]
  %v3515 = vld [vmem:[%s3 + $0x1738] sm:$0xff]
  %v3516 = vld [vmem:[%s3 + $0x1740] sm:$0xff]
  %v3517 = vld [vmem:[%s3 + $0x1748] sm:$0xff]
  %v3518 = vld [vmem:[%s3 + $0x1750] sm:$0xff]
  %v3519 = vld [vmem:[%s3 + $0x1758] sm:$0xff]
  %v3520 = vld [vmem:[%s3 + $0x1760] sm:$0xff]
  %v3521 = vld [vmem:[%s3 + $0x1768] sm:$0xff]
  %v3522 = vld [vmem:[%s3 + $0x1770] sm:$0xff]
  %v3523 = vld [vmem:[%s3 + $0x1778] sm:$0xff]
  %v3524 = vld [vmem:[%s3 + $0x1780] sm:$0xff]
  %v3525 = vld [vmem:[%s3 + $0x1788] sm:$0xff]
  %v3526 = vld [vmem:[%s3 + $0x1790] sm:$0xff]
  %v3527 = vld [vmem:[%s3 + $0x1798] sm:$0xff]
  %v3528 = vld [vmem:[%s3 + $0x17a0] sm:$0xff]
  %v3529 = vld [vmem:[%s3 + $0x17a8] sm:$0xff]
  %v3530 = vld [vmem:[%s3 + $0x17b0] sm:$0xff]
  %v3531 = vld [vmem:[%s3 + $0x17b8] sm:$0xff]
  %v3532 = vld [vmem:[%s3 + $0x17c0] sm:$0xff]
  %v3533 = vld [vmem:[%s3 + $0x17c8] sm:$0xff]
  %v3534 = vld [vmem:[%s3 + $0x17d0] sm:$0xff]
  %v3535 = vld [vmem:[%s3 + $0x17d8] sm:$0xff]
  %v3536 = vld [vmem:[%s3 + $0x17e0] sm:$0xff]
  %v3537 = vld [vmem:[%s3 + $0x17e8] sm:$0xff]
  %v3538 = vld [vmem:[%s3 + $0x17f0] sm:$0xff]
  %v3539 = vld [vmem:[%s3 + $0x17f8] sm:$0xff]
  %v3540 = vld [vmem:[%s3 + $0x1800] sm:$0xff]
  %v3541 = vld [vmem:[%s3 + $0x1808] sm:$0xff]
  %v3542 = vld [vmem:[%s3 + $0x1810] sm:$0xff]
  %v3543 = vld [vmem:[%s3 + $0x1818] sm:$0xff]
  %v3544 = vld [vmem:[%s3 + $0x1820] sm:$0xff]
  %v3545 = vld [vmem:[%s3 + $0x1828] sm:$0xff]
  %v3546 = vld [vmem:[%s3 + $0x1830] sm:$0xff]
  %v3547 = vld [vmem:[%s3 + $0x1838] sm:$0xff]
  %v3548 = vld [vmem:[%s3 + $0x1840] sm:$0xff]
  %v3549 = vld [vmem:[%s3 + $0x1848] sm:$0xff]
  %v3550 = vld [vmem:[%s3 + $0x1850] sm:$0xff]
  %v3551 = vld [vmem:[%s3 + $0x1858] sm:$0xff]
  %v3552 = vld [vmem:[%s3 + $0x1860] sm:$0xff]
  %v3553 = vld [vmem:[%s3 + $0x1868] sm:$0xff]
  %v3554 = vld [vmem:[%s3 + $0x1870] sm:$0xff]
  %v3555 = vld [vmem:[%s3 + $0x1878] sm:$0xff]
  %v3556 = vld [vmem:[%s3 + $0x1880] sm:$0xff]
  %v3557 = vld [vmem:[%s3 + $0x1888] sm:$0xff]
  %v3558 = vld [vmem:[%s3 + $0x1890] sm:$0xff]
  %v3559 = vld [vmem:[%s3 + $0x1898] sm:$0xff]
  %v3560 = vld [vmem:[%s3 + $0x18a0] sm:$0xff]
  %v3561 = vld [vmem:[%s3 + $0x18a8] sm:$0xff]
  %v3562 = vld [vmem:[%s3 + $0x18b0] sm:$0xff]
  %v3563 = vld [vmem:[%s3 + $0x18b8] sm:$0xff]
  %v3564 = vld [vmem:[%s3 + $0x18c0] sm:$0xff]
  %v3565 = vld [vmem:[%s3 + $0x18c8] sm:$0xff]
  %v3566 = vld [vmem:[%s3 + $0x18d0] sm:$0xff]
  %v3567 = vld [vmem:[%s3 + $0x18d8] sm:$0xff]
  %v3568 = vld [vmem:[%s3 + $0x18e0] sm:$0xff]
  %v3569 = vld [vmem:[%s3 + $0x18e8] sm:$0xff]
  %v3570 = vld [vmem:[%s3 + $0x18f0] sm:$0xff]
  %v3571 = vld [vmem:[%s3 + $0x18f8] sm:$0xff]
  %v3572 = vld [vmem:[%s3 + $0x1900] sm:$0xff]
  %v3573 = vld [vmem:[%s3 + $0x1908] sm:$0xff]
  %v3574 = vld [vmem:[%s3 + $0x1910] sm:$0xff]
  %v3575 = vld [vmem:[%s3 + $0x1918] sm:$0xff]
  %v3576 = vld [vmem:[%s3 + $0x1920] sm:$0xff]
  %v3577 = vld [vmem:[%s3 + $0x1928] sm:$0xff]
  %v3578 = vld [vmem:[%s3 + $0x1930] sm:$0xff]
  %v3579 = vld [vmem:[%s3 + $0x1938] sm:$0xff]
  %v3580 = vld [vmem:[%s3 + $0x1940] sm:$0xff]
  %v3581 = vld [vmem:[%s3 + $0x1948] sm:$0xff]
  %v3583 = vsel %vm1256, %v3459, 0
  %3585 = vmatprep.subr.mxu0 %v3508
  %3586 = vmatpush1.msra.mxu0 %v3507
  %3587 = vmatprep.subr.mxu0 %v3505
  %3588 = vmatpush1.msra.mxu0 %v3504
  %3589 = vmatprep.subr.mxu0 %v3502
  %3590 = vmatpush1.msra.mxu0 %v3501
  %3591 = vmatprep.subr.mxu0 %v3499
  %3592 = vmatpush1.msra.mxu0 %v3498
  %3593 = vmatprep.subr.mxu0 %v3496
  %3594 = vmatpush1.msra.mxu0 %v3495
  %3595 = vmatprep.subr.mxu0 %v3493
  %3596 = vmatpush1.msra.mxu0 %v3492
  %3597 = vmatprep.subr.mxu0 %v3490
  %3598 = vmatpush1.msra.mxu0 %v3489
  %3599 = vmatprep.subr.mxu0 %v3487
  %3600 = vmatpush1.msra.mxu0 %v3486
  %3601 = vmatprep.subr.mxu0 %v3484
  %3602 = vmatpush1.msra.mxu0 %v3483
  %3603 = vmatprep.subr.mxu0 %v3481
  %3604 = vmatpush1.msra.mxu0 %v3480
  %3605 = vmatprep.subr.mxu0 %v3478
  %3606 = vmatpush1.msra.mxu0 %v3477
  %3607 = vmatprep.subr.mxu0 %v3475
  %3608 = vmatpush1.msra.mxu0 %v3474
  %3609 = vmatprep.subr.mxu0 %v3472
  %3610 = vmatpush1.msra.mxu0 %v3471
  %3611 = vmatprep.subr.mxu0 %v3469
  %3612 = vmatpush1.msra.mxu0 %v3468
  %3613 = vmatprep.subr.mxu0 %v3466
  %3614 = vmatpush1.msra.mxu0 %v3465
  %3615 = vmatprep.subr.mxu0 %v3463
  %3616 = vmatpush1.msra.mxu0 %v3462
  %3617 = vmatprep.subr.mxu0 %v3556
  %3618 = vmatpush2.msra.mxu0 %v3555
  %3619 = vmatprep.subr.mxu0 %v3553
  %3620 = vmatpush2.msra.mxu0 %v3552
  %3621 = vmatprep.subr.mxu0 %v3550
  %3622 = vmatpush2.msra.mxu0 %v3549
  %3623 = vmatprep.subr.mxu0 %v3547
  %3624 = vmatpush2.msra.mxu0 %v3546
  %3625 = vmatprep.subr.mxu0 %v3544
  %3626 = vmatpush2.msra.mxu0 %v3543
  %3627 = vmatprep.subr.mxu0 %v3541
  %3628 = vmatpush2.msra.mxu0 %v3540
  %3629 = vmatprep.subr.mxu0 %v3538
  %3630 = vmatpush2.msra.mxu0 %v3537
  %3631 = vmatprep.subr.mxu0 %v3535
  %3632 = vmatpush2.msra.mxu0 %v3534
  %3633 = vmatprep.subr.mxu0 %v3532
  %3634 = vmatpush2.msra.mxu0 %v3531
  %3635 = vmatprep.subr.mxu0 %v3529
  %3636 = vmatpush2.msra.mxu0 %v3528
  %3637 = vmatprep.subr.mxu0 %v3526
  %3638 = vmatpush2.msra.mxu0 %v3525
  %3639 = vmatprep.subr.mxu0 %v3523
  %3640 = vmatpush2.msra.mxu0 %v3522
  %3641 = vmatprep.subr.mxu0 %v3520
  %3642 = vmatpush2.msra.mxu0 %v3519
  %3643 = vmatprep.subr.mxu0 %v3517
  %3644 = vmatpush2.msra.mxu0 %v3516
  %3645 = vmatprep.subr.mxu0 %v3514
  %3646 = vmatpush2.msra.mxu0 %v3513
  %3647 = vmatprep.subr.mxu0 %v3511
  %3648 = vmatpush2.msra.mxu0 %v3510
  %3649 = vmatprep.mubr.f32.mxu0 %v3390
  %3650 = vmatmul.mubr.f32.gmra.mxu0 %v3388
  %v3651 = vpop.f32.mrf.mxu0
  %v3652 = vadd.f32 0.0, %v3651
  %v3653 = vpop.f32.mrf.mxu0
  %v3654 = vadd.f32 0.0, %v3653
  %3655 = vdwg.mxu0
  %3656 = vmatprep.subr.mxu0 0.0
  %3657 = vmatpush1.msra.mxu0 0.0
  %3658 = vmatprep.subr.mxu0 0.0
  %3659 = vmatpush1.msra.mxu0 0.0
  %3660 = vmatprep.subr.mxu0 0.0
  %3661 = vmatpush1.msra.mxu0 0.0
  %3662 = vmatprep.subr.mxu0 0.0
  %3663 = vmatpush1.msra.mxu0 0.0
  %3664 = vmatprep.subr.mxu0 0.0
  %3665 = vmatpush1.msra.mxu0 0.0
  %3666 = vmatprep.subr.mxu0 0.0
  %3667 = vmatpush1.msra.mxu0 0.0
  %3668 = vmatprep.subr.mxu0 0.0
  %3669 = vmatpush1.msra.mxu0 0.0
  %3670 = vmatprep.subr.mxu0 0.0
  %3671 = vmatpush1.msra.mxu0 0.0
  %3672 = vmatprep.subr.mxu0 %v3580
  %3673 = vmatpush1.msra.mxu0 %v3579
  %3674 = vmatprep.subr.mxu0 %v3577
  %3675 = vmatpush1.msra.mxu0 %v3576
  %3676 = vmatprep.subr.mxu0 %v3574
  %3677 = vmatpush1.msra.mxu0 %v3573
  %3678 = vmatprep.subr.mxu0 %v3571
  %3679 = vmatpush1.msra.mxu0 %v3570
  %3680 = vmatprep.subr.mxu0 %v3568
  %3681 = vmatpush1.msra.mxu0 %v3567
  %3682 = vmatprep.subr.mxu0 %v3565
  %3683 = vmatpush1.msra.mxu0 %v3564
  %3684 = vmatprep.subr.mxu0 %v3562
  %3685 = vmatpush1.msra.mxu0 %v3561
  %3686 = vmatprep.subr.mxu0 %v3559
  %3687 = vmatpush1.msra.mxu0 %v3558
  %3688 = vmatprep.subr.mxu0 0.0
  %3689 = vmatpush2.msra.mxu0 0.0
  %3690 = vmatprep.subr.mxu0 0.0
  %3691 = vmatpush2.msra.mxu0 0.0
  %3692 = vmatprep.subr.mxu0 0.0
  %3693 = vmatpush2.msra.mxu0 0.0
  %3694 = vmatprep.subr.mxu0 0.0
  %3695 = vmatpush2.msra.mxu0 0.0
  %3696 = vmatprep.subr.mxu0 0.0
  %3697 = vmatpush2.msra.mxu0 0.0
  %3698 = vmatprep.subr.mxu0 0.0
  %3699 = vmatpush2.msra.mxu0 0.0
  %3700 = vmatprep.subr.mxu0 0.0
  %3701 = vmatpush2.msra.mxu0 0.0
  %3702 = vmatprep.subr.mxu0 0.0
  %3703 = vmatpush2.msra.mxu0 0.0
  %3704 = vmatprep.subr.mxu0 0.0
  %3705 = vmatpush2.msra.mxu0 0.0
  %3706 = vmatprep.subr.mxu0 0.0
  %3707 = vmatpush2.msra.mxu0 0.0
  %3708 = vmatprep.subr.mxu0 0.0
  %3709 = vmatpush2.msra.mxu0 0.0
  %3710 = vmatprep.subr.mxu0 0.0
  %3711 = vmatpush2.msra.mxu0 0.0
  %3712 = vmatprep.subr.mxu0 0.0
  %3713 = vmatpush2.msra.mxu0 0.0
  %3714 = vmatprep.subr.mxu0 0.0
  %3715 = vmatpush2.msra.mxu0 0.0
  %3716 = vmatprep.subr.mxu0 0.0
  %3717 = vmatpush2.msra.mxu0 0.0
  %3718 = vmatprep.subr.mxu0 0.0
  %3719 = vmatpush2.msra.mxu0 0.0
  %3720 = vmatprep.mubr.f32.mxu0 0.0
  %3721 = vmatmul.mubr.f32.gmra.mxu0 %v3583
  %v3722 = vpop.f32.mrf.mxu0
  %v3723 = vadd.f32 %v3652, %v3722
  %v3724 = vpop.f32.mrf.mxu0
  %v3725 = vadd.f32 %v3654, %v3724
  %3726 = vdwg.mxu0
  %3727 = vmatprep.subr.mxu0 0.0
  %3728 = vmatpush1.msra.mxu0 %v3509
  %3729 = vmatprep.subr.mxu0 0.0
  %3730 = vmatpush1.msra.mxu0 %v3506
  %3731 = vmatprep.subr.mxu0 0.0
  %3732 = vmatpush1.msra.mxu0 %v3503
  %3733 = vmatprep.subr.mxu0 0.0
  %3734 = vmatpush1.msra.mxu0 %v3500
  %3735 = vmatprep.subr.mxu0 0.0
  %3736 = vmatpush1.msra.mxu0 %v3497
  %3737 = vmatprep.subr.mxu0 0.0
  %3738 = vmatpush1.msra.mxu0 %v3494
  %3739 = vmatprep.subr.mxu0 0.0
  %3740 = vmatpush1.msra.mxu0 %v3491
  %3741 = vmatprep.subr.mxu0 0.0
  %3742 = vmatpush1.msra.mxu0 %v3488
  %3743 = vmatprep.subr.mxu0 0.0
  %3744 = vmatpush1.msra.mxu0 %v3485
  %3745 = vmatprep.subr.mxu0 0.0
  %3746 = vmatpush1.msra.mxu0 %v3482
  %3747 = vmatprep.subr.mxu0 0.0
  %3748 = vmatpush1.msra.mxu0 %v3479
  %3749 = vmatprep.subr.mxu0 0.0
  %3750 = vmatpush1.msra.mxu0 %v3476
  %3751 = vmatprep.subr.mxu0 0.0
  %3752 = vmatpush1.msra.mxu0 %v3473
  %3753 = vmatprep.subr.mxu0 0.0
  %3754 = vmatpush1.msra.mxu0 %v3470
  %3755 = vmatprep.subr.mxu0 0.0
  %3756 = vmatpush1.msra.mxu0 %v3467
  %3757 = vmatprep.subr.mxu0 0.0
  %3758 = vmatpush1.msra.mxu0 %v3464
  %3759 = vmatprep.subr.mxu0 0.0
  %3760 = vmatpush2.msra.mxu0 %v3557
  %3761 = vmatprep.subr.mxu0 0.0
  %3762 = vmatpush2.msra.mxu0 %v3554
  %3763 = vmatprep.subr.mxu0 0.0
  %3764 = vmatpush2.msra.mxu0 %v3551
  %3765 = vmatprep.subr.mxu0 0.0
  %3766 = vmatpush2.msra.mxu0 %v3548
  %3767 = vmatprep.subr.mxu0 0.0
  %3768 = vmatpush2.msra.mxu0 %v3545
  %3769 = vmatprep.subr.mxu0 0.0
  %3770 = vmatpush2.msra.mxu0 %v3542
  %3771 = vmatprep.subr.mxu0 0.0
  %3772 = vmatpush2.msra.mxu0 %v3539
  %3773 = vmatprep.subr.mxu0 0.0
  %3774 = vmatpush2.msra.mxu0 %v3536
  %3775 = vmatprep.subr.mxu0 0.0
  %3776 = vmatpush2.msra.mxu0 %v3533
  %3777 = vmatprep.subr.mxu0 0.0
  %3778 = vmatpush2.msra.mxu0 %v3530
  %3779 = vmatprep.subr.mxu0 0.0
  %3780 = vmatpush2.msra.mxu0 %v3527
  %3781 = vmatprep.subr.mxu0 0.0
  %3782 = vmatpush2.msra.mxu0 %v3524
  %3783 = vmatprep.subr.mxu0 0.0
  %3784 = vmatpush2.msra.mxu0 %v3521
  %3785 = vmatprep.subr.mxu0 0.0
  %3786 = vmatpush2.msra.mxu0 %v3518
  %3787 = vmatprep.subr.mxu0 0.0
  %3788 = vmatpush2.msra.mxu0 %v3515
  %3789 = vmatprep.subr.mxu0 0.0
  %3790 = vmatpush2.msra.mxu0 %v3512
  %3791 = vmatprep.mubr.f32.mxu0 %v3390
  %3792 = vmatmul.mubr.f32.gmra.mxu0 %v3388
  %v3793 = vpop.f32.mrf.mxu0
  %v3794 = vadd.f32 0.0, %v3793
  %v3795 = vpop.f32.mrf.mxu0
  %3796 = vdwg.mxu0
  %3797 = vmatprep.subr.mxu0 0.0
  %3798 = vmatpush1.msra.mxu0 0.0
  %3799 = vmatprep.subr.mxu0 0.0
  %3800 = vmatpush1.msra.mxu0 0.0
  %3801 = vmatprep.subr.mxu0 0.0
  %3802 = vmatpush1.msra.mxu0 0.0
  %3803 = vmatprep.subr.mxu0 0.0
  %3804 = vmatpush1.msra.mxu0 0.0
  %3805 = vmatprep.subr.mxu0 0.0
  %3806 = vmatpush1.msra.mxu0 0.0
  %3807 = vmatprep.subr.mxu0 0.0
  %3808 = vmatpush1.msra.mxu0 0.0
  %3809 = vmatprep.subr.mxu0 0.0
  %3810 = vmatpush1.msra.mxu0 0.0
  %3811 = vmatprep.subr.mxu0 0.0
  %3812 = vmatpush1.msra.mxu0 0.0
  %3813 = vmatprep.subr.mxu0 0.0
  %3814 = vmatpush1.msra.mxu0 %v3581
  %3815 = vmatprep.subr.mxu0 0.0
  %3816 = vmatpush1.msra.mxu0 %v3578
  %3817 = vmatprep.subr.mxu0 0.0
  %3818 = vmatpush1.msra.mxu0 %v3575
  %3819 = vmatprep.subr.mxu0 0.0
  %3820 = vmatpush1.msra.mxu0 %v3572
  %3821 = vmatprep.subr.mxu0 0.0
  %3822 = vmatpush1.msra.mxu0 %v3569
  %3823 = vmatprep.subr.mxu0 0.0
  %3824 = vmatpush1.msra.mxu0 %v3566
  %3825 = vmatprep.subr.mxu0 0.0
  %3826 = vmatpush1.msra.mxu0 %v3563
  %3827 = vmatprep.subr.mxu0 0.0
  %3828 = vmatpush1.msra.mxu0 %v3560
  %3829 = vmatprep.subr.mxu0 0.0
  %3830 = vmatpush2.msra.mxu0 0.0
  %3831 = vmatprep.subr.mxu0 0.0
  %3832 = vmatpush2.msra.mxu0 0.0
  %3833 = vmatprep.subr.mxu0 0.0
  %3834 = vmatpush2.msra.mxu0 0.0
  %3835 = vmatprep.subr.mxu0 0.0
  %3836 = vmatpush2.msra.mxu0 0.0
  %3837 = vmatprep.subr.mxu0 0.0
  %3838 = vmatpush2.msra.mxu0 0.0
  %3839 = vmatprep.subr.mxu0 0.0
  %3840 = vmatpush2.msra.mxu0 0.0
  %3841 = vmatprep.subr.mxu0 0.0
  %3842 = vmatpush2.msra.mxu0 0.0
  %3843 = vmatprep.subr.mxu0 0.0
  %3844 = vmatpush2.msra.mxu0 0.0
  %3845 = vmatprep.subr.mxu0 0.0
  %3846 = vmatpush2.msra.mxu0 0.0
  %3847 = vmatprep.subr.mxu0 0.0
  %3848 = vmatpush2.msra.mxu0 0.0
  %3849 = vmatprep.subr.mxu0 0.0
  %3850 = vmatpush2.msra.mxu0 0.0
  %3851 = vmatprep.subr.mxu0 0.0
  %3852 = vmatpush2.msra.mxu0 0.0
  %3853 = vmatprep.subr.mxu0 0.0
  %3854 = vmatpush2.msra.mxu0 0.0
  %3855 = vmatprep.subr.mxu0 0.0
  %3856 = vmatpush2.msra.mxu0 0.0
  %3857 = vmatprep.subr.mxu0 0.0
  %3858 = vmatpush2.msra.mxu0 0.0
  %3859 = vmatprep.subr.mxu0 0.0
  %3860 = vmatpush2.msra.mxu0 0.0
  %3861 = vmatprep.mubr.f32.mxu0 0.0
  %3862 = vmatmul.mubr.f32.gmra.mxu0 %v3583
  %v3863 = vpop.f32.mrf.mxu0
  %v3864 = vadd.f32 %v3794, %v3863
  %v3865 = vpop.f32.mrf.mxu0
  %3866 = vdwg.mxu0
  %v3868 = vsel %vm1256, %v3194, 0
  %3870 = vmatprep.subr.mxu0 %v3243
  %3871 = vmatpush1.msra.mxu0 %v3242
  %3872 = vmatprep.subr.mxu0 %v3240
  %3873 = vmatpush1.msra.mxu0 %v3239
  %3874 = vmatprep.subr.mxu0 %v3237
  %3875 = vmatpush1.msra.mxu0 %v3236
  %3876 = vmatprep.subr.mxu0 %v3234
  %3877 = vmatpush1.msra.mxu0 %v3233
  %3878 = vmatprep.subr.mxu0 %v3231
  %3879 = vmatpush1.msra.mxu0 %v3230
  %3880 = vmatprep.subr.mxu0 %v3228
  %3881 = vmatpush1.msra.mxu0 %v3227
  %3882 = vmatprep.subr.mxu0 %v3225
  %3883 = vmatpush1.msra.mxu0 %v3224
  %3884 = vmatprep.subr.mxu0 %v3222
  %3885 = vmatpush1.msra.mxu0 %v3221
  %3886 = vmatprep.subr.mxu0 %v3219
  %3887 = vmatpush1.msra.mxu0 %v3218
  %3888 = vmatprep.subr.mxu0 %v3216
  %3889 = vmatpush1.msra.mxu0 %v3215
  %3890 = vmatprep.subr.mxu0 %v3213
  %3891 = vmatpush1.msra.mxu0 %v3212
  %3892 = vmatprep.subr.mxu0 %v3210
  %3893 = vmatpush1.msra.mxu0 %v3209
  %3894 = vmatprep.subr.mxu0 %v3207
  %3895 = vmatpush1.msra.mxu0 %v3206
  %3896 = vmatprep.subr.mxu0 %v3204
  %3897 = vmatpush1.msra.mxu0 %v3203
  %3898 = vmatprep.subr.mxu0 %v3201
  %3899 = vmatpush1.msra.mxu0 %v3200
  %3900 = vmatprep.subr.mxu0 %v3198
  %3901 = vmatpush1.msra.mxu0 %v3197
  %3902 = vmatprep.subr.mxu0 %v3291
  %3903 = vmatpush2.msra.mxu0 %v3290
  %3904 = vmatprep.subr.mxu0 %v3288
  %3905 = vmatpush2.msra.mxu0 %v3287
  %3906 = vmatprep.subr.mxu0 %v3285
  %3907 = vmatpush2.msra.mxu0 %v3284
  %3908 = vmatprep.subr.mxu0 %v3282
  %3909 = vmatpush2.msra.mxu0 %v3281
  %3910 = vmatprep.subr.mxu0 %v3279
  %3911 = vmatpush2.msra.mxu0 %v3278
  %3912 = vmatprep.subr.mxu0 %v3276
  %3913 = vmatpush2.msra.mxu0 %v3275
  %3914 = vmatprep.subr.mxu0 %v3273
  %3915 = vmatpush2.msra.mxu0 %v3272
  %3916 = vmatprep.subr.mxu0 %v3270
  %3917 = vmatpush2.msra.mxu0 %v3269
  %3918 = vmatprep.subr.mxu0 %v3267
  %3919 = vmatpush2.msra.mxu0 %v3266
  %3920 = vmatprep.subr.mxu0 %v3264
  %3921 = vmatpush2.msra.mxu0 %v3263
  %3922 = vmatprep.subr.mxu0 %v3261
  %3923 = vmatpush2.msra.mxu0 %v3260
  %3924 = vmatprep.subr.mxu0 %v3258
  %3925 = vmatpush2.msra.mxu0 %v3257
  %3926 = vmatprep.subr.mxu0 %v3255
  %3927 = vmatpush2.msra.mxu0 %v3254
  %3928 = vmatprep.subr.mxu0 %v3252
  %3929 = vmatpush2.msra.mxu0 %v3251
  %3930 = vmatprep.subr.mxu0 %v3249
  %3931 = vmatpush2.msra.mxu0 %v3248
  %3932 = vmatprep.subr.mxu0 %v3246
  %3933 = vmatpush2.msra.mxu0 %v3245
  %3934 = vmatprep.mubr.f32.mxu0 %v3125
  %3935 = vmatmul.mubr.f32.gmra.mxu0 %v3123
  %v3936 = vpop.f32.mrf.mxu0
  %v3937 = vadd.f32 %v3723, %v3936
  %v3938 = vpop.f32.mrf.mxu0
  %v3939 = vadd.f32 %v3725, %v3938
  %3940 = vdwg.mxu0
  %3941 = vmatprep.subr.mxu0 0.0
  %3942 = vmatpush1.msra.mxu0 0.0
  %3943 = vmatprep.subr.mxu0 0.0
  %3944 = vmatpush1.msra.mxu0 0.0
  %3945 = vmatprep.subr.mxu0 0.0
  %3946 = vmatpush1.msra.mxu0 0.0
  %3947 = vmatprep.subr.mxu0 0.0
  %3948 = vmatpush1.msra.mxu0 0.0
  %3949 = vmatprep.subr.mxu0 0.0
  %3950 = vmatpush1.msra.mxu0 0.0
  %3951 = vmatprep.subr.mxu0 0.0
  %3952 = vmatpush1.msra.mxu0 0.0
  %3953 = vmatprep.subr.mxu0 0.0
  %3954 = vmatpush1.msra.mxu0 0.0
  %3955 = vmatprep.subr.mxu0 0.0
  %3956 = vmatpush1.msra.mxu0 0.0
  %3957 = vmatprep.subr.mxu0 %v3315
  %3958 = vmatpush1.msra.mxu0 %v3314
  %3959 = vmatprep.subr.mxu0 %v3312
  %3960 = vmatpush1.msra.mxu0 %v3311
  %3961 = vmatprep.subr.mxu0 %v3309
  %3962 = vmatpush1.msra.mxu0 %v3308
  %3963 = vmatprep.subr.mxu0 %v3306
  %3964 = vmatpush1.msra.mxu0 %v3305
  %3965 = vmatprep.subr.mxu0 %v3303
  %3966 = vmatpush1.msra.mxu0 %v3302
  %3967 = vmatprep.subr.mxu0 %v3300
  %3968 = vmatpush1.msra.mxu0 %v3299
  %3969 = vmatprep.subr.mxu0 %v3297
  %3970 = vmatpush1.msra.mxu0 %v3296
  %3971 = vmatprep.subr.mxu0 %v3294
  %3972 = vmatpush1.msra.mxu0 %v3293
  %3973 = vmatprep.subr.mxu0 0.0
  %3974 = vmatpush2.msra.mxu0 0.0
  %3975 = vmatprep.subr.mxu0 0.0
  %3976 = vmatpush2.msra.mxu0 0.0
  %3977 = vmatprep.subr.mxu0 0.0
  %3978 = vmatpush2.msra.mxu0 0.0
  %3979 = vmatprep.subr.mxu0 0.0
  %3980 = vmatpush2.msra.mxu0 0.0
  %3981 = vmatprep.subr.mxu0 0.0
  %3982 = vmatpush2.msra.mxu0 0.0
  %3983 = vmatprep.subr.mxu0 0.0
  %3984 = vmatpush2.msra.mxu0 0.0
  %3985 = vmatprep.subr.mxu0 0.0
  %3986 = vmatpush2.msra.mxu0 0.0
  %3987 = vmatprep.subr.mxu0 0.0
  %3988 = vmatpush2.msra.mxu0 0.0
  %3989 = vmatprep.subr.mxu0 0.0
  %3990 = vmatpush2.msra.mxu0 0.0
  %3991 = vmatprep.subr.mxu0 0.0
  %3992 = vmatpush2.msra.mxu0 0.0
  %3993 = vmatprep.subr.mxu0 0.0
  %3994 = vmatpush2.msra.mxu0 0.0
  %3995 = vmatprep.subr.mxu0 0.0
  %3996 = vmatpush2.msra.mxu0 0.0
  %3997 = vmatprep.subr.mxu0 0.0
  %3998 = vmatpush2.msra.mxu0 0.0
  %3999 = vmatprep.subr.mxu0 0.0
  %4000 = vmatpush2.msra.mxu0 0.0
  %4001 = vmatprep.subr.mxu0 0.0
  %4002 = vmatpush2.msra.mxu0 0.0
  %4003 = vmatprep.subr.mxu0 0.0
  %4004 = vmatpush2.msra.mxu0 0.0
  %4005 = vmatprep.mubr.f32.mxu0 0.0
  %4006 = vmatmul.mubr.f32.gmra.mxu0 %v3868
  %v4007 = vpop.f32.mrf.mxu0
  %v4008 = vadd.f32 %v3937, %v4007
  %v4009 = vpop.f32.mrf.mxu0
  %v4010 = vadd.f32 %v3939, %v4009
  %4011 = vdwg.mxu0
  %4012 = vmatprep.subr.mxu0 0.0
  %4013 = vmatpush1.msra.mxu0 %v3244
  %4014 = vmatprep.subr.mxu0 0.0
  %4015 = vmatpush1.msra.mxu0 %v3241
  %4016 = vmatprep.subr.mxu0 0.0
  %4017 = vmatpush1.msra.mxu0 %v3238
  %4018 = vmatprep.subr.mxu0 0.0
  %4019 = vmatpush1.msra.mxu0 %v3235
  %4020 = vmatprep.subr.mxu0 0.0
  %4021 = vmatpush1.msra.mxu0 %v3232
  %4022 = vmatprep.subr.mxu0 0.0
  %4023 = vmatpush1.msra.mxu0 %v3229
  %4024 = vmatprep.subr.mxu0 0.0
  %4025 = vmatpush1.msra.mxu0 %v3226
  %4026 = vmatprep.subr.mxu0 0.0
  %4027 = vmatpush1.msra.mxu0 %v3223
  %4028 = vmatprep.subr.mxu0 0.0
  %4029 = vmatpush1.msra.mxu0 %v3220
  %4030 = vmatprep.subr.mxu0 0.0
  %4031 = vmatpush1.msra.mxu0 %v3217
  %4032 = vmatprep.subr.mxu0 0.0
  %4033 = vmatpush1.msra.mxu0 %v3214
  %4034 = vmatprep.subr.mxu0 0.0
  %4035 = vmatpush1.msra.mxu0 %v3211
  %4036 = vmatprep.subr.mxu0 0.0
  %4037 = vmatpush1.msra.mxu0 %v3208
  %4038 = vmatprep.subr.mxu0 0.0
  %4039 = vmatpush1.msra.mxu0 %v3205
  %4040 = vmatprep.subr.mxu0 0.0
  %4041 = vmatpush1.msra.mxu0 %v3202
  %4042 = vmatprep.subr.mxu0 0.0
  %4043 = vmatpush1.msra.mxu0 %v3199
  %4044 = vmatprep.subr.mxu0 0.0
  %4045 = vmatpush2.msra.mxu0 %v3292
  %4046 = vmatprep.subr.mxu0 0.0
  %4047 = vmatpush2.msra.mxu0 %v3289
  %4048 = vmatprep.subr.mxu0 0.0
  %4049 = vmatpush2.msra.mxu0 %v3286
  %4050 = vmatprep.subr.mxu0 0.0
  %4051 = vmatpush2.msra.mxu0 %v3283
  %4052 = vmatprep.subr.mxu0 0.0
  %4053 = vmatpush2.msra.mxu0 %v3280
  %4054 = vmatprep.subr.mxu0 0.0
  %4055 = vmatpush2.msra.mxu0 %v3277
  %4056 = vmatprep.subr.mxu0 0.0
  %4057 = vmatpush2.msra.mxu0 %v3274
  %4058 = vmatprep.subr.mxu0 0.0
  %4059 = vmatpush2.msra.mxu0 %v3271
  %4060 = vmatprep.subr.mxu0 0.0
  %4061 = vmatpush2.msra.mxu0 %v3268
  %4062 = vmatprep.subr.mxu0 0.0
  %4063 = vmatpush2.msra.mxu0 %v3265
  %4064 = vmatprep.subr.mxu0 0.0
  %4065 = vmatpush2.msra.mxu0 %v3262
  %4066 = vmatprep.subr.mxu0 0.0
  %4067 = vmatpush2.msra.mxu0 %v3259
  %4068 = vmatprep.subr.mxu0 0.0
  %4069 = vmatpush2.msra.mxu0 %v3256
  %4070 = vmatprep.subr.mxu0 0.0
  %4071 = vmatpush2.msra.mxu0 %v3253
  %4072 = vmatprep.subr.mxu0 0.0
  %4073 = vmatpush2.msra.mxu0 %v3250
  %4074 = vmatprep.subr.mxu0 0.0
  %4075 = vmatpush2.msra.mxu0 %v3247
  %4076 = vmatprep.mubr.f32.mxu0 %v3125
  %4077 = vmatmul.mubr.f32.gmra.mxu0 %v3123
  %v4078 = vpop.f32.mrf.mxu0
  %v4079 = vadd.f32 %v3864, %v4078
  %v4080 = vpop.f32.mrf.mxu0
  %4081 = vdwg.mxu0
  %4082 = vmatprep.subr.mxu0 0.0
  %4083 = vmatpush1.msra.mxu0 0.0
  %4084 = vmatprep.subr.mxu0 0.0
  %4085 = vmatpush1.msra.mxu0 0.0
  %4086 = vmatprep.subr.mxu0 0.0
  %4087 = vmatpush1.msra.mxu0 0.0
  %4088 = vmatprep.subr.mxu0 0.0
  %4089 = vmatpush1.msra.mxu0 0.0
  %4090 = vmatprep.subr.mxu0 0.0
  %4091 = vmatpush1.msra.mxu0 0.0
  %4092 = vmatprep.subr.mxu0 0.0
  %4093 = vmatpush1.msra.mxu0 0.0
  %4094 = vmatprep.subr.mxu0 0.0
  %4095 = vmatpush1.msra.mxu0 0.0
  %4096 = vmatprep.subr.mxu0 0.0
  %4097 = vmatpush1.msra.mxu0 0.0
  %4098 = vmatprep.subr.mxu0 0.0
  %4099 = vmatpush1.msra.mxu0 %v3316
  %4100 = vmatprep.subr.mxu0 0.0
  %4101 = vmatpush1.msra.mxu0 %v3313
  %4102 = vmatprep.subr.mxu0 0.0
  %4103 = vmatpush1.msra.mxu0 %v3310
  %4104 = vmatprep.subr.mxu0 0.0
  %4105 = vmatpush1.msra.mxu0 %v3307
  %4106 = vmatprep.subr.mxu0 0.0
  %4107 = vmatpush1.msra.mxu0 %v3304
  %4108 = vmatprep.subr.mxu0 0.0
  %4109 = vmatpush1.msra.mxu0 %v3301
  %4110 = vmatprep.subr.mxu0 0.0
  %4111 = vmatpush1.msra.mxu0 %v3298
  %4112 = vmatprep.subr.mxu0 0.0
  %4113 = vmatpush1.msra.mxu0 %v3295
  %4114 = vmatprep.subr.mxu0 0.0
  %4115 = vmatpush2.msra.mxu0 0.0
  %4116 = vmatprep.subr.mxu0 0.0
  %4117 = vmatpush2.msra.mxu0 0.0
  %4118 = vmatprep.subr.mxu0 0.0
  %4119 = vmatpush2.msra.mxu0 0.0
  %4120 = vmatprep.subr.mxu0 0.0
  %4121 = vmatpush2.msra.mxu0 0.0
  %4122 = vmatprep.subr.mxu0 0.0
  %4123 = vmatpush2.msra.mxu0 0.0
  %4124 = vmatprep.subr.mxu0 0.0
  %4125 = vmatpush2.msra.mxu0 0.0
  %4126 = vmatprep.subr.mxu0 0.0
  %4127 = vmatpush2.msra.mxu0 0.0
  %4128 = vmatprep.subr.mxu0 0.0
  %4129 = vmatpush2.msra.mxu0 0.0
  %4130 = vmatprep.subr.mxu0 0.0
  %4131 = vmatpush2.msra.mxu0 0.0
  %4132 = vmatprep.subr.mxu0 0.0
  %4133 = vmatpush2.msra.mxu0 0.0
  %4134 = vmatprep.subr.mxu0 0.0
  %4135 = vmatpush2.msra.mxu0 0.0
  %4136 = vmatprep.subr.mxu0 0.0
  %4137 = vmatpush2.msra.mxu0 0.0
  %4138 = vmatprep.subr.mxu0 0.0
  %4139 = vmatpush2.msra.mxu0 0.0
  %4140 = vmatprep.subr.mxu0 0.0
  %4141 = vmatpush2.msra.mxu0 0.0
  %4142 = vmatprep.subr.mxu0 0.0
  %4143 = vmatpush2.msra.mxu0 0.0
  %4144 = vmatprep.subr.mxu0 0.0
  %4145 = vmatpush2.msra.mxu0 0.0
  %4146 = vmatprep.mubr.f32.mxu0 0.0
  %4147 = vmatmul.mubr.f32.gmra.mxu0 %v3868
  %v4148 = vpop.f32.mrf.mxu0
  %v4149 = vadd.f32 %v4079, %v4148
  %v4150 = vpop.f32.mrf.mxu0
  %4151 = vdwg.mxu0
  %s4152 = scalar_lea.vmem %s4, 3
  %v4153 = vld [vmem:[%s4152] ss:$8 sm:$0x7]
  %v4155 = vlaneseq
  %v4156 = vshrl.u32 %v4155, 7
  %v4157 = vsub.s32 0, %v4156
  %v4158 = vrot.slane %v4153, %v4157
  %v4159 = vlaneseq
  %v4160 = vshrl.u32 %v4159, 7
  %v4161 = vsub.s32 1, %v4160
  %v4162 = vrot.slane %v4153, %v4161
  %v4163 = vlaneseq
  %v4164 = vshrl.u32 %v4163, 7
  %v4165 = vsub.s32 2, %v4164
  %v4166 = vrot.slane %v4153, %v4165
  %v4170 = vadd.f32 %v4008, %v4158
  %v4171 = vadd.f32 %v4010, %v4162
  %v4172 = vadd.f32 %v4149, %v4166
  %v4173 = vmax.f32 %v4170, 0.0
  %v4174 = vmax.f32 %v4171, 0.0
  %v4175 = vmax.f32 %v4172, 0.0
  %v4176 = vld [vmem:[%s2 + $0x70] sm:$0xf]
  %vm4177 = vcmask 31744
  %v4179 = vsel %vm4177, %v4176, 0
  %vm4181 = vcmask 1043456
  %v4183 = vsel %vm4181, %v4173, 0
  %v4186 = vsel %vm4181, %v4174, 0
  %v4189 = vsel %vm4181, %v4175, 0
  %4191 = vmatprep.subr.mxu0 0.0
  %4192 = vmatpush1.msra.mxu0 0.0
  %4193 = vmatprep.subr.mxu0 0.0
  %4194 = vmatpush1.msra.mxu0 0.0
  %4195 = vmatprep.subr.mxu0 0.0
  %4196 = vmatpush1.msra.mxu0 0.0
  %4197 = vmatprep.subr.mxu0 0.0
  %4198 = vmatpush1.msra.mxu0 0.0
  %4199 = vmatprep.subr.mxu0 0.0
  %4200 = vmatpush1.msra.mxu0 0.0
  %4201 = vmatprep.subr.mxu0 0.0
  %4202 = vmatpush1.msra.mxu0 0.0
  %4203 = vmatprep.subr.mxu0 0.0
  %4204 = vmatpush1.msra.mxu0 0.0
  %4205 = vmatprep.subr.mxu0 0.0
  %4206 = vmatpush1.msra.mxu0 0.0
  %4207 = vmatprep.subr.mxu0 0.0
  %4208 = vmatpush1.msra.mxu0 0.0
  %4209 = vmatprep.subr.mxu0 0.0
  %4210 = vmatpush1.msra.mxu0 0.0
  %4211 = vmatprep.subr.mxu0 0.0
  %4212 = vmatpush1.msra.mxu0 0.0
  %4213 = vmatprep.subr.mxu0 0.0
  %4214 = vmatpush1.msra.mxu0 0.0
  %4215 = vmatprep.subr.mxu0 0.0
  %4216 = vmatpush1.msra.mxu0 0.0
  %4217 = vmatprep.subr.mxu0 0.0
  %4218 = vmatpush1.msra.mxu0 0.0
  %4219 = vmatprep.subr.mxu0 0.0
  %4220 = vmatpush1.msra.mxu0 0.0
  %4221 = vmatprep.subr.mxu0 %v4186
  %4222 = vmatpush1.msra.mxu0 %v4183
  %4223 = vmatprep.subr.mxu0 0.0
  %4224 = vmatpush2.msra.mxu0 0.0
  %4225 = vmatprep.subr.mxu0 0.0
  %4226 = vmatpush2.msra.mxu0 0.0
  %4227 = vmatprep.subr.mxu0 0.0
  %4228 = vmatpush2.msra.mxu0 0.0
  %4229 = vmatprep.subr.mxu0 0.0
  %4230 = vmatpush2.msra.mxu0 0.0
  %4231 = vmatprep.subr.mxu0 0.0
  %4232 = vmatpush2.msra.mxu0 0.0
  %4233 = vmatprep.subr.mxu0 0.0
  %4234 = vmatpush2.msra.mxu0 0.0
  %4235 = vmatprep.subr.mxu0 0.0
  %4236 = vmatpush2.msra.mxu0 0.0
  %4237 = vmatprep.subr.mxu0 0.0
  %4238 = vmatpush2.msra.mxu0 0.0
  %4239 = vmatprep.subr.mxu0 0.0
  %4240 = vmatpush2.msra.mxu0 0.0
  %4241 = vmatprep.subr.mxu0 0.0
  %4242 = vmatpush2.msra.mxu0 0.0
  %4243 = vmatprep.subr.mxu0 0.0
  %4244 = vmatpush2.msra.mxu0 0.0
  %4245 = vmatprep.subr.mxu0 0.0
  %4246 = vmatpush2.msra.mxu0 0.0
  %4247 = vmatprep.subr.mxu0 0.0
  %4248 = vmatpush2.msra.mxu0 0.0
  %4249 = vmatprep.subr.mxu0 0.0
  %4250 = vmatpush2.msra.mxu0 0.0
  %4251 = vmatprep.subr.mxu0 0.0
  %4252 = vmatpush2.msra.mxu0 0.0
  %4253 = vmatprep.subr.mxu0 0.0
  %4254 = vmatpush2.msra.mxu0 0.0
  %4255 = vmatprep.mubr.f32.mxu0 0.0
  %4256 = vmatmul.mubr.f32.gmra.mxu0 %v4179
  %v4257 = vpop.f32.mrf.mxu0
  %v4258 = vadd.f32 0.0, %v4257
  %v4259 = vpop.f32.mrf.mxu0
  %v4260 = vadd.f32 0.0, %v4259
  %4261 = vdwg.mxu0
  %4262 = vmatprep.subr.mxu0 0.0
  %4263 = vmatpush1.msra.mxu0 0.0
  %4264 = vmatprep.subr.mxu0 0.0
  %4265 = vmatpush1.msra.mxu0 0.0
  %4266 = vmatprep.subr.mxu0 0.0
  %4267 = vmatpush1.msra.mxu0 0.0
  %4268 = vmatprep.subr.mxu0 0.0
  %4269 = vmatpush1.msra.mxu0 0.0
  %4270 = vmatprep.subr.mxu0 0.0
  %4271 = vmatpush1.msra.mxu0 0.0
  %4272 = vmatprep.subr.mxu0 0.0
  %4273 = vmatpush1.msra.mxu0 0.0
  %4274 = vmatprep.subr.mxu0 0.0
  %4275 = vmatpush1.msra.mxu0 0.0
  %4276 = vmatprep.subr.mxu0 0.0
  %4277 = vmatpush1.msra.mxu0 0.0
  %4278 = vmatprep.subr.mxu0 0.0
  %4279 = vmatpush1.msra.mxu0 0.0
  %4280 = vmatprep.subr.mxu0 0.0
  %4281 = vmatpush1.msra.mxu0 0.0
  %4282 = vmatprep.subr.mxu0 0.0
  %4283 = vmatpush1.msra.mxu0 0.0
  %4284 = vmatprep.subr.mxu0 0.0
  %4285 = vmatpush1.msra.mxu0 0.0
  %4286 = vmatprep.subr.mxu0 0.0
  %4287 = vmatpush1.msra.mxu0 0.0
  %4288 = vmatprep.subr.mxu0 0.0
  %4289 = vmatpush1.msra.mxu0 0.0
  %4290 = vmatprep.subr.mxu0 0.0
  %4291 = vmatpush1.msra.mxu0 0.0
  %4292 = vmatprep.subr.mxu0 0.0
  %4293 = vmatpush1.msra.mxu0 %v4189
  %4294 = vmatprep.subr.mxu0 0.0
  %4295 = vmatpush2.msra.mxu0 0.0
  %4296 = vmatprep.subr.mxu0 0.0
  %4297 = vmatpush2.msra.mxu0 0.0
  %4298 = vmatprep.subr.mxu0 0.0
  %4299 = vmatpush2.msra.mxu0 0.0
  %4300 = vmatprep.subr.mxu0 0.0
  %4301 = vmatpush2.msra.mxu0 0.0
  %4302 = vmatprep.subr.mxu0 0.0
  %4303 = vmatpush2.msra.mxu0 0.0
  %4304 = vmatprep.subr.mxu0 0.0
  %4305 = vmatpush2.msra.mxu0 0.0
  %4306 = vmatprep.subr.mxu0 0.0
  %4307 = vmatpush2.msra.mxu0 0.0
  %4308 = vmatprep.subr.mxu0 0.0
  %4309 = vmatpush2.msra.mxu0 0.0
  %4310 = vmatprep.subr.mxu0 0.0
  %4311 = vmatpush2.msra.mxu0 0.0
  %4312 = vmatprep.subr.mxu0 0.0
  %4313 = vmatpush2.msra.mxu0 0.0
  %4314 = vmatprep.subr.mxu0 0.0
  %4315 = vmatpush2.msra.mxu0 0.0
  %4316 = vmatprep.subr.mxu0 0.0
  %4317 = vmatpush2.msra.mxu0 0.0
  %4318 = vmatprep.subr.mxu0 0.0
  %4319 = vmatpush2.msra.mxu0 0.0
  %4320 = vmatprep.subr.mxu0 0.0
  %4321 = vmatpush2.msra.mxu0 0.0
  %4322 = vmatprep.subr.mxu0 0.0
  %4323 = vmatpush2.msra.mxu0 0.0
  %4324 = vmatprep.subr.mxu0 0.0
  %4325 = vmatpush2.msra.mxu0 0.0
  %4326 = vmatprep.mubr.f32.mxu0 0.0
  %4327 = vmatmul.mubr.f32.gmra.mxu0 %v4179
  %v4328 = vpop.f32.mrf.mxu0
  %v4329 = vadd.f32 0.0, %v4328
  %v4330 = vpop.f32.mrf.mxu0
  %4331 = vdwg.mxu0
  %v4332 = vld [vmem:[%s3 + $0x1950] sm:$0xff]
  %v4333 = vld [vmem:[%s3 + $0x1958] sm:$0xff]
  %v4334 = vld [vmem:[%s3 + $0x1968] sm:$0xff]
  %v4335 = vld [vmem:[%s3 + $0x1970] sm:$0xff]
  %v4336 = vld [vmem:[%s3 + $0x1980] sm:$0xff]
  %v4337 = vld [vmem:[%s3 + $0x1988] sm:$0xff]
  %v4338 = vld [vmem:[%s3 + $0x1998] sm:$0xff]
  %v4339 = vld [vmem:[%s3 + $0x19a0] sm:$0xff]
  %v4340 = vld [vmem:[%s3 + $0x19b0] sm:$0xff]
  %v4341 = vld [vmem:[%s3 + $0x19b8] sm:$0xff]
  %v4342 = vld [vmem:[%s3 + $0x19c8] sm:$0xff]
  %v4343 = vld [vmem:[%s3 + $0x19d0] sm:$0xff]
  %v4344 = vld [vmem:[%s3 + $0x19e0] sm:$0xff]
  %v4345 = vld [vmem:[%s3 + $0x19e8] sm:$0xff]
  %v4346 = vld [vmem:[%s3 + $0x19f8] sm:$0xff]
  %v4347 = vld [vmem:[%s3 + $0x1a00] sm:$0xff]
  %v4348 = vld [vmem:[%s3 + $0x1a10] sm:$0xff]
  %v4349 = vld [vmem:[%s3 + $0x1a18] sm:$0xff]
  %v4350 = vld [vmem:[%s3 + $0x1a28] sm:$0xff]
  %v4351 = vld [vmem:[%s3 + $0x1a30] sm:$0xff]
  %v4352 = vld [vmem:[%s3 + $0x1a40] sm:$0xff]
  %v4353 = vld [vmem:[%s3 + $0x1a48] sm:$0xff]
  %v4354 = vld [vmem:[%s3 + $0x1a58] sm:$0xff]
  %v4355 = vld [vmem:[%s3 + $0x1a60] sm:$0xff]
  %v4356 = vld [vmem:[%s3 + $0x1a70] sm:$0xff]
  %v4357 = vld [vmem:[%s3 + $0x1a78] sm:$0xff]
  %v4358 = vld [vmem:[%s3 + $0x1a88] sm:$0xff]
  %v4359 = vld [vmem:[%s3 + $0x1a90] sm:$0xff]
  %v4360 = vld [vmem:[%s3 + $0x1aa0] sm:$0xff]
  %v4361 = vld [vmem:[%s3 + $0x1aa8] sm:$0xff]
  %v4362 = vld [vmem:[%s3 + $0x1ab8] sm:$0xff]
  %v4363 = vld [vmem:[%s3 + $0x1ac0] sm:$0xff]
  %v4364 = vld [vmem:[%s3 + $0x1ad0] sm:$0xff]
  %v4365 = vld [vmem:[%s3 + $0x1ad8] sm:$0xff]
  %v4366 = vld [vmem:[%s3 + $0x1ae8] sm:$0xff]
  %v4367 = vld [vmem:[%s3 + $0x1af0] sm:$0xff]
  %v4368 = vld [vmem:[%s3 + $0x1b00] sm:$0xff]
  %v4369 = vld [vmem:[%s3 + $0x1b08] sm:$0xff]
  %v4370 = vld [vmem:[%s3 + $0x1b18] sm:$0xff]
  %v4371 = vld [vmem:[%s3 + $0x1b20] sm:$0xff]
  %v4372 = vld [vmem:[%s3 + $0x1b30] sm:$0xff]
  %v4373 = vld [vmem:[%s3 + $0x1b38] sm:$0xff]
  %v4374 = vld [vmem:[%s3 + $0x1b48] sm:$0xff]
  %v4375 = vld [vmem:[%s3 + $0x1b50] sm:$0xff]
  %v4376 = vld [vmem:[%s3 + $0x1b60] sm:$0xff]
  %v4377 = vld [vmem:[%s3 + $0x1b68] sm:$0xff]
  %v4378 = vld [vmem:[%s3 + $0x1b78] sm:$0xff]
  %v4379 = vld [vmem:[%s3 + $0x1b80] sm:$0xff]
  %v4380 = vld [vmem:[%s3 + $0x1b90] sm:$0xff]
  %v4381 = vld [vmem:[%s3 + $0x1b98] sm:$0xff]
  %v4382 = vld [vmem:[%s3 + $0x1ba8] sm:$0xff]
  %v4383 = vld [vmem:[%s3 + $0x1bb0] sm:$0xff]
  %v4384 = vld [vmem:[%s3 + $0x1bc0] sm:$0xff]
  %v4385 = vld [vmem:[%s3 + $0x1bc8] sm:$0xff]
  %v4386 = vld [vmem:[%s3 + $0x1bd8] sm:$0xff]
  %v4387 = vld [vmem:[%s3 + $0x1be0] sm:$0xff]
  %v4388 = vld [vmem:[%s3 + $0x1bf0] sm:$0xff]
  %v4389 = vld [vmem:[%s3 + $0x1bf8] sm:$0xff]
  %v4390 = vld [vmem:[%s3 + $0x1c08] sm:$0xff]
  %v4391 = vld [vmem:[%s3 + $0x1c10] sm:$0xff]
  %v4392 = vld [vmem:[%s3 + $0x1c20] sm:$0xff]
  %v4393 = vld [vmem:[%s3 + $0x1c28] sm:$0xff]
  %v4394 = vld [vmem:[%s3 + $0x1c38] sm:$0xff]
  %v4395 = vld [vmem:[%s3 + $0x1c40] sm:$0xff]
  %v4396 = vld [vmem:[%s3 + $0x1c50] sm:$0xff]
  %v4397 = vld [vmem:[%s3 + $0x1c58] sm:$0xff]
  %v4398 = vld [vmem:[%s3 + $0x1c68] sm:$0xff]
  %v4399 = vld [vmem:[%s3 + $0x1c70] sm:$0xff]
  %v4400 = vld [vmem:[%s3 + $0x1c80] sm:$0xff]
  %v4401 = vld [vmem:[%s3 + $0x1c88] sm:$0xff]
  %v4402 = vld [vmem:[%s3 + $0x1c98] sm:$0xff]
  %v4403 = vld [vmem:[%s3 + $0x1ca0] sm:$0xff]
  %v4404 = vld [vmem:[%s3 + $0x1cb0] sm:$0xff]
  %v4405 = vld [vmem:[%s3 + $0x1cb8] sm:$0xff]
  %v4406 = vld [vmem:[%s3 + $0x1cc8] sm:$0xff]
  %v4407 = vld [vmem:[%s3 + $0x1cd0] sm:$0xff]
  %v4408 = vld [vmem:[%s3 + $0x1ce0] sm:$0xff]
  %v4409 = vld [vmem:[%s3 + $0x1ce8] sm:$0xff]
  %v4410 = vld [vmem:[%s3 + $0x1cf8] sm:$0xff]
  %v4411 = vld [vmem:[%s3 + $0x1d00] sm:$0xff]
  %v4412 = vld [vmem:[%s2 + $0x78] sm:$0xf]
  %v4414 = vsel %vm4177, %v4412, 0
  %4416 = vmatprep.subr.mxu0 0.0
  %4417 = vmatpush1.msra.mxu0 0.0
  %4418 = vmatprep.subr.mxu0 0.0
  %4419 = vmatpush1.msra.mxu0 0.0
  %4420 = vmatprep.subr.mxu0 0.0
  %4421 = vmatpush1.msra.mxu0 0.0
  %4422 = vmatprep.subr.mxu0 0.0
  %4423 = vmatpush1.msra.mxu0 0.0
  %4424 = vmatprep.subr.mxu0 0.0
  %4425 = vmatpush1.msra.mxu0 0.0
  %4426 = vmatprep.subr.mxu0 0.0
  %4427 = vmatpush1.msra.mxu0 0.0
  %4428 = vmatprep.subr.mxu0 0.0
  %4429 = vmatpush1.msra.mxu0 0.0
  %4430 = vmatprep.subr.mxu0 0.0
  %4431 = vmatpush1.msra.mxu0 0.0
  %4432 = vmatprep.subr.mxu0 0.0
  %4433 = vmatpush1.msra.mxu0 0.0
  %4434 = vmatprep.subr.mxu0 0.0
  %4435 = vmatpush1.msra.mxu0 0.0
  %4436 = vmatprep.subr.mxu0 0.0
  %4437 = vmatpush1.msra.mxu0 0.0
  %4438 = vmatprep.subr.mxu0 0.0
  %4439 = vmatpush1.msra.mxu0 0.0
  %4440 = vmatprep.subr.mxu0 0.0
  %4441 = vmatpush1.msra.mxu0 0.0
  %4442 = vmatprep.subr.mxu0 0.0
  %4443 = vmatpush1.msra.mxu0 0.0
  %4444 = vmatprep.subr.mxu0 0.0
  %4445 = vmatpush1.msra.mxu0 0.0
  %4446 = vmatprep.subr.mxu0 %v4186
  %4447 = vmatpush1.msra.mxu0 %v4183
  %4448 = vmatprep.subr.mxu0 0.0
  %4449 = vmatpush2.msra.mxu0 0.0
  %4450 = vmatprep.subr.mxu0 0.0
  %4451 = vmatpush2.msra.mxu0 0.0
  %4452 = vmatprep.subr.mxu0 0.0
  %4453 = vmatpush2.msra.mxu0 0.0
  %4454 = vmatprep.subr.mxu0 0.0
  %4455 = vmatpush2.msra.mxu0 0.0
  %4456 = vmatprep.subr.mxu0 0.0
  %4457 = vmatpush2.msra.mxu0 0.0
  %4458 = vmatprep.subr.mxu0 0.0
  %4459 = vmatpush2.msra.mxu0 0.0
  %4460 = vmatprep.subr.mxu0 0.0
  %4461 = vmatpush2.msra.mxu0 0.0
  %4462 = vmatprep.subr.mxu0 0.0
  %4463 = vmatpush2.msra.mxu0 0.0
  %4464 = vmatprep.subr.mxu0 0.0
  %4465 = vmatpush2.msra.mxu0 0.0
  %4466 = vmatprep.subr.mxu0 0.0
  %4467 = vmatpush2.msra.mxu0 0.0
  %4468 = vmatprep.subr.mxu0 0.0
  %4469 = vmatpush2.msra.mxu0 0.0
  %4470 = vmatprep.subr.mxu0 0.0
  %4471 = vmatpush2.msra.mxu0 0.0
  %4472 = vmatprep.subr.mxu0 0.0
  %4473 = vmatpush2.msra.mxu0 0.0
  %4474 = vmatprep.subr.mxu0 0.0
  %4475 = vmatpush2.msra.mxu0 0.0
  %4476 = vmatprep.subr.mxu0 0.0
  %4477 = vmatpush2.msra.mxu0 0.0
  %4478 = vmatprep.subr.mxu0 0.0
  %4479 = vmatpush2.msra.mxu0 0.0
  %4480 = vmatprep.mubr.f32.mxu0 0.0
  %4481 = vmatmul.mubr.f32.gmra.mxu0 %v4414
  %v4482 = vpop.f32.mrf.mxu0
  %v4483 = vadd.f32 0.0, %v4482
  %v4484 = vpop.f32.mrf.mxu0
  %v4485 = vadd.f32 0.0, %v4484
  %4486 = vdwg.mxu0
  %4487 = vmatprep.subr.mxu0 0.0
  %4488 = vmatpush1.msra.mxu0 0.0
  %4489 = vmatprep.subr.mxu0 0.0
  %4490 = vmatpush1.msra.mxu0 0.0
  %4491 = vmatprep.subr.mxu0 0.0
  %4492 = vmatpush1.msra.mxu0 0.0
  %4493 = vmatprep.subr.mxu0 0.0
  %4494 = vmatpush1.msra.mxu0 0.0
  %4495 = vmatprep.subr.mxu0 0.0
  %4496 = vmatpush1.msra.mxu0 0.0
  %4497 = vmatprep.subr.mxu0 0.0
  %4498 = vmatpush1.msra.mxu0 0.0
  %4499 = vmatprep.subr.mxu0 0.0
  %4500 = vmatpush1.msra.mxu0 0.0
  %4501 = vmatprep.subr.mxu0 0.0
  %4502 = vmatpush1.msra.mxu0 0.0
  %4503 = vmatprep.subr.mxu0 0.0
  %4504 = vmatpush1.msra.mxu0 0.0
  %4505 = vmatprep.subr.mxu0 0.0
  %4506 = vmatpush1.msra.mxu0 0.0
  %4507 = vmatprep.subr.mxu0 0.0
  %4508 = vmatpush1.msra.mxu0 0.0
  %4509 = vmatprep.subr.mxu0 0.0
  %4510 = vmatpush1.msra.mxu0 0.0
  %4511 = vmatprep.subr.mxu0 0.0
  %4512 = vmatpush1.msra.mxu0 0.0
  %4513 = vmatprep.subr.mxu0 0.0
  %4514 = vmatpush1.msra.mxu0 0.0
  %4515 = vmatprep.subr.mxu0 0.0
  %4516 = vmatpush1.msra.mxu0 0.0
  %4517 = vmatprep.subr.mxu0 0.0
  %4518 = vmatpush1.msra.mxu0 %v4189
  %4519 = vmatprep.subr.mxu0 0.0
  %4520 = vmatpush2.msra.mxu0 0.0
  %4521 = vmatprep.subr.mxu0 0.0
  %4522 = vmatpush2.msra.mxu0 0.0
  %4523 = vmatprep.subr.mxu0 0.0
  %4524 = vmatpush2.msra.mxu0 0.0
  %4525 = vmatprep.subr.mxu0 0.0
  %4526 = vmatpush2.msra.mxu0 0.0
  %4527 = vmatprep.subr.mxu0 0.0
  %4528 = vmatpush2.msra.mxu0 0.0
  %4529 = vmatprep.subr.mxu0 0.0
  %4530 = vmatpush2.msra.mxu0 0.0
  %4531 = vmatprep.subr.mxu0 0.0
  %4532 = vmatpush2.msra.mxu0 0.0
  %4533 = vmatprep.subr.mxu0 0.0
  %4534 = vmatpush2.msra.mxu0 0.0
  %4535 = vmatprep.subr.mxu0 0.0
  %4536 = vmatpush2.msra.mxu0 0.0
  %4537 = vmatprep.subr.mxu0 0.0
  %4538 = vmatpush2.msra.mxu0 0.0
  %4539 = vmatprep.subr.mxu0 0.0
  %4540 = vmatpush2.msra.mxu0 0.0
  %4541 = vmatprep.subr.mxu0 0.0
  %4542 = vmatpush2.msra.mxu0 0.0
  %4543 = vmatprep.subr.mxu0 0.0
  %4544 = vmatpush2.msra.mxu0 0.0
  %4545 = vmatprep.subr.mxu0 0.0
  %4546 = vmatpush2.msra.mxu0 0.0
  %4547 = vmatprep.subr.mxu0 0.0
  %4548 = vmatpush2.msra.mxu0 0.0
  %4549 = vmatprep.subr.mxu0 0.0
  %4550 = vmatpush2.msra.mxu0 0.0
  %4551 = vmatprep.mubr.f32.mxu0 0.0
  %4552 = vmatmul.mubr.f32.gmra.mxu0 %v4414
  %v4553 = vpop.f32.mrf.mxu0
  %v4554 = vadd.f32 0.0, %v4553
  %v4555 = vpop.f32.mrf.mxu0
  %4556 = vdwg.mxu0
  %v4557 = vld [vmem:[%s3 + $0x1d10] sm:$0xff]
  %v4558 = vld [vmem:[%s3 + $0x1d18] sm:$0xff]
  %v4559 = vld [vmem:[%s3 + $0x1d28] sm:$0xff]
  %v4560 = vld [vmem:[%s3 + $0x1d30] sm:$0xff]
  %v4561 = vld [vmem:[%s3 + $0x1d40] sm:$0xff]
  %v4562 = vld [vmem:[%s3 + $0x1d48] sm:$0xff]
  %v4563 = vld [vmem:[%s3 + $0x1d58] sm:$0xff]
  %v4564 = vld [vmem:[%s3 + $0x1d60] sm:$0xff]
  %v4565 = vld [vmem:[%s3 + $0x1d70] sm:$0xff]
  %v4566 = vld [vmem:[%s3 + $0x1d78] sm:$0xff]
  %v4567 = vld [vmem:[%s3 + $0x1d88] sm:$0xff]
  %v4568 = vld [vmem:[%s3 + $0x1d90] sm:$0xff]
  %v4569 = vld [vmem:[%s3 + $0x1da0] sm:$0xff]
  %v4570 = vld [vmem:[%s3 + $0x1da8] sm:$0xff]
  %v4571 = vld [vmem:[%s3 + $0x1db8] sm:$0xff]
  %v4572 = vld [vmem:[%s3 + $0x1dc0] sm:$0xff]
  %v4573 = vld [vmem:[%s3 + $0x1dd0] sm:$0xff]
  %v4574 = vld [vmem:[%s3 + $0x1dd8] sm:$0xff]
  %v4575 = vld [vmem:[%s3 + $0x1de8] sm:$0xff]
  %v4576 = vld [vmem:[%s3 + $0x1df0] sm:$0xff]
  %v4577 = vld [vmem:[%s3 + $0x1e00] sm:$0xff]
  %v4578 = vld [vmem:[%s3 + $0x1e08] sm:$0xff]
  %v4579 = vld [vmem:[%s3 + $0x1e18] sm:$0xff]
  %v4580 = vld [vmem:[%s3 + $0x1e20] sm:$0xff]
  %v4581 = vld [vmem:[%s3 + $0x1e30] sm:$0xff]
  %v4582 = vld [vmem:[%s3 + $0x1e38] sm:$0xff]
  %v4583 = vld [vmem:[%s3 + $0x1e48] sm:$0xff]
  %v4584 = vld [vmem:[%s3 + $0x1e50] sm:$0xff]
  %v4585 = vld [vmem:[%s3 + $0x1e60] sm:$0xff]
  %v4586 = vld [vmem:[%s3 + $0x1e68] sm:$0xff]
  %v4587 = vld [vmem:[%s3 + $0x1e78] sm:$0xff]
  %v4588 = vld [vmem:[%s3 + $0x1e80] sm:$0xff]
  %v4589 = vld [vmem:[%s3 + $0x1e90] sm:$0xff]
  %v4590 = vld [vmem:[%s3 + $0x1e98] sm:$0xff]
  %v4591 = vld [vmem:[%s3 + $0x1ea8] sm:$0xff]
  %v4592 = vld [vmem:[%s3 + $0x1eb0] sm:$0xff]
  %v4593 = vld [vmem:[%s3 + $0x1ec0] sm:$0xff]
  %v4594 = vld [vmem:[%s3 + $0x1ec8] sm:$0xff]
  %v4595 = vld [vmem:[%s3 + $0x1ed8] sm:$0xff]
  %v4596 = vld [vmem:[%s3 + $0x1ee0] sm:$0xff]
  %v4597 = vld [vmem:[%s3 + $0x1ef0] sm:$0xff]
  %v4598 = vld [vmem:[%s3 + $0x1ef8] sm:$0xff]
  %v4599 = vld [vmem:[%s3 + $0x1f08] sm:$0xff]
  %v4600 = vld [vmem:[%s3 + $0x1f10] sm:$0xff]
  %v4601 = vld [vmem:[%s3 + $0x1f20] sm:$0xff]
  %v4602 = vld [vmem:[%s3 + $0x1f28] sm:$0xff]
  %v4603 = vld [vmem:[%s3 + $0x1f38] sm:$0xff]
  %v4604 = vld [vmem:[%s3 + $0x1f40] sm:$0xff]
  %v4605 = vld [vmem:[%s3 + $0x1f50] sm:$0xff]
  %v4606 = vld [vmem:[%s3 + $0x1f58] sm:$0xff]
  %v4607 = vld [vmem:[%s3 + $0x1f68] sm:$0xff]
  %v4608 = vld [vmem:[%s3 + $0x1f70] sm:$0xff]
  %v4609 = vld [vmem:[%s3 + $0x1f80] sm:$0xff]
  %v4610 = vld [vmem:[%s3 + $0x1f88] sm:$0xff]
  %v4611 = vld [vmem:[%s3 + $0x1f98] sm:$0xff]
  %v4612 = vld [vmem:[%s3 + $0x1fa0] sm:$0xff]
  %v4613 = vld [vmem:[%s3 + $0x1fb0] sm:$0xff]
  %v4614 = vld [vmem:[%s3 + $0x1fb8] sm:$0xff]
  %v4615 = vld [vmem:[%s3 + $0x1fc8] sm:$0xff]
  %v4616 = vld [vmem:[%s3 + $0x1fd0] sm:$0xff]
  %v4617 = vld [vmem:[%s3 + $0x1fe0] sm:$0xff]
  %v4618 = vld [vmem:[%s3 + $0x1fe8] sm:$0xff]
  %v4619 = vld [vmem:[%s3 + $0x1ff8] sm:$0xff]
  %v4620 = vld [vmem:[%s3 + $0x2000] sm:$0xff]
  %v4621 = vld [vmem:[%s3 + $0x2010] sm:$0xff]
  %v4622 = vld [vmem:[%s3 + $0x2018] sm:$0xff]
  %v4623 = vld [vmem:[%s3 + $0x2028] sm:$0xff]
  %v4624 = vld [vmem:[%s3 + $0x2030] sm:$0xff]
  %v4625 = vld [vmem:[%s3 + $0x2040] sm:$0xff]
  %v4626 = vld [vmem:[%s3 + $0x2048] sm:$0xff]
  %v4627 = vld [vmem:[%s3 + $0x2058] sm:$0xff]
  %v4628 = vld [vmem:[%s3 + $0x2060] sm:$0xff]
  %v4629 = vld [vmem:[%s3 + $0x2070] sm:$0xff]
  %v4630 = vld [vmem:[%s3 + $0x2078] sm:$0xff]
  %v4631 = vld [vmem:[%s3 + $0x2088] sm:$0xff]
  %v4632 = vld [vmem:[%s3 + $0x2090] sm:$0xff]
  %v4633 = vld [vmem:[%s3 + $0x20a0] sm:$0xff]
  %v4634 = vld [vmem:[%s3 + $0x20a8] sm:$0xff]
  %v4635 = vld [vmem:[%s3 + $0x20b8] sm:$0xff]
  %v4636 = vld [vmem:[%s3 + $0x20c0] sm:$0xff]
  %v4638 = vsel %vm1256, %v4554, 0
  %4640 = vmatprep.subr.mxu0 %v4588
  %4641 = vmatpush1.msra.mxu0 %v4587
  %4642 = vmatprep.subr.mxu0 %v4586
  %4643 = vmatpush1.msra.mxu0 %v4585
  %4644 = vmatprep.subr.mxu0 %v4584
  %4645 = vmatpush1.msra.mxu0 %v4583
  %4646 = vmatprep.subr.mxu0 %v4582
  %4647 = vmatpush1.msra.mxu0 %v4581
  %4648 = vmatprep.subr.mxu0 %v4580
  %4649 = vmatpush1.msra.mxu0 %v4579
  %4650 = vmatprep.subr.mxu0 %v4578
  %4651 = vmatpush1.msra.mxu0 %v4577
  %4652 = vmatprep.subr.mxu0 %v4576
  %4653 = vmatpush1.msra.mxu0 %v4575
  %4654 = vmatprep.subr.mxu0 %v4574
  %4655 = vmatpush1.msra.mxu0 %v4573
  %4656 = vmatprep.subr.mxu0 %v4572
  %4657 = vmatpush1.msra.mxu0 %v4571
  %4658 = vmatprep.subr.mxu0 %v4570
  %4659 = vmatpush1.msra.mxu0 %v4569
  %4660 = vmatprep.subr.mxu0 %v4568
  %4661 = vmatpush1.msra.mxu0 %v4567
  %4662 = vmatprep.subr.mxu0 %v4566
  %4663 = vmatpush1.msra.mxu0 %v4565
  %4664 = vmatprep.subr.mxu0 %v4564
  %4665 = vmatpush1.msra.mxu0 %v4563
  %4666 = vmatprep.subr.mxu0 %v4562
  %4667 = vmatpush1.msra.mxu0 %v4561
  %4668 = vmatprep.subr.mxu0 %v4560
  %4669 = vmatpush1.msra.mxu0 %v4559
  %4670 = vmatprep.subr.mxu0 %v4558
  %4671 = vmatpush1.msra.mxu0 %v4557
  %4672 = vmatprep.subr.mxu0 %v4620
  %4673 = vmatpush2.msra.mxu0 %v4619
  %4674 = vmatprep.subr.mxu0 %v4618
  %4675 = vmatpush2.msra.mxu0 %v4617
  %4676 = vmatprep.subr.mxu0 %v4616
  %4677 = vmatpush2.msra.mxu0 %v4615
  %4678 = vmatprep.subr.mxu0 %v4614
  %4679 = vmatpush2.msra.mxu0 %v4613
  %4680 = vmatprep.subr.mxu0 %v4612
  %4681 = vmatpush2.msra.mxu0 %v4611
  %4682 = vmatprep.subr.mxu0 %v4610
  %4683 = vmatpush2.msra.mxu0 %v4609
  %4684 = vmatprep.subr.mxu0 %v4608
  %4685 = vmatpush2.msra.mxu0 %v4607
  %4686 = vmatprep.subr.mxu0 %v4606
  %4687 = vmatpush2.msra.mxu0 %v4605
  %4688 = vmatprep.subr.mxu0 %v4604
  %4689 = vmatpush2.msra.mxu0 %v4603
  %4690 = vmatprep.subr.mxu0 %v4602
  %4691 = vmatpush2.msra.mxu0 %v4601
  %4692 = vmatprep.subr.mxu0 %v4600
  %4693 = vmatpush2.msra.mxu0 %v4599
  %4694 = vmatprep.subr.mxu0 %v4598
  %4695 = vmatpush2.msra.mxu0 %v4597
  %4696 = vmatprep.subr.mxu0 %v4596
  %4697 = vmatpush2.msra.mxu0 %v4595
  %4698 = vmatprep.subr.mxu0 %v4594
  %4699 = vmatpush2.msra.mxu0 %v4593
  %4700 = vmatprep.subr.mxu0 %v4592
  %4701 = vmatpush2.msra.mxu0 %v4591
  %4702 = vmatprep.subr.mxu0 %v4590
  %4703 = vmatpush2.msra.mxu0 %v4589
  %4704 = vmatprep.mubr.f32.mxu0 %v4485
  %4705 = vmatmul.mubr.f32.gmra.mxu0 %v4483
  %v4706 = vpop.f32.mrf.mxu0
  %v4707 = vadd.f32 0.0, %v4706
  %v4708 = vpop.f32.mrf.mxu0
  %v4709 = vadd.f32 0.0, %v4708
  %4710 = vdwg.mxu0
  %4711 = vmatprep.subr.mxu0 0.0
  %4712 = vmatpush1.msra.mxu0 0.0
  %4713 = vmatprep.subr.mxu0 0.0
  %4714 = vmatpush1.msra.mxu0 0.0
  %4715 = vmatprep.subr.mxu0 0.0
  %4716 = vmatpush1.msra.mxu0 0.0
  %4717 = vmatprep.subr.mxu0 0.0
  %4718 = vmatpush1.msra.mxu0 0.0
  %4719 = vmatprep.subr.mxu0 0.0
  %4720 = vmatpush1.msra.mxu0 0.0
  %4721 = vmatprep.subr.mxu0 0.0
  %4722 = vmatpush1.msra.mxu0 0.0
  %4723 = vmatprep.subr.mxu0 0.0
  %4724 = vmatpush1.msra.mxu0 0.0
  %4725 = vmatprep.subr.mxu0 0.0
  %4726 = vmatpush1.msra.mxu0 0.0
  %4727 = vmatprep.subr.mxu0 %v4636
  %4728 = vmatpush1.msra.mxu0 %v4635
  %4729 = vmatprep.subr.mxu0 %v4634
  %4730 = vmatpush1.msra.mxu0 %v4633
  %4731 = vmatprep.subr.mxu0 %v4632
  %4732 = vmatpush1.msra.mxu0 %v4631
  %4733 = vmatprep.subr.mxu0 %v4630
  %4734 = vmatpush1.msra.mxu0 %v4629
  %4735 = vmatprep.subr.mxu0 %v4628
  %4736 = vmatpush1.msra.mxu0 %v4627
  %4737 = vmatprep.subr.mxu0 %v4626
  %4738 = vmatpush1.msra.mxu0 %v4625
  %4739 = vmatprep.subr.mxu0 %v4624
  %4740 = vmatpush1.msra.mxu0 %v4623
  %4741 = vmatprep.subr.mxu0 %v4622
  %4742 = vmatpush1.msra.mxu0 %v4621
  %4743 = vmatprep.subr.mxu0 0.0
  %4744 = vmatpush2.msra.mxu0 0.0
  %4745 = vmatprep.subr.mxu0 0.0
  %4746 = vmatpush2.msra.mxu0 0.0
  %4747 = vmatprep.subr.mxu0 0.0
  %4748 = vmatpush2.msra.mxu0 0.0
  %4749 = vmatprep.subr.mxu0 0.0
  %4750 = vmatpush2.msra.mxu0 0.0
  %4751 = vmatprep.subr.mxu0 0.0
  %4752 = vmatpush2.msra.mxu0 0.0
  %4753 = vmatprep.subr.mxu0 0.0
  %4754 = vmatpush2.msra.mxu0 0.0
  %4755 = vmatprep.subr.mxu0 0.0
  %4756 = vmatpush2.msra.mxu0 0.0
  %4757 = vmatprep.subr.mxu0 0.0
  %4758 = vmatpush2.msra.mxu0 0.0
  %4759 = vmatprep.subr.mxu0 0.0
  %4760 = vmatpush2.msra.mxu0 0.0
  %4761 = vmatprep.subr.mxu0 0.0
  %4762 = vmatpush2.msra.mxu0 0.0
  %4763 = vmatprep.subr.mxu0 0.0
  %4764 = vmatpush2.msra.mxu0 0.0
  %4765 = vmatprep.subr.mxu0 0.0
  %4766 = vmatpush2.msra.mxu0 0.0
  %4767 = vmatprep.subr.mxu0 0.0
  %4768 = vmatpush2.msra.mxu0 0.0
  %4769 = vmatprep.subr.mxu0 0.0
  %4770 = vmatpush2.msra.mxu0 0.0
  %4771 = vmatprep.subr.mxu0 0.0
  %4772 = vmatpush2.msra.mxu0 0.0
  %4773 = vmatprep.subr.mxu0 0.0
  %4774 = vmatpush2.msra.mxu0 0.0
  %4775 = vmatprep.mubr.f32.mxu0 0.0
  %4776 = vmatmul.mubr.f32.gmra.mxu0 %v4638
  %v4777 = vpop.f32.mrf.mxu0
  %v4778 = vadd.f32 %v4707, %v4777
  %v4779 = vpop.f32.mrf.mxu0
  %v4780 = vadd.f32 %v4709, %v4779
  %4781 = vdwg.mxu0
  %v4783 = vsel %vm1256, %v4329, 0
  %4785 = vmatprep.subr.mxu0 %v4363
  %4786 = vmatpush1.msra.mxu0 %v4362
  %4787 = vmatprep.subr.mxu0 %v4361
  %4788 = vmatpush1.msra.mxu0 %v4360
  %4789 = vmatprep.subr.mxu0 %v4359
  %4790 = vmatpush1.msra.mxu0 %v4358
  %4791 = vmatprep.subr.mxu0 %v4357
  %4792 = vmatpush1.msra.mxu0 %v4356
  %4793 = vmatprep.subr.mxu0 %v4355
  %4794 = vmatpush1.msra.mxu0 %v4354
  %4795 = vmatprep.subr.mxu0 %v4353
  %4796 = vmatpush1.msra.mxu0 %v4352
  %4797 = vmatprep.subr.mxu0 %v4351
  %4798 = vmatpush1.msra.mxu0 %v4350
  %4799 = vmatprep.subr.mxu0 %v4349
  %4800 = vmatpush1.msra.mxu0 %v4348
  %4801 = vmatprep.subr.mxu0 %v4347
  %4802 = vmatpush1.msra.mxu0 %v4346
  %4803 = vmatprep.subr.mxu0 %v4345
  %4804 = vmatpush1.msra.mxu0 %v4344
  %4805 = vmatprep.subr.mxu0 %v4343
  %4806 = vmatpush1.msra.mxu0 %v4342
  %4807 = vmatprep.subr.mxu0 %v4341
  %4808 = vmatpush1.msra.mxu0 %v4340
  %4809 = vmatprep.subr.mxu0 %v4339
  %4810 = vmatpush1.msra.mxu0 %v4338
  %4811 = vmatprep.subr.mxu0 %v4337
  %4812 = vmatpush1.msra.mxu0 %v4336
  %4813 = vmatprep.subr.mxu0 %v4335
  %4814 = vmatpush1.msra.mxu0 %v4334
  %4815 = vmatprep.subr.mxu0 %v4333
  %4816 = vmatpush1.msra.mxu0 %v4332
  %4817 = vmatprep.subr.mxu0 %v4395
  %4818 = vmatpush2.msra.mxu0 %v4394
  %4819 = vmatprep.subr.mxu0 %v4393
  %4820 = vmatpush2.msra.mxu0 %v4392
  %4821 = vmatprep.subr.mxu0 %v4391
  %4822 = vmatpush2.msra.mxu0 %v4390
  %4823 = vmatprep.subr.mxu0 %v4389
  %4824 = vmatpush2.msra.mxu0 %v4388
  %4825 = vmatprep.subr.mxu0 %v4387
  %4826 = vmatpush2.msra.mxu0 %v4386
  %4827 = vmatprep.subr.mxu0 %v4385
  %4828 = vmatpush2.msra.mxu0 %v4384
  %4829 = vmatprep.subr.mxu0 %v4383
  %4830 = vmatpush2.msra.mxu0 %v4382
  %4831 = vmatprep.subr.mxu0 %v4381
  %4832 = vmatpush2.msra.mxu0 %v4380
  %4833 = vmatprep.subr.mxu0 %v4379
  %4834 = vmatpush2.msra.mxu0 %v4378
  %4835 = vmatprep.subr.mxu0 %v4377
  %4836 = vmatpush2.msra.mxu0 %v4376
  %4837 = vmatprep.subr.mxu0 %v4375
  %4838 = vmatpush2.msra.mxu0 %v4374
  %4839 = vmatprep.subr.mxu0 %v4373
  %4840 = vmatpush2.msra.mxu0 %v4372
  %4841 = vmatprep.subr.mxu0 %v4371
  %4842 = vmatpush2.msra.mxu0 %v4370
  %4843 = vmatprep.subr.mxu0 %v4369
  %4844 = vmatpush2.msra.mxu0 %v4368
  %4845 = vmatprep.subr.mxu0 %v4367
  %4846 = vmatpush2.msra.mxu0 %v4366
  %4847 = vmatprep.subr.mxu0 %v4365
  %4848 = vmatpush2.msra.mxu0 %v4364
  %4849 = vmatprep.mubr.f32.mxu0 %v4260
  %4850 = vmatmul.mubr.f32.gmra.mxu0 %v4258
  %v4851 = vpop.f32.mrf.mxu0
  %v4852 = vadd.f32 %v4778, %v4851
  %v4853 = vpop.f32.mrf.mxu0
  %v4854 = vadd.f32 %v4780, %v4853
  %4855 = vdwg.mxu0
  %4856 = vmatprep.subr.mxu0 0.0
  %4857 = vmatpush1.msra.mxu0 0.0
  %4858 = vmatprep.subr.mxu0 0.0
  %4859 = vmatpush1.msra.mxu0 0.0
  %4860 = vmatprep.subr.mxu0 0.0
  %4861 = vmatpush1.msra.mxu0 0.0
  %4862 = vmatprep.subr.mxu0 0.0
  %4863 = vmatpush1.msra.mxu0 0.0
  %4864 = vmatprep.subr.mxu0 0.0
  %4865 = vmatpush1.msra.mxu0 0.0
  %4866 = vmatprep.subr.mxu0 0.0
  %4867 = vmatpush1.msra.mxu0 0.0
  %4868 = vmatprep.subr.mxu0 0.0
  %4869 = vmatpush1.msra.mxu0 0.0
  %4870 = vmatprep.subr.mxu0 0.0
  %4871 = vmatpush1.msra.mxu0 0.0
  %4872 = vmatprep.subr.mxu0 %v4411
  %4873 = vmatpush1.msra.mxu0 %v4410
  %4874 = vmatprep.subr.mxu0 %v4409
  %4875 = vmatpush1.msra.mxu0 %v4408
  %4876 = vmatprep.subr.mxu0 %v4407
  %4877 = vmatpush1.msra.mxu0 %v4406
  %4878 = vmatprep.subr.mxu0 %v4405
  %4879 = vmatpush1.msra.mxu0 %v4404
  %4880 = vmatprep.subr.mxu0 %v4403
  %4881 = vmatpush1.msra.mxu0 %v4402
  %4882 = vmatprep.subr.mxu0 %v4401
  %4883 = vmatpush1.msra.mxu0 %v4400
  %4884 = vmatprep.subr.mxu0 %v4399
  %4885 = vmatpush1.msra.mxu0 %v4398
  %4886 = vmatprep.subr.mxu0 %v4397
  %4887 = vmatpush1.msra.mxu0 %v4396
  %4888 = vmatprep.subr.mxu0 0.0
  %4889 = vmatpush2.msra.mxu0 0.0
  %4890 = vmatprep.subr.mxu0 0.0
  %4891 = vmatpush2.msra.mxu0 0.0
  %4892 = vmatprep.subr.mxu0 0.0
  %4893 = vmatpush2.msra.mxu0 0.0
  %4894 = vmatprep.subr.mxu0 0.0
  %4895 = vmatpush2.msra.mxu0 0.0
  %4896 = vmatprep.subr.mxu0 0.0
  %4897 = vmatpush2.msra.mxu0 0.0
  %4898 = vmatprep.subr.mxu0 0.0
  %4899 = vmatpush2.msra.mxu0 0.0
  %4900 = vmatprep.subr.mxu0 0.0
  %4901 = vmatpush2.msra.mxu0 0.0
  %4902 = vmatprep.subr.mxu0 0.0
  %4903 = vmatpush2.msra.mxu0 0.0
  %4904 = vmatprep.subr.mxu0 0.0
  %4905 = vmatpush2.msra.mxu0 0.0
  %4906 = vmatprep.subr.mxu0 0.0
  %4907 = vmatpush2.msra.mxu0 0.0
  %4908 = vmatprep.subr.mxu0 0.0
  %4909 = vmatpush2.msra.mxu0 0.0
  %4910 = vmatprep.subr.mxu0 0.0
  %4911 = vmatpush2.msra.mxu0 0.0
  %4912 = vmatprep.subr.mxu0 0.0
  %4913 = vmatpush2.msra.mxu0 0.0
  %4914 = vmatprep.subr.mxu0 0.0
  %4915 = vmatpush2.msra.mxu0 0.0
  %4916 = vmatprep.subr.mxu0 0.0
  %4917 = vmatpush2.msra.mxu0 0.0
  %4918 = vmatprep.subr.mxu0 0.0
  %4919 = vmatpush2.msra.mxu0 0.0
  %4920 = vmatprep.mubr.f32.mxu0 0.0
  %4921 = vmatmul.mubr.f32.gmra.mxu0 %v4783
  %v4922 = vpop.f32.mrf.mxu0
  %v4923 = vadd.f32 %v4852, %v4922
  %v4924 = vpop.f32.mrf.mxu0
  %v4925 = vadd.f32 %v4854, %v4924
  %4926 = vdwg.mxu0
  %s4927 = scalar_lea.vmem %s4, 4
  %v4928 = vld [vmem:[%s4927] ss:$8 sm:$0x3]
  %v4930 = vlaneseq
  %v4931 = vshrl.u32 %v4930, 7
  %v4932 = vsub.s32 0, %v4931
  %v4933 = vrot.slane %v4928, %v4932
  %v4934 = vlaneseq
  %v4935 = vshrl.u32 %v4934, 7
  %v4936 = vsub.s32 1, %v4935
  %v4937 = vrot.slane %v4928, %v4936
  %v4940 = vadd.f32 %v4923, %v4933
  %v4941 = vadd.f32 %v4925, %v4937
  %v4942 = vmax.f32 %v4940, 0.0
  %v4943 = vmax.f32 %v4941, 0.0
  %v4944 = vld [vmem:[%s2 + $0x80] sm:$0xf]
  %v4946 = vsel %vm4177, %v4944, 0
  %v4949 = vsel %vm4181, %v4942, 0
  %v4952 = vsel %vm4181, %v4943, 0
  %4954 = vmatprep.subr.mxu0 0.0
  %4955 = vmatpush1.msra.mxu0 0.0
  %4956 = vmatprep.subr.mxu0 0.0
  %4957 = vmatpush1.msra.mxu0 0.0
  %4958 = vmatprep.subr.mxu0 0.0
  %4959 = vmatpush1.msra.mxu0 0.0
  %4960 = vmatprep.subr.mxu0 0.0
  %4961 = vmatpush1.msra.mxu0 0.0
  %4962 = vmatprep.subr.mxu0 0.0
  %4963 = vmatpush1.msra.mxu0 0.0
  %4964 = vmatprep.subr.mxu0 0.0
  %4965 = vmatpush1.msra.mxu0 0.0
  %4966 = vmatprep.subr.mxu0 0.0
  %4967 = vmatpush1.msra.mxu0 0.0
  %4968 = vmatprep.subr.mxu0 0.0
  %4969 = vmatpush1.msra.mxu0 0.0
  %4970 = vmatprep.subr.mxu0 0.0
  %4971 = vmatpush1.msra.mxu0 0.0
  %4972 = vmatprep.subr.mxu0 0.0
  %4973 = vmatpush1.msra.mxu0 0.0
  %4974 = vmatprep.subr.mxu0 0.0
  %4975 = vmatpush1.msra.mxu0 0.0
  %4976 = vmatprep.subr.mxu0 0.0
  %4977 = vmatpush1.msra.mxu0 0.0
  %4978 = vmatprep.subr.mxu0 0.0
  %4979 = vmatpush1.msra.mxu0 0.0
  %4980 = vmatprep.subr.mxu0 0.0
  %4981 = vmatpush1.msra.mxu0 0.0
  %4982 = vmatprep.subr.mxu0 0.0
  %4983 = vmatpush1.msra.mxu0 0.0
  %4984 = vmatprep.subr.mxu0 %v4952
  %4985 = vmatpush1.msra.mxu0 %v4949
  %4986 = vmatprep.subr.mxu0 0.0
  %4987 = vmatpush2.msra.mxu0 0.0
  %4988 = vmatprep.subr.mxu0 0.0
  %4989 = vmatpush2.msra.mxu0 0.0
  %4990 = vmatprep.subr.mxu0 0.0
  %4991 = vmatpush2.msra.mxu0 0.0
  %4992 = vmatprep.subr.mxu0 0.0
  %4993 = vmatpush2.msra.mxu0 0.0
  %4994 = vmatprep.subr.mxu0 0.0
  %4995 = vmatpush2.msra.mxu0 0.0
  %4996 = vmatprep.subr.mxu0 0.0
  %4997 = vmatpush2.msra.mxu0 0.0
  %4998 = vmatprep.subr.mxu0 0.0
  %4999 = vmatpush2.msra.mxu0 0.0
  %5000 = vmatprep.subr.mxu0 0.0
  %5001 = vmatpush2.msra.mxu0 0.0
  %5002 = vmatprep.subr.mxu0 0.0
  %5003 = vmatpush2.msra.mxu0 0.0
  %5004 = vmatprep.subr.mxu0 0.0
  %5005 = vmatpush2.msra.mxu0 0.0
  %5006 = vmatprep.subr.mxu0 0.0
  %5007 = vmatpush2.msra.mxu0 0.0
  %5008 = vmatprep.subr.mxu0 0.0
  %5009 = vmatpush2.msra.mxu0 0.0
  %5010 = vmatprep.subr.mxu0 0.0
  %5011 = vmatpush2.msra.mxu0 0.0
  %5012 = vmatprep.subr.mxu0 0.0
  %5013 = vmatpush2.msra.mxu0 0.0
  %5014 = vmatprep.subr.mxu0 0.0
  %5015 = vmatpush2.msra.mxu0 0.0
  %5016 = vmatprep.subr.mxu0 0.0
  %5017 = vmatpush2.msra.mxu0 0.0
  %5018 = vmatprep.mubr.f32.mxu0 0.0
  %5019 = vmatmul.mubr.f32.gmra.mxu0 %v4946
  %v5020 = vpop.f32.mrf.mxu0
  %v5021 = vadd.f32 0.0, %v5020
  %v5022 = vpop.f32.mrf.mxu0
  %v5023 = vadd.f32 0.0, %v5022
  %5024 = vdwg.mxu0
  %v5025 = vld [vmem:[%s3 + $0x20d0] sm:$0xff]
  %v5026 = vld [vmem:[%s3 + $0x20d8] sm:$0xff]
  %v5027 = vld [vmem:[%s3 + $0x20e8] sm:$0xff]
  %v5028 = vld [vmem:[%s3 + $0x20f0] sm:$0xff]
  %v5029 = vld [vmem:[%s3 + $0x2100] sm:$0xff]
  %v5030 = vld [vmem:[%s3 + $0x2108] sm:$0xff]
  %v5031 = vld [vmem:[%s3 + $0x2118] sm:$0xff]
  %v5032 = vld [vmem:[%s3 + $0x2120] sm:$0xff]
  %v5033 = vld [vmem:[%s3 + $0x2130] sm:$0xff]
  %v5034 = vld [vmem:[%s3 + $0x2138] sm:$0xff]
  %v5035 = vld [vmem:[%s3 + $0x2148] sm:$0xff]
  %v5036 = vld [vmem:[%s3 + $0x2150] sm:$0xff]
  %v5037 = vld [vmem:[%s3 + $0x2160] sm:$0xff]
  %v5038 = vld [vmem:[%s3 + $0x2168] sm:$0xff]
  %v5039 = vld [vmem:[%s3 + $0x2178] sm:$0xff]
  %v5040 = vld [vmem:[%s3 + $0x2180] sm:$0xff]
  %v5041 = vld [vmem:[%s3 + $0x2190] sm:$0xff]
  %v5042 = vld [vmem:[%s3 + $0x2198] sm:$0xff]
  %v5043 = vld [vmem:[%s3 + $0x21a8] sm:$0xff]
  %v5044 = vld [vmem:[%s3 + $0x21b0] sm:$0xff]
  %v5045 = vld [vmem:[%s3 + $0x21c0] sm:$0xff]
  %v5046 = vld [vmem:[%s3 + $0x21c8] sm:$0xff]
  %v5047 = vld [vmem:[%s3 + $0x21d8] sm:$0xff]
  %v5048 = vld [vmem:[%s3 + $0x21e0] sm:$0xff]
  %v5049 = vld [vmem:[%s3 + $0x21f0] sm:$0xff]
  %v5050 = vld [vmem:[%s3 + $0x21f8] sm:$0xff]
  %v5051 = vld [vmem:[%s3 + $0x2208] sm:$0xff]
  %v5052 = vld [vmem:[%s3 + $0x2210] sm:$0xff]
  %v5053 = vld [vmem:[%s3 + $0x2220] sm:$0xff]
  %v5054 = vld [vmem:[%s3 + $0x2228] sm:$0xff]
  %v5055 = vld [vmem:[%s3 + $0x2238] sm:$0xff]
  %v5056 = vld [vmem:[%s3 + $0x2240] sm:$0xff]
  %v5057 = vld [vmem:[%s3 + $0x2250] sm:$0xff]
  %v5058 = vld [vmem:[%s3 + $0x2258] sm:$0xff]
  %v5059 = vld [vmem:[%s3 + $0x2268] sm:$0xff]
  %v5060 = vld [vmem:[%s3 + $0x2270] sm:$0xff]
  %v5061 = vld [vmem:[%s3 + $0x2280] sm:$0xff]
  %v5062 = vld [vmem:[%s3 + $0x2288] sm:$0xff]
  %v5063 = vld [vmem:[%s3 + $0x2298] sm:$0xff]
  %v5064 = vld [vmem:[%s3 + $0x22a0] sm:$0xff]
  %v5065 = vld [vmem:[%s3 + $0x22b0] sm:$0xff]
  %v5066 = vld [vmem:[%s3 + $0x22b8] sm:$0xff]
  %v5067 = vld [vmem:[%s3 + $0x22c8] sm:$0xff]
  %v5068 = vld [vmem:[%s3 + $0x22d0] sm:$0xff]
  %v5069 = vld [vmem:[%s3 + $0x22e0] sm:$0xff]
  %v5070 = vld [vmem:[%s3 + $0x22e8] sm:$0xff]
  %v5071 = vld [vmem:[%s3 + $0x22f8] sm:$0xff]
  %v5072 = vld [vmem:[%s3 + $0x2300] sm:$0xff]
  %v5073 = vld [vmem:[%s3 + $0x2310] sm:$0xff]
  %v5074 = vld [vmem:[%s3 + $0x2318] sm:$0xff]
  %v5075 = vld [vmem:[%s3 + $0x2328] sm:$0xff]
  %v5076 = vld [vmem:[%s3 + $0x2330] sm:$0xff]
  %v5077 = vld [vmem:[%s3 + $0x2340] sm:$0xff]
  %v5078 = vld [vmem:[%s3 + $0x2348] sm:$0xff]
  %v5079 = vld [vmem:[%s3 + $0x2358] sm:$0xff]
  %v5080 = vld [vmem:[%s3 + $0x2360] sm:$0xff]
  %v5081 = vld [vmem:[%s2 + $0x88] sm:$0xf]
  %v5083 = vsel %vm4177, %v5081, 0
  %5085 = vmatprep.subr.mxu0 0.0
  %5086 = vmatpush1.msra.mxu0 0.0
  %5087 = vmatprep.subr.mxu0 0.0
  %5088 = vmatpush1.msra.mxu0 0.0
  %5089 = vmatprep.subr.mxu0 0.0
  %5090 = vmatpush1.msra.mxu0 0.0
  %5091 = vmatprep.subr.mxu0 0.0
  %5092 = vmatpush1.msra.mxu0 0.0
  %5093 = vmatprep.subr.mxu0 0.0
  %5094 = vmatpush1.msra.mxu0 0.0
  %5095 = vmatprep.subr.mxu0 0.0
  %5096 = vmatpush1.msra.mxu0 0.0
  %5097 = vmatprep.subr.mxu0 0.0
  %5098 = vmatpush1.msra.mxu0 0.0
  %5099 = vmatprep.subr.mxu0 0.0
  %5100 = vmatpush1.msra.mxu0 0.0
  %5101 = vmatprep.subr.mxu0 0.0
  %5102 = vmatpush1.msra.mxu0 0.0
  %5103 = vmatprep.subr.mxu0 0.0
  %5104 = vmatpush1.msra.mxu0 0.0
  %5105 = vmatprep.subr.mxu0 0.0
  %5106 = vmatpush1.msra.mxu0 0.0
  %5107 = vmatprep.subr.mxu0 0.0
  %5108 = vmatpush1.msra.mxu0 0.0
  %5109 = vmatprep.subr.mxu0 0.0
  %5110 = vmatpush1.msra.mxu0 0.0
  %5111 = vmatprep.subr.mxu0 0.0
  %5112 = vmatpush1.msra.mxu0 0.0
  %5113 = vmatprep.subr.mxu0 0.0
  %5114 = vmatpush1.msra.mxu0 0.0
  %5115 = vmatprep.subr.mxu0 %v4952
  %5116 = vmatpush1.msra.mxu0 %v4949
  %5117 = vmatprep.subr.mxu0 0.0
  %5118 = vmatpush2.msra.mxu0 0.0
  %5119 = vmatprep.subr.mxu0 0.0
  %5120 = vmatpush2.msra.mxu0 0.0
  %5121 = vmatprep.subr.mxu0 0.0
  %5122 = vmatpush2.msra.mxu0 0.0
  %5123 = vmatprep.subr.mxu0 0.0
  %5124 = vmatpush2.msra.mxu0 0.0
  %5125 = vmatprep.subr.mxu0 0.0
  %5126 = vmatpush2.msra.mxu0 0.0
  %5127 = vmatprep.subr.mxu0 0.0
  %5128 = vmatpush2.msra.mxu0 0.0
  %5129 = vmatprep.subr.mxu0 0.0
  %5130 = vmatpush2.msra.mxu0 0.0
  %5131 = vmatprep.subr.mxu0 0.0
  %5132 = vmatpush2.msra.mxu0 0.0
  %5133 = vmatprep.subr.mxu0 0.0
  %5134 = vmatpush2.msra.mxu0 0.0
  %5135 = vmatprep.subr.mxu0 0.0
  %5136 = vmatpush2.msra.mxu0 0.0
  %5137 = vmatprep.subr.mxu0 0.0
  %5138 = vmatpush2.msra.mxu0 0.0
  %5139 = vmatprep.subr.mxu0 0.0
  %5140 = vmatpush2.msra.mxu0 0.0
  %5141 = vmatprep.subr.mxu0 0.0
  %5142 = vmatpush2.msra.mxu0 0.0
  %5143 = vmatprep.subr.mxu0 0.0
  %5144 = vmatpush2.msra.mxu0 0.0
  %5145 = vmatprep.subr.mxu0 0.0
  %5146 = vmatpush2.msra.mxu0 0.0
  %5147 = vmatprep.subr.mxu0 0.0
  %5148 = vmatpush2.msra.mxu0 0.0
  %5149 = vmatprep.mubr.f32.mxu0 0.0
  %5150 = vmatmul.mubr.f32.gmra.mxu0 %v5083
  %v5151 = vpop.f32.mrf.mxu0
  %v5152 = vadd.f32 0.0, %v5151
  %v5153 = vpop.f32.mrf.mxu0
  %v5154 = vadd.f32 0.0, %v5153
  %5155 = vdwg.mxu0
  %v5156 = vld [vmem:[%s3 + $0x2370] sm:$0xff]
  %v5157 = vld [vmem:[%s3 + $0x2378] sm:$0xff]
  %v5158 = vld [vmem:[%s3 + $0x2388] sm:$0xff]
  %v5159 = vld [vmem:[%s3 + $0x2390] sm:$0xff]
  %v5160 = vld [vmem:[%s3 + $0x23a0] sm:$0xff]
  %v5161 = vld [vmem:[%s3 + $0x23a8] sm:$0xff]
  %v5162 = vld [vmem:[%s3 + $0x23b8] sm:$0xff]
  %v5163 = vld [vmem:[%s3 + $0x23c0] sm:$0xff]
  %v5164 = vld [vmem:[%s3 + $0x23d0] sm:$0xff]
  %v5165 = vld [vmem:[%s3 + $0x23d8] sm:$0xff]
  %v5166 = vld [vmem:[%s3 + $0x23e8] sm:$0xff]
  %v5167 = vld [vmem:[%s3 + $0x23f0] sm:$0xff]
  %v5168 = vld [vmem:[%s3 + $0x2400] sm:$0xff]
  %v5169 = vld [vmem:[%s3 + $0x2408] sm:$0xff]
  %v5170 = vld [vmem:[%s3 + $0x2418] sm:$0xff]
  %v5171 = vld [vmem:[%s3 + $0x2420] sm:$0xff]
  %v5172 = vld [vmem:[%s3 + $0x2430] sm:$0xff]
  %v5173 = vld [vmem:[%s3 + $0x2438] sm:$0xff]
  %v5174 = vld [vmem:[%s3 + $0x2448] sm:$0xff]
  %v5175 = vld [vmem:[%s3 + $0x2450] sm:$0xff]
  %v5176 = vld [vmem:[%s3 + $0x2460] sm:$0xff]
  %v5177 = vld [vmem:[%s3 + $0x2468] sm:$0xff]
  %v5178 = vld [vmem:[%s3 + $0x2478] sm:$0xff]
  %v5179 = vld [vmem:[%s3 + $0x2480] sm:$0xff]
  %v5180 = vld [vmem:[%s3 + $0x2490] sm:$0xff]
  %v5181 = vld [vmem:[%s3 + $0x2498] sm:$0xff]
  %v5182 = vld [vmem:[%s3 + $0x24a8] sm:$0xff]
  %v5183 = vld [vmem:[%s3 + $0x24b0] sm:$0xff]
  %v5184 = vld [vmem:[%s3 + $0x24c0] sm:$0xff]
  %v5185 = vld [vmem:[%s3 + $0x24c8] sm:$0xff]
  %v5186 = vld [vmem:[%s3 + $0x24d8] sm:$0xff]
  %v5187 = vld [vmem:[%s3 + $0x24e0] sm:$0xff]
  %v5188 = vld [vmem:[%s3 + $0x24f0] sm:$0xff]
  %v5189 = vld [vmem:[%s3 + $0x24f8] sm:$0xff]
  %v5190 = vld [vmem:[%s3 + $0x2508] sm:$0xff]
  %v5191 = vld [vmem:[%s3 + $0x2510] sm:$0xff]
  %v5192 = vld [vmem:[%s3 + $0x2520] sm:$0xff]
  %v5193 = vld [vmem:[%s3 + $0x2528] sm:$0xff]
  %v5194 = vld [vmem:[%s3 + $0x2538] sm:$0xff]
  %v5195 = vld [vmem:[%s3 + $0x2540] sm:$0xff]
  %v5196 = vld [vmem:[%s3 + $0x2550] sm:$0xff]
  %v5197 = vld [vmem:[%s3 + $0x2558] sm:$0xff]
  %v5198 = vld [vmem:[%s3 + $0x2568] sm:$0xff]
  %v5199 = vld [vmem:[%s3 + $0x2570] sm:$0xff]
  %v5200 = vld [vmem:[%s3 + $0x2580] sm:$0xff]
  %v5201 = vld [vmem:[%s3 + $0x2588] sm:$0xff]
  %v5202 = vld [vmem:[%s3 + $0x2598] sm:$0xff]
  %v5203 = vld [vmem:[%s3 + $0x25a0] sm:$0xff]
  %v5204 = vld [vmem:[%s3 + $0x25b0] sm:$0xff]
  %v5205 = vld [vmem:[%s3 + $0x25b8] sm:$0xff]
  %v5206 = vld [vmem:[%s3 + $0x25c8] sm:$0xff]
  %v5207 = vld [vmem:[%s3 + $0x25d0] sm:$0xff]
  %v5208 = vld [vmem:[%s3 + $0x25e0] sm:$0xff]
  %v5209 = vld [vmem:[%s3 + $0x25e8] sm:$0xff]
  %v5210 = vld [vmem:[%s3 + $0x25f8] sm:$0xff]
  %v5211 = vld [vmem:[%s3 + $0x2600] sm:$0xff]
  %vm5212 = vcmask 785408
  %v5214 = vsel %vm5212, %v5154, 0
  %5216 = vmatprep.subr.mxu0 %v5187
  %5217 = vmatpush1.msra.mxu0 %v5186
  %5218 = vmatprep.subr.mxu0 %v5185
  %5219 = vmatpush1.msra.mxu0 %v5184
  %5220 = vmatprep.subr.mxu0 %v5183
  %5221 = vmatpush1.msra.mxu0 %v5182
  %5222 = vmatprep.subr.mxu0 %v5181
  %5223 = vmatpush1.msra.mxu0 %v5180
  %5224 = vmatprep.subr.mxu0 %v5179
  %5225 = vmatpush1.msra.mxu0 %v5178
  %5226 = vmatprep.subr.mxu0 %v5177
  %5227 = vmatpush1.msra.mxu0 %v5176
  %5228 = vmatprep.subr.mxu0 %v5175
  %5229 = vmatpush1.msra.mxu0 %v5174
  %5230 = vmatprep.subr.mxu0 %v5173
  %5231 = vmatpush1.msra.mxu0 %v5172
  %5232 = vmatprep.subr.mxu0 %v5171
  %5233 = vmatpush1.msra.mxu0 %v5170
  %5234 = vmatprep.subr.mxu0 %v5169
  %5235 = vmatpush1.msra.mxu0 %v5168
  %5236 = vmatprep.subr.mxu0 %v5167
  %5237 = vmatpush1.msra.mxu0 %v5166
  %5238 = vmatprep.subr.mxu0 %v5165
  %5239 = vmatpush1.msra.mxu0 %v5164
  %5240 = vmatprep.subr.mxu0 %v5163
  %5241 = vmatpush1.msra.mxu0 %v5162
  %5242 = vmatprep.subr.mxu0 %v5161
  %5243 = vmatpush1.msra.mxu0 %v5160
  %5244 = vmatprep.subr.mxu0 %v5159
  %5245 = vmatpush1.msra.mxu0 %v5158
  %5246 = vmatprep.subr.mxu0 %v5157
  %5247 = vmatpush1.msra.mxu0 %v5156
  %5248 = vmatprep.subr.mxu0 0.0
  %5249 = vmatpush2.msra.mxu0 0.0
  %5250 = vmatprep.subr.mxu0 0.0
  %5251 = vmatpush2.msra.mxu0 0.0
  %5252 = vmatprep.subr.mxu0 0.0
  %5253 = vmatpush2.msra.mxu0 0.0
  %5254 = vmatprep.subr.mxu0 0.0
  %5255 = vmatpush2.msra.mxu0 0.0
  %5256 = vmatprep.subr.mxu0 %v5211
  %5257 = vmatpush2.msra.mxu0 %v5210
  %5258 = vmatprep.subr.mxu0 %v5209
  %5259 = vmatpush2.msra.mxu0 %v5208
  %5260 = vmatprep.subr.mxu0 %v5207
  %5261 = vmatpush2.msra.mxu0 %v5206
  %5262 = vmatprep.subr.mxu0 %v5205
  %5263 = vmatpush2.msra.mxu0 %v5204
  %5264 = vmatprep.subr.mxu0 %v5203
  %5265 = vmatpush2.msra.mxu0 %v5202
  %5266 = vmatprep.subr.mxu0 %v5201
  %5267 = vmatpush2.msra.mxu0 %v5200
  %5268 = vmatprep.subr.mxu0 %v5199
  %5269 = vmatpush2.msra.mxu0 %v5198
  %5270 = vmatprep.subr.mxu0 %v5197
  %5271 = vmatpush2.msra.mxu0 %v5196
  %5272 = vmatprep.subr.mxu0 %v5195
  %5273 = vmatpush2.msra.mxu0 %v5194
  %5274 = vmatprep.subr.mxu0 %v5193
  %5275 = vmatpush2.msra.mxu0 %v5192
  %5276 = vmatprep.subr.mxu0 %v5191
  %5277 = vmatpush2.msra.mxu0 %v5190
  %5278 = vmatprep.subr.mxu0 %v5189
  %5279 = vmatpush2.msra.mxu0 %v5188
  %5280 = vmatprep.mubr.f32.mxu0 %v5214
  %5281 = vmatmul.mubr.f32.gmra.mxu0 %v5152
  %v5282 = vpop.f32.mrf.mxu0
  %v5283 = vadd.f32 0.0, %v5282
  %v5284 = vpop.f32.mrf.mxu0
  %v5285 = vadd.f32 0.0, %v5284
  %5286 = vdwg.mxu0
  %v5288 = vsel %vm5212, %v5023, 0
  %5290 = vmatprep.subr.mxu0 %v5056
  %5291 = vmatpush1.msra.mxu0 %v5055
  %5292 = vmatprep.subr.mxu0 %v5054
  %5293 = vmatpush1.msra.mxu0 %v5053
  %5294 = vmatprep.subr.mxu0 %v5052
  %5295 = vmatpush1.msra.mxu0 %v5051
  %5296 = vmatprep.subr.mxu0 %v5050
  %5297 = vmatpush1.msra.mxu0 %v5049
  %5298 = vmatprep.subr.mxu0 %v5048
  %5299 = vmatpush1.msra.mxu0 %v5047
  %5300 = vmatprep.subr.mxu0 %v5046
  %5301 = vmatpush1.msra.mxu0 %v5045
  %5302 = vmatprep.subr.mxu0 %v5044
  %5303 = vmatpush1.msra.mxu0 %v5043
  %5304 = vmatprep.subr.mxu0 %v5042
  %5305 = vmatpush1.msra.mxu0 %v5041
  %5306 = vmatprep.subr.mxu0 %v5040
  %5307 = vmatpush1.msra.mxu0 %v5039
  %5308 = vmatprep.subr.mxu0 %v5038
  %5309 = vmatpush1.msra.mxu0 %v5037
  %5310 = vmatprep.subr.mxu0 %v5036
  %5311 = vmatpush1.msra.mxu0 %v5035
  %5312 = vmatprep.subr.mxu0 %v5034
  %5313 = vmatpush1.msra.mxu0 %v5033
  %5314 = vmatprep.subr.mxu0 %v5032
  %5315 = vmatpush1.msra.mxu0 %v5031
  %5316 = vmatprep.subr.mxu0 %v5030
  %5317 = vmatpush1.msra.mxu0 %v5029
  %5318 = vmatprep.subr.mxu0 %v5028
  %5319 = vmatpush1.msra.mxu0 %v5027
  %5320 = vmatprep.subr.mxu0 %v5026
  %5321 = vmatpush1.msra.mxu0 %v5025
  %5322 = vmatprep.subr.mxu0 0.0
  %5323 = vmatpush2.msra.mxu0 0.0
  %5324 = vmatprep.subr.mxu0 0.0
  %5325 = vmatpush2.msra.mxu0 0.0
  %5326 = vmatprep.subr.mxu0 0.0
  %5327 = vmatpush2.msra.mxu0 0.0
  %5328 = vmatprep.subr.mxu0 0.0
  %5329 = vmatpush2.msra.mxu0 0.0
  %5330 = vmatprep.subr.mxu0 %v5080
  %5331 = vmatpush2.msra.mxu0 %v5079
  %5332 = vmatprep.subr.mxu0 %v5078
  %5333 = vmatpush2.msra.mxu0 %v5077
  %5334 = vmatprep.subr.mxu0 %v5076
  %5335 = vmatpush2.msra.mxu0 %v5075
  %5336 = vmatprep.subr.mxu0 %v5074
  %5337 = vmatpush2.msra.mxu0 %v5073
  %5338 = vmatprep.subr.mxu0 %v5072
  %5339 = vmatpush2.msra.mxu0 %v5071
  %5340 = vmatprep.subr.mxu0 %v5070
  %5341 = vmatpush2.msra.mxu0 %v5069
  %5342 = vmatprep.subr.mxu0 %v5068
  %5343 = vmatpush2.msra.mxu0 %v5067
  %5344 = vmatprep.subr.mxu0 %v5066
  %5345 = vmatpush2.msra.mxu0 %v5065
  %5346 = vmatprep.subr.mxu0 %v5064
  %5347 = vmatpush2.msra.mxu0 %v5063
  %5348 = vmatprep.subr.mxu0 %v5062
  %5349 = vmatpush2.msra.mxu0 %v5061
  %5350 = vmatprep.subr.mxu0 %v5060
  %5351 = vmatpush2.msra.mxu0 %v5059
  %5352 = vmatprep.subr.mxu0 %v5058
  %5353 = vmatpush2.msra.mxu0 %v5057
  %5354 = vmatprep.mubr.f32.mxu0 %v5288
  %5355 = vmatmul.mubr.f32.gmra.mxu0 %v5021
  %v5356 = vpop.f32.mrf.mxu0
  %v5357 = vadd.f32 %v5283, %v5356
  %v5358 = vpop.f32.mrf.mxu0
  %v5359 = vadd.f32 %v5285, %v5358
  %5360 = vdwg.mxu0
  %s5361 = scalar_lea.vmem %s4, 5
  %v5362 = vld [vmem:[%s5361] ss:$8 sm:$0x3]
  %v5364 = vlaneseq
  %v5365 = vshrl.u32 %v5364, 7
  %v5366 = vsub.s32 0, %v5365
  %v5367 = vrot.slane %v5362, %v5366
  %v5368 = vlaneseq
  %v5369 = vshrl.u32 %v5368, 7
  %v5370 = vsub.s32 1, %v5369
  %v5371 = vrot.slane %v5362, %v5370
  %v5374 = vadd.f32 %v5357, %v5367
  %v5375 = vadd.f32 %v5359, %v5371
  %v5376 = vmax.f32 %v5374, 0.0
  %v5377 = vmax.f32 %v5375, 0.0
  %v5378 = vld [vmem:[%s2 + $0x90] sm:$0xf]
  %v5380 = vsel %vm4177, %v5378, 0
  %v5383 = vsel %vm4181, %v5376, 0
  %v5386 = vsel %vm4181, %v5377, 0
  %5388 = vmatprep.subr.mxu0 0.0
  %5389 = vmatpush1.msra.mxu0 0.0
  %5390 = vmatprep.subr.mxu0 0.0
  %5391 = vmatpush1.msra.mxu0 0.0
  %5392 = vmatprep.subr.mxu0 0.0
  %5393 = vmatpush1.msra.mxu0 0.0
  %5394 = vmatprep.subr.mxu0 0.0
  %5395 = vmatpush1.msra.mxu0 0.0
  %5396 = vmatprep.subr.mxu0 0.0
  %5397 = vmatpush1.msra.mxu0 0.0
  %5398 = vmatprep.subr.mxu0 0.0
  %5399 = vmatpush1.msra.mxu0 0.0
  %5400 = vmatprep.subr.mxu0 0.0
  %5401 = vmatpush1.msra.mxu0 0.0
  %5402 = vmatprep.subr.mxu0 0.0
  %5403 = vmatpush1.msra.mxu0 0.0
  %5404 = vmatprep.subr.mxu0 0.0
  %5405 = vmatpush1.msra.mxu0 0.0
  %5406 = vmatprep.subr.mxu0 0.0
  %5407 = vmatpush1.msra.mxu0 0.0
  %5408 = vmatprep.subr.mxu0 0.0
  %5409 = vmatpush1.msra.mxu0 0.0
  %5410 = vmatprep.subr.mxu0 0.0
  %5411 = vmatpush1.msra.mxu0 0.0
  %5412 = vmatprep.subr.mxu0 0.0
  %5413 = vmatpush1.msra.mxu0 0.0
  %5414 = vmatprep.subr.mxu0 0.0
  %5415 = vmatpush1.msra.mxu0 0.0
  %5416 = vmatprep.subr.mxu0 0.0
  %5417 = vmatpush1.msra.mxu0 0.0
  %5418 = vmatprep.subr.mxu0 %v5386
  %5419 = vmatpush1.msra.mxu0 %v5383
  %5420 = vmatprep.subr.mxu0 0.0
  %5421 = vmatpush2.msra.mxu0 0.0
  %5422 = vmatprep.subr.mxu0 0.0
  %5423 = vmatpush2.msra.mxu0 0.0
  %5424 = vmatprep.subr.mxu0 0.0
  %5425 = vmatpush2.msra.mxu0 0.0
  %5426 = vmatprep.subr.mxu0 0.0
  %5427 = vmatpush2.msra.mxu0 0.0
  %5428 = vmatprep.subr.mxu0 0.0
  %5429 = vmatpush2.msra.mxu0 0.0
  %5430 = vmatprep.subr.mxu0 0.0
  %5431 = vmatpush2.msra.mxu0 0.0
  %5432 = vmatprep.subr.mxu0 0.0
  %5433 = vmatpush2.msra.mxu0 0.0
  %5434 = vmatprep.subr.mxu0 0.0
  %5435 = vmatpush2.msra.mxu0 0.0
  %5436 = vmatprep.subr.mxu0 0.0
  %5437 = vmatpush2.msra.mxu0 0.0
  %5438 = vmatprep.subr.mxu0 0.0
  %5439 = vmatpush2.msra.mxu0 0.0
  %5440 = vmatprep.subr.mxu0 0.0
  %5441 = vmatpush2.msra.mxu0 0.0
  %5442 = vmatprep.subr.mxu0 0.0
  %5443 = vmatpush2.msra.mxu0 0.0
  %5444 = vmatprep.subr.mxu0 0.0
  %5445 = vmatpush2.msra.mxu0 0.0
  %5446 = vmatprep.subr.mxu0 0.0
  %5447 = vmatpush2.msra.mxu0 0.0
  %5448 = vmatprep.subr.mxu0 0.0
  %5449 = vmatpush2.msra.mxu0 0.0
  %5450 = vmatprep.subr.mxu0 0.0
  %5451 = vmatpush2.msra.mxu0 0.0
  %5452 = vmatprep.mubr.f32.mxu0 0.0
  %5453 = vmatmul.mubr.f32.gmra.mxu0 %v5380
  %v5454 = vpop.f32.mrf.mxu0
  %v5455 = vadd.f32 0.0, %v5454
  %v5456 = vpop.f32.mrf.mxu0
  %v5457 = vadd.f32 0.0, %v5456
  %5458 = vdwg.mxu0
  %v5459 = vld [vmem:[%s3 + $0x2610] sm:$0xff]
  %v5460 = vld [vmem:[%s3 + $0x2618] sm:$0xff]
  %v5461 = vld [vmem:[%s3 + $0x2628] sm:$0xff]
  %v5462 = vld [vmem:[%s3 + $0x2630] sm:$0xff]
  %v5463 = vld [vmem:[%s3 + $0x2640] sm:$0xff]
  %v5464 = vld [vmem:[%s3 + $0x2648] sm:$0xff]
  %v5465 = vld [vmem:[%s3 + $0x2658] sm:$0xff]
  %v5466 = vld [vmem:[%s3 + $0x2660] sm:$0xff]
  %v5467 = vld [vmem:[%s3 + $0x2670] sm:$0xff]
  %v5468 = vld [vmem:[%s3 + $0x2678] sm:$0xff]
  %v5469 = vld [vmem:[%s3 + $0x2688] sm:$0xff]
  %v5470 = vld [vmem:[%s3 + $0x2690] sm:$0xff]
  %v5471 = vld [vmem:[%s3 + $0x26a0] sm:$0xff]
  %v5472 = vld [vmem:[%s3 + $0x26a8] sm:$0xff]
  %v5473 = vld [vmem:[%s3 + $0x26b8] sm:$0xff]
  %v5474 = vld [vmem:[%s3 + $0x26c0] sm:$0xff]
  %v5475 = vld [vmem:[%s3 + $0x26d0] sm:$0xff]
  %v5476 = vld [vmem:[%s3 + $0x26d8] sm:$0xff]
  %v5477 = vld [vmem:[%s3 + $0x26e8] sm:$0xff]
  %v5478 = vld [vmem:[%s3 + $0x26f0] sm:$0xff]
  %v5479 = vld [vmem:[%s3 + $0x2700] sm:$0xff]
  %v5480 = vld [vmem:[%s3 + $0x2708] sm:$0xff]
  %v5481 = vld [vmem:[%s3 + $0x2718] sm:$0xff]
  %v5482 = vld [vmem:[%s3 + $0x2720] sm:$0xff]
  %v5483 = vld [vmem:[%s3 + $0x2730] sm:$0xff]
  %v5484 = vld [vmem:[%s3 + $0x2738] sm:$0xff]
  %v5485 = vld [vmem:[%s3 + $0x2748] sm:$0xff]
  %v5486 = vld [vmem:[%s3 + $0x2750] sm:$0xff]
  %v5487 = vld [vmem:[%s3 + $0x2760] sm:$0xff]
  %v5488 = vld [vmem:[%s3 + $0x2768] sm:$0xff]
  %v5489 = vld [vmem:[%s3 + $0x2778] sm:$0xff]
  %v5490 = vld [vmem:[%s3 + $0x2780] sm:$0xff]
  %v5491 = vld [vmem:[%s3 + $0x2790] sm:$0xff]
  %v5492 = vld [vmem:[%s3 + $0x2798] sm:$0xff]
  %v5493 = vld [vmem:[%s3 + $0x27a8] sm:$0xff]
  %v5494 = vld [vmem:[%s3 + $0x27b0] sm:$0xff]
  %v5495 = vld [vmem:[%s3 + $0x27c0] sm:$0xff]
  %v5496 = vld [vmem:[%s3 + $0x27c8] sm:$0xff]
  %v5497 = vld [vmem:[%s3 + $0x27d8] sm:$0xff]
  %v5498 = vld [vmem:[%s3 + $0x27e0] sm:$0xff]
  %v5499 = vld [vmem:[%s3 + $0x27f0] sm:$0xff]
  %v5500 = vld [vmem:[%s3 + $0x27f8] sm:$0xff]
  %v5501 = vld [vmem:[%s3 + $0x2808] sm:$0xff]
  %v5502 = vld [vmem:[%s3 + $0x2810] sm:$0xff]
  %v5503 = vld [vmem:[%s3 + $0x2820] sm:$0xff]
  %v5504 = vld [vmem:[%s3 + $0x2828] sm:$0xff]
  %v5505 = vld [vmem:[%s3 + $0x2838] sm:$0xff]
  %v5506 = vld [vmem:[%s3 + $0x2840] sm:$0xff]
  %v5507 = vld [vmem:[%s3 + $0x2850] sm:$0xff]
  %v5508 = vld [vmem:[%s3 + $0x2858] sm:$0xff]
  %v5509 = vld [vmem:[%s3 + $0x2868] sm:$0xff]
  %v5510 = vld [vmem:[%s3 + $0x2870] sm:$0xff]
  %v5511 = vld [vmem:[%s3 + $0x2880] sm:$0xff]
  %v5512 = vld [vmem:[%s3 + $0x2888] sm:$0xff]
  %v5513 = vld [vmem:[%s3 + $0x2898] sm:$0xff]
  %v5514 = vld [vmem:[%s3 + $0x28a0] sm:$0xff]
  %v5515 = vld [vmem:[%s2 + $0x98] sm:$0xf]
  %v5517 = vsel %vm4177, %v5515, 0
  %5519 = vmatprep.subr.mxu0 0.0
  %5520 = vmatpush1.msra.mxu0 0.0
  %5521 = vmatprep.subr.mxu0 0.0
  %5522 = vmatpush1.msra.mxu0 0.0
  %5523 = vmatprep.subr.mxu0 0.0
  %5524 = vmatpush1.msra.mxu0 0.0
  %5525 = vmatprep.subr.mxu0 0.0
  %5526 = vmatpush1.msra.mxu0 0.0
  %5527 = vmatprep.subr.mxu0 0.0
  %5528 = vmatpush1.msra.mxu0 0.0
  %5529 = vmatprep.subr.mxu0 0.0
  %5530 = vmatpush1.msra.mxu0 0.0
  %5531 = vmatprep.subr.mxu0 0.0
  %5532 = vmatpush1.msra.mxu0 0.0
  %5533 = vmatprep.subr.mxu0 0.0
  %5534 = vmatpush1.msra.mxu0 0.0
  %5535 = vmatprep.subr.mxu0 0.0
  %5536 = vmatpush1.msra.mxu0 0.0
  %5537 = vmatprep.subr.mxu0 0.0
  %5538 = vmatpush1.msra.mxu0 0.0
  %5539 = vmatprep.subr.mxu0 0.0
  %5540 = vmatpush1.msra.mxu0 0.0
  %5541 = vmatprep.subr.mxu0 0.0
  %5542 = vmatpush1.msra.mxu0 0.0
  %5543 = vmatprep.subr.mxu0 0.0
  %5544 = vmatpush1.msra.mxu0 0.0
  %5545 = vmatprep.subr.mxu0 0.0
  %5546 = vmatpush1.msra.mxu0 0.0
  %5547 = vmatprep.subr.mxu0 0.0
  %5548 = vmatpush1.msra.mxu0 0.0
  %5549 = vmatprep.subr.mxu0 %v5386
  %5550 = vmatpush1.msra.mxu0 %v5383
  %5551 = vmatprep.subr.mxu0 0.0
  %5552 = vmatpush2.msra.mxu0 0.0
  %5553 = vmatprep.subr.mxu0 0.0
  %5554 = vmatpush2.msra.mxu0 0.0
  %5555 = vmatprep.subr.mxu0 0.0
  %5556 = vmatpush2.msra.mxu0 0.0
  %5557 = vmatprep.subr.mxu0 0.0
  %5558 = vmatpush2.msra.mxu0 0.0
  %5559 = vmatprep.subr.mxu0 0.0
  %5560 = vmatpush2.msra.mxu0 0.0
  %5561 = vmatprep.subr.mxu0 0.0
  %5562 = vmatpush2.msra.mxu0 0.0
  %5563 = vmatprep.subr.mxu0 0.0
  %5564 = vmatpush2.msra.mxu0 0.0
  %5565 = vmatprep.subr.mxu0 0.0
  %5566 = vmatpush2.msra.mxu0 0.0
  %5567 = vmatprep.subr.mxu0 0.0
  %5568 = vmatpush2.msra.mxu0 0.0
  %5569 = vmatprep.subr.mxu0 0.0
  %5570 = vmatpush2.msra.mxu0 0.0
  %5571 = vmatprep.subr.mxu0 0.0
  %5572 = vmatpush2.msra.mxu0 0.0
  %5573 = vmatprep.subr.mxu0 0.0
  %5574 = vmatpush2.msra.mxu0 0.0
  %5575 = vmatprep.subr.mxu0 0.0
  %5576 = vmatpush2.msra.mxu0 0.0
  %5577 = vmatprep.subr.mxu0 0.0
  %5578 = vmatpush2.msra.mxu0 0.0
  %5579 = vmatprep.subr.mxu0 0.0
  %5580 = vmatpush2.msra.mxu0 0.0
  %5581 = vmatprep.subr.mxu0 0.0
  %5582 = vmatpush2.msra.mxu0 0.0
  %5583 = vmatprep.mubr.f32.mxu0 0.0
  %5584 = vmatmul.mubr.f32.gmra.mxu0 %v5517
  %v5585 = vpop.f32.mrf.mxu0
  %v5586 = vadd.f32 0.0, %v5585
  %v5587 = vpop.f32.mrf.mxu0
  %v5588 = vadd.f32 0.0, %v5587
  %5589 = vdwg.mxu0
  %v5590 = vld [vmem:[%s3 + $0x28b0] sm:$0xff]
  %v5591 = vld [vmem:[%s3 + $0x28b8] sm:$0xff]
  %v5592 = vld [vmem:[%s3 + $0x28c8] sm:$0xff]
  %v5593 = vld [vmem:[%s3 + $0x28d0] sm:$0xff]
  %v5594 = vld [vmem:[%s3 + $0x28e0] sm:$0xff]
  %v5595 = vld [vmem:[%s3 + $0x28e8] sm:$0xff]
  %v5596 = vld [vmem:[%s3 + $0x28f8] sm:$0xff]
  %v5597 = vld [vmem:[%s3 + $0x2900] sm:$0xff]
  %v5598 = vld [vmem:[%s3 + $0x2910] sm:$0xff]
  %v5599 = vld [vmem:[%s3 + $0x2918] sm:$0xff]
  %v5600 = vld [vmem:[%s3 + $0x2928] sm:$0xff]
  %v5601 = vld [vmem:[%s3 + $0x2930] sm:$0xff]
  %v5602 = vld [vmem:[%s3 + $0x2940] sm:$0xff]
  %v5603 = vld [vmem:[%s3 + $0x2948] sm:$0xff]
  %v5604 = vld [vmem:[%s3 + $0x2958] sm:$0xff]
  %v5605 = vld [vmem:[%s3 + $0x2960] sm:$0xff]
  %v5606 = vld [vmem:[%s3 + $0x2970] sm:$0xff]
  %v5607 = vld [vmem:[%s3 + $0x2978] sm:$0xff]
  %v5608 = vld [vmem:[%s3 + $0x2988] sm:$0xff]
  %v5609 = vld [vmem:[%s3 + $0x2990] sm:$0xff]
  %v5610 = vld [vmem:[%s3 + $0x29a0] sm:$0xff]
  %v5611 = vld [vmem:[%s3 + $0x29a8] sm:$0xff]
  %v5612 = vld [vmem:[%s3 + $0x29b8] sm:$0xff]
  %v5613 = vld [vmem:[%s3 + $0x29c0] sm:$0xff]
  %v5614 = vld [vmem:[%s3 + $0x29d0] sm:$0xff]
  %v5615 = vld [vmem:[%s3 + $0x29d8] sm:$0xff]
  %v5616 = vld [vmem:[%s3 + $0x29e8] sm:$0xff]
  %v5617 = vld [vmem:[%s3 + $0x29f0] sm:$0xff]
  %v5618 = vld [vmem:[%s3 + $0x2a00] sm:$0xff]
  %v5619 = vld [vmem:[%s3 + $0x2a08] sm:$0xff]
  %v5620 = vld [vmem:[%s3 + $0x2a18] sm:$0xff]
  %v5621 = vld [vmem:[%s3 + $0x2a20] sm:$0xff]
  %v5622 = vld [vmem:[%s3 + $0x2a30] sm:$0xff]
  %v5623 = vld [vmem:[%s3 + $0x2a38] sm:$0xff]
  %v5624 = vld [vmem:[%s3 + $0x2a48] sm:$0xff]
  %v5625 = vld [vmem:[%s3 + $0x2a50] sm:$0xff]
  %v5626 = vld [vmem:[%s3 + $0x2a60] sm:$0xff]
  %v5627 = vld [vmem:[%s3 + $0x2a68] sm:$0xff]
  %v5628 = vld [vmem:[%s3 + $0x2a78] sm:$0xff]
  %v5629 = vld [vmem:[%s3 + $0x2a80] sm:$0xff]
  %v5630 = vld [vmem:[%s3 + $0x2a90] sm:$0xff]
  %v5631 = vld [vmem:[%s3 + $0x2a98] sm:$0xff]
  %v5632 = vld [vmem:[%s3 + $0x2aa8] sm:$0xff]
  %v5633 = vld [vmem:[%s3 + $0x2ab0] sm:$0xff]
  %v5634 = vld [vmem:[%s3 + $0x2ac0] sm:$0xff]
  %v5635 = vld [vmem:[%s3 + $0x2ac8] sm:$0xff]
  %v5636 = vld [vmem:[%s3 + $0x2ad8] sm:$0xff]
  %v5637 = vld [vmem:[%s3 + $0x2ae0] sm:$0xff]
  %v5638 = vld [vmem:[%s3 + $0x2af0] sm:$0xff]
  %v5639 = vld [vmem:[%s3 + $0x2af8] sm:$0xff]
  %v5640 = vld [vmem:[%s3 + $0x2b08] sm:$0xff]
  %v5641 = vld [vmem:[%s3 + $0x2b10] sm:$0xff]
  %v5642 = vld [vmem:[%s3 + $0x2b20] sm:$0xff]
  %v5643 = vld [vmem:[%s3 + $0x2b28] sm:$0xff]
  %v5644 = vld [vmem:[%s3 + $0x2b38] sm:$0xff]
  %v5645 = vld [vmem:[%s3 + $0x2b40] sm:$0xff]
  %v5647 = vsel %vm5212, %v5588, 0
  %5649 = vmatprep.subr.mxu0 %v5621
  %5650 = vmatpush1.msra.mxu0 %v5620
  %5651 = vmatprep.subr.mxu0 %v5619
  %5652 = vmatpush1.msra.mxu0 %v5618
  %5653 = vmatprep.subr.mxu0 %v5617
  %5654 = vmatpush1.msra.mxu0 %v5616
  %5655 = vmatprep.subr.mxu0 %v5615
  %5656 = vmatpush1.msra.mxu0 %v5614
  %5657 = vmatprep.subr.mxu0 %v5613
  %5658 = vmatpush1.msra.mxu0 %v5612
  %5659 = vmatprep.subr.mxu0 %v5611
  %5660 = vmatpush1.msra.mxu0 %v5610
  %5661 = vmatprep.subr.mxu0 %v5609
  %5662 = vmatpush1.msra.mxu0 %v5608
  %5663 = vmatprep.subr.mxu0 %v5607
  %5664 = vmatpush1.msra.mxu0 %v5606
  %5665 = vmatprep.subr.mxu0 %v5605
  %5666 = vmatpush1.msra.mxu0 %v5604
  %5667 = vmatprep.subr.mxu0 %v5603
  %5668 = vmatpush1.msra.mxu0 %v5602
  %5669 = vmatprep.subr.mxu0 %v5601
  %5670 = vmatpush1.msra.mxu0 %v5600
  %5671 = vmatprep.subr.mxu0 %v5599
  %5672 = vmatpush1.msra.mxu0 %v5598
  %5673 = vmatprep.subr.mxu0 %v5597
  %5674 = vmatpush1.msra.mxu0 %v5596
  %5675 = vmatprep.subr.mxu0 %v5595
  %5676 = vmatpush1.msra.mxu0 %v5594
  %5677 = vmatprep.subr.mxu0 %v5593
  %5678 = vmatpush1.msra.mxu0 %v5592
  %5679 = vmatprep.subr.mxu0 %v5591
  %5680 = vmatpush1.msra.mxu0 %v5590
  %5681 = vmatprep.subr.mxu0 0.0
  %5682 = vmatpush2.msra.mxu0 0.0
  %5683 = vmatprep.subr.mxu0 0.0
  %5684 = vmatpush2.msra.mxu0 0.0
  %5685 = vmatprep.subr.mxu0 0.0
  %5686 = vmatpush2.msra.mxu0 0.0
  %5687 = vmatprep.subr.mxu0 0.0
  %5688 = vmatpush2.msra.mxu0 0.0
  %5689 = vmatprep.subr.mxu0 %v5645
  %5690 = vmatpush2.msra.mxu0 %v5644
  %5691 = vmatprep.subr.mxu0 %v5643
  %5692 = vmatpush2.msra.mxu0 %v5642
  %5693 = vmatprep.subr.mxu0 %v5641
  %5694 = vmatpush2.msra.mxu0 %v5640
  %5695 = vmatprep.subr.mxu0 %v5639
  %5696 = vmatpush2.msra.mxu0 %v5638
  %5697 = vmatprep.subr.mxu0 %v5637
  %5698 = vmatpush2.msra.mxu0 %v5636
  %5699 = vmatprep.subr.mxu0 %v5635
  %5700 = vmatpush2.msra.mxu0 %v5634
  %5701 = vmatprep.subr.mxu0 %v5633
  %5702 = vmatpush2.msra.mxu0 %v5632
  %5703 = vmatprep.subr.mxu0 %v5631
  %5704 = vmatpush2.msra.mxu0 %v5630
  %5705 = vmatprep.subr.mxu0 %v5629
  %5706 = vmatpush2.msra.mxu0 %v5628
  %5707 = vmatprep.subr.mxu0 %v5627
  %5708 = vmatpush2.msra.mxu0 %v5626
  %5709 = vmatprep.subr.mxu0 %v5625
  %5710 = vmatpush2.msra.mxu0 %v5624
  %5711 = vmatprep.subr.mxu0 %v5623
  %5712 = vmatpush2.msra.mxu0 %v5622
  %5713 = vmatprep.mubr.f32.mxu0 %v5647
  %5714 = vmatmul.mubr.f32.gmra.mxu0 %v5586
  %v5715 = vpop.f32.mrf.mxu0
  %v5716 = vadd.f32 0.0, %v5715
  %v5717 = vpop.f32.mrf.mxu0
  %v5718 = vadd.f32 0.0, %v5717
  %5719 = vdwg.mxu0
  %v5721 = vsel %vm5212, %v5457, 0
  %5723 = vmatprep.subr.mxu0 %v5490
  %5724 = vmatpush1.msra.mxu0 %v5489
  %5725 = vmatprep.subr.mxu0 %v5488
  %5726 = vmatpush1.msra.mxu0 %v5487
  %5727 = vmatprep.subr.mxu0 %v5486
  %5728 = vmatpush1.msra.mxu0 %v5485
  %5729 = vmatprep.subr.mxu0 %v5484
  %5730 = vmatpush1.msra.mxu0 %v5483
  %5731 = vmatprep.subr.mxu0 %v5482
  %5732 = vmatpush1.msra.mxu0 %v5481
  %5733 = vmatprep.subr.mxu0 %v5480
  %5734 = vmatpush1.msra.mxu0 %v5479
  %5735 = vmatprep.subr.mxu0 %v5478
  %5736 = vmatpush1.msra.mxu0 %v5477
  %5737 = vmatprep.subr.mxu0 %v5476
  %5738 = vmatpush1.msra.mxu0 %v5475
  %5739 = vmatprep.subr.mxu0 %v5474
  %5740 = vmatpush1.msra.mxu0 %v5473
  %5741 = vmatprep.subr.mxu0 %v5472
  %5742 = vmatpush1.msra.mxu0 %v5471
  %5743 = vmatprep.subr.mxu0 %v5470
  %5744 = vmatpush1.msra.mxu0 %v5469
  %5745 = vmatprep.subr.mxu0 %v5468
  %5746 = vmatpush1.msra.mxu0 %v5467
  %5747 = vmatprep.subr.mxu0 %v5466
  %5748 = vmatpush1.msra.mxu0 %v5465
  %5749 = vmatprep.subr.mxu0 %v5464
  %5750 = vmatpush1.msra.mxu0 %v5463
  %5751 = vmatprep.subr.mxu0 %v5462
  %5752 = vmatpush1.msra.mxu0 %v5461
  %5753 = vmatprep.subr.mxu0 %v5460
  %5754 = vmatpush1.msra.mxu0 %v5459
  %5755 = vmatprep.subr.mxu0 0.0
  %5756 = vmatpush2.msra.mxu0 0.0
  %5757 = vmatprep.subr.mxu0 0.0
  %5758 = vmatpush2.msra.mxu0 0.0
  %5759 = vmatprep.subr.mxu0 0.0
  %5760 = vmatpush2.msra.mxu0 0.0
  %5761 = vmatprep.subr.mxu0 0.0
  %5762 = vmatpush2.msra.mxu0 0.0
  %5763 = vmatprep.subr.mxu0 %v5514
  %5764 = vmatpush2.msra.mxu0 %v5513
  %5765 = vmatprep.subr.mxu0 %v5512
  %5766 = vmatpush2.msra.mxu0 %v5511
  %5767 = vmatprep.subr.mxu0 %v5510
  %5768 = vmatpush2.msra.mxu0 %v5509
  %5769 = vmatprep.subr.mxu0 %v5508
  %5770 = vmatpush2.msra.mxu0 %v5507
  %5771 = vmatprep.subr.mxu0 %v5506
  %5772 = vmatpush2.msra.mxu0 %v5505
  %5773 = vmatprep.subr.mxu0 %v5504
  %5774 = vmatpush2.msra.mxu0 %v5503
  %5775 = vmatprep.subr.mxu0 %v5502
  %5776 = vmatpush2.msra.mxu0 %v5501
  %5777 = vmatprep.subr.mxu0 %v5500
  %5778 = vmatpush2.msra.mxu0 %v5499
  %5779 = vmatprep.subr.mxu0 %v5498
  %5780 = vmatpush2.msra.mxu0 %v5497
  %5781 = vmatprep.subr.mxu0 %v5496
  %5782 = vmatpush2.msra.mxu0 %v5495
  %5783 = vmatprep.subr.mxu0 %v5494
  %5784 = vmatpush2.msra.mxu0 %v5493
  %5785 = vmatprep.subr.mxu0 %v5492
  %5786 = vmatpush2.msra.mxu0 %v5491
  %5787 = vmatprep.mubr.f32.mxu0 %v5721
  %5788 = vmatmul.mubr.f32.gmra.mxu0 %v5455
  %v5789 = vpop.f32.mrf.mxu0
  %v5790 = vadd.f32 %v5716, %v5789
  %v5791 = vpop.f32.mrf.mxu0
  %v5792 = vadd.f32 %v5718, %v5791
  %5793 = vdwg.mxu0
  %s5794 = scalar_lea.vmem %s4, 6
  %v5795 = vld [vmem:[%s5794] ss:$8 sm:$0x3]
  %v5797 = vlaneseq
  %v5798 = vshrl.u32 %v5797, 7
  %v5799 = vsub.s32 0, %v5798
  %v5800 = vrot.slane %v5795, %v5799
  %v5801 = vlaneseq
  %v5802 = vshrl.u32 %v5801, 7
  %v5803 = vsub.s32 1, %v5802
  %v5804 = vrot.slane %v5795, %v5803
  %v5807 = vadd.f32 %v5790, %v5800
  %v5808 = vadd.f32 %v5792, %v5804
  %v5809 = vmax.f32 %v5807, 0.0
  %v5810 = vmax.f32 %v5808, 0.0
  %v5811 = vld [vmem:[%s2 + $0xa0] sm:$0xf]
  %v5813 = vsel %vm4177, %v5811, 0
  %v5816 = vsel %vm4181, %v5809, 0
  %v5819 = vsel %vm4181, %v5810, 0
  %5821 = vmatprep.subr.mxu0 0.0
  %5822 = vmatpush1.msra.mxu0 0.0
  %5823 = vmatprep.subr.mxu0 0.0
  %5824 = vmatpush1.msra.mxu0 0.0
  %5825 = vmatprep.subr.mxu0 0.0
  %5826 = vmatpush1.msra.mxu0 0.0
  %5827 = vmatprep.subr.mxu0 0.0
  %5828 = vmatpush1.msra.mxu0 0.0
  %5829 = vmatprep.subr.mxu0 0.0
  %5830 = vmatpush1.msra.mxu0 0.0
  %5831 = vmatprep.subr.mxu0 0.0
  %5832 = vmatpush1.msra.mxu0 0.0
  %5833 = vmatprep.subr.mxu0 0.0
  %5834 = vmatpush1.msra.mxu0 0.0
  %5835 = vmatprep.subr.mxu0 0.0
  %5836 = vmatpush1.msra.mxu0 0.0
  %5837 = vmatprep.subr.mxu0 0.0
  %5838 = vmatpush1.msra.mxu0 0.0
  %5839 = vmatprep.subr.mxu0 0.0
  %5840 = vmatpush1.msra.mxu0 0.0
  %5841 = vmatprep.subr.mxu0 0.0
  %5842 = vmatpush1.msra.mxu0 0.0
  %5843 = vmatprep.subr.mxu0 0.0
  %5844 = vmatpush1.msra.mxu0 0.0
  %5845 = vmatprep.subr.mxu0 0.0
  %5846 = vmatpush1.msra.mxu0 0.0
  %5847 = vmatprep.subr.mxu0 0.0
  %5848 = vmatpush1.msra.mxu0 0.0
  %5849 = vmatprep.subr.mxu0 0.0
  %5850 = vmatpush1.msra.mxu0 0.0
  %5851 = vmatprep.subr.mxu0 %v5819
  %5852 = vmatpush1.msra.mxu0 %v5816
  %5853 = vmatprep.subr.mxu0 0.0
  %5854 = vmatpush2.msra.mxu0 0.0
  %5855 = vmatprep.subr.mxu0 0.0
  %5856 = vmatpush2.msra.mxu0 0.0
  %5857 = vmatprep.subr.mxu0 0.0
  %5858 = vmatpush2.msra.mxu0 0.0
  %5859 = vmatprep.subr.mxu0 0.0
  %5860 = vmatpush2.msra.mxu0 0.0
  %5861 = vmatprep.subr.mxu0 0.0
  %5862 = vmatpush2.msra.mxu0 0.0
  %5863 = vmatprep.subr.mxu0 0.0
  %5864 = vmatpush2.msra.mxu0 0.0
  %5865 = vmatprep.subr.mxu0 0.0
  %5866 = vmatpush2.msra.mxu0 0.0
  %5867 = vmatprep.subr.mxu0 0.0
  %5868 = vmatpush2.msra.mxu0 0.0
  %5869 = vmatprep.subr.mxu0 0.0
  %5870 = vmatpush2.msra.mxu0 0.0
  %5871 = vmatprep.subr.mxu0 0.0
  %5872 = vmatpush2.msra.mxu0 0.0
  %5873 = vmatprep.subr.mxu0 0.0
  %5874 = vmatpush2.msra.mxu0 0.0
  %5875 = vmatprep.subr.mxu0 0.0
  %5876 = vmatpush2.msra.mxu0 0.0
  %5877 = vmatprep.subr.mxu0 0.0
  %5878 = vmatpush2.msra.mxu0 0.0
  %5879 = vmatprep.subr.mxu0 0.0
  %5880 = vmatpush2.msra.mxu0 0.0
  %5881 = vmatprep.subr.mxu0 0.0
  %5882 = vmatpush2.msra.mxu0 0.0
  %5883 = vmatprep.subr.mxu0 0.0
  %5884 = vmatpush2.msra.mxu0 0.0
  %5885 = vmatprep.mubr.f32.mxu0 0.0
  %5886 = vmatmul.mubr.f32.gmra.mxu0 %v5813
  %v5887 = vpop.f32.mrf.mxu0
  %v5888 = vadd.f32 0.0, %v5887
  %v5889 = vpop.f32.mrf.mxu0
  %v5890 = vadd.f32 0.0, %v5889
  %5891 = vdwg.mxu0
  %v5892 = vld [vmem:[%s3 + $0x2b50] sm:$0xff]
  %v5893 = vld [vmem:[%s3 + $0x2b58] sm:$0xff]
  %v5894 = vld [vmem:[%s3 + $0x2b68] sm:$0xff]
  %v5895 = vld [vmem:[%s3 + $0x2b70] sm:$0xff]
  %v5896 = vld [vmem:[%s3 + $0x2b80] sm:$0xff]
  %v5897 = vld [vmem:[%s3 + $0x2b88] sm:$0xff]
  %v5898 = vld [vmem:[%s3 + $0x2b98] sm:$0xff]
  %v5899 = vld [vmem:[%s3 + $0x2ba0] sm:$0xff]
  %v5900 = vld [vmem:[%s3 + $0x2bb0] sm:$0xff]
  %v5901 = vld [vmem:[%s3 + $0x2bb8] sm:$0xff]
  %v5902 = vld [vmem:[%s3 + $0x2bc8] sm:$0xff]
  %v5903 = vld [vmem:[%s3 + $0x2bd0] sm:$0xff]
  %v5904 = vld [vmem:[%s3 + $0x2be0] sm:$0xff]
  %v5905 = vld [vmem:[%s3 + $0x2be8] sm:$0xff]
  %v5906 = vld [vmem:[%s3 + $0x2bf8] sm:$0xff]
  %v5907 = vld [vmem:[%s3 + $0x2c00] sm:$0xff]
  %v5908 = vld [vmem:[%s3 + $0x2c10] sm:$0xff]
  %v5909 = vld [vmem:[%s3 + $0x2c18] sm:$0xff]
  %v5910 = vld [vmem:[%s3 + $0x2c28] sm:$0xff]
  %v5911 = vld [vmem:[%s3 + $0x2c30] sm:$0xff]
  %v5912 = vld [vmem:[%s3 + $0x2c40] sm:$0xff]
  %v5913 = vld [vmem:[%s3 + $0x2c48] sm:$0xff]
  %v5914 = vld [vmem:[%s3 + $0x2c58] sm:$0xff]
  %v5915 = vld [vmem:[%s3 + $0x2c60] sm:$0xff]
  %v5916 = vld [vmem:[%s3 + $0x2c70] sm:$0xff]
  %v5917 = vld [vmem:[%s3 + $0x2c78] sm:$0xff]
  %v5918 = vld [vmem:[%s3 + $0x2c88] sm:$0xff]
  %v5919 = vld [vmem:[%s3 + $0x2c90] sm:$0xff]
  %v5920 = vld [vmem:[%s3 + $0x2ca0] sm:$0xff]
  %v5921 = vld [vmem:[%s3 + $0x2ca8] sm:$0xff]
  %v5922 = vld [vmem:[%s3 + $0x2cb8] sm:$0xff]
  %v5923 = vld [vmem:[%s3 + $0x2cc0] sm:$0xff]
  %v5924 = vld [vmem:[%s3 + $0x2cd0] sm:$0xff]
  %v5925 = vld [vmem:[%s3 + $0x2cd8] sm:$0xff]
  %v5926 = vld [vmem:[%s3 + $0x2ce8] sm:$0xff]
  %v5927 = vld [vmem:[%s3 + $0x2cf0] sm:$0xff]
  %v5928 = vld [vmem:[%s3 + $0x2d00] sm:$0xff]
  %v5929 = vld [vmem:[%s3 + $0x2d08] sm:$0xff]
  %v5930 = vld [vmem:[%s3 + $0x2d18] sm:$0xff]
  %v5931 = vld [vmem:[%s3 + $0x2d20] sm:$0xff]
  %v5932 = vld [vmem:[%s3 + $0x2d30] sm:$0xff]
  %v5933 = vld [vmem:[%s3 + $0x2d38] sm:$0xff]
  %v5934 = vld [vmem:[%s3 + $0x2d48] sm:$0xff]
  %v5935 = vld [vmem:[%s3 + $0x2d50] sm:$0xff]
  %v5936 = vld [vmem:[%s3 + $0x2d60] sm:$0xff]
  %v5937 = vld [vmem:[%s3 + $0x2d68] sm:$0xff]
  %v5938 = vld [vmem:[%s3 + $0x2d78] sm:$0xff]
  %v5939 = vld [vmem:[%s3 + $0x2d80] sm:$0xff]
  %v5940 = vld [vmem:[%s3 + $0x2d90] sm:$0xff]
  %v5941 = vld [vmem:[%s3 + $0x2d98] sm:$0xff]
  %v5942 = vld [vmem:[%s3 + $0x2da8] sm:$0xff]
  %v5943 = vld [vmem:[%s3 + $0x2db0] sm:$0xff]
  %v5944 = vld [vmem:[%s3 + $0x2dc0] sm:$0xff]
  %v5945 = vld [vmem:[%s3 + $0x2dc8] sm:$0xff]
  %v5946 = vld [vmem:[%s3 + $0x2dd8] sm:$0xff]
  %v5947 = vld [vmem:[%s3 + $0x2de0] sm:$0xff]
  %v5948 = vld [vmem:[%s2 + $0xa8] sm:$0xf]
  %v5950 = vsel %vm4177, %v5948, 0
  %5952 = vmatprep.subr.mxu0 0.0
  %5953 = vmatpush1.msra.mxu0 0.0
  %5954 = vmatprep.subr.mxu0 0.0
  %5955 = vmatpush1.msra.mxu0 0.0
  %5956 = vmatprep.subr.mxu0 0.0
  %5957 = vmatpush1.msra.mxu0 0.0
  %5958 = vmatprep.subr.mxu0 0.0
  %5959 = vmatpush1.msra.mxu0 0.0
  %5960 = vmatprep.subr.mxu0 0.0
  %5961 = vmatpush1.msra.mxu0 0.0
  %5962 = vmatprep.subr.mxu0 0.0
  %5963 = vmatpush1.msra.mxu0 0.0
  %5964 = vmatprep.subr.mxu0 0.0
  %5965 = vmatpush1.msra.mxu0 0.0
  %5966 = vmatprep.subr.mxu0 0.0
  %5967 = vmatpush1.msra.mxu0 0.0
  %5968 = vmatprep.subr.mxu0 0.0
  %5969 = vmatpush1.msra.mxu0 0.0
  %5970 = vmatprep.subr.mxu0 0.0
  %5971 = vmatpush1.msra.mxu0 0.0
  %5972 = vmatprep.subr.mxu0 0.0
  %5973 = vmatpush1.msra.mxu0 0.0
  %5974 = vmatprep.subr.mxu0 0.0
  %5975 = vmatpush1.msra.mxu0 0.0
  %5976 = vmatprep.subr.mxu0 0.0
  %5977 = vmatpush1.msra.mxu0 0.0
  %5978 = vmatprep.subr.mxu0 0.0
  %5979 = vmatpush1.msra.mxu0 0.0
  %5980 = vmatprep.subr.mxu0 0.0
  %5981 = vmatpush1.msra.mxu0 0.0
  %5982 = vmatprep.subr.mxu0 %v5819
  %5983 = vmatpush1.msra.mxu0 %v5816
  %5984 = vmatprep.subr.mxu0 0.0
  %5985 = vmatpush2.msra.mxu0 0.0
  %5986 = vmatprep.subr.mxu0 0.0
  %5987 = vmatpush2.msra.mxu0 0.0
  %5988 = vmatprep.subr.mxu0 0.0
  %5989 = vmatpush2.msra.mxu0 0.0
  %5990 = vmatprep.subr.mxu0 0.0
  %5991 = vmatpush2.msra.mxu0 0.0
  %5992 = vmatprep.subr.mxu0 0.0
  %5993 = vmatpush2.msra.mxu0 0.0
  %5994 = vmatprep.subr.mxu0 0.0
  %5995 = vmatpush2.msra.mxu0 0.0
  %5996 = vmatprep.subr.mxu0 0.0
  %5997 = vmatpush2.msra.mxu0 0.0
  %5998 = vmatprep.subr.mxu0 0.0
  %5999 = vmatpush2.msra.mxu0 0.0
  %6000 = vmatprep.subr.mxu0 0.0
  %6001 = vmatpush2.msra.mxu0 0.0
  %6002 = vmatprep.subr.mxu0 0.0
  %6003 = vmatpush2.msra.mxu0 0.0
  %6004 = vmatprep.subr.mxu0 0.0
  %6005 = vmatpush2.msra.mxu0 0.0
  %6006 = vmatprep.subr.mxu0 0.0
  %6007 = vmatpush2.msra.mxu0 0.0
  %6008 = vmatprep.subr.mxu0 0.0
  %6009 = vmatpush2.msra.mxu0 0.0
  %6010 = vmatprep.subr.mxu0 0.0
  %6011 = vmatpush2.msra.mxu0 0.0
  %6012 = vmatprep.subr.mxu0 0.0
  %6013 = vmatpush2.msra.mxu0 0.0
  %6014 = vmatprep.subr.mxu0 0.0
  %6015 = vmatpush2.msra.mxu0 0.0
  %6016 = vmatprep.mubr.f32.mxu0 0.0
  %6017 = vmatmul.mubr.f32.gmra.mxu0 %v5950
  %v6018 = vpop.f32.mrf.mxu0
  %v6019 = vadd.f32 0.0, %v6018
  %v6020 = vpop.f32.mrf.mxu0
  %v6021 = vadd.f32 0.0, %v6020
  %6022 = vdwg.mxu0
  %v6023 = vld [vmem:[%s3 + $0x2df0] sm:$0xff]
  %v6024 = vld [vmem:[%s3 + $0x2df8] sm:$0xff]
  %v6025 = vld [vmem:[%s3 + $0x2e08] sm:$0xff]
  %v6026 = vld [vmem:[%s3 + $0x2e10] sm:$0xff]
  %v6027 = vld [vmem:[%s3 + $0x2e20] sm:$0xff]
  %v6028 = vld [vmem:[%s3 + $0x2e28] sm:$0xff]
  %v6029 = vld [vmem:[%s3 + $0x2e38] sm:$0xff]
  %v6030 = vld [vmem:[%s3 + $0x2e40] sm:$0xff]
  %v6031 = vld [vmem:[%s3 + $0x2e50] sm:$0xff]
  %v6032 = vld [vmem:[%s3 + $0x2e58] sm:$0xff]
  %v6033 = vld [vmem:[%s3 + $0x2e68] sm:$0xff]
  %v6034 = vld [vmem:[%s3 + $0x2e70] sm:$0xff]
  %v6035 = vld [vmem:[%s3 + $0x2e80] sm:$0xff]
  %v6036 = vld [vmem:[%s3 + $0x2e88] sm:$0xff]
  %v6037 = vld [vmem:[%s3 + $0x2e98] sm:$0xff]
  %v6038 = vld [vmem:[%s3 + $0x2ea0] sm:$0xff]
  %v6039 = vld [vmem:[%s3 + $0x2eb0] sm:$0xff]
  %v6040 = vld [vmem:[%s3 + $0x2eb8] sm:$0xff]
  %v6041 = vld [vmem:[%s3 + $0x2ec8] sm:$0xff]
  %v6042 = vld [vmem:[%s3 + $0x2ed0] sm:$0xff]
  %v6043 = vld [vmem:[%s3 + $0x2ee0] sm:$0xff]
  %v6044 = vld [vmem:[%s3 + $0x2ee8] sm:$0xff]
  %v6045 = vld [vmem:[%s3 + $0x2ef8] sm:$0xff]
  %v6046 = vld [vmem:[%s3 + $0x2f00] sm:$0xff]
  %v6047 = vld [vmem:[%s3 + $0x2f10] sm:$0xff]
  %v6048 = vld [vmem:[%s3 + $0x2f18] sm:$0xff]
  %v6049 = vld [vmem:[%s3 + $0x2f28] sm:$0xff]
  %v6050 = vld [vmem:[%s3 + $0x2f30] sm:$0xff]
  %v6051 = vld [vmem:[%s3 + $0x2f40] sm:$0xff]
  %v6052 = vld [vmem:[%s3 + $0x2f48] sm:$0xff]
  %v6053 = vld [vmem:[%s3 + $0x2f58] sm:$0xff]
  %v6054 = vld [vmem:[%s3 + $0x2f60] sm:$0xff]
  %v6055 = vld [vmem:[%s3 + $0x2f70] sm:$0xff]
  %v6056 = vld [vmem:[%s3 + $0x2f78] sm:$0xff]
  %v6057 = vld [vmem:[%s3 + $0x2f88] sm:$0xff]
  %v6058 = vld [vmem:[%s3 + $0x2f90] sm:$0xff]
  %v6059 = vld [vmem:[%s3 + $0x2fa0] sm:$0xff]
  %v6060 = vld [vmem:[%s3 + $0x2fa8] sm:$0xff]
  %v6061 = vld [vmem:[%s3 + $0x2fb8] sm:$0xff]
  %v6062 = vld [vmem:[%s3 + $0x2fc0] sm:$0xff]
  %v6063 = vld [vmem:[%s3 + $0x2fd0] sm:$0xff]
  %v6064 = vld [vmem:[%s3 + $0x2fd8] sm:$0xff]
  %v6065 = vld [vmem:[%s3 + $0x2fe8] sm:$0xff]
  %v6066 = vld [vmem:[%s3 + $0x2ff0] sm:$0xff]
  %v6067 = vld [vmem:[%s3 + $0x3000] sm:$0xff]
  %v6068 = vld [vmem:[%s3 + $0x3008] sm:$0xff]
  %v6069 = vld [vmem:[%s3 + $0x3018] sm:$0xff]
  %v6070 = vld [vmem:[%s3 + $0x3020] sm:$0xff]
  %v6071 = vld [vmem:[%s3 + $0x3030] sm:$0xff]
  %v6072 = vld [vmem:[%s3 + $0x3038] sm:$0xff]
  %v6073 = vld [vmem:[%s3 + $0x3048] sm:$0xff]
  %v6074 = vld [vmem:[%s3 + $0x3050] sm:$0xff]
  %v6075 = vld [vmem:[%s3 + $0x3060] sm:$0xff]
  %v6076 = vld [vmem:[%s3 + $0x3068] sm:$0xff]
  %v6077 = vld [vmem:[%s3 + $0x3078] sm:$0xff]
  %v6078 = vld [vmem:[%s3 + $0x3080] sm:$0xff]
  %v6080 = vsel %vm5212, %v6021, 0
  %6082 = vmatprep.subr.mxu0 %v6054
  %6083 = vmatpush1.msra.mxu0 %v6053
  %6084 = vmatprep.subr.mxu0 %v6052
  %6085 = vmatpush1.msra.mxu0 %v6051
  %6086 = vmatprep.subr.mxu0 %v6050
  %6087 = vmatpush1.msra.mxu0 %v6049
  %6088 = vmatprep.subr.mxu0 %v6048
  %6089 = vmatpush1.msra.mxu0 %v6047
  %6090 = vmatprep.subr.mxu0 %v6046
  %6091 = vmatpush1.msra.mxu0 %v6045
  %6092 = vmatprep.subr.mxu0 %v6044
  %6093 = vmatpush1.msra.mxu0 %v6043
  %6094 = vmatprep.subr.mxu0 %v6042
  %6095 = vmatpush1.msra.mxu0 %v6041
  %6096 = vmatprep.subr.mxu0 %v6040
  %6097 = vmatpush1.msra.mxu0 %v6039
  %6098 = vmatprep.subr.mxu0 %v6038
  %6099 = vmatpush1.msra.mxu0 %v6037
  %6100 = vmatprep.subr.mxu0 %v6036
  %6101 = vmatpush1.msra.mxu0 %v6035
  %6102 = vmatprep.subr.mxu0 %v6034
  %6103 = vmatpush1.msra.mxu0 %v6033
  %6104 = vmatprep.subr.mxu0 %v6032
  %6105 = vmatpush1.msra.mxu0 %v6031
  %6106 = vmatprep.subr.mxu0 %v6030
  %6107 = vmatpush1.msra.mxu0 %v6029
  %6108 = vmatprep.subr.mxu0 %v6028
  %6109 = vmatpush1.msra.mxu0 %v6027
  %6110 = vmatprep.subr.mxu0 %v6026
  %6111 = vmatpush1.msra.mxu0 %v6025
  %6112 = vmatprep.subr.mxu0 %v6024
  %6113 = vmatpush1.msra.mxu0 %v6023
  %6114 = vmatprep.subr.mxu0 0.0
  %6115 = vmatpush2.msra.mxu0 0.0
  %6116 = vmatprep.subr.mxu0 0.0
  %6117 = vmatpush2.msra.mxu0 0.0
  %6118 = vmatprep.subr.mxu0 0.0
  %6119 = vmatpush2.msra.mxu0 0.0
  %6120 = vmatprep.subr.mxu0 0.0
  %6121 = vmatpush2.msra.mxu0 0.0
  %6122 = vmatprep.subr.mxu0 %v6078
  %6123 = vmatpush2.msra.mxu0 %v6077
  %6124 = vmatprep.subr.mxu0 %v6076
  %6125 = vmatpush2.msra.mxu0 %v6075
  %6126 = vmatprep.subr.mxu0 %v6074
  %6127 = vmatpush2.msra.mxu0 %v6073
  %6128 = vmatprep.subr.mxu0 %v6072
  %6129 = vmatpush2.msra.mxu0 %v6071
  %6130 = vmatprep.subr.mxu0 %v6070
  %6131 = vmatpush2.msra.mxu0 %v6069
  %6132 = vmatprep.subr.mxu0 %v6068
  %6133 = vmatpush2.msra.mxu0 %v6067
  %6134 = vmatprep.subr.mxu0 %v6066
  %6135 = vmatpush2.msra.mxu0 %v6065
  %6136 = vmatprep.subr.mxu0 %v6064
  %6137 = vmatpush2.msra.mxu0 %v6063
  %6138 = vmatprep.subr.mxu0 %v6062
  %6139 = vmatpush2.msra.mxu0 %v6061
  %6140 = vmatprep.subr.mxu0 %v6060
  %6141 = vmatpush2.msra.mxu0 %v6059
  %6142 = vmatprep.subr.mxu0 %v6058
  %6143 = vmatpush2.msra.mxu0 %v6057
  %6144 = vmatprep.subr.mxu0 %v6056
  %6145 = vmatpush2.msra.mxu0 %v6055
  %6146 = vmatprep.mubr.f32.mxu0 %v6080
  %6147 = vmatmul.mubr.f32.gmra.mxu0 %v6019
  %v6148 = vpop.f32.mrf.mxu0
  %v6149 = vadd.f32 0.0, %v6148
  %v6150 = vpop.f32.mrf.mxu0
  %v6151 = vadd.f32 0.0, %v6150
  %6152 = vdwg.mxu0
  %v6154 = vsel %vm5212, %v5890, 0
  %6156 = vmatprep.subr.mxu0 %v5923
  %6157 = vmatpush1.msra.mxu0 %v5922
  %6158 = vmatprep.subr.mxu0 %v5921
  %6159 = vmatpush1.msra.mxu0 %v5920
  %6160 = vmatprep.subr.mxu0 %v5919
  %6161 = vmatpush1.msra.mxu0 %v5918
  %6162 = vmatprep.subr.mxu0 %v5917
  %6163 = vmatpush1.msra.mxu0 %v5916
  %6164 = vmatprep.subr.mxu0 %v5915
  %6165 = vmatpush1.msra.mxu0 %v5914
  %6166 = vmatprep.subr.mxu0 %v5913
  %6167 = vmatpush1.msra.mxu0 %v5912
  %6168 = vmatprep.subr.mxu0 %v5911
  %6169 = vmatpush1.msra.mxu0 %v5910
  %6170 = vmatprep.subr.mxu0 %v5909
  %6171 = vmatpush1.msra.mxu0 %v5908
  %6172 = vmatprep.subr.mxu0 %v5907
  %6173 = vmatpush1.msra.mxu0 %v5906
  %6174 = vmatprep.subr.mxu0 %v5905
  %6175 = vmatpush1.msra.mxu0 %v5904
  %6176 = vmatprep.subr.mxu0 %v5903
  %6177 = vmatpush1.msra.mxu0 %v5902
  %6178 = vmatprep.subr.mxu0 %v5901
  %6179 = vmatpush1.msra.mxu0 %v5900
  %6180 = vmatprep.subr.mxu0 %v5899
  %6181 = vmatpush1.msra.mxu0 %v5898
  %6182 = vmatprep.subr.mxu0 %v5897
  %6183 = vmatpush1.msra.mxu0 %v5896
  %6184 = vmatprep.subr.mxu0 %v5895
  %6185 = vmatpush1.msra.mxu0 %v5894
  %6186 = vmatprep.subr.mxu0 %v5893
  %6187 = vmatpush1.msra.mxu0 %v5892
  %6188 = vmatprep.subr.mxu0 0.0
  %6189 = vmatpush2.msra.mxu0 0.0
  %6190 = vmatprep.subr.mxu0 0.0
  %6191 = vmatpush2.msra.mxu0 0.0
  %6192 = vmatprep.subr.mxu0 0.0
  %6193 = vmatpush2.msra.mxu0 0.0
  %6194 = vmatprep.subr.mxu0 0.0
  %6195 = vmatpush2.msra.mxu0 0.0
  %6196 = vmatprep.subr.mxu0 %v5947
  %6197 = vmatpush2.msra.mxu0 %v5946
  %6198 = vmatprep.subr.mxu0 %v5945
  %6199 = vmatpush2.msra.mxu0 %v5944
  %6200 = vmatprep.subr.mxu0 %v5943
  %6201 = vmatpush2.msra.mxu0 %v5942
  %6202 = vmatprep.subr.mxu0 %v5941
  %6203 = vmatpush2.msra.mxu0 %v5940
  %6204 = vmatprep.subr.mxu0 %v5939
  %6205 = vmatpush2.msra.mxu0 %v5938
  %6206 = vmatprep.subr.mxu0 %v5937
  %6207 = vmatpush2.msra.mxu0 %v5936
  %6208 = vmatprep.subr.mxu0 %v5935
  %6209 = vmatpush2.msra.mxu0 %v5934
  %6210 = vmatprep.subr.mxu0 %v5933
  %6211 = vmatpush2.msra.mxu0 %v5932
  %6212 = vmatprep.subr.mxu0 %v5931
  %6213 = vmatpush2.msra.mxu0 %v5930
  %6214 = vmatprep.subr.mxu0 %v5929
  %6215 = vmatpush2.msra.mxu0 %v5928
  %6216 = vmatprep.subr.mxu0 %v5927
  %6217 = vmatpush2.msra.mxu0 %v5926
  %6218 = vmatprep.subr.mxu0 %v5925
  %6219 = vmatpush2.msra.mxu0 %v5924
  %6220 = vmatprep.mubr.f32.mxu0 %v6154
  %6221 = vmatmul.mubr.f32.gmra.mxu0 %v5888
  %v6222 = vpop.f32.mrf.mxu0
  %v6223 = vadd.f32 %v6149, %v6222
  %v6224 = vpop.f32.mrf.mxu0
  %v6225 = vadd.f32 %v6151, %v6224
  %6226 = vdwg.mxu0
  %s6227 = scalar_lea.vmem %s4, 7
  %v6228 = vld [vmem:[%s6227] ss:$8 sm:$0x3]
  %v6230 = vlaneseq
  %v6231 = vshrl.u32 %v6230, 7
  %v6232 = vsub.s32 0, %v6231
  %v6233 = vrot.slane %v6228, %v6232
  %v6234 = vlaneseq
  %v6235 = vshrl.u32 %v6234, 7
  %v6236 = vsub.s32 1, %v6235
  %v6237 = vrot.slane %v6228, %v6236
  %v6240 = vadd.f32 %v6223, %v6233
  %v6241 = vadd.f32 %v6225, %v6237
  %v6242 = vmax.f32 %v6240, 0.0
  %v6243 = vmax.f32 %v6241, 0.0
  %v6244 = vld [vmem:[%s2 + $0xb0] sm:$0x3]
  %v6246 = vsel %vm4177, %v6244, 0
  %v6249 = vsel %vm4181, %v6242, 0
  %v6252 = vsel %vm4181, %v6243, 0
  %6254 = vmatprep.subr.mxu0 0.0
  %6255 = vmatpush1.msra.mxu0 0.0
  %6256 = vmatprep.subr.mxu0 0.0
  %6257 = vmatpush1.msra.mxu0 0.0
  %6258 = vmatprep.subr.mxu0 0.0
  %6259 = vmatpush1.msra.mxu0 0.0
  %6260 = vmatprep.subr.mxu0 0.0
  %6261 = vmatpush1.msra.mxu0 0.0
  %6262 = vmatprep.subr.mxu0 0.0
  %6263 = vmatpush1.msra.mxu0 0.0
  %6264 = vmatprep.subr.mxu0 0.0
  %6265 = vmatpush1.msra.mxu0 0.0
  %6266 = vmatprep.subr.mxu0 0.0
  %6267 = vmatpush1.msra.mxu0 0.0
  %6268 = vmatprep.subr.mxu0 0.0
  %6269 = vmatpush1.msra.mxu0 0.0
  %6270 = vmatprep.subr.mxu0 0.0
  %6271 = vmatpush1.msra.mxu0 0.0
  %6272 = vmatprep.subr.mxu0 0.0
  %6273 = vmatpush1.msra.mxu0 0.0
  %6274 = vmatprep.subr.mxu0 0.0
  %6275 = vmatpush1.msra.mxu0 0.0
  %6276 = vmatprep.subr.mxu0 0.0
  %6277 = vmatpush1.msra.mxu0 0.0
  %6278 = vmatprep.subr.mxu0 0.0
  %6279 = vmatpush1.msra.mxu0 0.0
  %6280 = vmatprep.subr.mxu0 0.0
  %6281 = vmatpush1.msra.mxu0 0.0
  %6282 = vmatprep.subr.mxu0 0.0
  %6283 = vmatpush1.msra.mxu0 0.0
  %6284 = vmatprep.subr.mxu0 %v6252
  %6285 = vmatpush1.msra.mxu0 %v6249
  %6286 = vmatprep.subr.mxu0 0.0
  %6287 = vmatpush2.msra.mxu0 0.0
  %6288 = vmatprep.subr.mxu0 0.0
  %6289 = vmatpush2.msra.mxu0 0.0
  %6290 = vmatprep.subr.mxu0 0.0
  %6291 = vmatpush2.msra.mxu0 0.0
  %6292 = vmatprep.subr.mxu0 0.0
  %6293 = vmatpush2.msra.mxu0 0.0
  %6294 = vmatprep.subr.mxu0 0.0
  %6295 = vmatpush2.msra.mxu0 0.0
  %6296 = vmatprep.subr.mxu0 0.0
  %6297 = vmatpush2.msra.mxu0 0.0
  %6298 = vmatprep.subr.mxu0 0.0
  %6299 = vmatpush2.msra.mxu0 0.0
  %6300 = vmatprep.subr.mxu0 0.0
  %6301 = vmatpush2.msra.mxu0 0.0
  %6302 = vmatprep.subr.mxu0 0.0
  %6303 = vmatpush2.msra.mxu0 0.0
  %6304 = vmatprep.subr.mxu0 0.0
  %6305 = vmatpush2.msra.mxu0 0.0
  %6306 = vmatprep.subr.mxu0 0.0
  %6307 = vmatpush2.msra.mxu0 0.0
  %6308 = vmatprep.subr.mxu0 0.0
  %6309 = vmatpush2.msra.mxu0 0.0
  %6310 = vmatprep.subr.mxu0 0.0
  %6311 = vmatpush2.msra.mxu0 0.0
  %6312 = vmatprep.subr.mxu0 0.0
  %6313 = vmatpush2.msra.mxu0 0.0
  %6314 = vmatprep.subr.mxu0 0.0
  %6315 = vmatpush2.msra.mxu0 0.0
  %6316 = vmatprep.subr.mxu0 0.0
  %6317 = vmatpush2.msra.mxu0 0.0
  %6318 = vmatprep.mubr.f32.mxu0 0.0
  %6319 = vmatmul.mubr.f32.gmra.mxu0 %v6246
  %v6320 = vpop.f32.mrf.mxu0
  %v6321 = vadd.f32 0.0, %v6320
  %v6322 = vpop.f32.mrf.mxu0
  %v6323 = vadd.f32 0.0, %v6322
  %6324 = vdwg.mxu0
  %v6325 = vld [vmem:[%s3 + $0x3090] sm:$0xff]
  %v6326 = vld [vmem:[%s3 + $0x30a8] sm:$0xff]
  %v6327 = vld [vmem:[%s3 + $0x30c0] sm:$0xff]
  %v6328 = vld [vmem:[%s3 + $0x30d8] sm:$0xff]
  %v6329 = vld [vmem:[%s3 + $0x30f0] sm:$0xff]
  %v6330 = vld [vmem:[%s3 + $0x3108] sm:$0xff]
  %v6331 = vld [vmem:[%s3 + $0x3120] sm:$0xff]
  %v6332 = vld [vmem:[%s3 + $0x3138] sm:$0xff]
  %v6333 = vld [vmem:[%s3 + $0x3150] sm:$0xff]
  %v6334 = vld [vmem:[%s3 + $0x3168] sm:$0xff]
  %v6335 = vld [vmem:[%s3 + $0x3180] sm:$0xff]
  %v6336 = vld [vmem:[%s3 + $0x3198] sm:$0xff]
  %v6337 = vld [vmem:[%s3 + $0x31b0] sm:$0xff]
  %v6338 = vld [vmem:[%s3 + $0x31c8] sm:$0xff]
  %v6339 = vld [vmem:[%s3 + $0x31e0] sm:$0xff]
  %v6340 = vld [vmem:[%s3 + $0x31f8] sm:$0xff]
  %v6341 = vld [vmem:[%s3 + $0x3210] sm:$0xff]
  %v6342 = vld [vmem:[%s3 + $0x3228] sm:$0xff]
  %v6343 = vld [vmem:[%s3 + $0x3240] sm:$0xff]
  %v6344 = vld [vmem:[%s3 + $0x3258] sm:$0xff]
  %v6345 = vld [vmem:[%s3 + $0x3270] sm:$0xff]
  %v6346 = vld [vmem:[%s3 + $0x3288] sm:$0xff]
  %v6347 = vld [vmem:[%s3 + $0x32a0] sm:$0xff]
  %v6348 = vld [vmem:[%s3 + $0x32b8] sm:$0xff]
  %v6349 = vld [vmem:[%s3 + $0x32d0] sm:$0xff]
  %v6350 = vld [vmem:[%s3 + $0x32e8] sm:$0xff]
  %v6351 = vld [vmem:[%s3 + $0x3300] sm:$0xff]
  %v6352 = vld [vmem:[%s3 + $0x3318] sm:$0xff]
  %v6353 = vld [vmem:[%s2 + $0xb8] sm:$0x3]
  %v6355 = vsel %vm4177, %v6353, 0
  %6357 = vmatprep.subr.mxu0 0.0
  %6358 = vmatpush1.msra.mxu0 0.0
  %6359 = vmatprep.subr.mxu0 0.0
  %6360 = vmatpush1.msra.mxu0 0.0
  %6361 = vmatprep.subr.mxu0 0.0
  %6362 = vmatpush1.msra.mxu0 0.0
  %6363 = vmatprep.subr.mxu0 0.0
  %6364 = vmatpush1.msra.mxu0 0.0
  %6365 = vmatprep.subr.mxu0 0.0
  %6366 = vmatpush1.msra.mxu0 0.0
  %6367 = vmatprep.subr.mxu0 0.0
  %6368 = vmatpush1.msra.mxu0 0.0
  %6369 = vmatprep.subr.mxu0 0.0
  %6370 = vmatpush1.msra.mxu0 0.0
  %6371 = vmatprep.subr.mxu0 0.0
  %6372 = vmatpush1.msra.mxu0 0.0
  %6373 = vmatprep.subr.mxu0 0.0
  %6374 = vmatpush1.msra.mxu0 0.0
  %6375 = vmatprep.subr.mxu0 0.0
  %6376 = vmatpush1.msra.mxu0 0.0
  %6377 = vmatprep.subr.mxu0 0.0
  %6378 = vmatpush1.msra.mxu0 0.0
  %6379 = vmatprep.subr.mxu0 0.0
  %6380 = vmatpush1.msra.mxu0 0.0
  %6381 = vmatprep.subr.mxu0 0.0
  %6382 = vmatpush1.msra.mxu0 0.0
  %6383 = vmatprep.subr.mxu0 0.0
  %6384 = vmatpush1.msra.mxu0 0.0
  %6385 = vmatprep.subr.mxu0 0.0
  %6386 = vmatpush1.msra.mxu0 0.0
  %6387 = vmatprep.subr.mxu0 %v6252
  %6388 = vmatpush1.msra.mxu0 %v6249
  %6389 = vmatprep.subr.mxu0 0.0
  %6390 = vmatpush2.msra.mxu0 0.0
  %6391 = vmatprep.subr.mxu0 0.0
  %6392 = vmatpush2.msra.mxu0 0.0
  %6393 = vmatprep.subr.mxu0 0.0
  %6394 = vmatpush2.msra.mxu0 0.0
  %6395 = vmatprep.subr.mxu0 0.0
  %6396 = vmatpush2.msra.mxu0 0.0
  %6397 = vmatprep.subr.mxu0 0.0
  %6398 = vmatpush2.msra.mxu0 0.0
  %6399 = vmatprep.subr.mxu0 0.0
  %6400 = vmatpush2.msra.mxu0 0.0
  %6401 = vmatprep.subr.mxu0 0.0
  %6402 = vmatpush2.msra.mxu0 0.0
  %6403 = vmatprep.subr.mxu0 0.0
  %6404 = vmatpush2.msra.mxu0 0.0
  %6405 = vmatprep.subr.mxu0 0.0
  %6406 = vmatpush2.msra.mxu0 0.0
  %6407 = vmatprep.subr.mxu0 0.0
  %6408 = vmatpush2.msra.mxu0 0.0
  %6409 = vmatprep.subr.mxu0 0.0
  %6410 = vmatpush2.msra.mxu0 0.0
  %6411 = vmatprep.subr.mxu0 0.0
  %6412 = vmatpush2.msra.mxu0 0.0
  %6413 = vmatprep.subr.mxu0 0.0
  %6414 = vmatpush2.msra.mxu0 0.0
  %6415 = vmatprep.subr.mxu0 0.0
  %6416 = vmatpush2.msra.mxu0 0.0
  %6417 = vmatprep.subr.mxu0 0.0
  %6418 = vmatpush2.msra.mxu0 0.0
  %6419 = vmatprep.subr.mxu0 0.0
  %6420 = vmatpush2.msra.mxu0 0.0
  %6421 = vmatprep.mubr.f32.mxu0 0.0
  %6422 = vmatmul.mubr.f32.gmra.mxu0 %v6355
  %v6423 = vpop.f32.mrf.mxu0
  %v6424 = vadd.f32 0.0, %v6423
  %v6425 = vpop.f32.mrf.mxu0
  %v6426 = vadd.f32 0.0, %v6425
  %6427 = vdwg.mxu0
  %v6428 = vld [vmem:[%s3 + $0x3330] sm:$0xff]
  %v6429 = vld [vmem:[%s3 + $0x3348] sm:$0xff]
  %v6430 = vld [vmem:[%s3 + $0x3360] sm:$0xff]
  %v6431 = vld [vmem:[%s3 + $0x3378] sm:$0xff]
  %v6432 = vld [vmem:[%s3 + $0x3390] sm:$0xff]
  %v6433 = vld [vmem:[%s3 + $0x33a8] sm:$0xff]
  %v6434 = vld [vmem:[%s3 + $0x33c0] sm:$0xff]
  %v6435 = vld [vmem:[%s3 + $0x33d8] sm:$0xff]
  %v6436 = vld [vmem:[%s3 + $0x33f0] sm:$0xff]
  %v6437 = vld [vmem:[%s3 + $0x3408] sm:$0xff]
  %v6438 = vld [vmem:[%s3 + $0x3420] sm:$0xff]
  %v6439 = vld [vmem:[%s3 + $0x3438] sm:$0xff]
  %v6440 = vld [vmem:[%s3 + $0x3450] sm:$0xff]
  %v6441 = vld [vmem:[%s3 + $0x3468] sm:$0xff]
  %v6442 = vld [vmem:[%s3 + $0x3480] sm:$0xff]
  %v6443 = vld [vmem:[%s3 + $0x3498] sm:$0xff]
  %v6444 = vld [vmem:[%s3 + $0x34b0] sm:$0xff]
  %v6445 = vld [vmem:[%s3 + $0x34c8] sm:$0xff]
  %v6446 = vld [vmem:[%s3 + $0x34e0] sm:$0xff]
  %v6447 = vld [vmem:[%s3 + $0x34f8] sm:$0xff]
  %v6448 = vld [vmem:[%s3 + $0x3510] sm:$0xff]
  %v6449 = vld [vmem:[%s3 + $0x3528] sm:$0xff]
  %v6450 = vld [vmem:[%s3 + $0x3540] sm:$0xff]
  %v6451 = vld [vmem:[%s3 + $0x3558] sm:$0xff]
  %v6452 = vld [vmem:[%s3 + $0x3570] sm:$0xff]
  %v6453 = vld [vmem:[%s3 + $0x3588] sm:$0xff]
  %v6454 = vld [vmem:[%s3 + $0x35a0] sm:$0xff]
  %v6455 = vld [vmem:[%s3 + $0x35b8] sm:$0xff]
  %v6457 = vsel %vm5212, %v6426, 0
  %6459 = vmatprep.subr.mxu0 0.0
  %6460 = vmatpush1.msra.mxu0 %v6443
  %6461 = vmatprep.subr.mxu0 0.0
  %6462 = vmatpush1.msra.mxu0 %v6442
  %6463 = vmatprep.subr.mxu0 0.0
  %6464 = vmatpush1.msra.mxu0 %v6441
  %6465 = vmatprep.subr.mxu0 0.0
  %6466 = vmatpush1.msra.mxu0 %v6440
  %6467 = vmatprep.subr.mxu0 0.0
  %6468 = vmatpush1.msra.mxu0 %v6439
  %6469 = vmatprep.subr.mxu0 0.0
  %6470 = vmatpush1.msra.mxu0 %v6438
  %6471 = vmatprep.subr.mxu0 0.0
  %6472 = vmatpush1.msra.mxu0 %v6437
  %6473 = vmatprep.subr.mxu0 0.0
  %6474 = vmatpush1.msra.mxu0 %v6436
  %6475 = vmatprep.subr.mxu0 0.0
  %6476 = vmatpush1.msra.mxu0 %v6435
  %6477 = vmatprep.subr.mxu0 0.0
  %6478 = vmatpush1.msra.mxu0 %v6434
  %6479 = vmatprep.subr.mxu0 0.0
  %6480 = vmatpush1.msra.mxu0 %v6433
  %6481 = vmatprep.subr.mxu0 0.0
  %6482 = vmatpush1.msra.mxu0 %v6432
  %6483 = vmatprep.subr.mxu0 0.0
  %6484 = vmatpush1.msra.mxu0 %v6431
  %6485 = vmatprep.subr.mxu0 0.0
  %6486 = vmatpush1.msra.mxu0 %v6430
  %6487 = vmatprep.subr.mxu0 0.0
  %6488 = vmatpush1.msra.mxu0 %v6429
  %6489 = vmatprep.subr.mxu0 0.0
  %6490 = vmatpush1.msra.mxu0 %v6428
  %6491 = vmatprep.subr.mxu0 0.0
  %6492 = vmatpush2.msra.mxu0 0.0
  %6493 = vmatprep.subr.mxu0 0.0
  %6494 = vmatpush2.msra.mxu0 0.0
  %6495 = vmatprep.subr.mxu0 0.0
  %6496 = vmatpush2.msra.mxu0 0.0
  %6497 = vmatprep.subr.mxu0 0.0
  %6498 = vmatpush2.msra.mxu0 0.0
  %6499 = vmatprep.subr.mxu0 0.0
  %6500 = vmatpush2.msra.mxu0 %v6455
  %6501 = vmatprep.subr.mxu0 0.0
  %6502 = vmatpush2.msra.mxu0 %v6454
  %6503 = vmatprep.subr.mxu0 0.0
  %6504 = vmatpush2.msra.mxu0 %v6453
  %6505 = vmatprep.subr.mxu0 0.0
  %6506 = vmatpush2.msra.mxu0 %v6452
  %6507 = vmatprep.subr.mxu0 0.0
  %6508 = vmatpush2.msra.mxu0 %v6451
  %6509 = vmatprep.subr.mxu0 0.0
  %6510 = vmatpush2.msra.mxu0 %v6450
  %6511 = vmatprep.subr.mxu0 0.0
  %6512 = vmatpush2.msra.mxu0 %v6449
  %6513 = vmatprep.subr.mxu0 0.0
  %6514 = vmatpush2.msra.mxu0 %v6448
  %6515 = vmatprep.subr.mxu0 0.0
  %6516 = vmatpush2.msra.mxu0 %v6447
  %6517 = vmatprep.subr.mxu0 0.0
  %6518 = vmatpush2.msra.mxu0 %v6446
  %6519 = vmatprep.subr.mxu0 0.0
  %6520 = vmatpush2.msra.mxu0 %v6445
  %6521 = vmatprep.subr.mxu0 0.0
  %6522 = vmatpush2.msra.mxu0 %v6444
  %6523 = vmatprep.mubr.f32.mxu0 %v6457
  %6524 = vmatmul.mubr.f32.gmra.mxu0 %v6424
  %v6525 = vpop.f32.mrf.mxu0
  %v6526 = vadd.f32 0.0, %v6525
  %v6527 = vpop.f32.mrf.mxu0
  %6528 = vdwg.mxu0
  %v6530 = vsel %vm5212, %v6323, 0
  %6532 = vmatprep.subr.mxu0 0.0
  %6533 = vmatpush1.msra.mxu0 %v6340
  %6534 = vmatprep.subr.mxu0 0.0
  %6535 = vmatpush1.msra.mxu0 %v6339
  %6536 = vmatprep.subr.mxu0 0.0
  %6537 = vmatpush1.msra.mxu0 %v6338
  %6538 = vmatprep.subr.mxu0 0.0
  %6539 = vmatpush1.msra.mxu0 %v6337
  %6540 = vmatprep.subr.mxu0 0.0
  %6541 = vmatpush1.msra.mxu0 %v6336
  %6542 = vmatprep.subr.mxu0 0.0
  %6543 = vmatpush1.msra.mxu0 %v6335
  %6544 = vmatprep.subr.mxu0 0.0
  %6545 = vmatpush1.msra.mxu0 %v6334
  %6546 = vmatprep.subr.mxu0 0.0
  %6547 = vmatpush1.msra.mxu0 %v6333
  %6548 = vmatprep.subr.mxu0 0.0
  %6549 = vmatpush1.msra.mxu0 %v6332
  %6550 = vmatprep.subr.mxu0 0.0
  %6551 = vmatpush1.msra.mxu0 %v6331
  %6552 = vmatprep.subr.mxu0 0.0
  %6553 = vmatpush1.msra.mxu0 %v6330
  %6554 = vmatprep.subr.mxu0 0.0
  %6555 = vmatpush1.msra.mxu0 %v6329
  %6556 = vmatprep.subr.mxu0 0.0
  %6557 = vmatpush1.msra.mxu0 %v6328
  %6558 = vmatprep.subr.mxu0 0.0
  %6559 = vmatpush1.msra.mxu0 %v6327
  %6560 = vmatprep.subr.mxu0 0.0
  %6561 = vmatpush1.msra.mxu0 %v6326
  %6562 = vmatprep.subr.mxu0 0.0
  %6563 = vmatpush1.msra.mxu0 %v6325
  %6564 = vmatprep.subr.mxu0 0.0
  %6565 = vmatpush2.msra.mxu0 0.0
  %6566 = vmatprep.subr.mxu0 0.0
  %6567 = vmatpush2.msra.mxu0 0.0
  %6568 = vmatprep.subr.mxu0 0.0
  %6569 = vmatpush2.msra.mxu0 0.0
  %6570 = vmatprep.subr.mxu0 0.0
  %6571 = vmatpush2.msra.mxu0 0.0
  %6572 = vmatprep.subr.mxu0 0.0
  %6573 = vmatpush2.msra.mxu0 %v6352
  %6574 = vmatprep.subr.mxu0 0.0
  %6575 = vmatpush2.msra.mxu0 %v6351
  %6576 = vmatprep.subr.mxu0 0.0
  %6577 = vmatpush2.msra.mxu0 %v6350
  %6578 = vmatprep.subr.mxu0 0.0
  %6579 = vmatpush2.msra.mxu0 %v6349
  %6580 = vmatprep.subr.mxu0 0.0
  %6581 = vmatpush2.msra.mxu0 %v6348
  %6582 = vmatprep.subr.mxu0 0.0
  %6583 = vmatpush2.msra.mxu0 %v6347
  %6584 = vmatprep.subr.mxu0 0.0
  %6585 = vmatpush2.msra.mxu0 %v6346
  %6586 = vmatprep.subr.mxu0 0.0
  %6587 = vmatpush2.msra.mxu0 %v6345
  %6588 = vmatprep.subr.mxu0 0.0
  %6589 = vmatpush2.msra.mxu0 %v6344
  %6590 = vmatprep.subr.mxu0 0.0
  %6591 = vmatpush2.msra.mxu0 %v6343
  %6592 = vmatprep.subr.mxu0 0.0
  %6593 = vmatpush2.msra.mxu0 %v6342
  %6594 = vmatprep.subr.mxu0 0.0
  %6595 = vmatpush2.msra.mxu0 %v6341
  %6596 = vmatprep.mubr.f32.mxu0 %v6530
  %6597 = vmatmul.mubr.f32.gmra.mxu0 %v6321
  %v6598 = vpop.f32.mrf.mxu0
  %v6599 = vadd.f32 %v6526, %v6598
  %v6600 = vpop.f32.mrf.mxu0
  %6601 = vdwg.mxu0
  %v6602 = vld [vmem:[%s4 + $0x18] ss:$0 sm:$0xff]
  %v6603 = vadd.f32 %v6599, %v6602
  %v6604 = vmax.f32 %v6603, 0.0
  %v6605 = vld [vmem:[%s2 + $0xc0] sm:$0x3]
  %vm6606 = vcmask 15360
  %v6608 = vsel %vm6606, %v6605, 0
  %v6611 = vsel %vm694, %v6604, 0
  %6613 = vmatprep.subr.mxu0 0.0
  %6614 = vmatpush1.msra.mxu0 0.0
  %6615 = vmatprep.subr.mxu0 0.0
  %6616 = vmatpush1.msra.mxu0 0.0
  %6617 = vmatprep.subr.mxu0 0.0
  %6618 = vmatpush1.msra.mxu0 0.0
  %6619 = vmatprep.subr.mxu0 0.0
  %6620 = vmatpush1.msra.mxu0 0.0
  %6621 = vmatprep.subr.mxu0 0.0
  %6622 = vmatpush1.msra.mxu0 0.0
  %6623 = vmatprep.subr.mxu0 0.0
  %6624 = vmatpush1.msra.mxu0 0.0
  %6625 = vmatprep.subr.mxu0 0.0
  %6626 = vmatpush1.msra.mxu0 0.0
  %6627 = vmatprep.subr.mxu0 0.0
  %6628 = vmatpush1.msra.mxu0 0.0
  %6629 = vmatprep.subr.mxu0 0.0
  %6630 = vmatpush1.msra.mxu0 0.0
  %6631 = vmatprep.subr.mxu0 0.0
  %6632 = vmatpush1.msra.mxu0 0.0
  %6633 = vmatprep.subr.mxu0 0.0
  %6634 = vmatpush1.msra.mxu0 0.0
  %6635 = vmatprep.subr.mxu0 0.0
  %6636 = vmatpush1.msra.mxu0 0.0
  %6637 = vmatprep.subr.mxu0 0.0
  %6638 = vmatpush1.msra.mxu0 0.0
  %6639 = vmatprep.subr.mxu0 0.0
  %6640 = vmatpush1.msra.mxu0 0.0
  %6641 = vmatprep.subr.mxu0 0.0
  %6642 = vmatpush1.msra.mxu0 0.0
  %6643 = vmatprep.subr.mxu0 0.0
  %6644 = vmatpush1.msra.mxu0 %v6611
  %6645 = vmatprep.subr.mxu0 0.0
  %6646 = vmatpush2.msra.mxu0 0.0
  %6647 = vmatprep.subr.mxu0 0.0
  %6648 = vmatpush2.msra.mxu0 0.0
  %6649 = vmatprep.subr.mxu0 0.0
  %6650 = vmatpush2.msra.mxu0 0.0
  %6651 = vmatprep.subr.mxu0 0.0
  %6652 = vmatpush2.msra.mxu0 0.0
  %6653 = vmatprep.subr.mxu0 0.0
  %6654 = vmatpush2.msra.mxu0 0.0
  %6655 = vmatprep.subr.mxu0 0.0
  %6656 = vmatpush2.msra.mxu0 0.0
  %6657 = vmatprep.subr.mxu0 0.0
  %6658 = vmatpush2.msra.mxu0 0.0
  %6659 = vmatprep.subr.mxu0 0.0
  %6660 = vmatpush2.msra.mxu0 0.0
  %6661 = vmatprep.subr.mxu0 0.0
  %6662 = vmatpush2.msra.mxu0 0.0
  %6663 = vmatprep.subr.mxu0 0.0
  %6664 = vmatpush2.msra.mxu0 0.0
  %6665 = vmatprep.subr.mxu0 0.0
  %6666 = vmatpush2.msra.mxu0 0.0
  %6667 = vmatprep.subr.mxu0 0.0
  %6668 = vmatpush2.msra.mxu0 0.0
  %6669 = vmatprep.subr.mxu0 0.0
  %6670 = vmatpush2.msra.mxu0 0.0
  %6671 = vmatprep.subr.mxu0 0.0
  %6672 = vmatpush2.msra.mxu0 0.0
  %6673 = vmatprep.subr.mxu0 0.0
  %6674 = vmatpush2.msra.mxu0 0.0
  %6675 = vmatprep.subr.mxu0 0.0
  %6676 = vmatpush2.msra.mxu0 0.0
  %6677 = vmatprep.mubr.f32.mxu0 0.0
  %6678 = vmatmul.mubr.f32.gmra.mxu0 %v6608
  %v6679 = vpop.f32.mrf.mxu0
  %v6680 = vadd.f32 0.0, %v6679
  %v6681 = vpop.f32.mrf.mxu0
  %6682 = vdwg.mxu0
  %v6683 = vld [vmem:[%s3 + $0x35d0] sm:$0xff]
  %v6684 = vld [vmem:[%s3 + $0x35e8] sm:$0xff]
  %v6685 = vld [vmem:[%s3 + $0x3600] sm:$0xff]
  %v6686 = vld [vmem:[%s3 + $0x3618] sm:$0xff]
  %v6687 = vld [vmem:[%s3 + $0x3630] sm:$0xff]
  %v6688 = vld [vmem:[%s3 + $0x3648] sm:$0xff]
  %v6689 = vld [vmem:[%s3 + $0x3660] sm:$0xff]
  %v6690 = vld [vmem:[%s3 + $0x3678] sm:$0xff]
  %v6691 = vld [vmem:[%s3 + $0x3690] sm:$0xff]
  %v6692 = vld [vmem:[%s3 + $0x36a8] sm:$0xff]
  %v6693 = vld [vmem:[%s3 + $0x36c0] sm:$0xff]
  %v6694 = vld [vmem:[%s3 + $0x36d8] sm:$0xff]
  %v6695 = vld [vmem:[%s3 + $0x36f0] sm:$0xff]
  %v6696 = vld [vmem:[%s3 + $0x3708] sm:$0xff]
  %v6697 = vld [vmem:[%s3 + $0x3720] sm:$0xff]
  %v6698 = vld [vmem:[%s3 + $0x3738] sm:$0xff]
  %v6699 = vld [vmem:[%s4 + $0x19] ss:$0 sm:$0xff]
  %6700 = vmatprep.subr.mxu0 0.0
  %6701 = vmatpush1.msra.mxu0 %v6698
  %6702 = vmatprep.subr.mxu0 0.0
  %6703 = vmatpush1.msra.mxu0 %v6697
  %6704 = vmatprep.subr.mxu0 0.0
  %6705 = vmatpush1.msra.mxu0 %v6696
  %6706 = vmatprep.subr.mxu0 0.0
  %6707 = vmatpush1.msra.mxu0 %v6695
  %6708 = vmatprep.subr.mxu0 0.0
  %6709 = vmatpush1.msra.mxu0 %v6694
  %6710 = vmatprep.subr.mxu0 0.0
  %6711 = vmatpush1.msra.mxu0 %v6693
  %6712 = vmatprep.subr.mxu0 0.0
  %6713 = vmatpush1.msra.mxu0 %v6692
  %6714 = vmatprep.subr.mxu0 0.0
  %6715 = vmatpush1.msra.mxu0 %v6691
  %6716 = vmatprep.subr.mxu0 0.0
  %6717 = vmatpush1.msra.mxu0 %v6690
  %6718 = vmatprep.subr.mxu0 0.0
  %6719 = vmatpush1.msra.mxu0 %v6689
  %6720 = vmatprep.subr.mxu0 0.0
  %6721 = vmatpush1.msra.mxu0 %v6688
  %6722 = vmatprep.subr.mxu0 0.0
  %6723 = vmatpush1.msra.mxu0 %v6687
  %6724 = vmatprep.subr.mxu0 0.0
  %6725 = vmatpush1.msra.mxu0 %v6686
  %6726 = vmatprep.subr.mxu0 0.0
  %6727 = vmatpush1.msra.mxu0 %v6685
  %6728 = vmatprep.subr.mxu0 0.0
  %6729 = vmatpush1.msra.mxu0 %v6684
  %6730 = vmatprep.subr.mxu0 0.0
  %6731 = vmatpush1.msra.mxu0 %v6683
  %6732 = vmatprep.subr.mxu0 0.0
  %6733 = vmatpush2.msra.mxu0 0.0
  %6734 = vmatprep.subr.mxu0 0.0
  %6735 = vmatpush2.msra.mxu0 0.0
  %6736 = vmatprep.subr.mxu0 0.0
  %6737 = vmatpush2.msra.mxu0 0.0
  %6738 = vmatprep.subr.mxu0 0.0
  %6739 = vmatpush2.msra.mxu0 0.0
  %6740 = vmatprep.subr.mxu0 0.0
  %6741 = vmatpush2.msra.mxu0 0.0
  %6742 = vmatprep.subr.mxu0 0.0
  %6743 = vmatpush2.msra.mxu0 0.0
  %6744 = vmatprep.subr.mxu0 0.0
  %6745 = vmatpush2.msra.mxu0 0.0
  %6746 = vmatprep.subr.mxu0 0.0
  %6747 = vmatpush2.msra.mxu0 0.0
  %6748 = vmatprep.subr.mxu0 0.0
  %6749 = vmatpush2.msra.mxu0 0.0
  %6750 = vmatprep.subr.mxu0 0.0
  %6751 = vmatpush2.msra.mxu0 0.0
  %6752 = vmatprep.subr.mxu0 0.0
  %6753 = vmatpush2.msra.mxu0 0.0
  %6754 = vmatprep.subr.mxu0 0.0
  %6755 = vmatpush2.msra.mxu0 0.0
  %6756 = vmatprep.subr.mxu0 0.0
  %6757 = vmatpush2.msra.mxu0 0.0
  %6758 = vmatprep.subr.mxu0 0.0
  %6759 = vmatpush2.msra.mxu0 0.0
  %6760 = vmatprep.subr.mxu0 0.0
  %6761 = vmatpush2.msra.mxu0 0.0
  %6762 = vmatprep.subr.mxu0 0.0
  %6763 = vmatpush2.msra.mxu0 0.0
  %6764 = vmatprep.mubr.f32.mxu0 0.0
  %6765 = vmatmul.mubr.f32.gmra.mxu0 %v6680
  %v6766 = vpop.f32.mrf.mxu0
  %v6767 = vadd.f32 %v6699, %v6766
  %v6768 = vpop.f32.mrf.mxu0
  %6769 = vdwg.mxu0
  %v6770 = vmax.f32 %v6767, 0.0
  %v6771 = vld [vmem:[%s1] sm:$0x3]
  %v6772 = vld [vmem:[%s5] sm:$0xf]
  %v6773 = vld [vmem:[%s6] sm:$0x1]
  %v6774 = vlaneseq
  %v6775 = vshrl.u32 %v6774, 7
  %v6776 = vsub.s32 0, %v6775
  %v6777 = vrot.slane %v6773, %v6776
  %v6779 = vsel %vm4177, %v6771, 0
  %v6782 = vsel %vm4181, %v6772, 0
  %6784 = vmatprep.subr.mxu0 0.0
  %6785 = vmatpush1.msra.mxu0 0.0
  %6786 = vmatprep.subr.mxu0 0.0
  %6787 = vmatpush1.msra.mxu0 0.0
  %6788 = vmatprep.subr.mxu0 0.0
  %6789 = vmatpush1.msra.mxu0 0.0
  %6790 = vmatprep.subr.mxu0 0.0
  %6791 = vmatpush1.msra.mxu0 0.0
  %6792 = vmatprep.subr.mxu0 0.0
  %6793 = vmatpush1.msra.mxu0 0.0
  %6794 = vmatprep.subr.mxu0 0.0
  %6795 = vmatpush1.msra.mxu0 0.0
  %6796 = vmatprep.subr.mxu0 0.0
  %6797 = vmatpush1.msra.mxu0 0.0
  %6798 = vmatprep.subr.mxu0 0.0
  %6799 = vmatpush1.msra.mxu0 0.0
  %6800 = vmatprep.subr.mxu0 0.0
  %6801 = vmatpush1.msra.mxu0 0.0
  %6802 = vmatprep.subr.mxu0 0.0
  %6803 = vmatpush1.msra.mxu0 0.0
  %6804 = vmatprep.subr.mxu0 0.0
  %6805 = vmatpush1.msra.mxu0 0.0
  %6806 = vmatprep.subr.mxu0 0.0
  %6807 = vmatpush1.msra.mxu0 0.0
  %6808 = vmatprep.subr.mxu0 0.0
  %6809 = vmatpush1.msra.mxu0 0.0
  %6810 = vmatprep.subr.mxu0 0.0
  %6811 = vmatpush1.msra.mxu0 0.0
  %6812 = vmatprep.subr.mxu0 0.0
  %6813 = vmatpush1.msra.mxu0 0.0
  %6814 = vmatprep.subr.mxu0 0.0
  %6815 = vmatpush1.msra.mxu0 %v6782
  %6816 = vmatprep.subr.mxu0 0.0
  %6817 = vmatpush2.msra.mxu0 0.0
  %6818 = vmatprep.subr.mxu0 0.0
  %6819 = vmatpush2.msra.mxu0 0.0
  %6820 = vmatprep.subr.mxu0 0.0
  %6821 = vmatpush2.msra.mxu0 0.0
  %6822 = vmatprep.subr.mxu0 0.0
  %6823 = vmatpush2.msra.mxu0 0.0
  %6824 = vmatprep.subr.mxu0 0.0
  %6825 = vmatpush2.msra.mxu0 0.0
  %6826 = vmatprep.subr.mxu0 0.0
  %6827 = vmatpush2.msra.mxu0 0.0
  %6828 = vmatprep.subr.mxu0 0.0
  %6829 = vmatpush2.msra.mxu0 0.0
  %6830 = vmatprep.subr.mxu0 0.0
  %6831 = vmatpush2.msra.mxu0 0.0
  %6832 = vmatprep.subr.mxu0 0.0
  %6833 = vmatpush2.msra.mxu0 0.0
  %6834 = vmatprep.subr.mxu0 0.0
  %6835 = vmatpush2.msra.mxu0 0.0
  %6836 = vmatprep.subr.mxu0 0.0
  %6837 = vmatpush2.msra.mxu0 0.0
  %6838 = vmatprep.subr.mxu0 0.0
  %6839 = vmatpush2.msra.mxu0 0.0
  %6840 = vmatprep.subr.mxu0 0.0
  %6841 = vmatpush2.msra.mxu0 0.0
  %6842 = vmatprep.subr.mxu0 0.0
  %6843 = vmatpush2.msra.mxu0 0.0
  %6844 = vmatprep.subr.mxu0 0.0
  %6845 = vmatpush2.msra.mxu0 0.0
  %6846 = vmatprep.subr.mxu0 0.0
  %6847 = vmatpush2.msra.mxu0 0.0
  %6848 = vmatprep.mubr.f32.mxu0 0.0
  %6849 = vmatmul.mubr.f32.gmra.mxu0 %v6779
  %v6850 = vpop.f32.mrf.mxu0
  %v6851 = vadd.f32 %v6777, %v6850
  %v6852 = vpop.f32.mrf.mxu0
  %6853 = vdwg.mxu0
  %v6854 = vmax.f32 %v6851, 0.0
  %v6855 = vld [vmem:[%s5 + $0x8] sm:$0xff]
  %v6856 = vld [vmem:[%s5 + $0x10] sm:$0xff]
  %v6857 = vld [vmem:[%s5 + $0x18] sm:$0xff]
  %v6858 = vld [vmem:[%s5 + $0x20] sm:$0xff]
  %v6859 = vld [vmem:[%s6 + $0x1] sm:$0x1]
  %v6860 = vlaneseq
  %v6861 = vshrl.u32 %v6860, 7
  %v6862 = vsub.s32 0, %v6861
  %v6863 = vrot.slane %v6859, %v6862
  %v6865 = vsel %vm33, %v6854, 0
  %6867 = vmatprep.subr.mxu0 0.0
  %6868 = vmatpush1.msra.mxu0 0.0
  %6869 = vmatprep.subr.mxu0 0.0
  %6870 = vmatpush1.msra.mxu0 0.0
  %6871 = vmatprep.subr.mxu0 0.0
  %6872 = vmatpush1.msra.mxu0 0.0
  %6873 = vmatprep.subr.mxu0 0.0
  %6874 = vmatpush1.msra.mxu0 0.0
  %6875 = vmatprep.subr.mxu0 0.0
  %6876 = vmatpush1.msra.mxu0 0.0
  %6877 = vmatprep.subr.mxu0 0.0
  %6878 = vmatpush1.msra.mxu0 0.0
  %6879 = vmatprep.subr.mxu0 0.0
  %6880 = vmatpush1.msra.mxu0 0.0
  %6881 = vmatprep.subr.mxu0 0.0
  %6882 = vmatpush1.msra.mxu0 0.0
  %6883 = vmatprep.subr.mxu0 0.0
  %6884 = vmatpush1.msra.mxu0 0.0
  %6885 = vmatprep.subr.mxu0 0.0
  %6886 = vmatpush1.msra.mxu0 0.0
  %6887 = vmatprep.subr.mxu0 0.0
  %6888 = vmatpush1.msra.mxu0 0.0
  %6889 = vmatprep.subr.mxu0 0.0
  %6890 = vmatpush1.msra.mxu0 0.0
  %6891 = vmatprep.subr.mxu0 0.0
  %6892 = vmatpush1.msra.mxu0 %v6858
  %6893 = vmatprep.subr.mxu0 0.0
  %6894 = vmatpush1.msra.mxu0 %v6857
  %6895 = vmatprep.subr.mxu0 0.0
  %6896 = vmatpush1.msra.mxu0 %v6856
  %6897 = vmatprep.subr.mxu0 0.0
  %6898 = vmatpush1.msra.mxu0 %v6855
  %6899 = vmatprep.subr.mxu0 0.0
  %6900 = vmatpush2.msra.mxu0 0.0
  %6901 = vmatprep.subr.mxu0 0.0
  %6902 = vmatpush2.msra.mxu0 0.0
  %6903 = vmatprep.subr.mxu0 0.0
  %6904 = vmatpush2.msra.mxu0 0.0
  %6905 = vmatprep.subr.mxu0 0.0
  %6906 = vmatpush2.msra.mxu0 0.0
  %6907 = vmatprep.subr.mxu0 0.0
  %6908 = vmatpush2.msra.mxu0 0.0
  %6909 = vmatprep.subr.mxu0 0.0
  %6910 = vmatpush2.msra.mxu0 0.0
  %6911 = vmatprep.subr.mxu0 0.0
  %6912 = vmatpush2.msra.mxu0 0.0
  %6913 = vmatprep.subr.mxu0 0.0
  %6914 = vmatpush2.msra.mxu0 0.0
  %6915 = vmatprep.subr.mxu0 0.0
  %6916 = vmatpush2.msra.mxu0 0.0
  %6917 = vmatprep.subr.mxu0 0.0
  %6918 = vmatpush2.msra.mxu0 0.0
  %6919 = vmatprep.subr.mxu0 0.0
  %6920 = vmatpush2.msra.mxu0 0.0
  %6921 = vmatprep.subr.mxu0 0.0
  %6922 = vmatpush2.msra.mxu0 0.0
  %6923 = vmatprep.subr.mxu0 0.0
  %6924 = vmatpush2.msra.mxu0 0.0
  %6925 = vmatprep.subr.mxu0 0.0
  %6926 = vmatpush2.msra.mxu0 0.0
  %6927 = vmatprep.subr.mxu0 0.0
  %6928 = vmatpush2.msra.mxu0 0.0
  %6929 = vmatprep.subr.mxu0 0.0
  %6930 = vmatpush2.msra.mxu0 0.0
  %6931 = vmatprep.mubr.f32.mxu0 0.0
  %6932 = vmatmul.mubr.f32.gmra.mxu0 %v6865
  %v6933 = vpop.f32.mrf.mxu0
  %v6934 = vadd.f32 %v6863, %v6933
  %v6935 = vpop.f32.mrf.mxu0
  %6936 = vdwg.mxu0
  %v6937 = vmax.f32 %v6934, 0.0
  %v6938 = vld [vmem:[%s5 + $0x28] sm:$0xff]
  %v6939 = vld [vmem:[%s5 + $0x30] sm:$0xff]
  %v6940 = vld [vmem:[%s5 + $0x38] sm:$0xff]
  %v6941 = vld [vmem:[%s5 + $0x40] sm:$0xff]
  %v6942 = vld [vmem:[%s6 + $0x2] sm:$0x1]
  %v6943 = vlaneseq
  %v6944 = vshrl.u32 %v6943, 7
  %v6945 = vsub.s32 0, %v6944
  %v6946 = vrot.slane %v6942, %v6945
  %v6948 = vsel %vm33, %v6937, 0
  %6950 = vmatprep.subr.mxu0 0.0
  %6951 = vmatpush1.msra.mxu0 0.0
  %6952 = vmatprep.subr.mxu0 0.0
  %6953 = vmatpush1.msra.mxu0 0.0
  %6954 = vmatprep.subr.mxu0 0.0
  %6955 = vmatpush1.msra.mxu0 0.0
  %6956 = vmatprep.subr.mxu0 0.0
  %6957 = vmatpush1.msra.mxu0 0.0
  %6958 = vmatprep.subr.mxu0 0.0
  %6959 = vmatpush1.msra.mxu0 0.0
  %6960 = vmatprep.subr.mxu0 0.0
  %6961 = vmatpush1.msra.mxu0 0.0
  %6962 = vmatprep.subr.mxu0 0.0
  %6963 = vmatpush1.msra.mxu0 0.0
  %6964 = vmatprep.subr.mxu0 0.0
  %6965 = vmatpush1.msra.mxu0 0.0
  %6966 = vmatprep.subr.mxu0 0.0
  %6967 = vmatpush1.msra.mxu0 0.0
  %6968 = vmatprep.subr.mxu0 0.0
  %6969 = vmatpush1.msra.mxu0 0.0
  %6970 = vmatprep.subr.mxu0 0.0
  %6971 = vmatpush1.msra.mxu0 0.0
  %6972 = vmatprep.subr.mxu0 0.0
  %6973 = vmatpush1.msra.mxu0 0.0
  %6974 = vmatprep.subr.mxu0 0.0
  %6975 = vmatpush1.msra.mxu0 %v6941
  %6976 = vmatprep.subr.mxu0 0.0
  %6977 = vmatpush1.msra.mxu0 %v6940
  %6978 = vmatprep.subr.mxu0 0.0
  %6979 = vmatpush1.msra.mxu0 %v6939
  %6980 = vmatprep.subr.mxu0 0.0
  %6981 = vmatpush1.msra.mxu0 %v6938
  %6982 = vmatprep.subr.mxu0 0.0
  %6983 = vmatpush2.msra.mxu0 0.0
  %6984 = vmatprep.subr.mxu0 0.0
  %6985 = vmatpush2.msra.mxu0 0.0
  %6986 = vmatprep.subr.mxu0 0.0
  %6987 = vmatpush2.msra.mxu0 0.0
  %6988 = vmatprep.subr.mxu0 0.0
  %6989 = vmatpush2.msra.mxu0 0.0
  %6990 = vmatprep.subr.mxu0 0.0
  %6991 = vmatpush2.msra.mxu0 0.0
  %6992 = vmatprep.subr.mxu0 0.0
  %6993 = vmatpush2.msra.mxu0 0.0
  %6994 = vmatprep.subr.mxu0 0.0
  %6995 = vmatpush2.msra.mxu0 0.0
  %6996 = vmatprep.subr.mxu0 0.0
  %6997 = vmatpush2.msra.mxu0 0.0
  %6998 = vmatprep.subr.mxu0 0.0
  %6999 = vmatpush2.msra.mxu0 0.0
  %7000 = vmatprep.subr.mxu0 0.0
  %7001 = vmatpush2.msra.mxu0 0.0
  %7002 = vmatprep.subr.mxu0 0.0
  %7003 = vmatpush2.msra.mxu0 0.0
  %7004 = vmatprep.subr.mxu0 0.0
  %7005 = vmatpush2.msra.mxu0 0.0
  %7006 = vmatprep.subr.mxu0 0.0
  %7007 = vmatpush2.msra.mxu0 0.0
  %7008 = vmatprep.subr.mxu0 0.0
  %7009 = vmatpush2.msra.mxu0 0.0
  %7010 = vmatprep.subr.mxu0 0.0
  %7011 = vmatpush2.msra.mxu0 0.0
  %7012 = vmatprep.subr.mxu0 0.0
  %7013 = vmatpush2.msra.mxu0 0.0
  %7014 = vmatprep.mubr.f32.mxu0 0.0
  %7015 = vmatmul.mubr.f32.gmra.mxu0 %v6948
  %v7016 = vpop.f32.mrf.mxu0
  %v7017 = vadd.f32 %v6946, %v7016
  %v7018 = vpop.f32.mrf.mxu0
  %7019 = vdwg.mxu0
  %v7020 = vmax.f32 %v7017, 0.0
  %v7021 = vld [vmem:[%s5 + $0x48] sm:$0xff]
  %v7022 = vld [vmem:[%s5 + $0x50] sm:$0xff]
  %v7023 = vld [vmem:[%s5 + $0x58] sm:$0xff]
  %v7024 = vld [vmem:[%s5 + $0x60] sm:$0xff]
  %v7025 = vld [vmem:[%s6 + $0x3] sm:$0x1]
  %v7026 = vlaneseq
  %v7027 = vshrl.u32 %v7026, 7
  %v7028 = vsub.s32 0, %v7027
  %v7029 = vrot.slane %v7025, %v7028
  %v7031 = vsel %vm33, %v7020, 0
  %7033 = vmatprep.subr.mxu0 0.0
  %7034 = vmatpush1.msra.mxu0 0.0
  %7035 = vmatprep.subr.mxu0 0.0
  %7036 = vmatpush1.msra.mxu0 0.0
  %7037 = vmatprep.subr.mxu0 0.0
  %7038 = vmatpush1.msra.mxu0 0.0
  %7039 = vmatprep.subr.mxu0 0.0
  %7040 = vmatpush1.msra.mxu0 0.0
  %7041 = vmatprep.subr.mxu0 0.0
  %7042 = vmatpush1.msra.mxu0 0.0
  %7043 = vmatprep.subr.mxu0 0.0
  %7044 = vmatpush1.msra.mxu0 0.0
  %7045 = vmatprep.subr.mxu0 0.0
  %7046 = vmatpush1.msra.mxu0 0.0
  %7047 = vmatprep.subr.mxu0 0.0
  %7048 = vmatpush1.msra.mxu0 0.0
  %7049 = vmatprep.subr.mxu0 0.0
  %7050 = vmatpush1.msra.mxu0 0.0
  %7051 = vmatprep.subr.mxu0 0.0
  %7052 = vmatpush1.msra.mxu0 0.0
  %7053 = vmatprep.subr.mxu0 0.0
  %7054 = vmatpush1.msra.mxu0 0.0
  %7055 = vmatprep.subr.mxu0 0.0
  %7056 = vmatpush1.msra.mxu0 0.0
  %7057 = vmatprep.subr.mxu0 0.0
  %7058 = vmatpush1.msra.mxu0 %v7024
  %7059 = vmatprep.subr.mxu0 0.0
  %7060 = vmatpush1.msra.mxu0 %v7023
  %7061 = vmatprep.subr.mxu0 0.0
  %7062 = vmatpush1.msra.mxu0 %v7022
  %7063 = vmatprep.subr.mxu0 0.0
  %7064 = vmatpush1.msra.mxu0 %v7021
  %7065 = vmatprep.subr.mxu0 0.0
  %7066 = vmatpush2.msra.mxu0 0.0
  %7067 = vmatprep.subr.mxu0 0.0
  %7068 = vmatpush2.msra.mxu0 0.0
  %7069 = vmatprep.subr.mxu0 0.0
  %7070 = vmatpush2.msra.mxu0 0.0
  %7071 = vmatprep.subr.mxu0 0.0
  %7072 = vmatpush2.msra.mxu0 0.0
  %7073 = vmatprep.subr.mxu0 0.0
  %7074 = vmatpush2.msra.mxu0 0.0
  %7075 = vmatprep.subr.mxu0 0.0
  %7076 = vmatpush2.msra.mxu0 0.0
  %7077 = vmatprep.subr.mxu0 0.0
  %7078 = vmatpush2.msra.mxu0 0.0
  %7079 = vmatprep.subr.mxu0 0.0
  %7080 = vmatpush2.msra.mxu0 0.0
  %7081 = vmatprep.subr.mxu0 0.0
  %7082 = vmatpush2.msra.mxu0 0.0
  %7083 = vmatprep.subr.mxu0 0.0
  %7084 = vmatpush2.msra.mxu0 0.0
  %7085 = vmatprep.subr.mxu0 0.0
  %7086 = vmatpush2.msra.mxu0 0.0
  %7087 = vmatprep.subr.mxu0 0.0
  %7088 = vmatpush2.msra.mxu0 0.0
  %7089 = vmatprep.subr.mxu0 0.0
  %7090 = vmatpush2.msra.mxu0 0.0
  %7091 = vmatprep.subr.mxu0 0.0
  %7092 = vmatpush2.msra.mxu0 0.0
  %7093 = vmatprep.subr.mxu0 0.0
  %7094 = vmatpush2.msra.mxu0 0.0
  %7095 = vmatprep.subr.mxu0 0.0
  %7096 = vmatpush2.msra.mxu0 0.0
  %7097 = vmatprep.mubr.f32.mxu0 0.0
  %7098 = vmatmul.mubr.f32.gmra.mxu0 %v7031
  %v7099 = vpop.f32.mrf.mxu0
  %v7100 = vadd.f32 %v7029, %v7099
  %v7101 = vpop.f32.mrf.mxu0
  %7102 = vdwg.mxu0
  %v7103 = vmax.f32 %v7100, 0.0
  %v7104 = vld [vmem:[%s5 + $0x68] sm:$0xff]
  %v7105 = vld [vmem:[%s5 + $0x70] sm:$0xff]
  %v7106 = vld [vmem:[%s5 + $0x78] sm:$0xff]
  %v7107 = vld [vmem:[%s5 + $0x80] sm:$0xff]
  %v7108 = vld [vmem:[%s5 + $0x88] sm:$0xff]
  %v7109 = vld [vmem:[%s5 + $0x90] sm:$0xff]
  %v7110 = vld [vmem:[%s5 + $0x98] sm:$0xff]
  %v7111 = vld [vmem:[%s5 + $0xa0] sm:$0xff]
  %v7112 = vld [vmem:[%s6 + $0x4] sm:$0x1]
  %v7114 = vsel %vm33, %v7103, 0
  %7116 = vmatprep.subr.mxu0 0.0
  %7117 = vmatpush1.msra.mxu0 0.0
  %7118 = vmatprep.subr.mxu0 0.0
  %7119 = vmatpush1.msra.mxu0 0.0
  %7120 = vmatprep.subr.mxu0 0.0
  %7121 = vmatpush1.msra.mxu0 0.0
  %7122 = vmatprep.subr.mxu0 0.0
  %7123 = vmatpush1.msra.mxu0 0.0
  %7124 = vmatprep.subr.mxu0 0.0
  %7125 = vmatpush1.msra.mxu0 0.0
  %7126 = vmatprep.subr.mxu0 0.0
  %7127 = vmatpush1.msra.mxu0 0.0
  %7128 = vmatprep.subr.mxu0 0.0
  %7129 = vmatpush1.msra.mxu0 0.0
  %7130 = vmatprep.subr.mxu0 0.0
  %7131 = vmatpush1.msra.mxu0 0.0
  %7132 = vmatprep.subr.mxu0 0.0
  %7133 = vmatpush1.msra.mxu0 0.0
  %7134 = vmatprep.subr.mxu0 0.0
  %7135 = vmatpush1.msra.mxu0 0.0
  %7136 = vmatprep.subr.mxu0 0.0
  %7137 = vmatpush1.msra.mxu0 0.0
  %7138 = vmatprep.subr.mxu0 0.0
  %7139 = vmatpush1.msra.mxu0 0.0
  %7140 = vmatprep.subr.mxu0 0.0
  %7141 = vmatpush1.msra.mxu0 %v7111
  %7142 = vmatprep.subr.mxu0 0.0
  %7143 = vmatpush1.msra.mxu0 %v7110
  %7144 = vmatprep.subr.mxu0 0.0
  %7145 = vmatpush1.msra.mxu0 %v7109
  %7146 = vmatprep.subr.mxu0 0.0
  %7147 = vmatpush1.msra.mxu0 %v7108
  %7148 = vmatprep.subr.mxu0 0.0
  %7149 = vmatpush2.msra.mxu0 0.0
  %7150 = vmatprep.subr.mxu0 0.0
  %7151 = vmatpush2.msra.mxu0 0.0
  %7152 = vmatprep.subr.mxu0 0.0
  %7153 = vmatpush2.msra.mxu0 0.0
  %7154 = vmatprep.subr.mxu0 0.0
  %7155 = vmatpush2.msra.mxu0 0.0
  %7156 = vmatprep.subr.mxu0 0.0
  %7157 = vmatpush2.msra.mxu0 0.0
  %7158 = vmatprep.subr.mxu0 0.0
  %7159 = vmatpush2.msra.mxu0 0.0
  %7160 = vmatprep.subr.mxu0 0.0
  %7161 = vmatpush2.msra.mxu0 0.0
  %7162 = vmatprep.subr.mxu0 0.0
  %7163 = vmatpush2.msra.mxu0 0.0
  %7164 = vmatprep.subr.mxu0 0.0
  %7165 = vmatpush2.msra.mxu0 0.0
  %7166 = vmatprep.subr.mxu0 0.0
  %7167 = vmatpush2.msra.mxu0 0.0
  %7168 = vmatprep.subr.mxu0 0.0
  %7169 = vmatpush2.msra.mxu0 0.0
  %7170 = vmatprep.subr.mxu0 0.0
  %7171 = vmatpush2.msra.mxu0 0.0
  %7172 = vmatprep.subr.mxu0 0.0
  %7173 = vmatpush2.msra.mxu0 0.0
  %7174 = vmatprep.subr.mxu0 0.0
  %7175 = vmatpush2.msra.mxu0 0.0
  %7176 = vmatprep.subr.mxu0 0.0
  %7177 = vmatpush2.msra.mxu0 0.0
  %7178 = vmatprep.subr.mxu0 0.0
  %7179 = vmatpush2.msra.mxu0 0.0
  %7180 = vmatprep.mubr.f32.mxu0 0.0
  %7181 = vmatmul.mubr.f32.gmra.mxu0 %v7114
  %v7182 = vpop.f32.mrf.mxu0
  %v7183 = vadd.f32 0.0, %v7182
  %v7184 = vpop.f32.mrf.mxu0
  %7185 = vdwg.mxu0
  %v7187 = vsel %vm33, %v6770, 0
  %7189 = vmatprep.subr.mxu0 0.0
  %7190 = vmatpush1.msra.mxu0 0.0
  %7191 = vmatprep.subr.mxu0 0.0
  %7192 = vmatpush1.msra.mxu0 0.0
  %7193 = vmatprep.subr.mxu0 0.0
  %7194 = vmatpush1.msra.mxu0 0.0
  %7195 = vmatprep.subr.mxu0 0.0
  %7196 = vmatpush1.msra.mxu0 0.0
  %7197 = vmatprep.subr.mxu0 0.0
  %7198 = vmatpush1.msra.mxu0 0.0
  %7199 = vmatprep.subr.mxu0 0.0
  %7200 = vmatpush1.msra.mxu0 0.0
  %7201 = vmatprep.subr.mxu0 0.0
  %7202 = vmatpush1.msra.mxu0 0.0
  %7203 = vmatprep.subr.mxu0 0.0
  %7204 = vmatpush1.msra.mxu0 0.0
  %7205 = vmatprep.subr.mxu0 0.0
  %7206 = vmatpush1.msra.mxu0 0.0
  %7207 = vmatprep.subr.mxu0 0.0
  %7208 = vmatpush1.msra.mxu0 0.0
  %7209 = vmatprep.subr.mxu0 0.0
  %7210 = vmatpush1.msra.mxu0 0.0
  %7211 = vmatprep.subr.mxu0 0.0
  %7212 = vmatpush1.msra.mxu0 0.0
  %7213 = vmatprep.subr.mxu0 0.0
  %7214 = vmatpush1.msra.mxu0 %v7107
  %7215 = vmatprep.subr.mxu0 0.0
  %7216 = vmatpush1.msra.mxu0 %v7106
  %7217 = vmatprep.subr.mxu0 0.0
  %7218 = vmatpush1.msra.mxu0 %v7105
  %7219 = vmatprep.subr.mxu0 0.0
  %7220 = vmatpush1.msra.mxu0 %v7104
  %7221 = vmatprep.subr.mxu0 0.0
  %7222 = vmatpush2.msra.mxu0 0.0
  %7223 = vmatprep.subr.mxu0 0.0
  %7224 = vmatpush2.msra.mxu0 0.0
  %7225 = vmatprep.subr.mxu0 0.0
  %7226 = vmatpush2.msra.mxu0 0.0
  %7227 = vmatprep.subr.mxu0 0.0
  %7228 = vmatpush2.msra.mxu0 0.0
  %7229 = vmatprep.subr.mxu0 0.0
  %7230 = vmatpush2.msra.mxu0 0.0
  %7231 = vmatprep.subr.mxu0 0.0
  %7232 = vmatpush2.msra.mxu0 0.0
  %7233 = vmatprep.subr.mxu0 0.0
  %7234 = vmatpush2.msra.mxu0 0.0
  %7235 = vmatprep.subr.mxu0 0.0
  %7236 = vmatpush2.msra.mxu0 0.0
  %7237 = vmatprep.subr.mxu0 0.0
  %7238 = vmatpush2.msra.mxu0 0.0
  %7239 = vmatprep.subr.mxu0 0.0
  %7240 = vmatpush2.msra.mxu0 0.0
  %7241 = vmatprep.subr.mxu0 0.0
  %7242 = vmatpush2.msra.mxu0 0.0
  %7243 = vmatprep.subr.mxu0 0.0
  %7244 = vmatpush2.msra.mxu0 0.0
  %7245 = vmatprep.subr.mxu0 0.0
  %7246 = vmatpush2.msra.mxu0 0.0
  %7247 = vmatprep.subr.mxu0 0.0
  %7248 = vmatpush2.msra.mxu0 0.0
  %7249 = vmatprep.subr.mxu0 0.0
  %7250 = vmatpush2.msra.mxu0 0.0
  %7251 = vmatprep.subr.mxu0 0.0
  %7252 = vmatpush2.msra.mxu0 0.0
  %7253 = vmatprep.mubr.f32.mxu0 0.0
  %7254 = vmatmul.mubr.f32.gmra.mxu0 %v7187
  %v7255 = vpop.f32.mrf.mxu0
  %v7256 = vadd.f32 %v7183, %v7255
  %v7257 = vpop.f32.mrf.mxu0
  %7258 = vdwg.mxu0
  %v7259 = vlaneseq
  %v7260 = vshrl.u32 %v7259, 7
  %v7261 = vsub.s32 0, %v7260
  %v7262 = vrot.slane %v7112, %v7261
  %v7263 = vadd.f32 %v7256, %v7262
  %v7264 = vmax.f32 %v7263, 0.0
  %v7265 = vld [vmem:[%s5 + $0xa8] sm:$0xff]
  %v7266 = vld [vmem:[%s5 + $0xb0] sm:$0xff]
  %v7267 = vld [vmem:[%s5 + $0xb8] sm:$0xff]
  %v7268 = vld [vmem:[%s5 + $0xc0] sm:$0xff]
  %v7269 = vld [vmem:[%s6 + $0x5] sm:$0x1]
  %v7270 = vlaneseq
  %v7271 = vshrl.u32 %v7270, 7
  %v7272 = vsub.s32 0, %v7271
  %v7273 = vrot.slane %v7269, %v7272
  %v7275 = vsel %vm33, %v7264, 0
  %7277 = vmatprep.subr.mxu0 0.0
  %7278 = vmatpush1.msra.mxu0 0.0
  %7279 = vmatprep.subr.mxu0 0.0
  %7280 = vmatpush1.msra.mxu0 0.0
  %7281 = vmatprep.subr.mxu0 0.0
  %7282 = vmatpush1.msra.mxu0 0.0
  %7283 = vmatprep.subr.mxu0 0.0
  %7284 = vmatpush1.msra.mxu0 0.0
  %7285 = vmatprep.subr.mxu0 0.0
  %7286 = vmatpush1.msra.mxu0 0.0
  %7287 = vmatprep.subr.mxu0 0.0
  %7288 = vmatpush1.msra.mxu0 0.0
  %7289 = vmatprep.subr.mxu0 0.0
  %7290 = vmatpush1.msra.mxu0 0.0
  %7291 = vmatprep.subr.mxu0 0.0
  %7292 = vmatpush1.msra.mxu0 0.0
  %7293 = vmatprep.subr.mxu0 0.0
  %7294 = vmatpush1.msra.mxu0 0.0
  %7295 = vmatprep.subr.mxu0 0.0
  %7296 = vmatpush1.msra.mxu0 0.0
  %7297 = vmatprep.subr.mxu0 0.0
  %7298 = vmatpush1.msra.mxu0 0.0
  %7299 = vmatprep.subr.mxu0 0.0
  %7300 = vmatpush1.msra.mxu0 0.0
  %7301 = vmatprep.subr.mxu0 0.0
  %7302 = vmatpush1.msra.mxu0 %v7268
  %7303 = vmatprep.subr.mxu0 0.0
  %7304 = vmatpush1.msra.mxu0 %v7267
  %7305 = vmatprep.subr.mxu0 0.0
  %7306 = vmatpush1.msra.mxu0 %v7266
  %7307 = vmatprep.subr.mxu0 0.0
  %7308 = vmatpush1.msra.mxu0 %v7265
  %7309 = vmatprep.subr.mxu0 0.0
  %7310 = vmatpush2.msra.mxu0 0.0
  %7311 = vmatprep.subr.mxu0 0.0
  %7312 = vmatpush2.msra.mxu0 0.0
  %7313 = vmatprep.subr.mxu0 0.0
  %7314 = vmatpush2.msra.mxu0 0.0
  %7315 = vmatprep.subr.mxu0 0.0
  %7316 = vmatpush2.msra.mxu0 0.0
  %7317 = vmatprep.subr.mxu0 0.0
  %7318 = vmatpush2.msra.mxu0 0.0
  %7319 = vmatprep.subr.mxu0 0.0
  %7320 = vmatpush2.msra.mxu0 0.0
  %7321 = vmatprep.subr.mxu0 0.0
  %7322 = vmatpush2.msra.mxu0 0.0
  %7323 = vmatprep.subr.mxu0 0.0
  %7324 = vmatpush2.msra.mxu0 0.0
  %7325 = vmatprep.subr.mxu0 0.0
  %7326 = vmatpush2.msra.mxu0 0.0
  %7327 = vmatprep.subr.mxu0 0.0
  %7328 = vmatpush2.msra.mxu0 0.0
  %7329 = vmatprep.subr.mxu0 0.0
  %7330 = vmatpush2.msra.mxu0 0.0
  %7331 = vmatprep.subr.mxu0 0.0
  %7332 = vmatpush2.msra.mxu0 0.0
  %7333 = vmatprep.subr.mxu0 0.0
  %7334 = vmatpush2.msra.mxu0 0.0
  %7335 = vmatprep.subr.mxu0 0.0
  %7336 = vmatpush2.msra.mxu0 0.0
  %7337 = vmatprep.subr.mxu0 0.0
  %7338 = vmatpush2.msra.mxu0 0.0
  %7339 = vmatprep.subr.mxu0 0.0
  %7340 = vmatpush2.msra.mxu0 0.0
  %7341 = vmatprep.mubr.f32.mxu0 0.0
  %7342 = vmatmul.mubr.f32.gmra.mxu0 %v7275
  %v7343 = vpop.f32.mrf.mxu0
  %v7344 = vadd.f32 %v7273, %v7343
  %v7345 = vpop.f32.mrf.mxu0
  %7346 = vdwg.mxu0
  %v7347 = vmax.f32 %v7344, 0.0
  %v7348 = vld [vmem:[%s5 + $0xc8] sm:$0xff]
  %v7349 = vld [vmem:[%s5 + $0xd0] sm:$0xff]
  %v7350 = vld [vmem:[%s5 + $0xd8] sm:$0xff]
  %v7351 = vld [vmem:[%s5 + $0xe0] sm:$0xff]
  %v7352 = vld [vmem:[%s6 + $0x6] sm:$0x1]
  %v7353 = vlaneseq
  %v7354 = vshrl.u32 %v7353, 7
  %v7355 = vsub.s32 0, %v7354
  %v7356 = vrot.slane %v7352, %v7355
  %v7358 = vsel %vm33, %v7347, 0
  %7360 = vmatprep.subr.mxu0 0.0
  %7361 = vmatpush1.msra.mxu0 0.0
  %7362 = vmatprep.subr.mxu0 0.0
  %7363 = vmatpush1.msra.mxu0 0.0
  %7364 = vmatprep.subr.mxu0 0.0
  %7365 = vmatpush1.msra.mxu0 0.0
  %7366 = vmatprep.subr.mxu0 0.0
  %7367 = vmatpush1.msra.mxu0 0.0
  %7368 = vmatprep.subr.mxu0 0.0
  %7369 = vmatpush1.msra.mxu0 0.0
  %7370 = vmatprep.subr.mxu0 0.0
  %7371 = vmatpush1.msra.mxu0 0.0
  %7372 = vmatprep.subr.mxu0 0.0
  %7373 = vmatpush1.msra.mxu0 0.0
  %7374 = vmatprep.subr.mxu0 0.0
  %7375 = vmatpush1.msra.mxu0 0.0
  %7376 = vmatprep.subr.mxu0 0.0
  %7377 = vmatpush1.msra.mxu0 0.0
  %7378 = vmatprep.subr.mxu0 0.0
  %7379 = vmatpush1.msra.mxu0 0.0
  %7380 = vmatprep.subr.mxu0 0.0
  %7381 = vmatpush1.msra.mxu0 0.0
  %7382 = vmatprep.subr.mxu0 0.0
  %7383 = vmatpush1.msra.mxu0 0.0
  %7384 = vmatprep.subr.mxu0 0.0
  %7385 = vmatpush1.msra.mxu0 %v7351
  %7386 = vmatprep.subr.mxu0 0.0
  %7387 = vmatpush1.msra.mxu0 %v7350
  %7388 = vmatprep.subr.mxu0 0.0
  %7389 = vmatpush1.msra.mxu0 %v7349
  %7390 = vmatprep.subr.mxu0 0.0
  %7391 = vmatpush1.msra.mxu0 %v7348
  %7392 = vmatprep.subr.mxu0 0.0
  %7393 = vmatpush2.msra.mxu0 0.0
  %7394 = vmatprep.subr.mxu0 0.0
  %7395 = vmatpush2.msra.mxu0 0.0
  %7396 = vmatprep.subr.mxu0 0.0
  %7397 = vmatpush2.msra.mxu0 0.0
  %7398 = vmatprep.subr.mxu0 0.0
  %7399 = vmatpush2.msra.mxu0 0.0
  %7400 = vmatprep.subr.mxu0 0.0
  %7401 = vmatpush2.msra.mxu0 0.0
  %7402 = vmatprep.subr.mxu0 0.0
  %7403 = vmatpush2.msra.mxu0 0.0
  %7404 = vmatprep.subr.mxu0 0.0
  %7405 = vmatpush2.msra.mxu0 0.0
  %7406 = vmatprep.subr.mxu0 0.0
  %7407 = vmatpush2.msra.mxu0 0.0
  %7408 = vmatprep.subr.mxu0 0.0
  %7409 = vmatpush2.msra.mxu0 0.0
  %7410 = vmatprep.subr.mxu0 0.0
  %7411 = vmatpush2.msra.mxu0 0.0
  %7412 = vmatprep.subr.mxu0 0.0
  %7413 = vmatpush2.msra.mxu0 0.0
  %7414 = vmatprep.subr.mxu0 0.0
  %7415 = vmatpush2.msra.mxu0 0.0
  %7416 = vmatprep.subr.mxu0 0.0
  %7417 = vmatpush2.msra.mxu0 0.0
  %7418 = vmatprep.subr.mxu0 0.0
  %7419 = vmatpush2.msra.mxu0 0.0
  %7420 = vmatprep.subr.mxu0 0.0
  %7421 = vmatpush2.msra.mxu0 0.0
  %7422 = vmatprep.subr.mxu0 0.0
  %7423 = vmatpush2.msra.mxu0 0.0
  %7424 = vmatprep.mubr.f32.mxu0 0.0
  %7425 = vmatmul.mubr.f32.gmra.mxu0 %v7358
  %v7426 = vpop.f32.mrf.mxu0
  %v7427 = vadd.f32 %v7356, %v7426
  %v7428 = vpop.f32.mrf.mxu0
  %7429 = vdwg.mxu0
  %v7430 = vmax.f32 %v7427, 0.0
  %v7431 = vld [vmem:[%s5 + $0xe8] sm:$0xff]
  %v7432 = vld [vmem:[%s5 + $0xf0] sm:$0xff]
  %v7433 = vld [vmem:[%s5 + $0xf8] sm:$0xff]
  %v7434 = vld [vmem:[%s5 + $0x100] sm:$0xff]
  %v7435 = vld [vmem:[%s6 + $0x7] sm:$0x1]
  %v7436 = vlaneseq
  %v7437 = vshrl.u32 %v7436, 7
  %v7438 = vsub.s32 0, %v7437
  %v7439 = vrot.slane %v7435, %v7438
  %v7441 = vsel %vm33, %v7430, 0
  %7443 = vmatprep.subr.mxu0 0.0
  %7444 = vmatpush1.msra.mxu0 0.0
  %7445 = vmatprep.subr.mxu0 0.0
  %7446 = vmatpush1.msra.mxu0 0.0
  %7447 = vmatprep.subr.mxu0 0.0
  %7448 = vmatpush1.msra.mxu0 0.0
  %7449 = vmatprep.subr.mxu0 0.0
  %7450 = vmatpush1.msra.mxu0 0.0
  %7451 = vmatprep.subr.mxu0 0.0
  %7452 = vmatpush1.msra.mxu0 0.0
  %7453 = vmatprep.subr.mxu0 0.0
  %7454 = vmatpush1.msra.mxu0 0.0
  %7455 = vmatprep.subr.mxu0 0.0
  %7456 = vmatpush1.msra.mxu0 0.0
  %7457 = vmatprep.subr.mxu0 0.0
  %7458 = vmatpush1.msra.mxu0 0.0
  %7459 = vmatprep.subr.mxu0 0.0
  %7460 = vmatpush1.msra.mxu0 0.0
  %7461 = vmatprep.subr.mxu0 0.0
  %7462 = vmatpush1.msra.mxu0 0.0
  %7463 = vmatprep.subr.mxu0 0.0
  %7464 = vmatpush1.msra.mxu0 0.0
  %7465 = vmatprep.subr.mxu0 0.0
  %7466 = vmatpush1.msra.mxu0 0.0
  %7467 = vmatprep.subr.mxu0 0.0
  %7468 = vmatpush1.msra.mxu0 %v7434
  %7469 = vmatprep.subr.mxu0 0.0
  %7470 = vmatpush1.msra.mxu0 %v7433
  %7471 = vmatprep.subr.mxu0 0.0
  %7472 = vmatpush1.msra.mxu0 %v7432
  %7473 = vmatprep.subr.mxu0 0.0
  %7474 = vmatpush1.msra.mxu0 %v7431
  %7475 = vmatprep.subr.mxu0 0.0
  %7476 = vmatpush2.msra.mxu0 0.0
  %7477 = vmatprep.subr.mxu0 0.0
  %7478 = vmatpush2.msra.mxu0 0.0
  %7479 = vmatprep.subr.mxu0 0.0
  %7480 = vmatpush2.msra.mxu0 0.0
  %7481 = vmatprep.subr.mxu0 0.0
  %7482 = vmatpush2.msra.mxu0 0.0
  %7483 = vmatprep.subr.mxu0 0.0
  %7484 = vmatpush2.msra.mxu0 0.0
  %7485 = vmatprep.subr.mxu0 0.0
  %7486 = vmatpush2.msra.mxu0 0.0
  %7487 = vmatprep.subr.mxu0 0.0
  %7488 = vmatpush2.msra.mxu0 0.0
  %7489 = vmatprep.subr.mxu0 0.0
  %7490 = vmatpush2.msra.mxu0 0.0
  %7491 = vmatprep.subr.mxu0 0.0
  %7492 = vmatpush2.msra.mxu0 0.0
  %7493 = vmatprep.subr.mxu0 0.0
  %7494 = vmatpush2.msra.mxu0 0.0
  %7495 = vmatprep.subr.mxu0 0.0
  %7496 = vmatpush2.msra.mxu0 0.0
  %7497 = vmatprep.subr.mxu0 0.0
  %7498 = vmatpush2.msra.mxu0 0.0
  %7499 = vmatprep.subr.mxu0 0.0
  %7500 = vmatpush2.msra.mxu0 0.0
  %7501 = vmatprep.subr.mxu0 0.0
  %7502 = vmatpush2.msra.mxu0 0.0
  %7503 = vmatprep.subr.mxu0 0.0
  %7504 = vmatpush2.msra.mxu0 0.0
  %7505 = vmatprep.subr.mxu0 0.0
  %7506 = vmatpush2.msra.mxu0 0.0
  %7507 = vmatprep.mubr.f32.mxu0 0.0
  %7508 = vmatmul.mubr.f32.gmra.mxu0 %v7441
  %v7509 = vpop.f32.mrf.mxu0
  %v7510 = vadd.f32 %v7439, %v7509
  %v7511 = vpop.f32.mrf.mxu0
  %7512 = vdwg.mxu0
  %v7513 = vmax.f32 %v7510, 0.0
  %v7514 = vld [vmem:[%s5 + $0x108] sm:$0xff]
  %v7515 = vld [vmem:[%s5 + $0x110] sm:$0xff]
  %v7516 = vld [vmem:[%s5 + $0x118] sm:$0xff]
  %v7517 = vld [vmem:[%s5 + $0x120] sm:$0xff]
  %v7518 = vld [vmem:[%s6 + $0x8] sm:$0x1]
  %v7519 = vlaneseq
  %v7520 = vshrl.u32 %v7519, 7
  %v7521 = vsub.s32 0, %v7520
  %v7522 = vrot.slane %v7518, %v7521
  %v7524 = vsel %vm33, %v7513, 0
  %7526 = vmatprep.subr.mxu0 0.0
  %7527 = vmatpush1.msra.mxu0 0.0
  %7528 = vmatprep.subr.mxu0 0.0
  %7529 = vmatpush1.msra.mxu0 0.0
  %7530 = vmatprep.subr.mxu0 0.0
  %7531 = vmatpush1.msra.mxu0 0.0
  %7532 = vmatprep.subr.mxu0 0.0
  %7533 = vmatpush1.msra.mxu0 0.0
  %7534 = vmatprep.subr.mxu0 0.0
  %7535 = vmatpush1.msra.mxu0 0.0
  %7536 = vmatprep.subr.mxu0 0.0
  %7537 = vmatpush1.msra.mxu0 0.0
  %7538 = vmatprep.subr.mxu0 0.0
  %7539 = vmatpush1.msra.mxu0 0.0
  %7540 = vmatprep.subr.mxu0 0.0
  %7541 = vmatpush1.msra.mxu0 0.0
  %7542 = vmatprep.subr.mxu0 0.0
  %7543 = vmatpush1.msra.mxu0 0.0
  %7544 = vmatprep.subr.mxu0 0.0
  %7545 = vmatpush1.msra.mxu0 0.0
  %7546 = vmatprep.subr.mxu0 0.0
  %7547 = vmatpush1.msra.mxu0 0.0
  %7548 = vmatprep.subr.mxu0 0.0
  %7549 = vmatpush1.msra.mxu0 0.0
  %7550 = vmatprep.subr.mxu0 0.0
  %7551 = vmatpush1.msra.mxu0 %v7517
  %7552 = vmatprep.subr.mxu0 0.0
  %7553 = vmatpush1.msra.mxu0 %v7516
  %7554 = vmatprep.subr.mxu0 0.0
  %7555 = vmatpush1.msra.mxu0 %v7515
  %7556 = vmatprep.subr.mxu0 0.0
  %7557 = vmatpush1.msra.mxu0 %v7514
  %7558 = vmatprep.subr.mxu0 0.0
  %7559 = vmatpush2.msra.mxu0 0.0
  %7560 = vmatprep.subr.mxu0 0.0
  %7561 = vmatpush2.msra.mxu0 0.0
  %7562 = vmatprep.subr.mxu0 0.0
  %7563 = vmatpush2.msra.mxu0 0.0
  %7564 = vmatprep.subr.mxu0 0.0
  %7565 = vmatpush2.msra.mxu0 0.0
  %7566 = vmatprep.subr.mxu0 0.0
  %7567 = vmatpush2.msra.mxu0 0.0
  %7568 = vmatprep.subr.mxu0 0.0
  %7569 = vmatpush2.msra.mxu0 0.0
  %7570 = vmatprep.subr.mxu0 0.0
  %7571 = vmatpush2.msra.mxu0 0.0
  %7572 = vmatprep.subr.mxu0 0.0
  %7573 = vmatpush2.msra.mxu0 0.0
  %7574 = vmatprep.subr.mxu0 0.0
  %7575 = vmatpush2.msra.mxu0 0.0
  %7576 = vmatprep.subr.mxu0 0.0
  %7577 = vmatpush2.msra.mxu0 0.0
  %7578 = vmatprep.subr.mxu0 0.0
  %7579 = vmatpush2.msra.mxu0 0.0
  %7580 = vmatprep.subr.mxu0 0.0
  %7581 = vmatpush2.msra.mxu0 0.0
  %7582 = vmatprep.subr.mxu0 0.0
  %7583 = vmatpush2.msra.mxu0 0.0
  %7584 = vmatprep.subr.mxu0 0.0
  %7585 = vmatpush2.msra.mxu0 0.0
  %7586 = vmatprep.subr.mxu0 0.0
  %7587 = vmatpush2.msra.mxu0 0.0
  %7588 = vmatprep.subr.mxu0 0.0
  %7589 = vmatpush2.msra.mxu0 0.0
  %7590 = vmatprep.mubr.f32.mxu0 0.0
  %7591 = vmatmul.mubr.f32.gmra.mxu0 %v7524
  %v7592 = vpop.f32.mrf.mxu0
  %v7593 = vadd.f32 %v7522, %v7592
  %v7594 = vpop.f32.mrf.mxu0
  %7595 = vdwg.mxu0
  %v7596 = vmax.f32 %v7593, 0.0
  %v7597 = vld [vmem:[%s5 + $0x128] sm:$0xff]
  %v7598 = vld [vmem:[%s5 + $0x130] sm:$0xff]
  %v7599 = vld [vmem:[%s5 + $0x138] sm:$0xff]
  %v7600 = vld [vmem:[%s5 + $0x140] sm:$0xff]
  %v7601 = vld [vmem:[%s6 + $0x9] sm:$0x1]
  %v7602 = vlaneseq
  %v7603 = vshrl.u32 %v7602, 7
  %v7604 = vsub.s32 0, %v7603
  %v7605 = vrot.slane %v7601, %v7604
  %v7607 = vsel %vm33, %v7596, 0
  %7609 = vmatprep.subr.mxu0 0.0
  %7610 = vmatpush1.msra.mxu0 0.0
  %7611 = vmatprep.subr.mxu0 0.0
  %7612 = vmatpush1.msra.mxu0 0.0
  %7613 = vmatprep.subr.mxu0 0.0
  %7614 = vmatpush1.msra.mxu0 0.0
  %7615 = vmatprep.subr.mxu0 0.0
  %7616 = vmatpush1.msra.mxu0 0.0
  %7617 = vmatprep.subr.mxu0 0.0
  %7618 = vmatpush1.msra.mxu0 0.0
  %7619 = vmatprep.subr.mxu0 0.0
  %7620 = vmatpush1.msra.mxu0 0.0
  %7621 = vmatprep.subr.mxu0 0.0
  %7622 = vmatpush1.msra.mxu0 0.0
  %7623 = vmatprep.subr.mxu0 0.0
  %7624 = vmatpush1.msra.mxu0 0.0
  %7625 = vmatprep.subr.mxu0 0.0
  %7626 = vmatpush1.msra.mxu0 0.0
  %7627 = vmatprep.subr.mxu0 0.0
  %7628 = vmatpush1.msra.mxu0 0.0
  %7629 = vmatprep.subr.mxu0 0.0
  %7630 = vmatpush1.msra.mxu0 0.0
  %7631 = vmatprep.subr.mxu0 0.0
  %7632 = vmatpush1.msra.mxu0 0.0
  %7633 = vmatprep.subr.mxu0 0.0
  %7634 = vmatpush1.msra.mxu0 %v7600
  %7635 = vmatprep.subr.mxu0 0.0
  %7636 = vmatpush1.msra.mxu0 %v7599
  %7637 = vmatprep.subr.mxu0 0.0
  %7638 = vmatpush1.msra.mxu0 %v7598
  %7639 = vmatprep.subr.mxu0 0.0
  %7640 = vmatpush1.msra.mxu0 %v7597
  %7641 = vmatprep.subr.mxu0 0.0
  %7642 = vmatpush2.msra.mxu0 0.0
  %7643 = vmatprep.subr.mxu0 0.0
  %7644 = vmatpush2.msra.mxu0 0.0
  %7645 = vmatprep.subr.mxu0 0.0
  %7646 = vmatpush2.msra.mxu0 0.0
  %7647 = vmatprep.subr.mxu0 0.0
  %7648 = vmatpush2.msra.mxu0 0.0
  %7649 = vmatprep.subr.mxu0 0.0
  %7650 = vmatpush2.msra.mxu0 0.0
  %7651 = vmatprep.subr.mxu0 0.0
  %7652 = vmatpush2.msra.mxu0 0.0
  %7653 = vmatprep.subr.mxu0 0.0
  %7654 = vmatpush2.msra.mxu0 0.0
  %7655 = vmatprep.subr.mxu0 0.0
  %7656 = vmatpush2.msra.mxu0 0.0
  %7657 = vmatprep.subr.mxu0 0.0
  %7658 = vmatpush2.msra.mxu0 0.0
  %7659 = vmatprep.subr.mxu0 0.0
  %7660 = vmatpush2.msra.mxu0 0.0
  %7661 = vmatprep.subr.mxu0 0.0
  %7662 = vmatpush2.msra.mxu0 0.0
  %7663 = vmatprep.subr.mxu0 0.0
  %7664 = vmatpush2.msra.mxu0 0.0
  %7665 = vmatprep.subr.mxu0 0.0
  %7666 = vmatpush2.msra.mxu0 0.0
  %7667 = vmatprep.subr.mxu0 0.0
  %7668 = vmatpush2.msra.mxu0 0.0
  %7669 = vmatprep.subr.mxu0 0.0
  %7670 = vmatpush2.msra.mxu0 0.0
  %7671 = vmatprep.subr.mxu0 0.0
  %7672 = vmatpush2.msra.mxu0 0.0
  %7673 = vmatprep.mubr.f32.mxu0 0.0
  %7674 = vmatmul.mubr.f32.gmra.mxu0 %v7607
  %v7675 = vpop.f32.mrf.mxu0
  %v7676 = vadd.f32 %v7605, %v7675
  %v7677 = vpop.f32.mrf.mxu0
  %7678 = vdwg.mxu0
  %vm7679 = vcmask 1024
  %7680 = vst.msk [vmem:[%s7] sm:$0x3] %vm7679, %v7676
  // Predicated region
  $region30: #{cnnre_forward.1} parent=0 // pred_check
    _
  $region31: #{cnnre_forward.1} parent=0 // pred_check_branch
    %7682 = sbr.rel (0) target = $region33
  $region32: #{cnnre_forward.1} parent=0 // pred_region
    _
  $region33: #{cnnre_forward.1} parent=0 // pred_fallthru
    _
  // Predicated region
  $region34: #{cnnre_forward.1} parent=0 // pred_check
    _
  $region35: #{cnnre_forward.1} parent=0 // pred_check_branch
    %7684 = sbr.rel (0) target = $region37
  $region36: #{cnnre_forward.1} parent=0 // pred_region
    _
  $region37: #{cnnre_forward.1} parent=0 // pred_fallthru
    _

</llo_original>
